<compile_context>
chip_gen: v7x
topology: tpu7x:2x2x1
jax: 0.10.0
libtpu: 0.0.40
codegen_flags: <defaults>
</compile_context>

<pallas_src>
import functools

import jax
import jax.numpy as jnp
from jax.experimental import pallas as pl
from jax.experimental.pallas import tpu as pltpu


# ----------------------------------------------------------------------------
# Fused ResnetBlock kernel (one batch sample per grid step)
# ----------------------------------------------------------------------------

def _resnet_block_kernel(x_ref, w1_ref, w2_ref, o_ref, pad_ref, im_ref,
                         *, H, W, C, eps):
    HW = H * W

    def reflect_pad_store(a):
        # a: (H, W, C) bf16 value -> reflect-pad(1) into pad_ref (H+2, W+2, C).
        # Width pad via one concatenate (sublane relayout paid once), then
        # 3 wide stores (no per-edge / per-corner masked stores).
        wide = jnp.concatenate(
            [a[:, 1:2, :], a, a[:, W - 2:W - 1, :]], axis=1)      # (H, W+2, C)
        pad_ref[1:H + 1, :, :] = wide
        pad_ref[0:1, :, :] = wide[1:2]
        pad_ref[H + 1:H + 2, :, :] = wide[H - 2:H - 1]

    def build_im2col():
        # Fill im_ref (HW, 9C) bf16 from the padded plane. Only the kj=1,2
        # column shifts need a sublane relayout (paid once each); every store
        # is a full (HW, C) lane-dense block at a 128-lane-aligned offset.
        for kj in range(3):
            colw = pad_ref[:, kj:kj + W, :]                       # (H+2, W, C)
            for ki in range(3):
                k = ki * 3 + kj
                im_ref[:, k * C:(k + 1) * C] = colw[ki:ki + H].reshape(HW, C)

    def inst_norm(a):
        # InstanceNorm2d(affine=False), biased variance (PyTorch), f32 stats.
        # Single pass: E[x] and E[x^2] together.
        mean = jnp.mean(a, axis=0, keepdims=True)
        meansq = jnp.mean(a * a, axis=0, keepdims=True)
        var = meansq - mean * mean
        return (a - mean) * jax.lax.rsqrt(var + eps)

    # ---- conv1 + InstanceNorm + ReLU  (bias cancelled by InstanceNorm) ------
    reflect_pad_store(x_ref[...].astype(jnp.bfloat16))
    build_im2col()
    a1 = jnp.dot(im_ref[...], w1_ref[...],
                 preferred_element_type=jnp.float32)              # (HW, C) f32
    y1 = jnp.maximum(inst_norm(a1), 0.0)

    # ---- reflection-pad of the intermediate (reuse pad scratch) -------------
    reflect_pad_store(y1.reshape(H, W, C).astype(jnp.bfloat16))
    build_im2col()

    # ---- conv2 + InstanceNorm + residual add --------------------------------
    a2 = jnp.dot(im_ref[...], w2_ref[...],
                 preferred_element_type=jnp.float32)              # (HW, C) f32
    y2 = inst_norm(a2)

    # Residual read directly from the input ref only here (exact f32, short
    # live range).
    o_ref[...] = (x_ref[...] + y2.reshape(H, W, C)).astype(o_ref.dtype)


# ----------------------------------------------------------------------------
# Wrappers
# ----------------------------------------------------------------------------

def resnet_block_forward_nhwc(params, x_nhwc, eps=1e-5, out_dtype=None):
    """Core entry point: NHWC in / NHWC out (chain blocks without transposes)."""
    N, H, W, C = x_nhwc.shape
    out_dtype = out_dtype or x_nhwc.dtype

    # (Cout, Cin, kh, kw) -> (kh, kw, Cin, Cout) -> (9*Cin, Cout), bf16 MXU feed.
    w1m = jnp.transpose(params["w1"], (2, 3, 1, 0)).reshape(9 * C, C).astype(jnp.bfloat16)
    w2m = jnp.transpose(params["w2"], (2, 3, 1, 0)).reshape(9 * C, C).astype(jnp.bfloat16)
    # NOTE: conv biases are intentionally NOT passed — InstanceNorm(affine=False)
    # subtracts the per-channel mean, cancelling a per-channel bias exactly.

    return pl.pallas_call(
        functools.partial(_resnet_block_kernel, H=H, W=W, C=C, eps=eps),
        out_shape=jax.ShapeDtypeStruct((N, H, W, C), out_dtype),
        grid_spec=pltpu.PrefetchScalarGridSpec(
            num_scalar_prefetch=0,
            grid=(N,),
            in_specs=[
                pl.BlockSpec((None, H, W, C), lambda n: (n, 0, 0, 0)),
                pl.BlockSpec((9 * C, C), lambda n: (0, 0)),
                pl.BlockSpec((9 * C, C), lambda n: (0, 0)),
            ],
            out_specs=pl.BlockSpec((None, H, W, C), lambda n: (n, 0, 0, 0)),
            scratch_shapes=[
                pltpu.VMEM((H + 2, W + 2, C), jnp.bfloat16),   # padded plane
                pltpu.VMEM((H * W, 9 * C), jnp.bfloat16),      # im2col buffer
            ],
        ),
        compiler_params=pltpu.CompilerParams(
            dimension_semantics=("parallel",),
            vmem_limit_bytes=32 * 1024 * 1024,
        ),
    )(x_nhwc.astype(jnp.float32), w1m, w2m)


def resnet_block_forward(params, x_nchw, eps=1e-5):
    """PyTorch-semantics wrapper: NCHW in / NCHW out."""
    x = jnp.transpose(x_nchw, (0, 2, 3, 1))
    y = resnet_block_forward_nhwc(params, x, eps=eps, out_dtype=jnp.float32)
    return jnp.transpose(y, (0, 3, 1, 2))


# ----------------------------------------------------------------------------
# Pure-JAX f32 reference (PyTorch-equivalent) for correctness check
# ----------------------------------------------------------------------------

def _reference_forward(params, x, eps=1e-5):
    def conv(h, w, b):
        hp = jnp.pad(h, ((0, 0), (0, 0), (1, 1), (1, 1)), mode="reflect")
        y = jax.lax.conv_general_dilated(
            hp, w, window_strides=(1, 1), padding="VALID",
            dimension_numbers=("NCHW", "OIHW", "NCHW"))
        return y + b.reshape(1, -1, 1, 1)

    def inorm(h):
        m = jnp.mean(h, axis=(2, 3), keepdims=True)
        v = jnp.mean((h - m) ** 2, axis=(2, 3), keepdims=True)
        return (h - m) * jax.lax.rsqrt(v + eps)

    y = jax.nn.relu(inorm(conv(x, params["w1"], params["b1"])))
    y = inorm(conv(y, params["w2"], params["b2"]))
    return x + y


if __name__ == "__main__":
    # channels-in-lanes: C=128 keeps every store lane-dense on all generations
    N, C, H, W = 2, 128, 16, 16
    key = jax.random.PRNGKey(0)
    k1, k2, k3, k4, kx = jax.random.split(key, 5)
    params = {
        "w1": 0.05 * jax.random.normal(k1, (C, C, 3, 3), jnp.float32),
        "b1": 0.01 * jax.random.normal(k2, (C,), jnp.float32),
        "w2": 0.05 * jax.random.normal(k3, (C, C, 3, 3), jnp.float32),
        "b2": 0.01 * jax.random.normal(k4, (C,), jnp.float32),
    }
    x = jax.random.normal(kx, (N, C, H, W), jnp.float32)

    fwd = jax.jit(resnet_block_forward)
    y = jax.block_until_ready(fwd(params, x))

    assert y.shape == (N, C, H, W), y.shape
    assert bool(jnp.all(jnp.isfinite(y)))

    y_ref = _reference_forward(params, x)
    err = float(jnp.max(jnp.abs(y - y_ref)))
    assert err < 0.1, f"max abs err vs f32 reference: {err}"  # bf16 MXU operands

    print("KERNEL_OK")
</pallas_src>

<mosaic_0001>
module attributes {stable_mosaic.version = 11 : i64} {
  func.func @_resnet_block_kernel(%arg0: i32, %arg1: memref<1x16x16x128xf32, #tpu.memory_space<vmem>>, %arg2: memref<1152x128xbf16, #tpu.memory_space<vmem>>, %arg3: memref<1152x128xbf16, #tpu.memory_space<vmem>>, %arg4: memref<1x16x16x128xf32, #tpu.memory_space<vmem>>, %arg5: memref<18x18x128xbf16, #tpu.memory_space<vmem>>, %arg6: memref<256x1152xbf16, #tpu.memory_space<vmem>>) attributes {dimension_semantics = [#tpu.dimension_semantics<parallel>], iteration_bounds = array<i64: 2>, scalar_prefetch = 0 : i64, scratch_operands = 2 : i64, tpu.core_type = #tpu.core_type<tc>, window_params = [{transform_indices = @transform_0, window_bounds = array<i64: 1, 16, 16, 128>}, {pipeline_mode = #tpu.pipeline_mode<synchronous>, transform_indices = @transform_1, window_bounds = array<i64: 1152, 128>}, {pipeline_mode = #tpu.pipeline_mode<synchronous>, transform_indices = @transform_2, window_bounds = array<i64: 1152, 128>}, {transform_indices = @transform_3, window_bounds = array<i64: 1, 16, 16, 128>}]} {
    %c0 = arith.constant 0 : index
    %c0_0 = arith.constant 0 : index
    %c0_1 = arith.constant 0 : index
    %c0_2 = arith.constant 0 : index
    %0 = vector.load %arg1[%c0, %c0_0, %c0_1, %c0_2] : memref<1x16x16x128xf32, #tpu.memory_space<vmem>>, vector<1x16x16x128xf32>
    %1 = vector.shape_cast %0 : vector<1x16x16x128xf32> to vector<16x16x128xf32>
    %2 = arith.truncf %1 : vector<16x16x128xf32> to vector<16x16x128xbf16>
    %3 = vector.extract_strided_slice %2 {offsets = [0, 1, 0], sizes = [16, 1, 128], strides = [1, 1, 1]} : vector<16x16x128xbf16> to vector<16x1x128xbf16>
    %4 = vector.extract_strided_slice %2 {offsets = [0, 14, 0], sizes = [16, 1, 128], strides = [1, 1, 1]} : vector<16x16x128xbf16> to vector<16x1x128xbf16>
    %5 = tpu.concatenate %3, %2, %4 in 1 : vector<16x1x128xbf16>, vector<16x16x128xbf16>, vector<16x1x128xbf16> -> vector<16x18x128xbf16>
    %c1 = arith.constant 1 : index
    %c0_3 = arith.constant 0 : index
    %c0_4 = arith.constant 0 : index
    %6 = vector.load %arg5[%c1, %c0_3, %c0_4] : memref<18x18x128xbf16, #tpu.memory_space<vmem>>, vector<16x18x128xbf16>
    tpu.vector_store %arg5[%c1, %c0_3, %c0_4], %5 {strides = array<i32>} : memref<18x18x128xbf16, #tpu.memory_space<vmem>>, vector<16x18x128xbf16>,
    %7 = vector.extract_strided_slice %5 {offsets = [1, 0, 0], sizes = [1, 18, 128], strides = [1, 1, 1]} : vector<16x18x128xbf16> to vector<1x18x128xbf16>
    %c0_5 = arith.constant 0 : index
    %c0_6 = arith.constant 0 : index
    %c0_7 = arith.constant 0 : index
    %8 = vector.load %arg5[%c0_5, %c0_6, %c0_7] : memref<18x18x128xbf16, #tpu.memory_space<vmem>>, vector<1x18x128xbf16>
    tpu.vector_store %arg5[%c0_5, %c0_6, %c0_7], %7 {strides = array<i32>} : memref<18x18x128xbf16, #tpu.memory_space<vmem>>, vector<1x18x128xbf16>,
    %9 = vector.extract_strided_slice %5 {offsets = [14, 0, 0], sizes = [1, 18, 128], strides = [1, 1, 1]} : vector<16x18x128xbf16> to vector<1x18x128xbf16>
    %c17 = arith.constant 17 : index
    %c0_8 = arith.constant 0 : index
    %c0_9 = arith.constant 0 : index
    %10 = vector.load %arg5[%c17, %c0_8, %c0_9] : memref<18x18x128xbf16, #tpu.memory_space<vmem>>, vector<1x18x128xbf16>
    tpu.vector_store %arg5[%c17, %c0_8, %c0_9], %9 {strides = array<i32>} : memref<18x18x128xbf16, #tpu.memory_space<vmem>>, vector<1x18x128xbf16>,
    %c0_10 = arith.constant 0 : index
    %c0_11 = arith.constant 0 : index
    %c0_12 = arith.constant 0 : index
    %11 = vector.load %arg5[%c0_10, %c0_11, %c0_12] : memref<18x18x128xbf16, #tpu.memory_space<vmem>>, vector<18x16x128xbf16>
    %12 = vector.extract_strided_slice %11 {offsets = [0, 0, 0], sizes = [16, 16, 128], strides = [1, 1, 1]} : vector<18x16x128xbf16> to vector<16x16x128xbf16>
    %13 = vector.shape_cast %12 : vector<16x16x128xbf16> to vector<256x128xbf16>
    %c0_13 = arith.constant 0 : index
    %c0_14 = arith.constant 0 : index
    %14 = vector.load %arg6[%c0_13, %c0_14] : memref<256x1152xbf16, #tpu.memory_space<vmem>>, vector<256x128xbf16>
    tpu.vector_store %arg6[%c0_13, %c0_14], %13 {strides = array<i32>} : memref<256x1152xbf16, #tpu.memory_space<vmem>>, vector<256x128xbf16>,
    %15 = vector.extract_strided_slice %11 {offsets = [1, 0, 0], sizes = [16, 16, 128], strides = [1, 1, 1]} : vector<18x16x128xbf16> to vector<16x16x128xbf16>
    %16 = vector.shape_cast %15 : vector<16x16x128xbf16> to vector<256x128xbf16>
    %c0_15 = arith.constant 0 : index
    %c384 = arith.constant 384 : index
    %17 = vector.load %arg6[%c0_15, %c384] : memref<256x1152xbf16, #tpu.memory_space<vmem>>, vector<256x128xbf16>
    tpu.vector_store %arg6[%c0_15, %c384], %16 {strides = array<i32>} : memref<256x1152xbf16, #tpu.memory_space<vmem>>, vector<256x128xbf16>,
    %18 = vector.extract_strided_slice %11 {offsets = [2, 0, 0], sizes = [16, 16, 128], strides = [1, 1, 1]} : vector<18x16x128xbf16> to vector<16x16x128xbf16>
    %19 = vector.shape_cast %18 : vector<16x16x128xbf16> to vector<256x128xbf16>
    %c0_16 = arith.constant 0 : index
    %c768 = arith.constant 768 : index
    %20 = vector.load %arg6[%c0_16, %c768] : memref<256x1152xbf16, #tpu.memory_space<vmem>>, vector<256x128xbf16>
    tpu.vector_store %arg6[%c0_16, %c768], %19 {strides = array<i32>} : memref<256x1152xbf16, #tpu.memory_space<vmem>>, vector<256x128xbf16>,
    %c0_17 = arith.constant 0 : index
    %c1_18 = arith.constant 1 : index
    %c0_19 = arith.constant 0 : index
    %21 = vector.load %arg5[%c0_17, %c1_18, %c0_19] : memref<18x18x128xbf16, #tpu.memory_space<vmem>>, vector<18x16x128xbf16>
    %22 = vector.extract_strided_slice %21 {offsets = [0, 0, 0], sizes = [16, 16, 128], strides = [1, 1, 1]} : vector<18x16x128xbf16> to vector<16x16x128xbf16>
    %23 = vector.shape_cast %22 : vector<16x16x128xbf16> to vector<256x128xbf16>
    %c0_20 = arith.constant 0 : index
    %c128 = arith.constant 128 : index
    %24 = vector.load %arg6[%c0_20, %c128] : memref<256x1152xbf16, #tpu.memory_space<vmem>>, vector<256x128xbf16>
    tpu.vector_store %arg6[%c0_20, %c128], %23 {strides = array<i32>} : memref<256x1152xbf16, #tpu.memory_space<vmem>>, vector<256x128xbf16>,
    %25 = vector.extract_strided_slice %21 {offsets = [1, 0, 0], sizes = [16, 16, 128], strides = [1, 1, 1]} : vector<18x16x128xbf16> to vector<16x16x128xbf16>
    %26 = vector.shape_cast %25 : vector<16x16x128xbf16> to vector<256x128xbf16>
    %c0_21 = arith.constant 0 : index
    %c512 = arith.constant 512 : index
    %27 = vector.load %arg6[%c0_21, %c512] : memref<256x1152xbf16, #tpu.memory_space<vmem>>, vector<256x128xbf16>
    tpu.vector_store %arg6[%c0_21, %c512], %26 {strides = array<i32>} : memref<256x1152xbf16, #tpu.memory_space<vmem>>, vector<256x128xbf16>,
    %28 = vector.extract_strided_slice %21 {offsets = [2, 0, 0], sizes = [16, 16, 128], strides = [1, 1, 1]} : vector<18x16x128xbf16> to vector<16x16x128xbf16>
    %29 = vector.shape_cast %28 : vector<16x16x128xbf16> to vector<256x128xbf16>
    %c0_22 = arith.constant 0 : index
    %c896 = arith.constant 896 : index
    %30 = vector.load %arg6[%c0_22, %c896] : memref<256x1152xbf16, #tpu.memory_space<vmem>>, vector<256x128xbf16>
    tpu.vector_store %arg6[%c0_22, %c896], %29 {strides = array<i32>} : memref<256x1152xbf16, #tpu.memory_space<vmem>>, vector<256x128xbf16>,
    %c0_23 = arith.constant 0 : index
    %c2 = arith.constant 2 : index
    %c0_24 = arith.constant 0 : index
    %31 = vector.load %arg5[%c0_23, %c2, %c0_24] : memref<18x18x128xbf16, #tpu.memory_space<vmem>>, vector<18x16x128xbf16>
    %32 = vector.extract_strided_slice %31 {offsets = [0, 0, 0], sizes = [16, 16, 128], strides = [1, 1, 1]} : vector<18x16x128xbf16> to vector<16x16x128xbf16>
    %33 = vector.shape_cast %32 : vector<16x16x128xbf16> to vector<256x128xbf16>
    %c0_25 = arith.constant 0 : index
    %c256 = arith.constant 256 : index
    %34 = vector.load %arg6[%c0_25, %c256] : memref<256x1152xbf16, #tpu.memory_space<vmem>>, vector<256x128xbf16>
    tpu.vector_store %arg6[%c0_25, %c256], %33 {strides = array<i32>} : memref<256x1152xbf16, #tpu.memory_space<vmem>>, vector<256x128xbf16>,
    %35 = vector.extract_strided_slice %31 {offsets = [1, 0, 0], sizes = [16, 16, 128], strides = [1, 1, 1]} : vector<18x16x128xbf16> to vector<16x16x128xbf16>
    %36 = vector.shape_cast %35 : vector<16x16x128xbf16> to vector<256x128xbf16>
    %c0_26 = arith.constant 0 : index
    %c640 = arith.constant 640 : index
    %37 = vector.load %arg6[%c0_26, %c640] : memref<256x1152xbf16, #tpu.memory_space<vmem>>, vector<256x128xbf16>
    tpu.vector_store %arg6[%c0_26, %c640], %36 {strides = array<i32>} : memref<256x1152xbf16, #tpu.memory_space<vmem>>, vector<256x128xbf16>,
    %38 = vector.extract_strided_slice %31 {offsets = [2, 0, 0], sizes = [16, 16, 128], strides = [1, 1, 1]} : vector<18x16x128xbf16> to vector<16x16x128xbf16>
    %39 = vector.shape_cast %38 : vector<16x16x128xbf16> to vector<256x128xbf16>
    %c0_27 = arith.constant 0 : index
    %c1024 = arith.constant 1024 : index
    %40 = vector.load %arg6[%c0_27, %c1024] : memref<256x1152xbf16, #tpu.memory_space<vmem>>, vector<256x128xbf16>
    tpu.vector_store %arg6[%c0_27, %c1024], %39 {strides = array<i32>} : memref<256x1152xbf16, #tpu.memory_space<vmem>>, vector<256x128xbf16>,
    %c0_28 = arith.constant 0 : index
    %c0_29 = arith.constant 0 : index
    %41 = vector.load %arg6[%c0_28, %c0_29] : memref<256x1152xbf16, #tpu.memory_space<vmem>>, vector<256x1152xbf16>
    %c0_30 = arith.constant 0 : index
    %c0_31 = arith.constant 0 : index
    %42 = vector.load %arg2[%c0_30, %c0_31] : memref<1152x128xbf16, #tpu.memory_space<vmem>>, vector<1152x128xbf16>
    %cst = arith.constant dense<0.000000e+00> : vector<256x128xf32>
    %43 = tpu.matmul %41, %42, %cst {dimension_numbers = #tpu.dot_dimension_numbers<[1], [0], [0], [1], [0, 0, 1, 1], [], []>} : vector<256x1152xbf16>, vector<1152x128xbf16>, vector<256x128xf32> -> vector<256x128xf32>
    %cst_32 = arith.constant dense<0.000000e+00> : vector<128xf32>
    %44 = vector.multi_reduction <add>, %43, %cst_32 [0] : vector<256x128xf32> to vector<128xf32>
    %45 = vector.shape_cast %44 : vector<128xf32> to vector<1x128xf32>
    %cst_33 = arith.constant 2.560000e+02 : f32
    %46 = vector.broadcast %cst_33 : f32 to vector<1x128xf32>
    %47 = arith.divf %45, %46 : vector<1x128xf32>
    %48 = arith.mulf %43, %43 : vector<256x128xf32>
    %cst_34 = arith.constant dense<0.000000e+00> : vector<128xf32>
    %49 = vector.multi_reduction <add>, %48, %cst_34 [0] : vector<256x128xf32> to vector<128xf32>
    %50 = vector.shape_cast %49 : vector<128xf32> to vector<1x128xf32>
    %cst_35 = arith.constant 2.560000e+02 : f32
    %51 = vector.broadcast %cst_35 : f32 to vector<1x128xf32>
    %52 = arith.divf %50, %51 : vector<1x128xf32>
    %53 = arith.mulf %47, %47 : vector<1x128xf32>
    %54 = arith.subf %52, %53 : vector<1x128xf32>
    %55 = vector.broadcast %47 : vector<1x128xf32> to vector<256x128xf32>
    %56 = arith.subf %43, %55 : vector<256x128xf32>
    %cst_36 = arith.constant 9.99999974E-6 : f32
    %57 = vector.broadcast %cst_36 : f32 to vector<1x128xf32>
    %58 = arith.addf %54, %57 : vector<1x128xf32>
    %59 = math.rsqrt %58 : vector<1x128xf32>
    %60 = vector.broadcast %59 : vector<1x128xf32> to vector<256x128xf32>
    %61 = arith.mulf %56, %60 : vector<256x128xf32>
    %cst_37 = arith.constant 0.000000e+00 : f32
    %62 = vector.broadcast %cst_37 : f32 to vector<256x128xf32>
    %63 = arith.maximumf %61, %62 : vector<256x128xf32>
    %64 = vector.shape_cast %63 : vector<256x128xf32> to vector<16x16x128xf32>
    %65 = arith.truncf %64 : vector<16x16x128xf32> to vector<16x16x128xbf16>
    %66 = vector.extract_strided_slice %65 {offsets = [0, 1, 0], sizes = [16, 1, 128], strides = [1, 1, 1]} : vector<16x16x128xbf16> to vector<16x1x128xbf16>
    %67 = vector.extract_strided_slice %65 {offsets = [0, 14, 0], sizes = [16, 1, 128], strides = [1, 1, 1]} : vector<16x16x128xbf16> to vector<16x1x128xbf16>
    %68 = tpu.concatenate %66, %65, %67 in 1 : vector<16x1x128xbf16>, vector<16x16x128xbf16>, vector<16x1x128xbf16> -> vector<16x18x128xbf16>
    %c1_38 = arith.constant 1 : index
    %c0_39 = arith.constant 0 : index
    %c0_40 = arith.constant 0 : index
    %69 = vector.load %arg5[%c1_38, %c0_39, %c0_40] : memref<18x18x128xbf16, #tpu.memory_space<vmem>>, vector<16x18x128xbf16>
    tpu.vector_store %arg5[%c1_38, %c0_39, %c0_40], %68 {strides = array<i32>} : memref<18x18x128xbf16, #tpu.memory_space<vmem>>, vector<16x18x128xbf16>,
    %70 = vector.extract_strided_slice %68 {offsets = [1, 0, 0], sizes = [1, 18, 128], strides = [1, 1, 1]} : vector<16x18x128xbf16> to vector<1x18x128xbf16>
    %c0_41 = arith.constant 0 : index
    %c0_42 = arith.constant 0 : index
    %c0_43 = arith.constant 0 : index
    %71 = vector.load %arg5[%c0_41, %c0_42, %c0_43] : memref<18x18x128xbf16, #tpu.memory_space<vmem>>, vector<1x18x128xbf16>
    tpu.vector_store %arg5[%c0_41, %c0_42, %c0_43], %70 {strides = array<i32>} : memref<18x18x128xbf16, #tpu.memory_space<vmem>>, vector<1x18x128xbf16>,
    %72 = vector.extract_strided_slice %68 {offsets = [14, 0, 0], sizes = [1, 18, 128], strides = [1, 1, 1]} : vector<16x18x128xbf16> to vector<1x18x128xbf16>
    %c17_44 = arith.constant 17 : index
    %c0_45 = arith.constant 0 : index
    %c0_46 = arith.constant 0 : index
    %73 = vector.load %arg5[%c17_44, %c0_45, %c0_46] : memref<18x18x128xbf16, #tpu.memory_space<vmem>>, vector<1x18x128xbf16>
    tpu.vector_store %arg5[%c17_44, %c0_45, %c0_46], %72 {strides = array<i32>} : memref<18x18x128xbf16, #tpu.memory_space<vmem>>, vector<1x18x128xbf16>,
    %c0_47 = arith.constant 0 : index
    %c0_48 = arith.constant 0 : index
    %c0_49 = arith.constant 0 : index
    %74 = vector.load %arg5[%c0_47, %c0_48, %c0_49] : memref<18x18x128xbf16, #tpu.memory_space<vmem>>, vector<18x16x128xbf16>
    %75 = vector.extract_strided_slice %74 {offsets = [0, 0, 0], sizes = [16, 16, 128], strides = [1, 1, 1]} : vector<18x16x128xbf16> to vector<16x16x128xbf16>
    %76 = vector.shape_cast %75 : vector<16x16x128xbf16> to vector<256x128xbf16>
    %c0_50 = arith.constant 0 : index
    %c0_51 = arith.constant 0 : index
    %77 = vector.load %arg6[%c0_50, %c0_51] : memref<256x1152xbf16, #tpu.memory_space<vmem>>, vector<256x128xbf16>
    tpu.vector_store %arg6[%c0_50, %c0_51], %76 {strides = array<i32>} : memref<256x1152xbf16, #tpu.memory_space<vmem>>, vector<256x128xbf16>,
    %78 = vector.extract_strided_slice %74 {offsets = [1, 0, 0], sizes = [16, 16, 128], strides = [1, 1, 1]} : vector<18x16x128xbf16> to vector<16x16x128xbf16>
    %79 = vector.shape_cast %78 : vector<16x16x128xbf16> to vector<256x128xbf16>
    %c0_52 = arith.constant 0 : index
    %c384_53 = arith.constant 384 : index
    %80 = vector.load %arg6[%c0_52, %c384_53] : memref<256x1152xbf16, #tpu.memory_space<vmem>>, vector<256x128xbf16>
    tpu.vector_store %arg6[%c0_52, %c384_53], %79 {strides = array<i32>} : memref<256x1152xbf16, #tpu.memory_space<vmem>>, vector<256x128xbf16>,
    %81 = vector.extract_strided_slice %74 {offsets = [2, 0, 0], sizes = [16, 16, 128], strides = [1, 1, 1]} : vector<18x16x128xbf16> to vector<16x16x128xbf16>
    %82 = vector.shape_cast %81 : vector<16x16x128xbf16> to vector<256x128xbf16>
    %c0_54 = arith.constant 0 : index
    %c768_55 = arith.constant 768 : index
    %83 = vector.load %arg6[%c0_54, %c768_55] : memref<256x1152xbf16, #tpu.memory_space<vmem>>, vector<256x128xbf16>
    tpu.vector_store %arg6[%c0_54, %c768_55], %82 {strides = array<i32>} : memref<256x1152xbf16, #tpu.memory_space<vmem>>, vector<256x128xbf16>,
    %c0_56 = arith.constant 0 : index
    %c1_57 = arith.constant 1 : index
    %c0_58 = arith.constant 0 : index
    %84 = vector.load %arg5[%c0_56, %c1_57, %c0_58] : memref<18x18x128xbf16, #tpu.memory_space<vmem>>, vector<18x16x128xbf16>
    %85 = vector.extract_strided_slice %84 {offsets = [0, 0, 0], sizes = [16, 16, 128], strides = [1, 1, 1]} : vector<18x16x128xbf16> to vector<16x16x128xbf16>
    %86 = vector.shape_cast %85 : vector<16x16x128xbf16> to vector<256x128xbf16>
    %c0_59 = arith.constant 0 : index
    %c128_60 = arith.constant 128 : index
    %87 = vector.load %arg6[%c0_59, %c128_60] : memref<256x1152xbf16, #tpu.memory_space<vmem>>, vector<256x128xbf16>
    tpu.vector_store %arg6[%c0_59, %c128_60], %86 {strides = array<i32>} : memref<256x1152xbf16, #tpu.memory_space<vmem>>, vector<256x128xbf16>,
    %88 = vector.extract_strided_slice %84 {offsets = [1, 0, 0], sizes = [16, 16, 128], strides = [1, 1, 1]} : vector<18x16x128xbf16> to vector<16x16x128xbf16>
    %89 = vector.shape_cast %88 : vector<16x16x128xbf16> to vector<256x128xbf16>
    %c0_61 = arith.constant 0 : index
    %c512_62 = arith.constant 512 : index
    %90 = vector.load %arg6[%c0_61, %c512_62] : memref<256x1152xbf16, #tpu.memory_space<vmem>>, vector<256x128xbf16>
    tpu.vector_store %arg6[%c0_61, %c512_62], %89 {strides = array<i32>} : memref<256x1152xbf16, #tpu.memory_space<vmem>>, vector<256x128xbf16>,
    %91 = vector.extract_strided_slice %84 {offsets = [2, 0, 0], sizes = [16, 16, 128], strides = [1, 1, 1]} : vector<18x16x128xbf16> to vector<16x16x128xbf16>
    %92 = vector.shape_cast %91 : vector<16x16x128xbf16> to vector<256x128xbf16>
    %c0_63 = arith.constant 0 : index
    %c896_64 = arith.constant 896 : index
    %93 = vector.load %arg6[%c0_63, %c896_64] : memref<256x1152xbf16, #tpu.memory_space<vmem>>, vector<256x128xbf16>
    tpu.vector_store %arg6[%c0_63, %c896_64], %92 {strides = array<i32>} : memref<256x1152xbf16, #tpu.memory_space<vmem>>, vector<256x128xbf16>,
    %c0_65 = arith.constant 0 : index
    %c2_66 = arith.constant 2 : index
    %c0_67 = arith.constant 0 : index
    %94 = vector.load %arg5[%c0_65, %c2_66, %c0_67] : memref<18x18x128xbf16, #tpu.memory_space<vmem>>, vector<18x16x128xbf16>
    %95 = vector.extract_strided_slice %94 {offsets = [0, 0, 0], sizes = [16, 16, 128], strides = [1, 1, 1]} : vector<18x16x128xbf16> to vector<16x16x128xbf16>
    %96 = vector.shape_cast %95 : vector<16x16x128xbf16> to vector<256x128xbf16>
    %c0_68 = arith.constant 0 : index
    %c256_69 = arith.constant 256 : index
    %97 = vector.load %arg6[%c0_68, %c256_69] : memref<256x1152xbf16, #tpu.memory_space<vmem>>, vector<256x128xbf16>
    tpu.vector_store %arg6[%c0_68, %c256_69], %96 {strides = array<i32>} : memref<256x1152xbf16, #tpu.memory_space<vmem>>, vector<256x128xbf16>,
    %98 = vector.extract_strided_slice %94 {offsets = [1, 0, 0], sizes = [16, 16, 128], strides = [1, 1, 1]} : vector<18x16x128xbf16> to vector<16x16x128xbf16>
    %99 = vector.shape_cast %98 : vector<16x16x128xbf16> to vector<256x128xbf16>
    %c0_70 = arith.constant 0 : index
    %c640_71 = arith.constant 640 : index
    %100 = vector.load %arg6[%c0_70, %c640_71] : memref<256x1152xbf16, #tpu.memory_space<vmem>>, vector<256x128xbf16>
    tpu.vector_store %arg6[%c0_70, %c640_71], %99 {strides = array<i32>} : memref<256x1152xbf16, #tpu.memory_space<vmem>>, vector<256x128xbf16>,
    %101 = vector.extract_strided_slice %94 {offsets = [2, 0, 0], sizes = [16, 16, 128], strides = [1, 1, 1]} : vector<18x16x128xbf16> to vector<16x16x128xbf16>
    %102 = vector.shape_cast %101 : vector<16x16x128xbf16> to vector<256x128xbf16>
    %c0_72 = arith.constant 0 : index
    %c1024_73 = arith.constant 1024 : index
    %103 = vector.load %arg6[%c0_72, %c1024_73] : memref<256x1152xbf16, #tpu.memory_space<vmem>>, vector<256x128xbf16>
    tpu.vector_store %arg6[%c0_72, %c1024_73], %102 {strides = array<i32>} : memref<256x1152xbf16, #tpu.memory_space<vmem>>, vector<256x128xbf16>,
    %c0_74 = arith.constant 0 : index
    %c0_75 = arith.constant 0 : index
    %104 = vector.load %arg6[%c0_74, %c0_75] : memref<256x1152xbf16, #tpu.memory_space<vmem>>, vector<256x1152xbf16>
    %c0_76 = arith.constant 0 : index
    %c0_77 = arith.constant 0 : index
    %105 = vector.load %arg3[%c0_76, %c0_77] : memref<1152x128xbf16, #tpu.memory_space<vmem>>, vector<1152x128xbf16>
    %cst_78 = arith.constant dense<0.000000e+00> : vector<256x128xf32>
    %106 = tpu.matmul %104, %105, %cst_78 {dimension_numbers = #tpu.dot_dimension_numbers<[1], [0], [0], [1], [0, 0, 1, 1], [], []>} : vector<256x1152xbf16>, vector<1152x128xbf16>, vector<256x128xf32> -> vector<256x128xf32>
    %cst_79 = arith.constant dense<0.000000e+00> : vector<128xf32>
    %107 = vector.multi_reduction <add>, %106, %cst_79 [0] : vector<256x128xf32> to vector<128xf32>
    %108 = vector.shape_cast %107 : vector<128xf32> to vector<1x128xf32>
    %cst_80 = arith.constant 2.560000e+02 : f32
    %109 = vector.broadcast %cst_80 : f32 to vector<1x128xf32>
    %110 = arith.divf %108, %109 : vector<1x128xf32>
    %111 = arith.mulf %106, %106 : vector<256x128xf32>
    %cst_81 = arith.constant dense<0.000000e+00> : vector<128xf32>
    %112 = vector.multi_reduction <add>, %111, %cst_81 [0] : vector<256x128xf32> to vector<128xf32>
    %113 = vector.shape_cast %112 : vector<128xf32> to vector<1x128xf32>
    %cst_82 = arith.constant 2.560000e+02 : f32
    %114 = vector.broadcast %cst_82 : f32 to vector<1x128xf32>
    %115 = arith.divf %113, %114 : vector<1x128xf32>
    %116 = arith.mulf %110, %110 : vector<1x128xf32>
    %117 = arith.subf %115, %116 : vector<1x128xf32>
    %118 = vector.broadcast %110 : vector<1x128xf32> to vector<256x128xf32>
    %119 = arith.subf %106, %118 : vector<256x128xf32>
    %cst_83 = arith.constant 9.99999974E-6 : f32
    %120 = vector.broadcast %cst_83 : f32 to vector<1x128xf32>
    %121 = arith.addf %117, %120 : vector<1x128xf32>
    %122 = math.rsqrt %121 : vector<1x128xf32>
    %123 = vector.broadcast %122 : vector<1x128xf32> to vector<256x128xf32>
    %124 = arith.mulf %119, %123 : vector<256x128xf32>
    %c0_84 = arith.constant 0 : index
    %c0_85 = arith.constant 0 : index
    %c0_86 = arith.constant 0 : index
    %c0_87 = arith.constant 0 : index
    %125 = vector.load %arg1[%c0_84, %c0_85, %c0_86, %c0_87] : memref<1x16x16x128xf32, #tpu.memory_space<vmem>>, vector<1x16x16x128xf32>
    %126 = vector.shape_cast %125 : vector<1x16x16x128xf32> to vector<16x16x128xf32>
    %127 = vector.shape_cast %124 : vector<256x128xf32> to vector<16x16x128xf32>
    %128 = arith.addf %126, %127 : vector<16x16x128xf32>
    %c0_88 = arith.constant 0 : index
    %c0_89 = arith.constant 0 : index
    %c0_90 = arith.constant 0 : index
    %c0_91 = arith.constant 0 : index
    %129 = vector.load %arg4[%c0_88, %c0_89, %c0_90, %c0_91] : memref<1x16x16x128xf32, #tpu.memory_space<vmem>>, vector<1x16x16x128xf32>
    %130 = vector.shape_cast %129 : vector<1x16x16x128xf32> to vector<16x16x128xf32>
    %131 = vector.shape_cast %128 : vector<16x16x128xf32> to vector<1x16x16x128xf32>
    tpu.vector_store %arg4[%c0_88, %c0_89, %c0_90, %c0_91], %131 {strides = array<i32>} : memref<1x16x16x128xf32, #tpu.memory_space<vmem>>, vector<1x16x16x128xf32>,
    return
  }
  func.func @transform_0(%arg0: i32) -> (i32, i32, i32, i32) {
    %c0_i32 = arith.constant 0 : i32
    %c0_i32_0 = arith.constant 0 : i32
    %c0_i32_1 = arith.constant 0 : i32
    %c0_i32_2 = arith.constant 0 : i32
    return %arg0, %c0_i32, %c0_i32_0, %c0_i32_1 : i32, i32, i32, i32
  }
  func.func @transform_1(%arg0: i32) -> (i32, i32) {
    %c0_i32 = arith.constant 0 : i32
    %c0_i32_0 = arith.constant 0 : i32
    %c0_i32_1 = arith.constant 0 : i32
    return %c0_i32, %c0_i32_0 : i32, i32
  }
  func.func @transform_2(%arg0: i32) -> (i32, i32) {
    %c0_i32 = arith.constant 0 : i32
    %c0_i32_0 = arith.constant 0 : i32
    %c0_i32_1 = arith.constant 0 : i32
    return %c0_i32, %c0_i32_0 : i32, i32
  }
  func.func @transform_3(%arg0: i32) -> (i32, i32, i32, i32) {
    %c0_i32 = arith.constant 0 : i32
    %c0_i32_0 = arith.constant 0 : i32
    %c0_i32_1 = arith.constant 0 : i32
    %c0_i32_2 = arith.constant 0 : i32
    return %arg0, %c0_i32, %c0_i32_0, %c0_i32_1 : i32, i32, i32, i32
  }
}

</mosaic_0001>

<llo_original>
// kernel: resnet_block_forward.1
$region0: #{resnet_block_forward.1}
  #allocation0 [shape = 'u32[]', space=smem, size = 0x4, offset = 0x4, fixed_abs, tag = 'smem constant byte address 0x4 - core index']
  #allocation1 [shape = 'u32[144,128]{1,0:T(1,128)}', space=vmem, size = 0x12000, scoped, tag = 'internal scratch']
  #allocation2 [shape = 'bf16[18,18,128]{2,1,0:T(8,128)(2,1)}', space=vmem, size = 0x1b000, scoped, tag = 'scratch operand']
  #allocation3 [shape = 'bf16[256,1152]{1,0:T(16,128)(2,1)}', space=vmem, size = 0x90000, scoped, tag = 'scratch operand']
  %s0 = inlined_call_operand.vmem [shape: f32[2,16,16,128], index: 0, kind: input, shape index: {}]
  %s1 = inlined_call_operand.vmem [shape: bf16[1152,128], index: 1, kind: input, shape index: {}]
  %s2 = inlined_call_operand.vmem [shape: bf16[1152,128], index: 2, kind: input, shape index: {}]
  %s3 = inlined_call_operand.hbm [shape: f32[2,16,16,128], index: 3, kind: output, shape index: {}]
  %s4 = sld [smem:[#allocation0]]
  $region45: #{resnet_block_forward.1} parent=0
    _
  %s6 = ssub.s32 1, %s4
  %s7 = scalar_select 0, %s6, %s4
  $region1: #{resnet_block_forward.1} parent=0
    #allocation4 [shape = 'u8[262144]{0}', space=vmem, size = 0x40000, scoped, tag = 'output window, operand 0']
    #allocation5 [shape = 's32[2]{0}', space=sflag, size = 0x8, scoped, tag = 'scoped memory for resnet_block_forward.1']
    %8 = vsyncpa [#allocation5], 0
    %s9 = scalar_lea.sflag [#allocation5], 1
    %10 = vsyncpa %s9, 0
    loop: start=0, step=1, limit=4
    $region2: #{resnet_block_forward.1} parent=1 // loop_pre_header
      _
    $region3: #{resnet_block_forward.1} parent=1 // loop_header
      %s12 = sphi 0, %s16
      %p13 = scmp.ge.s32.totalorder %s12, 4
      %s22 = sphi 0, %s24
      %s25 = sphi 0, %s22
      %s26 = sphi 0, %s25
      %s42 = sphi 0, %s26
      %s46 = sphi 0, %s46
      %s48 = sphi 0, %s46
      %s49 = sphi 0, %s48
      %s63 = sphi 0, %s49
      %s67 = sphi 0, %s67
      %s69 = sphi 0, %s67
      %s70 = sphi 0, %s69
      %s84 = sphi 0, %s70
      %s90 = sphi 0, %s92
      %s93 = sphi 0, %s90
      %s94 = sphi 0, %s93
      %s110 = sphi 0, %s94
    $region4: #{resnet_block_forward.1} parent=1 // loop_header_branch
      %15 = sbr.rel (%p13) target = $region8
    $region5: #{resnet_block_forward.1} parent=1 // loop_body
      %s17 = ssub.s32 %s12, 1
      %s18 = ssub.s32 %s12, 2
      %s19 = sadd.s32 %s12, 1
      %s20 = ssub.s32 %s12, %s19
      %p21 = scmp.eq.s32.totalorder %s20, 0
      %s23 = sadd.s32 %s22, 1
      %s24 = scalar_select %p21, %s22, %s23
      %p27 = pneg %p21
      %p28 = scmp.eq.s32.totalorder %s12, 1
      %p29 = por %p27, %p28
      %p30 = scmp.ne.s32.totalorder %s22, %s25
      %p31 = scmp.eq.s32.totalorder %s12, 0
      %p32 = por %p30, %p31
      %p33 = scmp.ne.s32.totalorder %s22, %s25
      %p34 = scmp.eq.s32.totalorder %s17, 1
      %p35 = por %p33, %p34
      %p36 = scmp.ne.s32.totalorder %s25, %s26
      %p37 = scmp.eq.s32.totalorder %s17, 0
      %p38 = por %p36, %p37
      %p39 = scmp.ne.s32.totalorder %s25, %s26
      %p40 = scmp.eq.s32.totalorder %s18, 1
      %p41 = por %p39, %p40
      %p43 = scmp.ne.s32.totalorder %s26, %s42
      %p44 = scmp.eq.s32.totalorder %s18, 0
      %p45 = por %p43, %p44
      %s47 = sadd.s32 %s46, 1
      %p50 = scmp.eq.s32.totalorder %s12, 1
      %p51 = scmp.ne.s32.totalorder %s46, %s48
      %p52 = scmp.eq.s32.totalorder %s12, 0
      %p53 = por %p51, %p52
      %p54 = scmp.ne.s32.totalorder %s46, %s48
      %p55 = scmp.eq.s32.totalorder %s17, 1
      %p56 = por %p54, %p55
      %p57 = scmp.ne.s32.totalorder %s48, %s49
      %p58 = scmp.eq.s32.totalorder %s17, 0
      %p59 = por %p57, %p58
      %p60 = scmp.ne.s32.totalorder %s48, %s49
      %p61 = scmp.eq.s32.totalorder %s18, 1
      %p62 = por %p60, %p61
      %p64 = scmp.ne.s32.totalorder %s49, %s63
      %p65 = scmp.eq.s32.totalorder %s18, 0
      %p66 = por %p64, %p65
      %s68 = sadd.s32 %s67, 1
      %p71 = scmp.eq.s32.totalorder %s12, 1
      %p72 = scmp.ne.s32.totalorder %s67, %s69
      %p73 = scmp.eq.s32.totalorder %s12, 0
      %p74 = por %p72, %p73
      %p75 = scmp.ne.s32.totalorder %s67, %s69
      %p76 = scmp.eq.s32.totalorder %s17, 1
      %p77 = por %p75, %p76
      %p78 = scmp.ne.s32.totalorder %s69, %s70
      %p79 = scmp.eq.s32.totalorder %s17, 0
      %p80 = por %p78, %p79
      %p81 = scmp.ne.s32.totalorder %s69, %s70
      %p82 = scmp.eq.s32.totalorder %s18, 1
      %p83 = por %p81, %p82
      %p85 = scmp.ne.s32.totalorder %s70, %s84
      %p86 = scmp.eq.s32.totalorder %s18, 0
      %p87 = por %p85, %p86
      %s88 = ssub.s32 %s12, %s19
      %p89 = scmp.eq.s32.totalorder %s88, 0
      %s91 = sadd.s32 %s90, 1
      %s92 = scalar_select %p89, %s90, %s91
      %p95 = pneg %p89
      %p96 = scmp.eq.s32.totalorder %s12, 1
      %p97 = por %p95, %p96
      %p98 = scmp.ne.s32.totalorder %s90, %s93
      %p99 = scmp.eq.s32.totalorder %s12, 0
      %p100 = por %p98, %p99
      %p101 = scmp.ne.s32.totalorder %s90, %s93
      %p102 = scmp.eq.s32.totalorder %s17, 1
      %p103 = por %p101, %p102
      %p104 = scmp.ne.s32.totalorder %s93, %s94
      %p105 = scmp.eq.s32.totalorder %s17, 0
      %p106 = por %p104, %p105
      %p107 = scmp.ne.s32.totalorder %s93, %s94
      %p108 = scmp.eq.s32.totalorder %s18, 1
      %p109 = por %p107, %p108
      %p111 = scmp.ne.s32.totalorder %s94, %s110
      %p112 = scmp.eq.s32.totalorder %s18, 0
      %p113 = por %p111, %p112
      %p114 = scmp.le.s32.totalorder 1, %s12
      %p115 = scmp.lt.s32.totalorder %s12, 3
      %p116 = pnand %p114, %p115
      %p117 = pneg %p116
      // Predicated region
      $region9: #{resnet_block_forward.1} parent=5 // pred_check
        _
      $region10: #{resnet_block_forward.1} parent=5 // pred_check_branch
        %119 = sbr.rel (%p116) target = $region12
      $region11: #{resnet_block_forward.1} parent=5 // pred_region
        %s120 = ssub.s32 %s12, 1
        // Predicated region
        $region13: #{resnet_block_forward.1} parent=11 // pred_check
          %p121 = pneg %p59
        $region14: #{resnet_block_forward.1} parent=11 // pred_check_branch
          %123 = sbr.rel (%p121) target = $region16
        $region15: #{resnet_block_forward.1} parent=11 // pred_region
          _
        $region16: #{resnet_block_forward.1} parent=11 // pred_fallthru
          _
        // Predicated region
        $region17: #{resnet_block_forward.1} parent=11 // pred_check
          %p124 = pneg %p80
        $region18: #{resnet_block_forward.1} parent=11 // pred_check_branch
          %126 = sbr.rel (%p124) target = $region20
        $region19: #{resnet_block_forward.1} parent=11 // pred_region
          _
        $region20: #{resnet_block_forward.1} parent=11 // pred_fallthru
          _
      $region12: #{resnet_block_forward.1} parent=5 // pred_fallthru
        _
      %p127 = scmp.lt.s32.totalorder %s12, 2
      // Predicated region
      $region21: #{resnet_block_forward.1} parent=5 // pred_check
        %p128 = pneg %p127
      $region22: #{resnet_block_forward.1} parent=5 // pred_check_branch
        %130 = sbr.rel (%p128) target = $region24
      $region23: #{resnet_block_forward.1} parent=5 // pred_region
        // Predicated region
        $region25: #{resnet_block_forward.1} parent=23 // pred_check
          %p131 = pneg %p32
        $region26: #{resnet_block_forward.1} parent=23 // pred_check_branch
          %133 = sbr.rel (%p131) target = $region28
        $region27: #{resnet_block_forward.1} parent=23 // pred_region
          %p134 = scmp.lt.s32.totalorder %s12, 1
          %s135 = scalar_select %p134, %s12, 1
          %s136 = smul.addr %s135, 32
          %s137 = smul.addr %s136, 8
          %s138 = scalar_lea.vmem %s0, %s137
        $region28: #{resnet_block_forward.1} parent=23 // pred_fallthru
          _
      $region24: #{resnet_block_forward.1} parent=5 // pred_fallthru
        _
      %p139 = scmp.le.s32.totalorder 1, %s12
      %p140 = scmp.lt.s32.totalorder %s12, 3
      %p141 = pnand %p139, %p140
      %p142 = pneg %p141
      // Predicated region
      $region29: #{resnet_block_forward.1} parent=5 // pred_check
        _
      $region30: #{resnet_block_forward.1} parent=5 // pred_check_branch
        %144 = sbr.rel (%p141) target = $region32
      $region31: #{resnet_block_forward.1} parent=5 // pred_region
        %s145 = ssub.s32 %s12, 1
        %p146 = scmp.lt.s32.totalorder %s17, 1
        %s147 = scalar_select %p146, %s17, 1
        %s148 = smul.addr %s147, 32
        %s149 = smul.addr %s148, 8
        %s150 = scalar_lea.vmem %s0, %s149
        %p151 = pneg %p38
        %p152 = pneg %p35
        %p153 = pneg %p59
        %p154 = pneg %p56
        %p155 = pneg %p80
        %p156 = pneg %p77
        %p157 = pneg %p106
        %p158 = pneg %p103
        %s159 = sand.u32 %s93, 1
        %s160 = scalar_lea.sflag [#allocation5], %s159
        %s161 = sand.u32 %s93, 1
        %s162 = smul.addr %s161, 256
        %s163 = scalar_lea.vmem [#allocation4], %s162
        %p164 = scmp.lt.s32.totalorder %s17, 1
        %s165 = scalar_select %p164, %s17, 1
        %s166 = smul.addr %s165, 32
        %s167 = smul.addr %s166, 8
        %s168 = scalar_lea.vmem %s0, %s167
        %v170 = vld [vmem:[%s168] sm:$0xff]
        %v171 = vld [vmem:[%s168 + $0x8] sm:$0xff]
        %v172 = vld [vmem:[%s168 + $0x10] sm:$0xff]
        %v173 = vld [vmem:[%s168 + $0x18] sm:$0xff]
        %v174 = vld [vmem:[%s168 + $0x20] sm:$0xff]
        %v175 = vld [vmem:[%s168 + $0x28] sm:$0xff]
        %v176 = vld [vmem:[%s168 + $0x30] sm:$0xff]
        %v177 = vld [vmem:[%s168 + $0x38] sm:$0xff]
        %v178 = vld [vmem:[%s168 + $0x40] sm:$0xff]
        %v179 = vld [vmem:[%s168 + $0x48] sm:$0xff]
        %v180 = vld [vmem:[%s168 + $0x50] sm:$0xff]
        %v181 = vld [vmem:[%s168 + $0x58] sm:$0xff]
        %v182 = vld [vmem:[%s168 + $0x60] sm:$0xff]
        %v183 = vld [vmem:[%s168 + $0x68] sm:$0xff]
        %v184 = vld [vmem:[%s168 + $0x70] sm:$0xff]
        %v185 = vld [vmem:[%s168 + $0x78] sm:$0xff]
        %v186 = vld [vmem:[%s168 + $0x80] sm:$0xff]
        %v187 = vld [vmem:[%s168 + $0x88] sm:$0xff]
        %v188 = vld [vmem:[%s168 + $0x90] sm:$0xff]
        %v189 = vld [vmem:[%s168 + $0x98] sm:$0xff]
        %v190 = vld [vmem:[%s168 + $0xa0] sm:$0xff]
        %v191 = vld [vmem:[%s168 + $0xa8] sm:$0xff]
        %v192 = vld [vmem:[%s168 + $0xb0] sm:$0xff]
        %v193 = vld [vmem:[%s168 + $0xb8] sm:$0xff]
        %v194 = vld [vmem:[%s168 + $0xc0] sm:$0xff]
        %v195 = vld [vmem:[%s168 + $0xc8] sm:$0xff]
        %v196 = vld [vmem:[%s168 + $0xd0] sm:$0xff]
        %v197 = vld [vmem:[%s168 + $0xd8] sm:$0xff]
        %v198 = vld [vmem:[%s168 + $0xe0] sm:$0xff]
        %v199 = vld [vmem:[%s168 + $0xe8] sm:$0xff]
        %v200 = vld [vmem:[%s168 + $0xf0] sm:$0xff]
        %v201 = vld [vmem:[%s168 + $0xf8] sm:$0xff]
        %v202 = vpack.c.bf16 %v171, %v170
        %v203 = vpack.c.bf16 %v173, %v172
        %v204 = vpack.c.bf16 %v175, %v174
        %v205 = vpack.c.bf16 %v177, %v176
        %v206 = vpack.c.bf16 %v179, %v178
        %v207 = vpack.c.bf16 %v181, %v180
        %v208 = vpack.c.bf16 %v183, %v182
        %v209 = vpack.c.bf16 %v185, %v184
        %v210 = vpack.c.bf16 %v187, %v186
        %v211 = vpack.c.bf16 %v189, %v188
        %v212 = vpack.c.bf16 %v191, %v190
        %v213 = vpack.c.bf16 %v193, %v192
        %v214 = vpack.c.bf16 %v195, %v194
        %v215 = vpack.c.bf16 %v197, %v196
        %v216 = vpack.c.bf16 %v199, %v198
        %v217 = vpack.c.bf16 %v201, %v200
        %v219 = vshrl.u32 %v202, 16
        %v222 = vshrl.u32 %v203, 16
        %v225 = vshrl.u32 %v204, 16
        %v228 = vshrl.u32 %v205, 16
        %v231 = vshrl.u32 %v206, 16
        %v234 = vshrl.u32 %v207, 16
        %v237 = vshrl.u32 %v208, 16
        %v240 = vshrl.u32 %v209, 16
        %v243 = vshrl.u32 %v210, 16
        %v246 = vshrl.u32 %v211, 16
        %v249 = vshrl.u32 %v212, 16
        %v252 = vshrl.u32 %v213, 16
        %v255 = vshrl.u32 %v214, 16
        %v258 = vshrl.u32 %v215, 16
        %v261 = vshrl.u32 %v216, 16
        %v264 = vshrl.u32 %v217, 16
        %v282 = vrot.slane %v219, 7
        %v283 = vshll.u32 %v202, 16
        %v285 = vor.u32 %v282, %v283
        %v286 = vrot.slane %v222, 7
        %v287 = vshll.u32 %v203, 16
        %v289 = vor.u32 %v286, %v287
        %v290 = vrot.slane %v225, 7
        %v291 = vshll.u32 %v204, 16
        %v293 = vor.u32 %v290, %v291
        %v294 = vrot.slane %v228, 7
        %v295 = vshll.u32 %v205, 16
        %v297 = vor.u32 %v294, %v295
        %v298 = vrot.slane %v231, 7
        %v299 = vshll.u32 %v206, 16
        %v301 = vor.u32 %v298, %v299
        %v302 = vrot.slane %v234, 7
        %v303 = vshll.u32 %v207, 16
        %v305 = vor.u32 %v302, %v303
        %v306 = vrot.slane %v237, 7
        %v307 = vshll.u32 %v208, 16
        %v309 = vor.u32 %v306, %v307
        %v310 = vrot.slane %v240, 7
        %v311 = vshll.u32 %v209, 16
        %v313 = vor.u32 %v310, %v311
        %v314 = vrot.slane %v243, 7
        %v315 = vshll.u32 %v210, 16
        %v317 = vor.u32 %v314, %v315
        %v318 = vrot.slane %v246, 7
        %v319 = vshll.u32 %v211, 16
        %v321 = vor.u32 %v318, %v319
        %v322 = vrot.slane %v249, 7
        %v323 = vshll.u32 %v212, 16
        %v325 = vor.u32 %v322, %v323
        %v326 = vrot.slane %v252, 7
        %v327 = vshll.u32 %v213, 16
        %v329 = vor.u32 %v326, %v327
        %v330 = vrot.slane %v255, 7
        %v331 = vshll.u32 %v214, 16
        %v333 = vor.u32 %v330, %v331
        %v334 = vrot.slane %v258, 7
        %v335 = vshll.u32 %v215, 16
        %v337 = vor.u32 %v334, %v335
        %v338 = vrot.slane %v261, 7
        %v339 = vshll.u32 %v216, 16
        %v341 = vor.u32 %v338, %v339
        %v342 = vrot.slane %v264, 7
        %v343 = vshll.u32 %v217, 16
        %v345 = vor.u32 %v342, %v343
        %v378 = vrot.slane %v283, 7
        %v379 = vrot.slane %v287, 7
        %v380 = vrot.slane %v291, 7
        %v381 = vrot.slane %v295, 7
        %v382 = vrot.slane %v299, 7
        %v383 = vrot.slane %v303, 7
        %v384 = vrot.slane %v307, 7
        %v385 = vrot.slane %v311, 7
        %v386 = vrot.slane %v315, 7
        %v387 = vrot.slane %v319, 7
        %v388 = vrot.slane %v323, 7
        %v389 = vrot.slane %v327, 7
        %v390 = vrot.slane %v331, 7
        %v391 = vrot.slane %v335, 7
        %v392 = vrot.slane %v339, 7
        %v393 = vrot.slane %v343, 7
        %vm410 = vcmask 1040384
        %vm411 = vsmask.f32 256
        %vm412 = vmand %vm410, %vm411
        %v413 = vsel %vm412, %v219, %v285
        %v414 = vsel %vm412, %v222, %v289
        %v415 = vsel %vm412, %v225, %v293
        %v416 = vsel %vm412, %v228, %v297
        %v417 = vsel %vm412, %v231, %v301
        %v418 = vsel %vm412, %v234, %v305
        %v419 = vsel %vm412, %v237, %v309
        %v420 = vsel %vm412, %v240, %v313
        %v421 = vsel %vm412, %v243, %v317
        %v422 = vsel %vm412, %v246, %v321
        %v423 = vsel %vm412, %v249, %v325
        %v424 = vsel %vm412, %v252, %v329
        %v425 = vsel %vm412, %v255, %v333
        %v426 = vsel %vm412, %v258, %v337
        %v427 = vsel %vm412, %v261, %v341
        %v428 = vsel %vm412, %v264, %v345
        %v429 = vsel %vm412, %v282, %v378
        %v430 = vsel %vm412, %v286, %v379
        %v431 = vsel %vm412, %v290, %v380
        %v432 = vsel %vm412, %v294, %v381
        %v433 = vsel %vm412, %v298, %v382
        %v434 = vsel %vm412, %v302, %v383
        %v435 = vsel %vm412, %v306, %v384
        %v436 = vsel %vm412, %v310, %v385
        %v437 = vsel %vm412, %v314, %v386
        %v438 = vsel %vm412, %v318, %v387
        %v439 = vsel %vm412, %v322, %v388
        %v440 = vsel %vm412, %v326, %v389
        %v441 = vsel %vm412, %v330, %v390
        %v442 = vsel %vm412, %v334, %v391
        %v443 = vsel %vm412, %v338, %v392
        %v444 = vsel %vm412, %v342, %v393
        %v477 = vunpack.c.l.b16 %v413
        %v478 = vunpack.c.h.b16 %v413
        %v479 = vunpack.c.l.b16 %v429
        %v480 = vunpack.c.l.b16 %v414
        %v481 = vunpack.c.h.b16 %v414
        %v482 = vunpack.c.l.b16 %v430
        %v483 = vunpack.c.l.b16 %v415
        %v484 = vunpack.c.h.b16 %v415
        %v485 = vunpack.c.l.b16 %v431
        %v486 = vunpack.c.l.b16 %v416
        %v487 = vunpack.c.h.b16 %v416
        %v488 = vunpack.c.l.b16 %v432
        %v489 = vunpack.c.l.b16 %v417
        %v490 = vunpack.c.h.b16 %v417
        %v491 = vunpack.c.l.b16 %v433
        %v492 = vunpack.c.l.b16 %v418
        %v493 = vunpack.c.h.b16 %v418
        %v494 = vunpack.c.l.b16 %v434
        %v495 = vunpack.c.l.b16 %v419
        %v496 = vunpack.c.h.b16 %v419
        %v497 = vunpack.c.l.b16 %v435
        %v498 = vunpack.c.l.b16 %v420
        %v499 = vunpack.c.h.b16 %v420
        %v500 = vunpack.c.l.b16 %v436
        %v501 = vunpack.c.l.b16 %v421
        %v502 = vunpack.c.h.b16 %v421
        %v503 = vunpack.c.l.b16 %v437
        %v504 = vunpack.c.l.b16 %v422
        %v505 = vunpack.c.h.b16 %v422
        %v506 = vunpack.c.l.b16 %v438
        %v507 = vunpack.c.l.b16 %v423
        %v508 = vunpack.c.h.b16 %v423
        %v509 = vunpack.c.l.b16 %v439
        %v510 = vunpack.c.l.b16 %v424
        %v511 = vunpack.c.h.b16 %v424
        %v512 = vunpack.c.l.b16 %v440
        %v513 = vunpack.c.l.b16 %v425
        %v514 = vunpack.c.h.b16 %v425
        %v515 = vunpack.c.l.b16 %v441
        %v516 = vunpack.c.l.b16 %v426
        %v517 = vunpack.c.h.b16 %v426
        %v518 = vunpack.c.l.b16 %v442
        %v519 = vunpack.c.l.b16 %v427
        %v520 = vunpack.c.h.b16 %v427
        %v521 = vunpack.c.l.b16 %v443
        %v522 = vunpack.c.l.b16 %v428
        %v523 = vunpack.c.h.b16 %v428
        %v524 = vunpack.c.l.b16 %v444
        %v525 = vpack.c.b16 %v477, %v477
        %v526 = vpack.c.b16 %v478, %v478
        %v527 = vpack.c.b16 %v479, %v479
        %v528 = vpack.c.b16 %v480, %v480
        %v529 = vpack.c.b16 %v481, %v481
        %v530 = vpack.c.b16 %v482, %v482
        %v531 = vpack.c.b16 %v483, %v483
        %v532 = vpack.c.b16 %v484, %v484
        %v533 = vpack.c.b16 %v485, %v485
        %v534 = vpack.c.b16 %v486, %v486
        %v535 = vpack.c.b16 %v487, %v487
        %v536 = vpack.c.b16 %v488, %v488
        %v537 = vpack.c.b16 %v489, %v489
        %v538 = vpack.c.b16 %v490, %v490
        %v539 = vpack.c.b16 %v491, %v491
        %v540 = vpack.c.b16 %v492, %v492
        %v541 = vpack.c.b16 %v493, %v493
        %v542 = vpack.c.b16 %v494, %v494
        %v543 = vpack.c.b16 %v495, %v495
        %v544 = vpack.c.b16 %v496, %v496
        %v545 = vpack.c.b16 %v497, %v497
        %v546 = vpack.c.b16 %v498, %v498
        %v547 = vpack.c.b16 %v499, %v499
        %v548 = vpack.c.b16 %v500, %v500
        %v549 = vpack.c.b16 %v501, %v501
        %v550 = vpack.c.b16 %v502, %v502
        %v551 = vpack.c.b16 %v503, %v503
        %v552 = vpack.c.b16 %v504, %v504
        %v553 = vpack.c.b16 %v505, %v505
        %v554 = vpack.c.b16 %v506, %v506
        %v555 = vpack.c.b16 %v507, %v507
        %v556 = vpack.c.b16 %v508, %v508
        %v557 = vpack.c.b16 %v509, %v509
        %v558 = vpack.c.b16 %v510, %v510
        %v559 = vpack.c.b16 %v511, %v511
        %v560 = vpack.c.b16 %v512, %v512
        %v561 = vpack.c.b16 %v513, %v513
        %v562 = vpack.c.b16 %v514, %v514
        %v563 = vpack.c.b16 %v515, %v515
        %v564 = vpack.c.b16 %v516, %v516
        %v565 = vpack.c.b16 %v517, %v517
        %v566 = vpack.c.b16 %v518, %v518
        %v567 = vpack.c.b16 %v519, %v519
        %v568 = vpack.c.b16 %v520, %v520
        %v569 = vpack.c.b16 %v521, %v521
        %v570 = vpack.c.b16 %v522, %v522
        %v571 = vpack.c.b16 %v523, %v523
        %v572 = vpack.c.b16 %v524, %v524
        %s621 = scalar_lea.vmem [#allocation2], 12
        %622 = vst [vmem:[%s621] sm:$0xf] %v525
        %623 = vst [vmem:[%s621 + $0x4] sm:$0xf] %v526
        %624 = vst [vmem:[%s621 + $0x8] sm:$0x1] %v527
        %625 = vst [vmem:[%s621 + $0xc] sm:$0xf] %v528
        %626 = vst [vmem:[%s621 + $0x10] sm:$0xf] %v529
        %627 = vst [vmem:[%s621 + $0x14] sm:$0x1] %v530
        %628 = vst [vmem:[%s621 + $0x18] sm:$0xf] %v531
        %629 = vst [vmem:[%s621 + $0x1c] sm:$0xf] %v532
        %630 = vst [vmem:[%s621 + $0x20] sm:$0x1] %v533
        %631 = vst [vmem:[%s621 + $0x24] sm:$0xf] %v534
        %632 = vst [vmem:[%s621 + $0x28] sm:$0xf] %v535
        %633 = vst [vmem:[%s621 + $0x2c] sm:$0x1] %v536
        %634 = vst [vmem:[%s621 + $0x30] sm:$0xf] %v537
        %635 = vst [vmem:[%s621 + $0x34] sm:$0xf] %v538
        %636 = vst [vmem:[%s621 + $0x38] sm:$0x1] %v539
        %637 = vst [vmem:[%s621 + $0x3c] sm:$0xf] %v540
        %638 = vst [vmem:[%s621 + $0x40] sm:$0xf] %v541
        %639 = vst [vmem:[%s621 + $0x44] sm:$0x1] %v542
        %640 = vst [vmem:[%s621 + $0x48] sm:$0xf] %v543
        %641 = vst [vmem:[%s621 + $0x4c] sm:$0xf] %v544
        %642 = vst [vmem:[%s621 + $0x50] sm:$0x1] %v545
        %643 = vst [vmem:[%s621 + $0x54] sm:$0xf] %v546
        %644 = vst [vmem:[%s621 + $0x58] sm:$0xf] %v547
        %645 = vst [vmem:[%s621 + $0x5c] sm:$0x1] %v548
        %646 = vst [vmem:[%s621 + $0x60] sm:$0xf] %v549
        %647 = vst [vmem:[%s621 + $0x64] sm:$0xf] %v550
        %648 = vst [vmem:[%s621 + $0x68] sm:$0x1] %v551
        %649 = vst [vmem:[%s621 + $0x6c] sm:$0xf] %v552
        %650 = vst [vmem:[%s621 + $0x70] sm:$0xf] %v553
        %651 = vst [vmem:[%s621 + $0x74] sm:$0x1] %v554
        %652 = vst [vmem:[%s621 + $0x78] sm:$0xf] %v555
        %653 = vst [vmem:[%s621 + $0x7c] sm:$0xf] %v556
        %654 = vst [vmem:[%s621 + $0x80] sm:$0x1] %v557
        %655 = vst [vmem:[%s621 + $0x84] sm:$0xf] %v558
        %656 = vst [vmem:[%s621 + $0x88] sm:$0xf] %v559
        %657 = vst [vmem:[%s621 + $0x8c] sm:$0x1] %v560
        %658 = vst [vmem:[%s621 + $0x90] sm:$0xf] %v561
        %659 = vst [vmem:[%s621 + $0x94] sm:$0xf] %v562
        %660 = vst [vmem:[%s621 + $0x98] sm:$0x1] %v563
        %661 = vst [vmem:[%s621 + $0x9c] sm:$0xf] %v564
        %662 = vst [vmem:[%s621 + $0xa0] sm:$0xf] %v565
        %663 = vst [vmem:[%s621 + $0xa4] sm:$0x1] %v566
        %664 = vst [vmem:[%s621 + $0xa8] sm:$0xf] %v567
        %665 = vst [vmem:[%s621 + $0xac] sm:$0xf] %v568
        %666 = vst [vmem:[%s621 + $0xb0] sm:$0x1] %v569
        %667 = vst [vmem:[%s621 + $0xb4] sm:$0xf] %v570
        %668 = vst [vmem:[%s621 + $0xb8] sm:$0xf] %v571
        %669 = vst [vmem:[%s621 + $0xbc] sm:$0x1] %v572
        %670 = vst [vmem:[#allocation2] sm:$0xf] %v528
        %671 = vst [vmem:[#allocation2 + $0x4] sm:$0xf] %v529
        %672 = vst [vmem:[#allocation2 + $0x8] sm:$0x1] %v530
        %s673 = scalar_lea.vmem [#allocation2], 204
        %674 = vst [vmem:[%s673] sm:$0xf] %v567
        %675 = vst [vmem:[%s673 + $0x4] sm:$0xf] %v568
        %676 = vst [vmem:[%s673 + $0x8] sm:$0x1] %v569
        %v677 = vld [vmem:[#allocation2] sm:$0xf]
        %v678 = vld [vmem:[#allocation2 + $0x4] sm:$0xf]
        %v679 = vld [vmem:[#allocation2 + $0xc] sm:$0xf]
        %v680 = vld [vmem:[#allocation2 + $0x10] sm:$0xf]
        %v681 = vld [vmem:[#allocation2 + $0x18] sm:$0xf]
        %v682 = vld [vmem:[#allocation2 + $0x1c] sm:$0xf]
        %v683 = vld [vmem:[#allocation2 + $0x24] sm:$0xf]
        %v684 = vld [vmem:[#allocation2 + $0x28] sm:$0xf]
        %v685 = vld [vmem:[#allocation2 + $0x30] sm:$0xf]
        %v686 = vld [vmem:[#allocation2 + $0x34] sm:$0xf]
        %v687 = vld [vmem:[#allocation2 + $0x3c] sm:$0xf]
        %v688 = vld [vmem:[#allocation2 + $0x40] sm:$0xf]
        %v689 = vld [vmem:[#allocation2 + $0x48] sm:$0xf]
        %v690 = vld [vmem:[#allocation2 + $0x4c] sm:$0xf]
        %v691 = vld [vmem:[#allocation2 + $0x54] sm:$0xf]
        %v692 = vld [vmem:[#allocation2 + $0x58] sm:$0xf]
        %v693 = vld [vmem:[#allocation2 + $0x60] sm:$0xf]
        %v694 = vld [vmem:[#allocation2 + $0x64] sm:$0xf]
        %v695 = vld [vmem:[#allocation2 + $0x6c] sm:$0xf]
        %v696 = vld [vmem:[#allocation2 + $0x70] sm:$0xf]
        %v697 = vld [vmem:[#allocation2 + $0x78] sm:$0xf]
        %v698 = vld [vmem:[#allocation2 + $0x7c] sm:$0xf]
        %v699 = vld [vmem:[#allocation2 + $0x84] sm:$0xf]
        %v700 = vld [vmem:[#allocation2 + $0x88] sm:$0xf]
        %v701 = vld [vmem:[#allocation2 + $0x90] sm:$0xf]
        %v702 = vld [vmem:[#allocation2 + $0x94] sm:$0xf]
        %v703 = vld [vmem:[#allocation2 + $0x9c] sm:$0xf]
        %v704 = vld [vmem:[#allocation2 + $0xa0] sm:$0xf]
        %v705 = vld [vmem:[#allocation2 + $0xa8] sm:$0xf]
        %v706 = vld [vmem:[#allocation2 + $0xac] sm:$0xf]
        %v707 = vld [vmem:[#allocation2 + $0xb4] sm:$0xf]
        %v708 = vld [vmem:[#allocation2 + $0xb8] sm:$0xf]
        %v709 = vld [vmem:[#allocation2 + $0xc0] sm:$0xf]
        %v710 = vld [vmem:[#allocation2 + $0xc4] sm:$0xf]
        %v711 = vld [vmem:[#allocation2 + $0xcc] sm:$0xf]
        %v712 = vld [vmem:[#allocation2 + $0xd0] sm:$0xf]
        %v745 = vunpack.c.l.b16 %v677
        %v746 = vunpack.c.l.b16 %v678
        %v747 = vunpack.c.l.b16 %v679
        %v748 = vunpack.c.l.b16 %v680
        %v749 = vunpack.c.l.b16 %v681
        %v750 = vunpack.c.l.b16 %v682
        %v751 = vunpack.c.l.b16 %v683
        %v752 = vunpack.c.l.b16 %v684
        %v753 = vunpack.c.l.b16 %v685
        %v754 = vunpack.c.l.b16 %v686
        %v755 = vunpack.c.l.b16 %v687
        %v756 = vunpack.c.l.b16 %v688
        %v757 = vunpack.c.l.b16 %v689
        %v758 = vunpack.c.l.b16 %v690
        %v759 = vunpack.c.l.b16 %v691
        %v760 = vunpack.c.l.b16 %v692
        %v761 = vunpack.c.l.b16 %v693
        %v762 = vunpack.c.l.b16 %v694
        %v763 = vunpack.c.l.b16 %v695
        %v764 = vunpack.c.l.b16 %v696
        %v765 = vunpack.c.l.b16 %v697
        %v766 = vunpack.c.l.b16 %v698
        %v767 = vunpack.c.l.b16 %v699
        %v768 = vunpack.c.l.b16 %v700
        %v769 = vunpack.c.l.b16 %v701
        %v770 = vunpack.c.l.b16 %v702
        %v771 = vunpack.c.l.b16 %v703
        %v772 = vunpack.c.l.b16 %v704
        %v773 = vunpack.c.l.b16 %v705
        %v774 = vunpack.c.l.b16 %v706
        %v775 = vunpack.c.l.b16 %v707
        %v776 = vunpack.c.l.b16 %v708
        %v777 = vpack.c.b16 %v746, %v745
        %v778 = vpack.c.b16 %v748, %v747
        %v779 = vpack.c.b16 %v750, %v749
        %v780 = vpack.c.b16 %v752, %v751
        %v781 = vpack.c.b16 %v754, %v753
        %v782 = vpack.c.b16 %v756, %v755
        %v783 = vpack.c.b16 %v758, %v757
        %v784 = vpack.c.b16 %v760, %v759
        %v785 = vpack.c.b16 %v762, %v761
        %v786 = vpack.c.b16 %v764, %v763
        %v787 = vpack.c.b16 %v766, %v765
        %v788 = vpack.c.b16 %v768, %v767
        %v789 = vpack.c.b16 %v770, %v769
        %v790 = vpack.c.b16 %v772, %v771
        %v791 = vpack.c.b16 %v774, %v773
        %v792 = vpack.c.b16 %v776, %v775
        %809 = vst [vmem:[#allocation3] sm:$0xff] %v777
        %810 = vst [vmem:[#allocation3 + $0x48] sm:$0xff] %v778
        %811 = vst [vmem:[#allocation3 + $0x90] sm:$0xff] %v779
        %812 = vst [vmem:[#allocation3 + $0xd8] sm:$0xff] %v780
        %813 = vst [vmem:[#allocation3 + $0x120] sm:$0xff] %v781
        %814 = vst [vmem:[#allocation3 + $0x168] sm:$0xff] %v782
        %815 = vst [vmem:[#allocation3 + $0x1b0] sm:$0xff] %v783
        %816 = vst [vmem:[#allocation3 + $0x1f8] sm:$0xff] %v784
        %817 = vst [vmem:[#allocation3 + $0x240] sm:$0xff] %v785
        %818 = vst [vmem:[#allocation3 + $0x288] sm:$0xff] %v786
        %819 = vst [vmem:[#allocation3 + $0x2d0] sm:$0xff] %v787
        %820 = vst [vmem:[#allocation3 + $0x318] sm:$0xff] %v788
        %821 = vst [vmem:[#allocation3 + $0x360] sm:$0xff] %v789
        %822 = vst [vmem:[#allocation3 + $0x3a8] sm:$0xff] %v790
        %823 = vst [vmem:[#allocation3 + $0x3f0] sm:$0xff] %v791
        %824 = vst [vmem:[#allocation3 + $0x438] sm:$0xff] %v792
        %v827 = vunpack.c.l.b16 %v709
        %v828 = vunpack.c.l.b16 %v710
        %v829 = vpack.c.b16 %v828, %v827
        %831 = vst [vmem:[#allocation3 + $0x18] sm:$0xff] %v778
        %832 = vst [vmem:[#allocation3 + $0x60] sm:$0xff] %v779
        %833 = vst [vmem:[#allocation3 + $0xa8] sm:$0xff] %v780
        %834 = vst [vmem:[#allocation3 + $0xf0] sm:$0xff] %v781
        %835 = vst [vmem:[#allocation3 + $0x138] sm:$0xff] %v782
        %836 = vst [vmem:[#allocation3 + $0x180] sm:$0xff] %v783
        %837 = vst [vmem:[#allocation3 + $0x1c8] sm:$0xff] %v784
        %838 = vst [vmem:[#allocation3 + $0x210] sm:$0xff] %v785
        %839 = vst [vmem:[#allocation3 + $0x258] sm:$0xff] %v786
        %840 = vst [vmem:[#allocation3 + $0x2a0] sm:$0xff] %v787
        %841 = vst [vmem:[#allocation3 + $0x2e8] sm:$0xff] %v788
        %842 = vst [vmem:[#allocation3 + $0x330] sm:$0xff] %v789
        %843 = vst [vmem:[#allocation3 + $0x378] sm:$0xff] %v790
        %844 = vst [vmem:[#allocation3 + $0x3c0] sm:$0xff] %v791
        %845 = vst [vmem:[#allocation3 + $0x408] sm:$0xff] %v792
        %846 = vst [vmem:[#allocation3 + $0x450] sm:$0xff] %v829
        %v849 = vunpack.c.l.b16 %v711
        %v850 = vunpack.c.l.b16 %v712
        %v851 = vpack.c.b16 %v850, %v849
        %853 = vst [vmem:[#allocation3 + $0x30] sm:$0xff] %v779
        %854 = vst [vmem:[#allocation3 + $0x78] sm:$0xff] %v780
        %855 = vst [vmem:[#allocation3 + $0xc0] sm:$0xff] %v781
        %856 = vst [vmem:[#allocation3 + $0x108] sm:$0xff] %v782
        %857 = vst [vmem:[#allocation3 + $0x150] sm:$0xff] %v783
        %858 = vst [vmem:[#allocation3 + $0x198] sm:$0xff] %v784
        %859 = vst [vmem:[#allocation3 + $0x1e0] sm:$0xff] %v785
        %860 = vst [vmem:[#allocation3 + $0x228] sm:$0xff] %v786
        %861 = vst [vmem:[#allocation3 + $0x270] sm:$0xff] %v787
        %862 = vst [vmem:[#allocation3 + $0x2b8] sm:$0xff] %v788
        %863 = vst [vmem:[#allocation3 + $0x300] sm:$0xff] %v789
        %864 = vst [vmem:[#allocation3 + $0x348] sm:$0xff] %v790
        %865 = vst [vmem:[#allocation3 + $0x390] sm:$0xff] %v791
        %866 = vst [vmem:[#allocation3 + $0x3d8] sm:$0xff] %v792
        %867 = vst [vmem:[#allocation3 + $0x420] sm:$0xff] %v829
        %868 = vst [vmem:[#allocation3 + $0x468] sm:$0xff] %v851
        %v869 = vld [vmem:[#allocation2] sm:$0xf]
        %v870 = vld [vmem:[#allocation2 + $0x4] sm:$0xf]
        %v871 = vld [vmem:[#allocation2 + $0x8] sm:$0x1]
        %v872 = vld [vmem:[#allocation2 + $0xc] sm:$0xf]
        %v873 = vld [vmem:[#allocation2 + $0x10] sm:$0xf]
        %v874 = vld [vmem:[#allocation2 + $0x14] sm:$0x1]
        %v875 = vld [vmem:[#allocation2 + $0x18] sm:$0xf]
        %v876 = vld [vmem:[#allocation2 + $0x1c] sm:$0xf]
        %v877 = vld [vmem:[#allocation2 + $0x20] sm:$0x1]
        %v878 = vld [vmem:[#allocation2 + $0x24] sm:$0xf]
        %v879 = vld [vmem:[#allocation2 + $0x28] sm:$0xf]
        %v880 = vld [vmem:[#allocation2 + $0x2c] sm:$0x1]
        %v881 = vld [vmem:[#allocation2 + $0x30] sm:$0xf]
        %v882 = vld [vmem:[#allocation2 + $0x34] sm:$0xf]
        %v883 = vld [vmem:[#allocation2 + $0x38] sm:$0x1]
        %v884 = vld [vmem:[#allocation2 + $0x3c] sm:$0xf]
        %v885 = vld [vmem:[#allocation2 + $0x40] sm:$0xf]
        %v886 = vld [vmem:[#allocation2 + $0x44] sm:$0x1]
        %v887 = vld [vmem:[#allocation2 + $0x48] sm:$0xf]
        %v888 = vld [vmem:[#allocation2 + $0x4c] sm:$0xf]
        %v889 = vld [vmem:[#allocation2 + $0x50] sm:$0x1]
        %v890 = vld [vmem:[#allocation2 + $0x54] sm:$0xf]
        %v891 = vld [vmem:[#allocation2 + $0x58] sm:$0xf]
        %v892 = vld [vmem:[#allocation2 + $0x5c] sm:$0x1]
        %v893 = vld [vmem:[#allocation2 + $0x60] sm:$0xf]
        %v894 = vld [vmem:[#allocation2 + $0x64] sm:$0xf]
        %v895 = vld [vmem:[#allocation2 + $0x68] sm:$0x1]
        %v896 = vld [vmem:[#allocation2 + $0x6c] sm:$0xf]
        %v897 = vld [vmem:[#allocation2 + $0x70] sm:$0xf]
        %v898 = vld [vmem:[#allocation2 + $0x74] sm:$0x1]
        %v899 = vld [vmem:[#allocation2 + $0x78] sm:$0xf]
        %v900 = vld [vmem:[#allocation2 + $0x7c] sm:$0xf]
        %v901 = vld [vmem:[#allocation2 + $0x80] sm:$0x1]
        %v902 = vld [vmem:[#allocation2 + $0x84] sm:$0xf]
        %v903 = vld [vmem:[#allocation2 + $0x88] sm:$0xf]
        %v904 = vld [vmem:[#allocation2 + $0x8c] sm:$0x1]
        %v905 = vld [vmem:[#allocation2 + $0x90] sm:$0xf]
        %v906 = vld [vmem:[#allocation2 + $0x94] sm:$0xf]
        %v907 = vld [vmem:[#allocation2 + $0x98] sm:$0x1]
        %v908 = vld [vmem:[#allocation2 + $0x9c] sm:$0xf]
        %v909 = vld [vmem:[#allocation2 + $0xa0] sm:$0xf]
        %v910 = vld [vmem:[#allocation2 + $0xa4] sm:$0x1]
        %v911 = vld [vmem:[#allocation2 + $0xa8] sm:$0xf]
        %v912 = vld [vmem:[#allocation2 + $0xac] sm:$0xf]
        %v913 = vld [vmem:[#allocation2 + $0xb0] sm:$0x1]
        %v914 = vld [vmem:[#allocation2 + $0xb4] sm:$0xf]
        %v915 = vld [vmem:[#allocation2 + $0xb8] sm:$0xf]
        %v916 = vld [vmem:[#allocation2 + $0xbc] sm:$0x1]
        %v917 = vld [vmem:[#allocation2 + $0xc0] sm:$0xf]
        %v918 = vld [vmem:[#allocation2 + $0xc4] sm:$0xf]
        %v919 = vld [vmem:[#allocation2 + $0xc8] sm:$0x1]
        %v920 = vld [vmem:[#allocation2 + $0xcc] sm:$0xf]
        %v921 = vld [vmem:[#allocation2 + $0xd0] sm:$0xf]
        %v922 = vld [vmem:[#allocation2 + $0xd4] sm:$0x1]
        %vm923 = vsmask.f32 3328
        %vm924 = vsmask.f32 7440
        %vm925 = vmor %vm923, %vm924
        %v927 = vshrl.u32 %v869, 16
        %v929 = vrot.slane %v927, 4
        %v930 = vshll.u32 %v869, 16
        %v932 = vrot.slane %v930, 5
        %v933 = vor.u32 %v929, %v932
        %v934 = vrot.slane %v933, 4
        %v936 = vshll.u32 %v870, 16
        %v938 = vrot.slane %v936, 5
        %v939 = vsel %vm925, %v934, %v938
        %v940 = vshrl.u32 %v870, 16
        %v942 = vrot.slane %v940, 4
        %v943 = vor.u32 %v942, %v938
        %v944 = vrot.slane %v943, 4
        %v946 = vshll.u32 %v871, 16
        %v948 = vrot.slane %v946, 5
        %v949 = vsel %vm925, %v944, %v948
        %v951 = vshrl.u32 %v872, 16
        %v953 = vrot.slane %v951, 4
        %v954 = vshll.u32 %v872, 16
        %v956 = vrot.slane %v954, 5
        %v957 = vor.u32 %v953, %v956
        %v958 = vrot.slane %v957, 4
        %v960 = vshll.u32 %v873, 16
        %v962 = vrot.slane %v960, 5
        %v963 = vsel %vm925, %v958, %v962
        %v964 = vshrl.u32 %v873, 16
        %v966 = vrot.slane %v964, 4
        %v967 = vor.u32 %v966, %v962
        %v968 = vrot.slane %v967, 4
        %v970 = vshll.u32 %v874, 16
        %v972 = vrot.slane %v970, 5
        %v973 = vsel %vm925, %v968, %v972
        %v975 = vshrl.u32 %v875, 16
        %v977 = vrot.slane %v975, 4
        %v978 = vshll.u32 %v875, 16
        %v980 = vrot.slane %v978, 5
        %v981 = vor.u32 %v977, %v980
        %v982 = vrot.slane %v981, 4
        %v984 = vshll.u32 %v876, 16
        %v986 = vrot.slane %v984, 5
        %v987 = vsel %vm925, %v982, %v986
        %v988 = vshrl.u32 %v876, 16
        %v990 = vrot.slane %v988, 4
        %v991 = vor.u32 %v990, %v986
        %v992 = vrot.slane %v991, 4
        %v994 = vshll.u32 %v877, 16
        %v996 = vrot.slane %v994, 5
        %v997 = vsel %vm925, %v992, %v996
        %v999 = vshrl.u32 %v878, 16
        %v1001 = vrot.slane %v999, 4
        %v1002 = vshll.u32 %v878, 16
        %v1004 = vrot.slane %v1002, 5
        %v1005 = vor.u32 %v1001, %v1004
        %v1006 = vrot.slane %v1005, 4
        %v1008 = vshll.u32 %v879, 16
        %v1010 = vrot.slane %v1008, 5
        %v1011 = vsel %vm925, %v1006, %v1010
        %v1012 = vshrl.u32 %v879, 16
        %v1014 = vrot.slane %v1012, 4
        %v1015 = vor.u32 %v1014, %v1010
        %v1016 = vrot.slane %v1015, 4
        %v1018 = vshll.u32 %v880, 16
        %v1020 = vrot.slane %v1018, 5
        %v1021 = vsel %vm925, %v1016, %v1020
        %v1023 = vshrl.u32 %v881, 16
        %v1025 = vrot.slane %v1023, 4
        %v1026 = vshll.u32 %v881, 16
        %v1028 = vrot.slane %v1026, 5
        %v1029 = vor.u32 %v1025, %v1028
        %v1030 = vrot.slane %v1029, 4
        %v1032 = vshll.u32 %v882, 16
        %v1034 = vrot.slane %v1032, 5
        %v1035 = vsel %vm925, %v1030, %v1034
        %v1036 = vshrl.u32 %v882, 16
        %v1038 = vrot.slane %v1036, 4
        %v1039 = vor.u32 %v1038, %v1034
        %v1040 = vrot.slane %v1039, 4
        %v1042 = vshll.u32 %v883, 16
        %v1044 = vrot.slane %v1042, 5
        %v1045 = vsel %vm925, %v1040, %v1044
        %v1047 = vshrl.u32 %v884, 16
        %v1049 = vrot.slane %v1047, 4
        %v1050 = vshll.u32 %v884, 16
        %v1052 = vrot.slane %v1050, 5
        %v1053 = vor.u32 %v1049, %v1052
        %v1054 = vrot.slane %v1053, 4
        %v1056 = vshll.u32 %v885, 16
        %v1058 = vrot.slane %v1056, 5
        %v1059 = vsel %vm925, %v1054, %v1058
        %v1060 = vshrl.u32 %v885, 16
        %v1062 = vrot.slane %v1060, 4
        %v1063 = vor.u32 %v1062, %v1058
        %v1064 = vrot.slane %v1063, 4
        %v1066 = vshll.u32 %v886, 16
        %v1068 = vrot.slane %v1066, 5
        %v1069 = vsel %vm925, %v1064, %v1068
        %v1071 = vshrl.u32 %v887, 16
        %v1073 = vrot.slane %v1071, 4
        %v1074 = vshll.u32 %v887, 16
        %v1076 = vrot.slane %v1074, 5
        %v1077 = vor.u32 %v1073, %v1076
        %v1078 = vrot.slane %v1077, 4
        %v1080 = vshll.u32 %v888, 16
        %v1082 = vrot.slane %v1080, 5
        %v1083 = vsel %vm925, %v1078, %v1082
        %v1084 = vshrl.u32 %v888, 16
        %v1086 = vrot.slane %v1084, 4
        %v1087 = vor.u32 %v1086, %v1082
        %v1088 = vrot.slane %v1087, 4
        %v1090 = vshll.u32 %v889, 16
        %v1092 = vrot.slane %v1090, 5
        %v1093 = vsel %vm925, %v1088, %v1092
        %v1095 = vshrl.u32 %v890, 16
        %v1097 = vrot.slane %v1095, 4
        %v1098 = vshll.u32 %v890, 16
        %v1100 = vrot.slane %v1098, 5
        %v1101 = vor.u32 %v1097, %v1100
        %v1102 = vrot.slane %v1101, 4
        %v1104 = vshll.u32 %v891, 16
        %v1106 = vrot.slane %v1104, 5
        %v1107 = vsel %vm925, %v1102, %v1106
        %v1108 = vshrl.u32 %v891, 16
        %v1110 = vrot.slane %v1108, 4
        %v1111 = vor.u32 %v1110, %v1106
        %v1112 = vrot.slane %v1111, 4
        %v1114 = vshll.u32 %v892, 16
        %v1116 = vrot.slane %v1114, 5
        %v1117 = vsel %vm925, %v1112, %v1116
        %v1119 = vshrl.u32 %v893, 16
        %v1121 = vrot.slane %v1119, 4
        %v1122 = vshll.u32 %v893, 16
        %v1124 = vrot.slane %v1122, 5
        %v1125 = vor.u32 %v1121, %v1124
        %v1126 = vrot.slane %v1125, 4
        %v1128 = vshll.u32 %v894, 16
        %v1130 = vrot.slane %v1128, 5
        %v1131 = vsel %vm925, %v1126, %v1130
        %v1132 = vshrl.u32 %v894, 16
        %v1134 = vrot.slane %v1132, 4
        %v1135 = vor.u32 %v1134, %v1130
        %v1136 = vrot.slane %v1135, 4
        %v1138 = vshll.u32 %v895, 16
        %v1140 = vrot.slane %v1138, 5
        %v1141 = vsel %vm925, %v1136, %v1140
        %v1143 = vshrl.u32 %v896, 16
        %v1145 = vrot.slane %v1143, 4
        %v1146 = vshll.u32 %v896, 16
        %v1148 = vrot.slane %v1146, 5
        %v1149 = vor.u32 %v1145, %v1148
        %v1150 = vrot.slane %v1149, 4
        %v1152 = vshll.u32 %v897, 16
        %v1154 = vrot.slane %v1152, 5
        %v1155 = vsel %vm925, %v1150, %v1154
        %v1156 = vshrl.u32 %v897, 16
        %v1158 = vrot.slane %v1156, 4
        %v1159 = vor.u32 %v1158, %v1154
        %v1160 = vrot.slane %v1159, 4
        %v1162 = vshll.u32 %v898, 16
        %v1164 = vrot.slane %v1162, 5
        %v1165 = vsel %vm925, %v1160, %v1164
        %v1167 = vshrl.u32 %v899, 16
        %v1169 = vrot.slane %v1167, 4
        %v1170 = vshll.u32 %v899, 16
        %v1172 = vrot.slane %v1170, 5
        %v1173 = vor.u32 %v1169, %v1172
        %v1174 = vrot.slane %v1173, 4
        %v1176 = vshll.u32 %v900, 16
        %v1178 = vrot.slane %v1176, 5
        %v1179 = vsel %vm925, %v1174, %v1178
        %v1180 = vshrl.u32 %v900, 16
        %v1182 = vrot.slane %v1180, 4
        %v1183 = vor.u32 %v1182, %v1178
        %v1184 = vrot.slane %v1183, 4
        %v1186 = vshll.u32 %v901, 16
        %v1188 = vrot.slane %v1186, 5
        %v1189 = vsel %vm925, %v1184, %v1188
        %v1191 = vshrl.u32 %v902, 16
        %v1193 = vrot.slane %v1191, 4
        %v1194 = vshll.u32 %v902, 16
        %v1196 = vrot.slane %v1194, 5
        %v1197 = vor.u32 %v1193, %v1196
        %v1198 = vrot.slane %v1197, 4
        %v1200 = vshll.u32 %v903, 16
        %v1202 = vrot.slane %v1200, 5
        %v1203 = vsel %vm925, %v1198, %v1202
        %v1204 = vshrl.u32 %v903, 16
        %v1206 = vrot.slane %v1204, 4
        %v1207 = vor.u32 %v1206, %v1202
        %v1208 = vrot.slane %v1207, 4
        %v1210 = vshll.u32 %v904, 16
        %v1212 = vrot.slane %v1210, 5
        %v1213 = vsel %vm925, %v1208, %v1212
        %v1215 = vshrl.u32 %v905, 16
        %v1217 = vrot.slane %v1215, 4
        %v1218 = vshll.u32 %v905, 16
        %v1220 = vrot.slane %v1218, 5
        %v1221 = vor.u32 %v1217, %v1220
        %v1222 = vrot.slane %v1221, 4
        %v1224 = vshll.u32 %v906, 16
        %v1226 = vrot.slane %v1224, 5
        %v1227 = vsel %vm925, %v1222, %v1226
        %v1228 = vshrl.u32 %v906, 16
        %v1230 = vrot.slane %v1228, 4
        %v1231 = vor.u32 %v1230, %v1226
        %v1232 = vrot.slane %v1231, 4
        %v1234 = vshll.u32 %v907, 16
        %v1236 = vrot.slane %v1234, 5
        %v1237 = vsel %vm925, %v1232, %v1236
        %v1239 = vshrl.u32 %v908, 16
        %v1241 = vrot.slane %v1239, 4
        %v1242 = vshll.u32 %v908, 16
        %v1244 = vrot.slane %v1242, 5
        %v1245 = vor.u32 %v1241, %v1244
        %v1246 = vrot.slane %v1245, 4
        %v1248 = vshll.u32 %v909, 16
        %v1250 = vrot.slane %v1248, 5
        %v1251 = vsel %vm925, %v1246, %v1250
        %v1252 = vshrl.u32 %v909, 16
        %v1254 = vrot.slane %v1252, 4
        %v1255 = vor.u32 %v1254, %v1250
        %v1256 = vrot.slane %v1255, 4
        %v1258 = vshll.u32 %v910, 16
        %v1260 = vrot.slane %v1258, 5
        %v1261 = vsel %vm925, %v1256, %v1260
        %v1263 = vshrl.u32 %v911, 16
        %v1265 = vrot.slane %v1263, 4
        %v1266 = vshll.u32 %v911, 16
        %v1268 = vrot.slane %v1266, 5
        %v1269 = vor.u32 %v1265, %v1268
        %v1270 = vrot.slane %v1269, 4
        %v1272 = vshll.u32 %v912, 16
        %v1274 = vrot.slane %v1272, 5
        %v1275 = vsel %vm925, %v1270, %v1274
        %v1276 = vshrl.u32 %v912, 16
        %v1278 = vrot.slane %v1276, 4
        %v1279 = vor.u32 %v1278, %v1274
        %v1280 = vrot.slane %v1279, 4
        %v1282 = vshll.u32 %v913, 16
        %v1284 = vrot.slane %v1282, 5
        %v1285 = vsel %vm925, %v1280, %v1284
        %v1287 = vshrl.u32 %v914, 16
        %v1289 = vrot.slane %v1287, 4
        %v1290 = vshll.u32 %v914, 16
        %v1292 = vrot.slane %v1290, 5
        %v1293 = vor.u32 %v1289, %v1292
        %v1294 = vrot.slane %v1293, 4
        %v1296 = vshll.u32 %v915, 16
        %v1298 = vrot.slane %v1296, 5
        %v1299 = vsel %vm925, %v1294, %v1298
        %v1300 = vshrl.u32 %v915, 16
        %v1302 = vrot.slane %v1300, 4
        %v1303 = vor.u32 %v1302, %v1298
        %v1304 = vrot.slane %v1303, 4
        %v1306 = vshll.u32 %v916, 16
        %v1308 = vrot.slane %v1306, 5
        %v1309 = vsel %vm925, %v1304, %v1308
        %v1310 = vunpack.c.l.b16 %v939
        %v1311 = vunpack.c.l.b16 %v949
        %v1312 = vunpack.c.l.b16 %v963
        %v1313 = vunpack.c.l.b16 %v973
        %v1314 = vunpack.c.l.b16 %v987
        %v1315 = vunpack.c.l.b16 %v997
        %v1316 = vunpack.c.l.b16 %v1011
        %v1317 = vunpack.c.l.b16 %v1021
        %v1318 = vunpack.c.l.b16 %v1035
        %v1319 = vunpack.c.l.b16 %v1045
        %v1320 = vunpack.c.l.b16 %v1059
        %v1321 = vunpack.c.l.b16 %v1069
        %v1322 = vunpack.c.l.b16 %v1083
        %v1323 = vunpack.c.l.b16 %v1093
        %v1324 = vunpack.c.l.b16 %v1107
        %v1325 = vunpack.c.l.b16 %v1117
        %v1326 = vunpack.c.l.b16 %v1131
        %v1327 = vunpack.c.l.b16 %v1141
        %v1328 = vunpack.c.l.b16 %v1155
        %v1329 = vunpack.c.l.b16 %v1165
        %v1330 = vunpack.c.l.b16 %v1179
        %v1331 = vunpack.c.l.b16 %v1189
        %v1332 = vunpack.c.l.b16 %v1203
        %v1333 = vunpack.c.l.b16 %v1213
        %v1334 = vunpack.c.l.b16 %v1227
        %v1335 = vunpack.c.l.b16 %v1237
        %v1336 = vunpack.c.l.b16 %v1251
        %v1337 = vunpack.c.l.b16 %v1261
        %v1338 = vunpack.c.l.b16 %v1275
        %v1339 = vunpack.c.l.b16 %v1285
        %v1340 = vunpack.c.l.b16 %v1299
        %v1341 = vunpack.c.l.b16 %v1309
        %v1342 = vpack.c.b16 %v1311, %v1310
        %v1343 = vpack.c.b16 %v1313, %v1312
        %v1344 = vpack.c.b16 %v1315, %v1314
        %v1345 = vpack.c.b16 %v1317, %v1316
        %v1346 = vpack.c.b16 %v1319, %v1318
        %v1347 = vpack.c.b16 %v1321, %v1320
        %v1348 = vpack.c.b16 %v1323, %v1322
        %v1349 = vpack.c.b16 %v1325, %v1324
        %v1350 = vpack.c.b16 %v1327, %v1326
        %v1351 = vpack.c.b16 %v1329, %v1328
        %v1352 = vpack.c.b16 %v1331, %v1330
        %v1353 = vpack.c.b16 %v1333, %v1332
        %v1354 = vpack.c.b16 %v1335, %v1334
        %v1355 = vpack.c.b16 %v1337, %v1336
        %v1356 = vpack.c.b16 %v1339, %v1338
        %v1357 = vpack.c.b16 %v1341, %v1340
        %1374 = vst [vmem:[#allocation3 + $0x8] sm:$0xff] %v1342
        %1375 = vst [vmem:[#allocation3 + $0x50] sm:$0xff] %v1343
        %1376 = vst [vmem:[#allocation3 + $0x98] sm:$0xff] %v1344
        %1377 = vst [vmem:[#allocation3 + $0xe0] sm:$0xff] %v1345
        %1378 = vst [vmem:[#allocation3 + $0x128] sm:$0xff] %v1346
        %1379 = vst [vmem:[#allocation3 + $0x170] sm:$0xff] %v1347
        %1380 = vst [vmem:[#allocation3 + $0x1b8] sm:$0xff] %v1348
        %1381 = vst [vmem:[#allocation3 + $0x200] sm:$0xff] %v1349
        %1382 = vst [vmem:[#allocation3 + $0x248] sm:$0xff] %v1350
        %1383 = vst [vmem:[#allocation3 + $0x290] sm:$0xff] %v1351
        %1384 = vst [vmem:[#allocation3 + $0x2d8] sm:$0xff] %v1352
        %1385 = vst [vmem:[#allocation3 + $0x320] sm:$0xff] %v1353
        %1386 = vst [vmem:[#allocation3 + $0x368] sm:$0xff] %v1354
        %1387 = vst [vmem:[#allocation3 + $0x3b0] sm:$0xff] %v1355
        %1388 = vst [vmem:[#allocation3 + $0x3f8] sm:$0xff] %v1356
        %1389 = vst [vmem:[#allocation3 + $0x440] sm:$0xff] %v1357
        %v1391 = vshrl.u32 %v917, 16
        %v1393 = vrot.slane %v1391, 4
        %v1394 = vshll.u32 %v917, 16
        %v1396 = vrot.slane %v1394, 5
        %v1397 = vor.u32 %v1393, %v1396
        %v1398 = vrot.slane %v1397, 4
        %v1400 = vshll.u32 %v918, 16
        %v1402 = vrot.slane %v1400, 5
        %v1403 = vsel %vm925, %v1398, %v1402
        %v1404 = vshrl.u32 %v918, 16
        %v1406 = vrot.slane %v1404, 4
        %v1407 = vor.u32 %v1406, %v1402
        %v1408 = vrot.slane %v1407, 4
        %v1410 = vshll.u32 %v919, 16
        %v1412 = vrot.slane %v1410, 5
        %v1413 = vsel %vm925, %v1408, %v1412
        %v1414 = vunpack.c.l.b16 %v1403
        %v1415 = vunpack.c.l.b16 %v1413
        %v1416 = vpack.c.b16 %v1415, %v1414
        %1418 = vst [vmem:[#allocation3 + $0x20] sm:$0xff] %v1343
        %1419 = vst [vmem:[#allocation3 + $0x68] sm:$0xff] %v1344
        %1420 = vst [vmem:[#allocation3 + $0xb0] sm:$0xff] %v1345
        %1421 = vst [vmem:[#allocation3 + $0xf8] sm:$0xff] %v1346
        %1422 = vst [vmem:[#allocation3 + $0x140] sm:$0xff] %v1347
        %1423 = vst [vmem:[#allocation3 + $0x188] sm:$0xff] %v1348
        %1424 = vst [vmem:[#allocation3 + $0x1d0] sm:$0xff] %v1349
        %1425 = vst [vmem:[#allocation3 + $0x218] sm:$0xff] %v1350
        %1426 = vst [vmem:[#allocation3 + $0x260] sm:$0xff] %v1351
        %1427 = vst [vmem:[#allocation3 + $0x2a8] sm:$0xff] %v1352
        %1428 = vst [vmem:[#allocation3 + $0x2f0] sm:$0xff] %v1353
        %1429 = vst [vmem:[#allocation3 + $0x338] sm:$0xff] %v1354
        %1430 = vst [vmem:[#allocation3 + $0x380] sm:$0xff] %v1355
        %1431 = vst [vmem:[#allocation3 + $0x3c8] sm:$0xff] %v1356
        %1432 = vst [vmem:[#allocation3 + $0x410] sm:$0xff] %v1357
        %1433 = vst [vmem:[#allocation3 + $0x458] sm:$0xff] %v1416
        %v1435 = vshrl.u32 %v920, 16
        %v1437 = vrot.slane %v1435, 4
        %v1438 = vshll.u32 %v920, 16
        %v1440 = vrot.slane %v1438, 5
        %v1441 = vor.u32 %v1437, %v1440
        %v1442 = vrot.slane %v1441, 4
        %v1444 = vshll.u32 %v921, 16
        %v1446 = vrot.slane %v1444, 5
        %v1447 = vsel %vm925, %v1442, %v1446
        %v1448 = vshrl.u32 %v921, 16
        %v1450 = vrot.slane %v1448, 4
        %v1451 = vor.u32 %v1450, %v1446
        %v1452 = vrot.slane %v1451, 4
        %v1454 = vshll.u32 %v922, 16
        %v1456 = vrot.slane %v1454, 5
        %v1457 = vsel %vm925, %v1452, %v1456
        %v1458 = vunpack.c.l.b16 %v1447
        %v1459 = vunpack.c.l.b16 %v1457
        %v1460 = vpack.c.b16 %v1459, %v1458
        %1462 = vst [vmem:[#allocation3 + $0x38] sm:$0xff] %v1344
        %1463 = vst [vmem:[#allocation3 + $0x80] sm:$0xff] %v1345
        %1464 = vst [vmem:[#allocation3 + $0xc8] sm:$0xff] %v1346
        %1465 = vst [vmem:[#allocation3 + $0x110] sm:$0xff] %v1347
        %1466 = vst [vmem:[#allocation3 + $0x158] sm:$0xff] %v1348
        %1467 = vst [vmem:[#allocation3 + $0x1a0] sm:$0xff] %v1349
        %1468 = vst [vmem:[#allocation3 + $0x1e8] sm:$0xff] %v1350
        %1469 = vst [vmem:[#allocation3 + $0x230] sm:$0xff] %v1351
        %1470 = vst [vmem:[#allocation3 + $0x278] sm:$0xff] %v1352
        %1471 = vst [vmem:[#allocation3 + $0x2c0] sm:$0xff] %v1353
        %1472 = vst [vmem:[#allocation3 + $0x308] sm:$0xff] %v1354
        %1473 = vst [vmem:[#allocation3 + $0x350] sm:$0xff] %v1355
        %1474 = vst [vmem:[#allocation3 + $0x398] sm:$0xff] %v1356
        %1475 = vst [vmem:[#allocation3 + $0x3e0] sm:$0xff] %v1357
        %1476 = vst [vmem:[#allocation3 + $0x428] sm:$0xff] %v1416
        %1477 = vst [vmem:[#allocation3 + $0x470] sm:$0xff] %v1460
        %v1478 = vld [vmem:[#allocation2] sm:$0xe]
        %v1479 = vld [vmem:[#allocation2 + $0x4] sm:$0xf]
        %v1480 = vld [vmem:[#allocation2 + $0x8] sm:$0x1]
        %v1481 = vld [vmem:[#allocation2 + $0xc] sm:$0xe]
        %v1482 = vld [vmem:[#allocation2 + $0x10] sm:$0xf]
        %v1483 = vld [vmem:[#allocation2 + $0x14] sm:$0x1]
        %v1484 = vld [vmem:[#allocation2 + $0x18] sm:$0xe]
        %v1485 = vld [vmem:[#allocation2 + $0x1c] sm:$0xf]
        %v1486 = vld [vmem:[#allocation2 + $0x20] sm:$0x1]
        %v1487 = vld [vmem:[#allocation2 + $0x24] sm:$0xe]
        %v1488 = vld [vmem:[#allocation2 + $0x28] sm:$0xf]
        %v1489 = vld [vmem:[#allocation2 + $0x2c] sm:$0x1]
        %v1490 = vld [vmem:[#allocation2 + $0x30] sm:$0xe]
        %v1491 = vld [vmem:[#allocation2 + $0x34] sm:$0xf]
        %v1492 = vld [vmem:[#allocation2 + $0x38] sm:$0x1]
        %v1493 = vld [vmem:[#allocation2 + $0x3c] sm:$0xe]
        %v1494 = vld [vmem:[#allocation2 + $0x40] sm:$0xf]
        %v1495 = vld [vmem:[#allocation2 + $0x44] sm:$0x1]
        %v1496 = vld [vmem:[#allocation2 + $0x48] sm:$0xe]
        %v1497 = vld [vmem:[#allocation2 + $0x4c] sm:$0xf]
        %v1498 = vld [vmem:[#allocation2 + $0x50] sm:$0x1]
        %v1499 = vld [vmem:[#allocation2 + $0x54] sm:$0xe]
        %v1500 = vld [vmem:[#allocation2 + $0x58] sm:$0xf]
        %v1501 = vld [vmem:[#allocation2 + $0x5c] sm:$0x1]
        %v1502 = vld [vmem:[#allocation2 + $0x60] sm:$0xe]
        %v1503 = vld [vmem:[#allocation2 + $0x64] sm:$0xf]
        %v1504 = vld [vmem:[#allocation2 + $0x68] sm:$0x1]
        %v1505 = vld [vmem:[#allocation2 + $0x6c] sm:$0xe]
        %v1506 = vld [vmem:[#allocation2 + $0x70] sm:$0xf]
        %v1507 = vld [vmem:[#allocation2 + $0x74] sm:$0x1]
        %v1508 = vld [vmem:[#allocation2 + $0x78] sm:$0xe]
        %v1509 = vld [vmem:[#allocation2 + $0x7c] sm:$0xf]
        %v1510 = vld [vmem:[#allocation2 + $0x80] sm:$0x1]
        %v1511 = vld [vmem:[#allocation2 + $0x84] sm:$0xe]
        %v1512 = vld [vmem:[#allocation2 + $0x88] sm:$0xf]
        %v1513 = vld [vmem:[#allocation2 + $0x8c] sm:$0x1]
        %v1514 = vld [vmem:[#allocation2 + $0x90] sm:$0xe]
        %v1515 = vld [vmem:[#allocation2 + $0x94] sm:$0xf]
        %v1516 = vld [vmem:[#allocation2 + $0x98] sm:$0x1]
        %v1517 = vld [vmem:[#allocation2 + $0x9c] sm:$0xe]
        %v1518 = vld [vmem:[#allocation2 + $0xa0] sm:$0xf]
        %v1519 = vld [vmem:[#allocation2 + $0xa4] sm:$0x1]
        %v1520 = vld [vmem:[#allocation2 + $0xa8] sm:$0xe]
        %v1521 = vld [vmem:[#allocation2 + $0xac] sm:$0xf]
        %v1522 = vld [vmem:[#allocation2 + $0xb0] sm:$0x1]
        %v1523 = vld [vmem:[#allocation2 + $0xb4] sm:$0xe]
        %v1524 = vld [vmem:[#allocation2 + $0xb8] sm:$0xf]
        %v1525 = vld [vmem:[#allocation2 + $0xbc] sm:$0x1]
        %v1526 = vld [vmem:[#allocation2 + $0xc0] sm:$0xe]
        %v1527 = vld [vmem:[#allocation2 + $0xc4] sm:$0xf]
        %v1528 = vld [vmem:[#allocation2 + $0xc8] sm:$0x1]
        %v1529 = vld [vmem:[#allocation2 + $0xcc] sm:$0xe]
        %v1530 = vld [vmem:[#allocation2 + $0xd0] sm:$0xf]
        %v1531 = vld [vmem:[#allocation2 + $0xd4] sm:$0x1]
        %vm1580 = vcmask 1042432
        %vm1581 = vcmask 1046532
        %vm1582 = vmor %vm1580, %vm1581
        %v1583 = vrot.slane %v1478, 5
        %v1584 = vrot.slane %v1583, 4
        %v1585 = vrot.slane %v1479, 5
        %v1586 = vsel %vm1582, %v1584, %v1585
        %v1587 = vrot.slane %v1585, 4
        %v1588 = vrot.slane %v1480, 5
        %v1589 = vsel %vm1582, %v1587, %v1588
        %v1590 = vrot.slane %v1481, 5
        %v1591 = vrot.slane %v1590, 4
        %v1592 = vrot.slane %v1482, 5
        %v1593 = vsel %vm1582, %v1591, %v1592
        %v1594 = vrot.slane %v1592, 4
        %v1595 = vrot.slane %v1483, 5
        %v1596 = vsel %vm1582, %v1594, %v1595
        %v1597 = vrot.slane %v1484, 5
        %v1598 = vrot.slane %v1597, 4
        %v1599 = vrot.slane %v1485, 5
        %v1600 = vsel %vm1582, %v1598, %v1599
        %v1601 = vrot.slane %v1599, 4
        %v1602 = vrot.slane %v1486, 5
        %v1603 = vsel %vm1582, %v1601, %v1602
        %v1604 = vrot.slane %v1487, 5
        %v1605 = vrot.slane %v1604, 4
        %v1606 = vrot.slane %v1488, 5
        %v1607 = vsel %vm1582, %v1605, %v1606
        %v1608 = vrot.slane %v1606, 4
        %v1609 = vrot.slane %v1489, 5
        %v1610 = vsel %vm1582, %v1608, %v1609
        %v1611 = vrot.slane %v1490, 5
        %v1612 = vrot.slane %v1611, 4
        %v1613 = vrot.slane %v1491, 5
        %v1614 = vsel %vm1582, %v1612, %v1613
        %v1615 = vrot.slane %v1613, 4
        %v1616 = vrot.slane %v1492, 5
        %v1617 = vsel %vm1582, %v1615, %v1616
        %v1618 = vrot.slane %v1493, 5
        %v1619 = vrot.slane %v1618, 4
        %v1620 = vrot.slane %v1494, 5
        %v1621 = vsel %vm1582, %v1619, %v1620
        %v1622 = vrot.slane %v1620, 4
        %v1623 = vrot.slane %v1495, 5
        %v1624 = vsel %vm1582, %v1622, %v1623
        %v1625 = vrot.slane %v1496, 5
        %v1626 = vrot.slane %v1625, 4
        %v1627 = vrot.slane %v1497, 5
        %v1628 = vsel %vm1582, %v1626, %v1627
        %v1629 = vrot.slane %v1627, 4
        %v1630 = vrot.slane %v1498, 5
        %v1631 = vsel %vm1582, %v1629, %v1630
        %v1632 = vrot.slane %v1499, 5
        %v1633 = vrot.slane %v1632, 4
        %v1634 = vrot.slane %v1500, 5
        %v1635 = vsel %vm1582, %v1633, %v1634
        %v1636 = vrot.slane %v1634, 4
        %v1637 = vrot.slane %v1501, 5
        %v1638 = vsel %vm1582, %v1636, %v1637
        %v1639 = vrot.slane %v1502, 5
        %v1640 = vrot.slane %v1639, 4
        %v1641 = vrot.slane %v1503, 5
        %v1642 = vsel %vm1582, %v1640, %v1641
        %v1643 = vrot.slane %v1641, 4
        %v1644 = vrot.slane %v1504, 5
        %v1645 = vsel %vm1582, %v1643, %v1644
        %v1646 = vrot.slane %v1505, 5
        %v1647 = vrot.slane %v1646, 4
        %v1648 = vrot.slane %v1506, 5
        %v1649 = vsel %vm1582, %v1647, %v1648
        %v1650 = vrot.slane %v1648, 4
        %v1651 = vrot.slane %v1507, 5
        %v1652 = vsel %vm1582, %v1650, %v1651
        %v1653 = vrot.slane %v1508, 5
        %v1654 = vrot.slane %v1653, 4
        %v1655 = vrot.slane %v1509, 5
        %v1656 = vsel %vm1582, %v1654, %v1655
        %v1657 = vrot.slane %v1655, 4
        %v1658 = vrot.slane %v1510, 5
        %v1659 = vsel %vm1582, %v1657, %v1658
        %v1660 = vrot.slane %v1511, 5
        %v1661 = vrot.slane %v1660, 4
        %v1662 = vrot.slane %v1512, 5
        %v1663 = vsel %vm1582, %v1661, %v1662
        %v1664 = vrot.slane %v1662, 4
        %v1665 = vrot.slane %v1513, 5
        %v1666 = vsel %vm1582, %v1664, %v1665
        %v1667 = vrot.slane %v1514, 5
        %v1668 = vrot.slane %v1667, 4
        %v1669 = vrot.slane %v1515, 5
        %v1670 = vsel %vm1582, %v1668, %v1669
        %v1671 = vrot.slane %v1669, 4
        %v1672 = vrot.slane %v1516, 5
        %v1673 = vsel %vm1582, %v1671, %v1672
        %v1674 = vrot.slane %v1517, 5
        %v1675 = vrot.slane %v1674, 4
        %v1676 = vrot.slane %v1518, 5
        %v1677 = vsel %vm1582, %v1675, %v1676
        %v1678 = vrot.slane %v1676, 4
        %v1679 = vrot.slane %v1519, 5
        %v1680 = vsel %vm1582, %v1678, %v1679
        %v1681 = vrot.slane %v1520, 5
        %v1682 = vrot.slane %v1681, 4
        %v1683 = vrot.slane %v1521, 5
        %v1684 = vsel %vm1582, %v1682, %v1683
        %v1685 = vrot.slane %v1683, 4
        %v1686 = vrot.slane %v1522, 5
        %v1687 = vsel %vm1582, %v1685, %v1686
        %v1688 = vrot.slane %v1523, 5
        %v1689 = vrot.slane %v1688, 4
        %v1690 = vrot.slane %v1524, 5
        %v1691 = vsel %vm1582, %v1689, %v1690
        %v1692 = vrot.slane %v1690, 4
        %v1693 = vrot.slane %v1525, 5
        %v1694 = vsel %vm1582, %v1692, %v1693
        %v1695 = vunpack.c.l.b16 %v1586
        %v1696 = vunpack.c.l.b16 %v1589
        %v1697 = vunpack.c.l.b16 %v1593
        %v1698 = vunpack.c.l.b16 %v1596
        %v1699 = vunpack.c.l.b16 %v1600
        %v1700 = vunpack.c.l.b16 %v1603
        %v1701 = vunpack.c.l.b16 %v1607
        %v1702 = vunpack.c.l.b16 %v1610
        %v1703 = vunpack.c.l.b16 %v1614
        %v1704 = vunpack.c.l.b16 %v1617
        %v1705 = vunpack.c.l.b16 %v1621
        %v1706 = vunpack.c.l.b16 %v1624
        %v1707 = vunpack.c.l.b16 %v1628
        %v1708 = vunpack.c.l.b16 %v1631
        %v1709 = vunpack.c.l.b16 %v1635
        %v1710 = vunpack.c.l.b16 %v1638
        %v1711 = vunpack.c.l.b16 %v1642
        %v1712 = vunpack.c.l.b16 %v1645
        %v1713 = vunpack.c.l.b16 %v1649
        %v1714 = vunpack.c.l.b16 %v1652
        %v1715 = vunpack.c.l.b16 %v1656
        %v1716 = vunpack.c.l.b16 %v1659
        %v1717 = vunpack.c.l.b16 %v1663
        %v1718 = vunpack.c.l.b16 %v1666
        %v1719 = vunpack.c.l.b16 %v1670
        %v1720 = vunpack.c.l.b16 %v1673
        %v1721 = vunpack.c.l.b16 %v1677
        %v1722 = vunpack.c.l.b16 %v1680
        %v1723 = vunpack.c.l.b16 %v1684
        %v1724 = vunpack.c.l.b16 %v1687
        %v1725 = vunpack.c.l.b16 %v1691
        %v1726 = vunpack.c.l.b16 %v1694
        %v1727 = vpack.c.b16 %v1696, %v1695
        %v1728 = vpack.c.b16 %v1698, %v1697
        %v1729 = vpack.c.b16 %v1700, %v1699
        %v1730 = vpack.c.b16 %v1702, %v1701
        %v1731 = vpack.c.b16 %v1704, %v1703
        %v1732 = vpack.c.b16 %v1706, %v1705
        %v1733 = vpack.c.b16 %v1708, %v1707
        %v1734 = vpack.c.b16 %v1710, %v1709
        %v1735 = vpack.c.b16 %v1712, %v1711
        %v1736 = vpack.c.b16 %v1714, %v1713
        %v1737 = vpack.c.b16 %v1716, %v1715
        %v1738 = vpack.c.b16 %v1718, %v1717
        %v1739 = vpack.c.b16 %v1720, %v1719
        %v1740 = vpack.c.b16 %v1722, %v1721
        %v1741 = vpack.c.b16 %v1724, %v1723
        %v1742 = vpack.c.b16 %v1726, %v1725
        %1759 = vst [vmem:[#allocation3 + $0x10] sm:$0xff] %v1727
        %1760 = vst [vmem:[#allocation3 + $0x58] sm:$0xff] %v1728
        %1761 = vst [vmem:[#allocation3 + $0xa0] sm:$0xff] %v1729
        %1762 = vst [vmem:[#allocation3 + $0xe8] sm:$0xff] %v1730
        %1763 = vst [vmem:[#allocation3 + $0x130] sm:$0xff] %v1731
        %1764 = vst [vmem:[#allocation3 + $0x178] sm:$0xff] %v1732
        %1765 = vst [vmem:[#allocation3 + $0x1c0] sm:$0xff] %v1733
        %1766 = vst [vmem:[#allocation3 + $0x208] sm:$0xff] %v1734
        %1767 = vst [vmem:[#allocation3 + $0x250] sm:$0xff] %v1735
        %1768 = vst [vmem:[#allocation3 + $0x298] sm:$0xff] %v1736
        %1769 = vst [vmem:[#allocation3 + $0x2e0] sm:$0xff] %v1737
        %1770 = vst [vmem:[#allocation3 + $0x328] sm:$0xff] %v1738
        %1771 = vst [vmem:[#allocation3 + $0x370] sm:$0xff] %v1739
        %1772 = vst [vmem:[#allocation3 + $0x3b8] sm:$0xff] %v1740
        %1773 = vst [vmem:[#allocation3 + $0x400] sm:$0xff] %v1741
        %1774 = vst [vmem:[#allocation3 + $0x448] sm:$0xff] %v1742
        %v1778 = vrot.slane %v1526, 5
        %v1779 = vrot.slane %v1778, 4
        %v1780 = vrot.slane %v1527, 5
        %v1781 = vsel %vm1582, %v1779, %v1780
        %v1782 = vrot.slane %v1780, 4
        %v1783 = vrot.slane %v1528, 5
        %v1784 = vsel %vm1582, %v1782, %v1783
        %v1785 = vunpack.c.l.b16 %v1781
        %v1786 = vunpack.c.l.b16 %v1784
        %v1787 = vpack.c.b16 %v1786, %v1785
        %1789 = vst [vmem:[#allocation3 + $0x28] sm:$0xff] %v1728
        %1790 = vst [vmem:[#allocation3 + $0x70] sm:$0xff] %v1729
        %1791 = vst [vmem:[#allocation3 + $0xb8] sm:$0xff] %v1730
        %1792 = vst [vmem:[#allocation3 + $0x100] sm:$0xff] %v1731
        %1793 = vst [vmem:[#allocation3 + $0x148] sm:$0xff] %v1732
        %1794 = vst [vmem:[#allocation3 + $0x190] sm:$0xff] %v1733
        %1795 = vst [vmem:[#allocation3 + $0x1d8] sm:$0xff] %v1734
        %1796 = vst [vmem:[#allocation3 + $0x220] sm:$0xff] %v1735
        %1797 = vst [vmem:[#allocation3 + $0x268] sm:$0xff] %v1736
        %1798 = vst [vmem:[#allocation3 + $0x2b0] sm:$0xff] %v1737
        %1799 = vst [vmem:[#allocation3 + $0x2f8] sm:$0xff] %v1738
        %1800 = vst [vmem:[#allocation3 + $0x340] sm:$0xff] %v1739
        %1801 = vst [vmem:[#allocation3 + $0x388] sm:$0xff] %v1740
        %1802 = vst [vmem:[#allocation3 + $0x3d0] sm:$0xff] %v1741
        %1803 = vst [vmem:[#allocation3 + $0x418] sm:$0xff] %v1742
        %1804 = vst [vmem:[#allocation3 + $0x460] sm:$0xff] %v1787
        %v1808 = vrot.slane %v1529, 5
        %v1809 = vrot.slane %v1808, 4
        %v1810 = vrot.slane %v1530, 5
        %v1811 = vsel %vm1582, %v1809, %v1810
        %v1812 = vrot.slane %v1810, 4
        %v1813 = vrot.slane %v1531, 5
        %v1814 = vsel %vm1582, %v1812, %v1813
        %v1815 = vunpack.c.l.b16 %v1811
        %v1816 = vunpack.c.l.b16 %v1814
        %v1817 = vpack.c.b16 %v1816, %v1815
        %1819 = vst [vmem:[#allocation3 + $0x40] sm:$0xff] %v1729
        %1820 = vst [vmem:[#allocation3 + $0x88] sm:$0xff] %v1730
        %1821 = vst [vmem:[#allocation3 + $0xd0] sm:$0xff] %v1731
        %1822 = vst [vmem:[#allocation3 + $0x118] sm:$0xff] %v1732
        %1823 = vst [vmem:[#allocation3 + $0x160] sm:$0xff] %v1733
        %1824 = vst [vmem:[#allocation3 + $0x1a8] sm:$0xff] %v1734
        %1825 = vst [vmem:[#allocation3 + $0x1f0] sm:$0xff] %v1735
        %1826 = vst [vmem:[#allocation3 + $0x238] sm:$0xff] %v1736
        %1827 = vst [vmem:[#allocation3 + $0x280] sm:$0xff] %v1737
        %1828 = vst [vmem:[#allocation3 + $0x2c8] sm:$0xff] %v1738
        %1829 = vst [vmem:[#allocation3 + $0x310] sm:$0xff] %v1739
        %1830 = vst [vmem:[#allocation3 + $0x358] sm:$0xff] %v1740
        %1831 = vst [vmem:[#allocation3 + $0x3a0] sm:$0xff] %v1741
        %1832 = vst [vmem:[#allocation3 + $0x3e8] sm:$0xff] %v1742
        %1833 = vst [vmem:[#allocation3 + $0x430] sm:$0xff] %v1787
        %1834 = vst [vmem:[#allocation3 + $0x478] sm:$0xff] %v1817
        %v1835 = vld [vmem:[#allocation3] sm:$0xff]
        %v1836 = vld [vmem:[#allocation3 + $0x8] sm:$0xff]
        %v1837 = vld [vmem:[#allocation3 + $0x10] sm:$0xff]
        %v1838 = vld [vmem:[#allocation3 + $0x18] sm:$0xff]
        %v1839 = vld [vmem:[#allocation3 + $0x20] sm:$0xff]
        %v1840 = vld [vmem:[#allocation3 + $0x28] sm:$0xff]
        %v1841 = vld [vmem:[#allocation3 + $0x30] sm:$0xff]
        %v1842 = vld [vmem:[#allocation3 + $0x38] sm:$0xff]
        %v1843 = vld [vmem:[#allocation3 + $0x40] sm:$0xff]
        %v1844 = vld [vmem:[#allocation3 + $0x48] sm:$0xff]
        %v1845 = vld [vmem:[#allocation3 + $0x50] sm:$0xff]
        %v1846 = vld [vmem:[#allocation3 + $0x58] sm:$0xff]
        %v1847 = vld [vmem:[#allocation3 + $0x60] sm:$0xff]
        %v1848 = vld [vmem:[#allocation3 + $0x68] sm:$0xff]
        %v1849 = vld [vmem:[#allocation3 + $0x70] sm:$0xff]
        %v1850 = vld [vmem:[#allocation3 + $0x78] sm:$0xff]
        %v1851 = vld [vmem:[#allocation3 + $0x80] sm:$0xff]
        %v1852 = vld [vmem:[#allocation3 + $0x88] sm:$0xff]
        %v1853 = vld [vmem:[#allocation3 + $0x90] sm:$0xff]
        %v1854 = vld [vmem:[#allocation3 + $0x98] sm:$0xff]
        %v1855 = vld [vmem:[#allocation3 + $0xa0] sm:$0xff]
        %v1856 = vld [vmem:[#allocation3 + $0xa8] sm:$0xff]
        %v1857 = vld [vmem:[#allocation3 + $0xb0] sm:$0xff]
        %v1858 = vld [vmem:[#allocation3 + $0xb8] sm:$0xff]
        %v1859 = vld [vmem:[#allocation3 + $0xc0] sm:$0xff]
        %v1860 = vld [vmem:[#allocation3 + $0xc8] sm:$0xff]
        %v1861 = vld [vmem:[#allocation3 + $0xd0] sm:$0xff]
        %v1862 = vld [vmem:[#allocation3 + $0xd8] sm:$0xff]
        %v1863 = vld [vmem:[#allocation3 + $0xe0] sm:$0xff]
        %v1864 = vld [vmem:[#allocation3 + $0xe8] sm:$0xff]
        %v1865 = vld [vmem:[#allocation3 + $0xf0] sm:$0xff]
        %v1866 = vld [vmem:[#allocation3 + $0xf8] sm:$0xff]
        %v1867 = vld [vmem:[#allocation3 + $0x100] sm:$0xff]
        %v1868 = vld [vmem:[#allocation3 + $0x108] sm:$0xff]
        %v1869 = vld [vmem:[#allocation3 + $0x110] sm:$0xff]
        %v1870 = vld [vmem:[#allocation3 + $0x118] sm:$0xff]
        %v1871 = vld [vmem:[#allocation3 + $0x120] sm:$0xff]
        %v1872 = vld [vmem:[#allocation3 + $0x128] sm:$0xff]
        %v1873 = vld [vmem:[#allocation3 + $0x130] sm:$0xff]
        %v1874 = vld [vmem:[#allocation3 + $0x138] sm:$0xff]
        %v1875 = vld [vmem:[#allocation3 + $0x140] sm:$0xff]
        %v1876 = vld [vmem:[#allocation3 + $0x148] sm:$0xff]
        %v1877 = vld [vmem:[#allocation3 + $0x150] sm:$0xff]
        %v1878 = vld [vmem:[#allocation3 + $0x158] sm:$0xff]
        %v1879 = vld [vmem:[#allocation3 + $0x160] sm:$0xff]
        %v1880 = vld [vmem:[#allocation3 + $0x168] sm:$0xff]
        %v1881 = vld [vmem:[#allocation3 + $0x170] sm:$0xff]
        %v1882 = vld [vmem:[#allocation3 + $0x178] sm:$0xff]
        %v1883 = vld [vmem:[#allocation3 + $0x180] sm:$0xff]
        %v1884 = vld [vmem:[#allocation3 + $0x188] sm:$0xff]
        %v1885 = vld [vmem:[#allocation3 + $0x190] sm:$0xff]
        %v1886 = vld [vmem:[#allocation3 + $0x198] sm:$0xff]
        %v1887 = vld [vmem:[#allocation3 + $0x1a0] sm:$0xff]
        %v1888 = vld [vmem:[#allocation3 + $0x1a8] sm:$0xff]
        %v1889 = vld [vmem:[#allocation3 + $0x1b0] sm:$0xff]
        %v1890 = vld [vmem:[#allocation3 + $0x1b8] sm:$0xff]
        %v1891 = vld [vmem:[#allocation3 + $0x1c0] sm:$0xff]
        %v1892 = vld [vmem:[#allocation3 + $0x1c8] sm:$0xff]
        %v1893 = vld [vmem:[#allocation3 + $0x1d0] sm:$0xff]
        %v1894 = vld [vmem:[#allocation3 + $0x1d8] sm:$0xff]
        %v1895 = vld [vmem:[#allocation3 + $0x1e0] sm:$0xff]
        %v1896 = vld [vmem:[#allocation3 + $0x1e8] sm:$0xff]
        %v1897 = vld [vmem:[#allocation3 + $0x1f0] sm:$0xff]
        %v1898 = vld [vmem:[#allocation3 + $0x1f8] sm:$0xff]
        %v1899 = vld [vmem:[#allocation3 + $0x200] sm:$0xff]
        %v1900 = vld [vmem:[#allocation3 + $0x208] sm:$0xff]
        %v1901 = vld [vmem:[#allocation3 + $0x210] sm:$0xff]
        %v1902 = vld [vmem:[#allocation3 + $0x218] sm:$0xff]
        %v1903 = vld [vmem:[#allocation3 + $0x220] sm:$0xff]
        %v1904 = vld [vmem:[#allocation3 + $0x228] sm:$0xff]
        %v1905 = vld [vmem:[#allocation3 + $0x230] sm:$0xff]
        %v1906 = vld [vmem:[#allocation3 + $0x238] sm:$0xff]
        %v1907 = vld [vmem:[#allocation3 + $0x240] sm:$0xff]
        %v1908 = vld [vmem:[#allocation3 + $0x248] sm:$0xff]
        %v1909 = vld [vmem:[#allocation3 + $0x250] sm:$0xff]
        %v1910 = vld [vmem:[#allocation3 + $0x258] sm:$0xff]
        %v1911 = vld [vmem:[#allocation3 + $0x260] sm:$0xff]
        %v1912 = vld [vmem:[#allocation3 + $0x268] sm:$0xff]
        %v1913 = vld [vmem:[#allocation3 + $0x270] sm:$0xff]
        %v1914 = vld [vmem:[#allocation3 + $0x278] sm:$0xff]
        %v1915 = vld [vmem:[#allocation3 + $0x280] sm:$0xff]
        %v1916 = vld [vmem:[#allocation3 + $0x288] sm:$0xff]
        %v1917 = vld [vmem:[#allocation3 + $0x290] sm:$0xff]
        %v1918 = vld [vmem:[#allocation3 + $0x298] sm:$0xff]
        %v1919 = vld [vmem:[#allocation3 + $0x2a0] sm:$0xff]
        %v1920 = vld [vmem:[#allocation3 + $0x2a8] sm:$0xff]
        %v1921 = vld [vmem:[#allocation3 + $0x2b0] sm:$0xff]
        %v1922 = vld [vmem:[#allocation3 + $0x2b8] sm:$0xff]
        %v1923 = vld [vmem:[#allocation3 + $0x2c0] sm:$0xff]
        %v1924 = vld [vmem:[#allocation3 + $0x2c8] sm:$0xff]
        %v1925 = vld [vmem:[#allocation3 + $0x2d0] sm:$0xff]
        %v1926 = vld [vmem:[#allocation3 + $0x2d8] sm:$0xff]
        %v1927 = vld [vmem:[#allocation3 + $0x2e0] sm:$0xff]
        %v1928 = vld [vmem:[#allocation3 + $0x2e8] sm:$0xff]
        %v1929 = vld [vmem:[#allocation3 + $0x2f0] sm:$0xff]
        %v1930 = vld [vmem:[#allocation3 + $0x2f8] sm:$0xff]
        %v1931 = vld [vmem:[#allocation3 + $0x300] sm:$0xff]
        %v1932 = vld [vmem:[#allocation3 + $0x308] sm:$0xff]
        %v1933 = vld [vmem:[#allocation3 + $0x310] sm:$0xff]
        %v1934 = vld [vmem:[#allocation3 + $0x318] sm:$0xff]
        %v1935 = vld [vmem:[#allocation3 + $0x320] sm:$0xff]
        %v1936 = vld [vmem:[#allocation3 + $0x328] sm:$0xff]
        %v1937 = vld [vmem:[#allocation3 + $0x330] sm:$0xff]
        %v1938 = vld [vmem:[#allocation3 + $0x338] sm:$0xff]
        %v1939 = vld [vmem:[#allocation3 + $0x340] sm:$0xff]
        %v1940 = vld [vmem:[#allocation3 + $0x348] sm:$0xff]
        %v1941 = vld [vmem:[#allocation3 + $0x350] sm:$0xff]
        %v1942 = vld [vmem:[#allocation3 + $0x358] sm:$0xff]
        %v1943 = vld [vmem:[#allocation3 + $0x360] sm:$0xff]
        %v1944 = vld [vmem:[#allocation3 + $0x368] sm:$0xff]
        %v1945 = vld [vmem:[#allocation3 + $0x370] sm:$0xff]
        %v1946 = vld [vmem:[#allocation3 + $0x378] sm:$0xff]
        %v1947 = vld [vmem:[#allocation3 + $0x380] sm:$0xff]
        %v1948 = vld [vmem:[#allocation3 + $0x388] sm:$0xff]
        %v1949 = vld [vmem:[#allocation3 + $0x390] sm:$0xff]
        %v1950 = vld [vmem:[#allocation3 + $0x398] sm:$0xff]
        %v1951 = vld [vmem:[#allocation3 + $0x3a0] sm:$0xff]
        %v1952 = vld [vmem:[#allocation3 + $0x3a8] sm:$0xff]
        %v1953 = vld [vmem:[#allocation3 + $0x3b0] sm:$0xff]
        %v1954 = vld [vmem:[#allocation3 + $0x3b8] sm:$0xff]
        %v1955 = vld [vmem:[#allocation3 + $0x3c0] sm:$0xff]
        %v1956 = vld [vmem:[#allocation3 + $0x3c8] sm:$0xff]
        %v1957 = vld [vmem:[#allocation3 + $0x3d0] sm:$0xff]
        %v1958 = vld [vmem:[#allocation3 + $0x3d8] sm:$0xff]
        %v1959 = vld [vmem:[#allocation3 + $0x3e0] sm:$0xff]
        %v1960 = vld [vmem:[#allocation3 + $0x3e8] sm:$0xff]
        %v1961 = vld [vmem:[#allocation3 + $0x3f0] sm:$0xff]
        %v1962 = vld [vmem:[#allocation3 + $0x3f8] sm:$0xff]
        %v1963 = vld [vmem:[#allocation3 + $0x400] sm:$0xff]
        %v1964 = vld [vmem:[#allocation3 + $0x408] sm:$0xff]
        %v1965 = vld [vmem:[#allocation3 + $0x410] sm:$0xff]
        %v1966 = vld [vmem:[#allocation3 + $0x418] sm:$0xff]
        %v1967 = vld [vmem:[#allocation3 + $0x420] sm:$0xff]
        %v1968 = vld [vmem:[#allocation3 + $0x428] sm:$0xff]
        %v1969 = vld [vmem:[#allocation3 + $0x430] sm:$0xff]
        %v1970 = vld [vmem:[#allocation3 + $0x438] sm:$0xff]
        %v1971 = vld [vmem:[#allocation3 + $0x440] sm:$0xff]
        %v1972 = vld [vmem:[#allocation3 + $0x448] sm:$0xff]
        %v1973 = vld [vmem:[#allocation3 + $0x450] sm:$0xff]
        %v1974 = vld [vmem:[#allocation3 + $0x458] sm:$0xff]
        %v1975 = vld [vmem:[#allocation3 + $0x460] sm:$0xff]
        %v1976 = vld [vmem:[#allocation3 + $0x468] sm:$0xff]
        %v1977 = vld [vmem:[#allocation3 + $0x470] sm:$0xff]
        %v1978 = vld [vmem:[#allocation3 + $0x478] sm:$0xff]
        %v1979 = vld [vmem:[%s1] sm:$0xf]
        %v1980 = vld [vmem:[%s1 + $0x4] sm:$0xf]
        %v1981 = vld [vmem:[%s1 + $0x8] sm:$0xf]
        %v1982 = vld [vmem:[%s1 + $0xc] sm:$0xf]
        %v1983 = vld [vmem:[%s1 + $0x10] sm:$0xf]
        %v1984 = vld [vmem:[%s1 + $0x14] sm:$0xf]
        %v1985 = vld [vmem:[%s1 + $0x18] sm:$0xf]
        %v1986 = vld [vmem:[%s1 + $0x1c] sm:$0xf]
        %v1987 = vld [vmem:[%s1 + $0x20] sm:$0xf]
        %v1988 = vld [vmem:[%s1 + $0x24] sm:$0xf]
        %v1989 = vld [vmem:[%s1 + $0x28] sm:$0xf]
        %v1990 = vld [vmem:[%s1 + $0x2c] sm:$0xf]
        %v1991 = vld [vmem:[%s1 + $0x30] sm:$0xf]
        %v1992 = vld [vmem:[%s1 + $0x34] sm:$0xf]
        %v1993 = vld [vmem:[%s1 + $0x38] sm:$0xf]
        %v1994 = vld [vmem:[%s1 + $0x3c] sm:$0xf]
        %v1995 = vld [vmem:[%s1 + $0x40] sm:$0xf]
        %v1996 = vld [vmem:[%s1 + $0x44] sm:$0xf]
        %v1997 = vld [vmem:[%s1 + $0x48] sm:$0xf]
        %v1998 = vld [vmem:[%s1 + $0x4c] sm:$0xf]
        %v1999 = vld [vmem:[%s1 + $0x50] sm:$0xf]
        %v2000 = vld [vmem:[%s1 + $0x54] sm:$0xf]
        %v2001 = vld [vmem:[%s1 + $0x58] sm:$0xf]
        %v2002 = vld [vmem:[%s1 + $0x5c] sm:$0xf]
        %v2003 = vld [vmem:[%s1 + $0x60] sm:$0xf]
        %v2004 = vld [vmem:[%s1 + $0x64] sm:$0xf]
        %v2005 = vld [vmem:[%s1 + $0x68] sm:$0xf]
        %v2006 = vld [vmem:[%s1 + $0x6c] sm:$0xf]
        %v2007 = vld [vmem:[%s1 + $0x70] sm:$0xf]
        %v2008 = vld [vmem:[%s1 + $0x74] sm:$0xf]
        %v2009 = vld [vmem:[%s1 + $0x78] sm:$0xf]
        %v2010 = vld [vmem:[%s1 + $0x7c] sm:$0xf]
        %v2011 = vld [vmem:[%s1 + $0x80] sm:$0xf]
        %v2012 = vld [vmem:[%s1 + $0x84] sm:$0xf]
        %v2013 = vld [vmem:[%s1 + $0x88] sm:$0xf]
        %v2014 = vld [vmem:[%s1 + $0x8c] sm:$0xf]
        %v2015 = vld [vmem:[%s1 + $0x90] sm:$0xf]
        %v2016 = vld [vmem:[%s1 + $0x94] sm:$0xf]
        %v2017 = vld [vmem:[%s1 + $0x98] sm:$0xf]
        %v2018 = vld [vmem:[%s1 + $0x9c] sm:$0xf]
        %v2019 = vld [vmem:[%s1 + $0xa0] sm:$0xf]
        %v2020 = vld [vmem:[%s1 + $0xa4] sm:$0xf]
        %v2021 = vld [vmem:[%s1 + $0xa8] sm:$0xf]
        %v2022 = vld [vmem:[%s1 + $0xac] sm:$0xf]
        %v2023 = vld [vmem:[%s1 + $0xb0] sm:$0xf]
        %v2024 = vld [vmem:[%s1 + $0xb4] sm:$0xf]
        %v2025 = vld [vmem:[%s1 + $0xb8] sm:$0xf]
        %v2026 = vld [vmem:[%s1 + $0xbc] sm:$0xf]
        %v2027 = vld [vmem:[%s1 + $0xc0] sm:$0xf]
        %v2028 = vld [vmem:[%s1 + $0xc4] sm:$0xf]
        %v2029 = vld [vmem:[%s1 + $0xc8] sm:$0xf]
        %v2030 = vld [vmem:[%s1 + $0xcc] sm:$0xf]
        %v2031 = vld [vmem:[%s1 + $0xd0] sm:$0xf]
        %v2032 = vld [vmem:[%s1 + $0xd4] sm:$0xf]
        %v2033 = vld [vmem:[%s1 + $0xd8] sm:$0xf]
        %v2034 = vld [vmem:[%s1 + $0xdc] sm:$0xf]
        %v2035 = vld [vmem:[%s1 + $0xe0] sm:$0xf]
        %v2036 = vld [vmem:[%s1 + $0xe4] sm:$0xf]
        %v2037 = vld [vmem:[%s1 + $0xe8] sm:$0xf]
        %v2038 = vld [vmem:[%s1 + $0xec] sm:$0xf]
        %v2039 = vld [vmem:[%s1 + $0xf0] sm:$0xf]
        %v2040 = vld [vmem:[%s1 + $0xf4] sm:$0xf]
        %v2041 = vld [vmem:[%s1 + $0xf8] sm:$0xf]
        %v2042 = vld [vmem:[%s1 + $0xfc] sm:$0xf]
        %v2043 = vld [vmem:[%s1 + $0x100] sm:$0xf]
        %v2044 = vld [vmem:[%s1 + $0x104] sm:$0xf]
        %v2045 = vld [vmem:[%s1 + $0x108] sm:$0xf]
        %v2046 = vld [vmem:[%s1 + $0x10c] sm:$0xf]
        %v2047 = vld [vmem:[%s1 + $0x110] sm:$0xf]
        %v2048 = vld [vmem:[%s1 + $0x114] sm:$0xf]
        %v2049 = vld [vmem:[%s1 + $0x118] sm:$0xf]
        %v2050 = vld [vmem:[%s1 + $0x11c] sm:$0xf]
        %v2051 = vld [vmem:[%s1 + $0x120] sm:$0xf]
        %v2052 = vld [vmem:[%s1 + $0x124] sm:$0xf]
        %v2053 = vld [vmem:[%s1 + $0x128] sm:$0xf]
        %v2054 = vld [vmem:[%s1 + $0x12c] sm:$0xf]
        %v2055 = vld [vmem:[%s1 + $0x130] sm:$0xf]
        %v2056 = vld [vmem:[%s1 + $0x134] sm:$0xf]
        %v2057 = vld [vmem:[%s1 + $0x138] sm:$0xf]
        %v2058 = vld [vmem:[%s1 + $0x13c] sm:$0xf]
        %v2059 = vld [vmem:[%s1 + $0x140] sm:$0xf]
        %v2060 = vld [vmem:[%s1 + $0x144] sm:$0xf]
        %v2061 = vld [vmem:[%s1 + $0x148] sm:$0xf]
        %v2062 = vld [vmem:[%s1 + $0x14c] sm:$0xf]
        %v2063 = vld [vmem:[%s1 + $0x150] sm:$0xf]
        %v2064 = vld [vmem:[%s1 + $0x154] sm:$0xf]
        %v2065 = vld [vmem:[%s1 + $0x158] sm:$0xf]
        %v2066 = vld [vmem:[%s1 + $0x15c] sm:$0xf]
        %v2067 = vld [vmem:[%s1 + $0x160] sm:$0xf]
        %v2068 = vld [vmem:[%s1 + $0x164] sm:$0xf]
        %v2069 = vld [vmem:[%s1 + $0x168] sm:$0xf]
        %v2070 = vld [vmem:[%s1 + $0x16c] sm:$0xf]
        %v2071 = vld [vmem:[%s1 + $0x170] sm:$0xf]
        %v2072 = vld [vmem:[%s1 + $0x174] sm:$0xf]
        %v2073 = vld [vmem:[%s1 + $0x178] sm:$0xf]
        %v2074 = vld [vmem:[%s1 + $0x17c] sm:$0xf]
        %v2075 = vld [vmem:[%s1 + $0x180] sm:$0xf]
        %v2076 = vld [vmem:[%s1 + $0x184] sm:$0xf]
        %v2077 = vld [vmem:[%s1 + $0x188] sm:$0xf]
        %v2078 = vld [vmem:[%s1 + $0x18c] sm:$0xf]
        %v2079 = vld [vmem:[%s1 + $0x190] sm:$0xf]
        %v2080 = vld [vmem:[%s1 + $0x194] sm:$0xf]
        %v2081 = vld [vmem:[%s1 + $0x198] sm:$0xf]
        %v2082 = vld [vmem:[%s1 + $0x19c] sm:$0xf]
        %v2083 = vld [vmem:[%s1 + $0x1a0] sm:$0xf]
        %v2084 = vld [vmem:[%s1 + $0x1a4] sm:$0xf]
        %v2085 = vld [vmem:[%s1 + $0x1a8] sm:$0xf]
        %v2086 = vld [vmem:[%s1 + $0x1ac] sm:$0xf]
        %v2087 = vld [vmem:[%s1 + $0x1b0] sm:$0xf]
        %v2088 = vld [vmem:[%s1 + $0x1b4] sm:$0xf]
        %v2089 = vld [vmem:[%s1 + $0x1b8] sm:$0xf]
        %v2090 = vld [vmem:[%s1 + $0x1bc] sm:$0xf]
        %v2091 = vld [vmem:[%s1 + $0x1c0] sm:$0xf]
        %v2092 = vld [vmem:[%s1 + $0x1c4] sm:$0xf]
        %v2093 = vld [vmem:[%s1 + $0x1c8] sm:$0xf]
        %v2094 = vld [vmem:[%s1 + $0x1cc] sm:$0xf]
        %v2095 = vld [vmem:[%s1 + $0x1d0] sm:$0xf]
        %v2096 = vld [vmem:[%s1 + $0x1d4] sm:$0xf]
        %v2097 = vld [vmem:[%s1 + $0x1d8] sm:$0xf]
        %v2098 = vld [vmem:[%s1 + $0x1dc] sm:$0xf]
        %v2099 = vld [vmem:[%s1 + $0x1e0] sm:$0xf]
        %v2100 = vld [vmem:[%s1 + $0x1e4] sm:$0xf]
        %v2101 = vld [vmem:[%s1 + $0x1e8] sm:$0xf]
        %v2102 = vld [vmem:[%s1 + $0x1ec] sm:$0xf]
        %v2103 = vld [vmem:[%s1 + $0x1f0] sm:$0xf]
        %v2104 = vld [vmem:[%s1 + $0x1f4] sm:$0xf]
        %v2105 = vld [vmem:[%s1 + $0x1f8] sm:$0xf]
        %v2106 = vld [vmem:[%s1 + $0x1fc] sm:$0xf]
        %v2107 = vld [vmem:[%s1 + $0x200] sm:$0xf]
        %v2108 = vld [vmem:[%s1 + $0x204] sm:$0xf]
        %v2109 = vld [vmem:[%s1 + $0x208] sm:$0xf]
        %v2110 = vld [vmem:[%s1 + $0x20c] sm:$0xf]
        %v2111 = vld [vmem:[%s1 + $0x210] sm:$0xf]
        %v2112 = vld [vmem:[%s1 + $0x214] sm:$0xf]
        %v2113 = vld [vmem:[%s1 + $0x218] sm:$0xf]
        %v2114 = vld [vmem:[%s1 + $0x21c] sm:$0xf]
        %v2115 = vld [vmem:[%s1 + $0x220] sm:$0xf]
        %v2116 = vld [vmem:[%s1 + $0x224] sm:$0xf]
        %v2117 = vld [vmem:[%s1 + $0x228] sm:$0xf]
        %v2118 = vld [vmem:[%s1 + $0x22c] sm:$0xf]
        %v2119 = vld [vmem:[%s1 + $0x230] sm:$0xf]
        %v2120 = vld [vmem:[%s1 + $0x234] sm:$0xf]
        %v2121 = vld [vmem:[%s1 + $0x238] sm:$0xf]
        %v2122 = vld [vmem:[%s1 + $0x23c] sm:$0xf]
        %v2267 = vunpack.c.l.b16 %v1979
        %v2268 = vunpack.c.l.b16 %v1980
        %v2269 = vunpack.c.l.b16 %v1981
        %v2270 = vunpack.c.l.b16 %v1982
        %v2271 = vunpack.c.l.b16 %v1983
        %v2272 = vunpack.c.l.b16 %v1984
        %v2273 = vunpack.c.l.b16 %v1985
        %v2274 = vunpack.c.l.b16 %v1986
        %v2275 = vunpack.c.l.b16 %v1987
        %v2276 = vunpack.c.l.b16 %v1988
        %v2277 = vunpack.c.l.b16 %v1989
        %v2278 = vunpack.c.l.b16 %v1990
        %v2279 = vunpack.c.l.b16 %v1991
        %v2280 = vunpack.c.l.b16 %v1992
        %v2281 = vunpack.c.l.b16 %v1993
        %v2282 = vunpack.c.l.b16 %v1994
        %v2283 = vunpack.c.l.b16 %v1995
        %v2284 = vunpack.c.l.b16 %v1996
        %v2285 = vunpack.c.l.b16 %v1997
        %v2286 = vunpack.c.l.b16 %v1998
        %v2287 = vunpack.c.l.b16 %v1999
        %v2288 = vunpack.c.l.b16 %v2000
        %v2289 = vunpack.c.l.b16 %v2001
        %v2290 = vunpack.c.l.b16 %v2002
        %v2291 = vunpack.c.l.b16 %v2003
        %v2292 = vunpack.c.l.b16 %v2004
        %v2293 = vunpack.c.l.b16 %v2005
        %v2294 = vunpack.c.l.b16 %v2006
        %v2295 = vunpack.c.l.b16 %v2007
        %v2296 = vunpack.c.l.b16 %v2008
        %v2297 = vunpack.c.l.b16 %v2009
        %v2298 = vunpack.c.l.b16 %v2010
        %v2299 = vunpack.c.l.b16 %v2011
        %v2300 = vunpack.c.l.b16 %v2012
        %v2301 = vunpack.c.l.b16 %v2013
        %v2302 = vunpack.c.l.b16 %v2014
        %v2303 = vunpack.c.l.b16 %v2015
        %v2304 = vunpack.c.l.b16 %v2016
        %v2305 = vunpack.c.l.b16 %v2017
        %v2306 = vunpack.c.l.b16 %v2018
        %v2307 = vunpack.c.l.b16 %v2019
        %v2308 = vunpack.c.l.b16 %v2020
        %v2309 = vunpack.c.l.b16 %v2021
        %v2310 = vunpack.c.l.b16 %v2022
        %v2311 = vunpack.c.l.b16 %v2023
        %v2312 = vunpack.c.l.b16 %v2024
        %v2313 = vunpack.c.l.b16 %v2025
        %v2314 = vunpack.c.l.b16 %v2026
        %v2315 = vunpack.c.l.b16 %v2027
        %v2316 = vunpack.c.l.b16 %v2028
        %v2317 = vunpack.c.l.b16 %v2029
        %v2318 = vunpack.c.l.b16 %v2030
        %v2319 = vunpack.c.l.b16 %v2031
        %v2320 = vunpack.c.l.b16 %v2032
        %v2321 = vunpack.c.l.b16 %v2033
        %v2322 = vunpack.c.l.b16 %v2034
        %v2323 = vunpack.c.l.b16 %v2035
        %v2324 = vunpack.c.l.b16 %v2036
        %v2325 = vunpack.c.l.b16 %v2037
        %v2326 = vunpack.c.l.b16 %v2038
        %v2327 = vunpack.c.l.b16 %v2039
        %v2328 = vunpack.c.l.b16 %v2040
        %v2329 = vunpack.c.l.b16 %v2041
        %v2330 = vunpack.c.l.b16 %v2042
        %v2331 = vunpack.c.l.b16 %v2043
        %v2332 = vunpack.c.l.b16 %v2044
        %v2333 = vunpack.c.l.b16 %v2045
        %v2334 = vunpack.c.l.b16 %v2046
        %v2335 = vunpack.c.l.b16 %v2047
        %v2336 = vunpack.c.l.b16 %v2048
        %v2337 = vunpack.c.l.b16 %v2049
        %v2338 = vunpack.c.l.b16 %v2050
        %v2339 = vunpack.c.l.b16 %v2051
        %v2340 = vunpack.c.l.b16 %v2052
        %v2341 = vunpack.c.l.b16 %v2053
        %v2342 = vunpack.c.l.b16 %v2054
        %v2343 = vunpack.c.l.b16 %v2055
        %v2344 = vunpack.c.l.b16 %v2056
        %v2345 = vunpack.c.l.b16 %v2057
        %v2346 = vunpack.c.l.b16 %v2058
        %v2347 = vunpack.c.l.b16 %v2059
        %v2348 = vunpack.c.l.b16 %v2060
        %v2349 = vunpack.c.l.b16 %v2061
        %v2350 = vunpack.c.l.b16 %v2062
        %v2351 = vunpack.c.l.b16 %v2063
        %v2352 = vunpack.c.l.b16 %v2064
        %v2353 = vunpack.c.l.b16 %v2065
        %v2354 = vunpack.c.l.b16 %v2066
        %v2355 = vunpack.c.l.b16 %v2067
        %v2356 = vunpack.c.l.b16 %v2068
        %v2357 = vunpack.c.l.b16 %v2069
        %v2358 = vunpack.c.l.b16 %v2070
        %v2359 = vunpack.c.l.b16 %v2071
        %v2360 = vunpack.c.l.b16 %v2072
        %v2361 = vunpack.c.l.b16 %v2073
        %v2362 = vunpack.c.l.b16 %v2074
        %v2363 = vunpack.c.l.b16 %v2075
        %v2364 = vunpack.c.l.b16 %v2076
        %v2365 = vunpack.c.l.b16 %v2077
        %v2366 = vunpack.c.l.b16 %v2078
        %v2367 = vunpack.c.l.b16 %v2079
        %v2368 = vunpack.c.l.b16 %v2080
        %v2369 = vunpack.c.l.b16 %v2081
        %v2370 = vunpack.c.l.b16 %v2082
        %v2371 = vunpack.c.l.b16 %v2083
        %v2372 = vunpack.c.l.b16 %v2084
        %v2373 = vunpack.c.l.b16 %v2085
        %v2374 = vunpack.c.l.b16 %v2086
        %v2375 = vunpack.c.l.b16 %v2087
        %v2376 = vunpack.c.l.b16 %v2088
        %v2377 = vunpack.c.l.b16 %v2089
        %v2378 = vunpack.c.l.b16 %v2090
        %v2379 = vunpack.c.l.b16 %v2091
        %v2380 = vunpack.c.l.b16 %v2092
        %v2381 = vunpack.c.l.b16 %v2093
        %v2382 = vunpack.c.l.b16 %v2094
        %v2383 = vunpack.c.l.b16 %v2095
        %v2384 = vunpack.c.l.b16 %v2096
        %v2385 = vunpack.c.l.b16 %v2097
        %v2386 = vunpack.c.l.b16 %v2098
        %v2387 = vunpack.c.l.b16 %v2099
        %v2388 = vunpack.c.l.b16 %v2100
        %v2389 = vunpack.c.l.b16 %v2101
        %v2390 = vunpack.c.l.b16 %v2102
        %v2391 = vunpack.c.l.b16 %v2103
        %v2392 = vunpack.c.l.b16 %v2104
        %v2393 = vunpack.c.l.b16 %v2105
        %v2394 = vunpack.c.l.b16 %v2106
        %v2395 = vunpack.c.l.b16 %v2107
        %v2396 = vunpack.c.l.b16 %v2108
        %v2397 = vunpack.c.l.b16 %v2109
        %v2398 = vunpack.c.l.b16 %v2110
        %v2399 = vunpack.c.l.b16 %v2111
        %v2400 = vunpack.c.l.b16 %v2112
        %v2401 = vunpack.c.l.b16 %v2113
        %v2402 = vunpack.c.l.b16 %v2114
        %v2403 = vunpack.c.l.b16 %v2115
        %v2404 = vunpack.c.l.b16 %v2116
        %v2405 = vunpack.c.l.b16 %v2117
        %v2406 = vunpack.c.l.b16 %v2118
        %v2407 = vunpack.c.l.b16 %v2119
        %v2408 = vunpack.c.l.b16 %v2120
        %v2409 = vunpack.c.l.b16 %v2121
        %v2410 = vunpack.c.l.b16 %v2122
        %v2411 = vpack.c.b16 %v2268, %v2267
        %v2412 = vpack.c.b16 %v2270, %v2269
        %v2413 = vpack.c.b16 %v2272, %v2271
        %v2414 = vpack.c.b16 %v2274, %v2273
        %v2415 = vpack.c.b16 %v2276, %v2275
        %v2416 = vpack.c.b16 %v2278, %v2277
        %v2417 = vpack.c.b16 %v2280, %v2279
        %v2418 = vpack.c.b16 %v2282, %v2281
        %v2419 = vpack.c.b16 %v2284, %v2283
        %v2420 = vpack.c.b16 %v2286, %v2285
        %v2421 = vpack.c.b16 %v2288, %v2287
        %v2422 = vpack.c.b16 %v2290, %v2289
        %v2423 = vpack.c.b16 %v2292, %v2291
        %v2424 = vpack.c.b16 %v2294, %v2293
        %v2425 = vpack.c.b16 %v2296, %v2295
        %v2426 = vpack.c.b16 %v2298, %v2297
        %v2427 = vpack.c.b16 %v2300, %v2299
        %v2428 = vpack.c.b16 %v2302, %v2301
        %v2429 = vpack.c.b16 %v2304, %v2303
        %v2430 = vpack.c.b16 %v2306, %v2305
        %v2431 = vpack.c.b16 %v2308, %v2307
        %v2432 = vpack.c.b16 %v2310, %v2309
        %v2433 = vpack.c.b16 %v2312, %v2311
        %v2434 = vpack.c.b16 %v2314, %v2313
        %v2435 = vpack.c.b16 %v2316, %v2315
        %v2436 = vpack.c.b16 %v2318, %v2317
        %v2437 = vpack.c.b16 %v2320, %v2319
        %v2438 = vpack.c.b16 %v2322, %v2321
        %v2439 = vpack.c.b16 %v2324, %v2323
        %v2440 = vpack.c.b16 %v2326, %v2325
        %v2441 = vpack.c.b16 %v2328, %v2327
        %v2442 = vpack.c.b16 %v2330, %v2329
        %v2443 = vpack.c.b16 %v2332, %v2331
        %v2444 = vpack.c.b16 %v2334, %v2333
        %v2445 = vpack.c.b16 %v2336, %v2335
        %v2446 = vpack.c.b16 %v2338, %v2337
        %v2447 = vpack.c.b16 %v2340, %v2339
        %v2448 = vpack.c.b16 %v2342, %v2341
        %v2449 = vpack.c.b16 %v2344, %v2343
        %v2450 = vpack.c.b16 %v2346, %v2345
        %v2451 = vpack.c.b16 %v2348, %v2347
        %v2452 = vpack.c.b16 %v2350, %v2349
        %v2453 = vpack.c.b16 %v2352, %v2351
        %v2454 = vpack.c.b16 %v2354, %v2353
        %v2455 = vpack.c.b16 %v2356, %v2355
        %v2456 = vpack.c.b16 %v2358, %v2357
        %v2457 = vpack.c.b16 %v2360, %v2359
        %v2458 = vpack.c.b16 %v2362, %v2361
        %v2459 = vpack.c.b16 %v2364, %v2363
        %v2460 = vpack.c.b16 %v2366, %v2365
        %v2461 = vpack.c.b16 %v2368, %v2367
        %v2462 = vpack.c.b16 %v2370, %v2369
        %v2463 = vpack.c.b16 %v2372, %v2371
        %v2464 = vpack.c.b16 %v2374, %v2373
        %v2465 = vpack.c.b16 %v2376, %v2375
        %v2466 = vpack.c.b16 %v2378, %v2377
        %v2467 = vpack.c.b16 %v2380, %v2379
        %v2468 = vpack.c.b16 %v2382, %v2381
        %v2469 = vpack.c.b16 %v2384, %v2383
        %v2470 = vpack.c.b16 %v2386, %v2385
        %v2471 = vpack.c.b16 %v2388, %v2387
        %v2472 = vpack.c.b16 %v2390, %v2389
        %v2473 = vpack.c.b16 %v2392, %v2391
        %v2474 = vpack.c.b16 %v2394, %v2393
        %v2475 = vpack.c.b16 %v2396, %v2395
        %v2476 = vpack.c.b16 %v2398, %v2397
        %v2477 = vpack.c.b16 %v2400, %v2399
        %v2478 = vpack.c.b16 %v2402, %v2401
        %v2479 = vpack.c.b16 %v2404, %v2403
        %v2480 = vpack.c.b16 %v2406, %v2405
        %v2481 = vpack.c.b16 %v2408, %v2407
        %v2482 = vpack.c.b16 %v2410, %v2409
        %2555 = vmatprep.subr.bf16.mxu0 0
        %2556 = vmatpush1.bf16.msra.mxu0 %v2411
        %2557 = vmatprep.subr.bf16.mxu0 0
        %2558 = vmatpush1.bf16.msra.mxu0 %v2412
        %2559 = vmatprep.subr.bf16.mxu0 0
        %2560 = vmatpush1.bf16.msra.mxu0 %v2413
        %2561 = vmatprep.subr.bf16.mxu0 0
        %2562 = vmatpush1.bf16.msra.mxu0 %v2414
        %2563 = vmatprep.subr.bf16.mxu0 0
        %2564 = vmatpush1.bf16.msra.mxu0 %v2415
        %2565 = vmatprep.subr.bf16.mxu0 0
        %2566 = vmatpush1.bf16.msra.mxu0 %v2416
        %2567 = vmatprep.subr.bf16.mxu0 0
        %2568 = vmatpush1.bf16.msra.mxu0 %v2417
        %2569 = vmatprep.subr.bf16.mxu0 0
        %2570 = vmatpush1.bf16.msra.mxu0 %v2418
        %2571 = vmatprep.subr.bf16.mxu0 0
        %2572 = vmatpush1.bf16.msra.mxu0 %v2419
        %2573 = vmatprep.subr.bf16.mxu0 0
        %2574 = vmatpush1.bf16.msra.mxu0 %v2420
        %2575 = vmatprep.subr.bf16.mxu0 0
        %2576 = vmatpush1.bf16.msra.mxu0 %v2421
        %2577 = vmatprep.subr.bf16.mxu0 0
        %2578 = vmatpush1.bf16.msra.mxu0 %v2422
        %2579 = vmatprep.subr.bf16.mxu0 0
        %2580 = vmatpush1.bf16.msra.mxu0 %v2423
        %2581 = vmatprep.subr.bf16.mxu0 0
        %2582 = vmatpush1.bf16.msra.mxu0 %v2424
        %2583 = vmatprep.subr.bf16.mxu0 0
        %2584 = vmatpush1.bf16.msra.mxu0 %v2425
        %2585 = vmatprep.subr.bf16.mxu0 0
        %2586 = vmatpush1.bf16.msra.mxu0 %v2426
        %2587 = vmatprep.mubr.bf16.mxu0 %v1836
        %2588 = vmatmul.mubr.bf16.gmra.mrb[0].mxu0 %v1835
        %v2589 = vpop.f32.mrb[0].mxu0
        %v2590 = vadd.f32 0.0, %v2589
        %v2591 = vpop.f32.mrb[0].mxu0
        %v2592 = vpop.f32.mrb[0].mxu0
        %v2593 = vadd.f32 0.0, %v2592
        %v2594 = vpop.f32.mrb[0].mxu0
        %2595 = vmatprep.mubr.bf16.mxu0 %v1845
        %2596 = vmatmul.mubr.bf16.gmra.mrb[0].mxu0 %v1844
        %v2597 = vpop.f32.mrb[0].mxu0
        %v2598 = vadd.f32 0.0, %v2597
        %v2599 = vpop.f32.mrb[0].mxu0
        %v2600 = vpop.f32.mrb[0].mxu0
        %v2601 = vadd.f32 0.0, %v2600
        %v2602 = vpop.f32.mrb[0].mxu0
        %2603 = vmatprep.mubr.bf16.mxu0 %v1854
        %2604 = vmatmul.mubr.bf16.gmra.mrb[0].mxu0 %v1853
        %v2605 = vpop.f32.mrb[0].mxu0
        %v2606 = vadd.f32 0.0, %v2605
        %v2607 = vpop.f32.mrb[0].mxu0
        %v2608 = vpop.f32.mrb[0].mxu0
        %v2609 = vadd.f32 0.0, %v2608
        %v2610 = vpop.f32.mrb[0].mxu0
        %2611 = vmatprep.mubr.bf16.mxu0 %v1863
        %2612 = vmatmul.mubr.bf16.gmra.mrb[0].mxu0 %v1862
        %v2613 = vpop.f32.mrb[0].mxu0
        %v2614 = vadd.f32 0.0, %v2613
        %v2615 = vpop.f32.mrb[0].mxu0
        %v2616 = vpop.f32.mrb[0].mxu0
        %v2617 = vadd.f32 0.0, %v2616
        %v2618 = vpop.f32.mrb[0].mxu0
        %2619 = vmatprep.mubr.bf16.mxu0 %v1872
        %2620 = vmatmul.mubr.bf16.gmra.mrb[0].mxu0 %v1871
        %v2621 = vpop.f32.mrb[0].mxu0
        %v2622 = vadd.f32 0.0, %v2621
        %v2623 = vpop.f32.mrb[0].mxu0
        %v2624 = vpop.f32.mrb[0].mxu0
        %v2625 = vadd.f32 0.0, %v2624
        %v2626 = vpop.f32.mrb[0].mxu0
        %2627 = vmatprep.mubr.bf16.mxu0 %v1881
        %2628 = vmatmul.mubr.bf16.gmra.mrb[0].mxu0 %v1880
        %v2629 = vpop.f32.mrb[0].mxu0
        %v2630 = vadd.f32 0.0, %v2629
        %v2631 = vpop.f32.mrb[0].mxu0
        %v2632 = vpop.f32.mrb[0].mxu0
        %v2633 = vadd.f32 0.0, %v2632
        %v2634 = vpop.f32.mrb[0].mxu0
        %2635 = vmatprep.mubr.bf16.mxu0 %v1890
        %2636 = vmatmul.mubr.bf16.gmra.mrb[0].mxu0 %v1889
        %v2637 = vpop.f32.mrb[0].mxu0
        %v2638 = vadd.f32 0.0, %v2637
        %v2639 = vpop.f32.mrb[0].mxu0
        %v2640 = vpop.f32.mrb[0].mxu0
        %v2641 = vadd.f32 0.0, %v2640
        %v2642 = vpop.f32.mrb[0].mxu0
        %2643 = vmatprep.mubr.bf16.mxu0 %v1899
        %2644 = vmatmul.mubr.bf16.gmra.mrb[0].mxu0 %v1898
        %v2645 = vpop.f32.mrb[0].mxu0
        %v2646 = vadd.f32 0.0, %v2645
        %v2647 = vpop.f32.mrb[0].mxu0
        %v2648 = vpop.f32.mrb[0].mxu0
        %v2649 = vadd.f32 0.0, %v2648
        %v2650 = vpop.f32.mrb[0].mxu0
        %2651 = vmatprep.mubr.bf16.mxu0 %v1908
        %2652 = vmatmul.mubr.bf16.gmra.mrb[0].mxu0 %v1907
        %v2653 = vpop.f32.mrb[0].mxu0
        %v2654 = vadd.f32 0.0, %v2653
        %v2655 = vpop.f32.mrb[0].mxu0
        %v2656 = vpop.f32.mrb[0].mxu0
        %v2657 = vadd.f32 0.0, %v2656
        %v2658 = vpop.f32.mrb[0].mxu0
        %2659 = vmatprep.mubr.bf16.mxu0 %v1917
        %2660 = vmatmul.mubr.bf16.gmra.mrb[0].mxu0 %v1916
        %v2661 = vpop.f32.mrb[0].mxu0
        %v2662 = vadd.f32 0.0, %v2661
        %v2663 = vpop.f32.mrb[0].mxu0
        %v2664 = vpop.f32.mrb[0].mxu0
        %v2665 = vadd.f32 0.0, %v2664
        %v2666 = vpop.f32.mrb[0].mxu0
        %2667 = vmatprep.mubr.bf16.mxu0 %v1926
        %2668 = vmatmul.mubr.bf16.gmra.mrb[0].mxu0 %v1925
        %v2669 = vpop.f32.mrb[0].mxu0
        %v2670 = vadd.f32 0.0, %v2669
        %v2671 = vpop.f32.mrb[0].mxu0
        %v2672 = vpop.f32.mrb[0].mxu0
        %v2673 = vadd.f32 0.0, %v2672
        %v2674 = vpop.f32.mrb[0].mxu0
        %2675 = vmatprep.mubr.bf16.mxu0 %v1935
        %2676 = vmatmul.mubr.bf16.gmra.mrb[0].mxu0 %v1934
        %v2677 = vpop.f32.mrb[0].mxu0
        %v2678 = vadd.f32 0.0, %v2677
        %v2679 = vpop.f32.mrb[0].mxu0
        %v2680 = vpop.f32.mrb[0].mxu0
        %v2681 = vadd.f32 0.0, %v2680
        %v2682 = vpop.f32.mrb[0].mxu0
        %2683 = vmatprep.mubr.bf16.mxu0 %v1944
        %2684 = vmatmul.mubr.bf16.gmra.mrb[0].mxu0 %v1943
        %v2685 = vpop.f32.mrb[0].mxu0
        %v2686 = vadd.f32 0.0, %v2685
        %v2687 = vpop.f32.mrb[0].mxu0
        %v2688 = vpop.f32.mrb[0].mxu0
        %v2689 = vadd.f32 0.0, %v2688
        %v2690 = vpop.f32.mrb[0].mxu0
        %2691 = vmatprep.mubr.bf16.mxu0 %v1953
        %2692 = vmatmul.mubr.bf16.gmra.mrb[0].mxu0 %v1952
        %v2693 = vpop.f32.mrb[0].mxu0
        %v2694 = vadd.f32 0.0, %v2693
        %v2695 = vpop.f32.mrb[0].mxu0
        %v2696 = vpop.f32.mrb[0].mxu0
        %v2697 = vadd.f32 0.0, %v2696
        %v2698 = vpop.f32.mrb[0].mxu0
        %2699 = vmatprep.mubr.bf16.mxu0 %v1962
        %2700 = vmatmul.mubr.bf16.gmra.mrb[0].mxu0 %v1961
        %v2701 = vpop.f32.mrb[0].mxu0
        %v2702 = vadd.f32 0.0, %v2701
        %v2703 = vpop.f32.mrb[0].mxu0
        %v2704 = vpop.f32.mrb[0].mxu0
        %v2705 = vadd.f32 0.0, %v2704
        %v2706 = vpop.f32.mrb[0].mxu0
        %2707 = vmatprep.mubr.bf16.mxu0 %v1971
        %2708 = vmatmul.mubr.bf16.gmra.mrb[0].mxu0 %v1970
        %v2709 = vpop.f32.mrb[0].mxu0
        %v2710 = vadd.f32 0.0, %v2709
        %v2711 = vpop.f32.mrb[0].mxu0
        %v2712 = vpop.f32.mrb[0].mxu0
        %v2713 = vadd.f32 0.0, %v2712
        %v2714 = vpop.f32.mrb[0].mxu0
        %2715 = vdwg.mxu0
        %2716 = vmatprep.subr.bf16.mxu0 0
        %2717 = vmatpush1.bf16.msra.mxu0 %v2427
        %2718 = vmatprep.subr.bf16.mxu0 0
        %2719 = vmatpush1.bf16.msra.mxu0 %v2428
        %2720 = vmatprep.subr.bf16.mxu0 0
        %2721 = vmatpush1.bf16.msra.mxu0 %v2429
        %2722 = vmatprep.subr.bf16.mxu0 0
        %2723 = vmatpush1.bf16.msra.mxu0 %v2430
        %2724 = vmatprep.subr.bf16.mxu0 0
        %2725 = vmatpush1.bf16.msra.mxu0 %v2431
        %2726 = vmatprep.subr.bf16.mxu0 0
        %2727 = vmatpush1.bf16.msra.mxu0 %v2432
        %2728 = vmatprep.subr.bf16.mxu0 0
        %2729 = vmatpush1.bf16.msra.mxu0 %v2433
        %2730 = vmatprep.subr.bf16.mxu0 0
        %2731 = vmatpush1.bf16.msra.mxu0 %v2434
        %2732 = vmatprep.subr.bf16.mxu0 0
        %2733 = vmatpush1.bf16.msra.mxu0 %v2435
        %2734 = vmatprep.subr.bf16.mxu0 0
        %2735 = vmatpush1.bf16.msra.mxu0 %v2436
        %2736 = vmatprep.subr.bf16.mxu0 0
        %2737 = vmatpush1.bf16.msra.mxu0 %v2437
        %2738 = vmatprep.subr.bf16.mxu0 0
        %2739 = vmatpush1.bf16.msra.mxu0 %v2438
        %2740 = vmatprep.subr.bf16.mxu0 0
        %2741 = vmatpush1.bf16.msra.mxu0 %v2439
        %2742 = vmatprep.subr.bf16.mxu0 0
        %2743 = vmatpush1.bf16.msra.mxu0 %v2440
        %2744 = vmatprep.subr.bf16.mxu0 0
        %2745 = vmatpush1.bf16.msra.mxu0 %v2441
        %2746 = vmatprep.subr.bf16.mxu0 0
        %2747 = vmatpush1.bf16.msra.mxu0 %v2442
        %2748 = vmatprep.mubr.bf16.mxu0 %v1838
        %2749 = vmatmul.mubr.bf16.gmra.mrb[0].mxu0 %v1837
        %v2750 = vpop.f32.mrb[0].mxu0
        %v2751 = vadd.f32 %v2590, %v2750
        %v2752 = vpop.f32.mrb[0].mxu0
        %v2753 = vpop.f32.mrb[0].mxu0
        %v2754 = vadd.f32 %v2593, %v2753
        %v2755 = vpop.f32.mrb[0].mxu0
        %2756 = vmatprep.mubr.bf16.mxu0 %v1847
        %2757 = vmatmul.mubr.bf16.gmra.mrb[0].mxu0 %v1846
        %v2758 = vpop.f32.mrb[0].mxu0
        %v2759 = vadd.f32 %v2598, %v2758
        %v2760 = vpop.f32.mrb[0].mxu0
        %v2761 = vpop.f32.mrb[0].mxu0
        %v2762 = vadd.f32 %v2601, %v2761
        %v2763 = vpop.f32.mrb[0].mxu0
        %2764 = vmatprep.mubr.bf16.mxu0 %v1856
        %2765 = vmatmul.mubr.bf16.gmra.mrb[0].mxu0 %v1855
        %v2766 = vpop.f32.mrb[0].mxu0
        %v2767 = vadd.f32 %v2606, %v2766
        %v2768 = vpop.f32.mrb[0].mxu0
        %v2769 = vpop.f32.mrb[0].mxu0
        %v2770 = vadd.f32 %v2609, %v2769
        %v2771 = vpop.f32.mrb[0].mxu0
        %2772 = vmatprep.mubr.bf16.mxu0 %v1865
        %2773 = vmatmul.mubr.bf16.gmra.mrb[0].mxu0 %v1864
        %v2774 = vpop.f32.mrb[0].mxu0
        %v2775 = vadd.f32 %v2614, %v2774
        %v2776 = vpop.f32.mrb[0].mxu0
        %v2777 = vpop.f32.mrb[0].mxu0
        %v2778 = vadd.f32 %v2617, %v2777
        %v2779 = vpop.f32.mrb[0].mxu0
        %2780 = vmatprep.mubr.bf16.mxu0 %v1874
        %2781 = vmatmul.mubr.bf16.gmra.mrb[0].mxu0 %v1873
        %v2782 = vpop.f32.mrb[0].mxu0
        %v2783 = vadd.f32 %v2622, %v2782
        %v2784 = vpop.f32.mrb[0].mxu0
        %v2785 = vpop.f32.mrb[0].mxu0
        %v2786 = vadd.f32 %v2625, %v2785
        %v2787 = vpop.f32.mrb[0].mxu0
        %2788 = vmatprep.mubr.bf16.mxu0 %v1883
        %2789 = vmatmul.mubr.bf16.gmra.mrb[0].mxu0 %v1882
        %v2790 = vpop.f32.mrb[0].mxu0
        %v2791 = vadd.f32 %v2630, %v2790
        %v2792 = vpop.f32.mrb[0].mxu0
        %v2793 = vpop.f32.mrb[0].mxu0
        %v2794 = vadd.f32 %v2633, %v2793
        %v2795 = vpop.f32.mrb[0].mxu0
        %2796 = vmatprep.mubr.bf16.mxu0 %v1892
        %2797 = vmatmul.mubr.bf16.gmra.mrb[0].mxu0 %v1891
        %v2798 = vpop.f32.mrb[0].mxu0
        %v2799 = vadd.f32 %v2638, %v2798
        %v2800 = vpop.f32.mrb[0].mxu0
        %v2801 = vpop.f32.mrb[0].mxu0
        %v2802 = vadd.f32 %v2641, %v2801
        %v2803 = vpop.f32.mrb[0].mxu0
        %2804 = vmatprep.mubr.bf16.mxu0 %v1901
        %2805 = vmatmul.mubr.bf16.gmra.mrb[0].mxu0 %v1900
        %v2806 = vpop.f32.mrb[0].mxu0
        %v2807 = vadd.f32 %v2646, %v2806
        %v2808 = vpop.f32.mrb[0].mxu0
        %v2809 = vpop.f32.mrb[0].mxu0
        %v2810 = vadd.f32 %v2649, %v2809
        %v2811 = vpop.f32.mrb[0].mxu0
        %2812 = vmatprep.mubr.bf16.mxu0 %v1910
        %2813 = vmatmul.mubr.bf16.gmra.mrb[0].mxu0 %v1909
        %v2814 = vpop.f32.mrb[0].mxu0
        %v2815 = vadd.f32 %v2654, %v2814
        %v2816 = vpop.f32.mrb[0].mxu0
        %v2817 = vpop.f32.mrb[0].mxu0
        %v2818 = vadd.f32 %v2657, %v2817
        %v2819 = vpop.f32.mrb[0].mxu0
        %2820 = vmatprep.mubr.bf16.mxu0 %v1919
        %2821 = vmatmul.mubr.bf16.gmra.mrb[0].mxu0 %v1918
        %v2822 = vpop.f32.mrb[0].mxu0
        %v2823 = vadd.f32 %v2662, %v2822
        %v2824 = vpop.f32.mrb[0].mxu0
        %v2825 = vpop.f32.mrb[0].mxu0
        %v2826 = vadd.f32 %v2665, %v2825
        %v2827 = vpop.f32.mrb[0].mxu0
        %2828 = vmatprep.mubr.bf16.mxu0 %v1928
        %2829 = vmatmul.mubr.bf16.gmra.mrb[0].mxu0 %v1927
        %v2830 = vpop.f32.mrb[0].mxu0
        %v2831 = vadd.f32 %v2670, %v2830
        %v2832 = vpop.f32.mrb[0].mxu0
        %v2833 = vpop.f32.mrb[0].mxu0
        %v2834 = vadd.f32 %v2673, %v2833
        %v2835 = vpop.f32.mrb[0].mxu0
        %2836 = vmatprep.mubr.bf16.mxu0 %v1937
        %2837 = vmatmul.mubr.bf16.gmra.mrb[0].mxu0 %v1936
        %v2838 = vpop.f32.mrb[0].mxu0
        %v2839 = vadd.f32 %v2678, %v2838
        %v2840 = vpop.f32.mrb[0].mxu0
        %v2841 = vpop.f32.mrb[0].mxu0
        %v2842 = vadd.f32 %v2681, %v2841
        %v2843 = vpop.f32.mrb[0].mxu0
        %2844 = vmatprep.mubr.bf16.mxu0 %v1946
        %2845 = vmatmul.mubr.bf16.gmra.mrb[0].mxu0 %v1945
        %v2846 = vpop.f32.mrb[0].mxu0
        %v2847 = vadd.f32 %v2686, %v2846
        %v2848 = vpop.f32.mrb[0].mxu0
        %v2849 = vpop.f32.mrb[0].mxu0
        %v2850 = vadd.f32 %v2689, %v2849
        %v2851 = vpop.f32.mrb[0].mxu0
        %2852 = vmatprep.mubr.bf16.mxu0 %v1955
        %2853 = vmatmul.mubr.bf16.gmra.mrb[0].mxu0 %v1954
        %v2854 = vpop.f32.mrb[0].mxu0
        %v2855 = vadd.f32 %v2694, %v2854
        %v2856 = vpop.f32.mrb[0].mxu0
        %v2857 = vpop.f32.mrb[0].mxu0
        %v2858 = vadd.f32 %v2697, %v2857
        %v2859 = vpop.f32.mrb[0].mxu0
        %2860 = vmatprep.mubr.bf16.mxu0 %v1964
        %2861 = vmatmul.mubr.bf16.gmra.mrb[0].mxu0 %v1963
        %v2862 = vpop.f32.mrb[0].mxu0
        %v2863 = vadd.f32 %v2702, %v2862
        %v2864 = vpop.f32.mrb[0].mxu0
        %v2865 = vpop.f32.mrb[0].mxu0
        %v2866 = vadd.f32 %v2705, %v2865
        %v2867 = vpop.f32.mrb[0].mxu0
        %2868 = vmatprep.mubr.bf16.mxu0 %v1973
        %2869 = vmatmul.mubr.bf16.gmra.mrb[0].mxu0 %v1972
        %v2870 = vpop.f32.mrb[0].mxu0
        %v2871 = vadd.f32 %v2710, %v2870
        %v2872 = vpop.f32.mrb[0].mxu0
        %v2873 = vpop.f32.mrb[0].mxu0
        %v2874 = vadd.f32 %v2713, %v2873
        %v2875 = vpop.f32.mrb[0].mxu0
        %2876 = vdwg.mxu0
        %2877 = vmatprep.subr.bf16.mxu0 0
        %2878 = vmatpush1.bf16.msra.mxu0 %v2443
        %2879 = vmatprep.subr.bf16.mxu0 0
        %2880 = vmatpush1.bf16.msra.mxu0 %v2444
        %2881 = vmatprep.subr.bf16.mxu0 0
        %2882 = vmatpush1.bf16.msra.mxu0 %v2445
        %2883 = vmatprep.subr.bf16.mxu0 0
        %2884 = vmatpush1.bf16.msra.mxu0 %v2446
        %2885 = vmatprep.subr.bf16.mxu0 0
        %2886 = vmatpush1.bf16.msra.mxu0 %v2447
        %2887 = vmatprep.subr.bf16.mxu0 0
        %2888 = vmatpush1.bf16.msra.mxu0 %v2448
        %2889 = vmatprep.subr.bf16.mxu0 0
        %2890 = vmatpush1.bf16.msra.mxu0 %v2449
        %2891 = vmatprep.subr.bf16.mxu0 0
        %2892 = vmatpush1.bf16.msra.mxu0 %v2450
        %2893 = vmatprep.subr.bf16.mxu0 0
        %2894 = vmatpush1.bf16.msra.mxu0 %v2451
        %2895 = vmatprep.subr.bf16.mxu0 0
        %2896 = vmatpush1.bf16.msra.mxu0 %v2452
        %2897 = vmatprep.subr.bf16.mxu0 0
        %2898 = vmatpush1.bf16.msra.mxu0 %v2453
        %2899 = vmatprep.subr.bf16.mxu0 0
        %2900 = vmatpush1.bf16.msra.mxu0 %v2454
        %2901 = vmatprep.subr.bf16.mxu0 0
        %2902 = vmatpush1.bf16.msra.mxu0 %v2455
        %2903 = vmatprep.subr.bf16.mxu0 0
        %2904 = vmatpush1.bf16.msra.mxu0 %v2456
        %2905 = vmatprep.subr.bf16.mxu0 0
        %2906 = vmatpush1.bf16.msra.mxu0 %v2457
        %2907 = vmatprep.subr.bf16.mxu0 0
        %2908 = vmatpush1.bf16.msra.mxu0 %v2458
        %2909 = vmatprep.mubr.bf16.mxu0 %v1840
        %2910 = vmatmul.mubr.bf16.gmra.mrb[0].mxu0 %v1839
        %v2911 = vpop.f32.mrb[0].mxu0
        %v2912 = vadd.f32 %v2751, %v2911
        %v2913 = vpop.f32.mrb[0].mxu0
        %v2914 = vpop.f32.mrb[0].mxu0
        %v2915 = vadd.f32 %v2754, %v2914
        %v2916 = vpop.f32.mrb[0].mxu0
        %2917 = vmatprep.mubr.bf16.mxu0 %v1849
        %2918 = vmatmul.mubr.bf16.gmra.mrb[0].mxu0 %v1848
        %v2919 = vpop.f32.mrb[0].mxu0
        %v2920 = vadd.f32 %v2759, %v2919
        %v2921 = vpop.f32.mrb[0].mxu0
        %v2922 = vpop.f32.mrb[0].mxu0
        %v2923 = vadd.f32 %v2762, %v2922
        %v2924 = vpop.f32.mrb[0].mxu0
        %2925 = vmatprep.mubr.bf16.mxu0 %v1858
        %2926 = vmatmul.mubr.bf16.gmra.mrb[0].mxu0 %v1857
        %v2927 = vpop.f32.mrb[0].mxu0
        %v2928 = vadd.f32 %v2767, %v2927
        %v2929 = vpop.f32.mrb[0].mxu0
        %v2930 = vpop.f32.mrb[0].mxu0
        %v2931 = vadd.f32 %v2770, %v2930
        %v2932 = vpop.f32.mrb[0].mxu0
        %2933 = vmatprep.mubr.bf16.mxu0 %v1867
        %2934 = vmatmul.mubr.bf16.gmra.mrb[0].mxu0 %v1866
        %v2935 = vpop.f32.mrb[0].mxu0
        %v2936 = vadd.f32 %v2775, %v2935
        %v2937 = vpop.f32.mrb[0].mxu0
        %v2938 = vpop.f32.mrb[0].mxu0
        %v2939 = vadd.f32 %v2778, %v2938
        %v2940 = vpop.f32.mrb[0].mxu0
        %2941 = vmatprep.mubr.bf16.mxu0 %v1876
        %2942 = vmatmul.mubr.bf16.gmra.mrb[0].mxu0 %v1875
        %v2943 = vpop.f32.mrb[0].mxu0
        %v2944 = vadd.f32 %v2783, %v2943
        %v2945 = vpop.f32.mrb[0].mxu0
        %v2946 = vpop.f32.mrb[0].mxu0
        %v2947 = vadd.f32 %v2786, %v2946
        %v2948 = vpop.f32.mrb[0].mxu0
        %2949 = vmatprep.mubr.bf16.mxu0 %v1885
        %2950 = vmatmul.mubr.bf16.gmra.mrb[0].mxu0 %v1884
        %v2951 = vpop.f32.mrb[0].mxu0
        %v2952 = vadd.f32 %v2791, %v2951
        %v2953 = vpop.f32.mrb[0].mxu0
        %v2954 = vpop.f32.mrb[0].mxu0
        %v2955 = vadd.f32 %v2794, %v2954
        %v2956 = vpop.f32.mrb[0].mxu0
        %2957 = vmatprep.mubr.bf16.mxu0 %v1894
        %2958 = vmatmul.mubr.bf16.gmra.mrb[0].mxu0 %v1893
        %v2959 = vpop.f32.mrb[0].mxu0
        %v2960 = vadd.f32 %v2799, %v2959
        %v2961 = vpop.f32.mrb[0].mxu0
        %v2962 = vpop.f32.mrb[0].mxu0
        %v2963 = vadd.f32 %v2802, %v2962
        %v2964 = vpop.f32.mrb[0].mxu0
        %2965 = vmatprep.mubr.bf16.mxu0 %v1903
        %2966 = vmatmul.mubr.bf16.gmra.mrb[0].mxu0 %v1902
        %v2967 = vpop.f32.mrb[0].mxu0
        %v2968 = vadd.f32 %v2807, %v2967
        %v2969 = vpop.f32.mrb[0].mxu0
        %v2970 = vpop.f32.mrb[0].mxu0
        %v2971 = vadd.f32 %v2810, %v2970
        %v2972 = vpop.f32.mrb[0].mxu0
        %2973 = vmatprep.mubr.bf16.mxu0 %v1912
        %2974 = vmatmul.mubr.bf16.gmra.mrb[0].mxu0 %v1911
        %v2975 = vpop.f32.mrb[0].mxu0
        %v2976 = vadd.f32 %v2815, %v2975
        %v2977 = vpop.f32.mrb[0].mxu0
        %v2978 = vpop.f32.mrb[0].mxu0
        %v2979 = vadd.f32 %v2818, %v2978
        %v2980 = vpop.f32.mrb[0].mxu0
        %2981 = vmatprep.mubr.bf16.mxu0 %v1921
        %2982 = vmatmul.mubr.bf16.gmra.mrb[0].mxu0 %v1920
        %v2983 = vpop.f32.mrb[0].mxu0
        %v2984 = vadd.f32 %v2823, %v2983
        %v2985 = vpop.f32.mrb[0].mxu0
        %v2986 = vpop.f32.mrb[0].mxu0
        %v2987 = vadd.f32 %v2826, %v2986
        %v2988 = vpop.f32.mrb[0].mxu0
        %2989 = vmatprep.mubr.bf16.mxu0 %v1930
        %2990 = vmatmul.mubr.bf16.gmra.mrb[0].mxu0 %v1929
        %v2991 = vpop.f32.mrb[0].mxu0
        %v2992 = vadd.f32 %v2831, %v2991
        %v2993 = vpop.f32.mrb[0].mxu0
        %v2994 = vpop.f32.mrb[0].mxu0
        %v2995 = vadd.f32 %v2834, %v2994
        %v2996 = vpop.f32.mrb[0].mxu0
        %2997 = vmatprep.mubr.bf16.mxu0 %v1939
        %2998 = vmatmul.mubr.bf16.gmra.mrb[0].mxu0 %v1938
        %v2999 = vpop.f32.mrb[0].mxu0
        %v3000 = vadd.f32 %v2839, %v2999
        %v3001 = vpop.f32.mrb[0].mxu0
        %v3002 = vpop.f32.mrb[0].mxu0
        %v3003 = vadd.f32 %v2842, %v3002
        %v3004 = vpop.f32.mrb[0].mxu0
        %3005 = vmatprep.mubr.bf16.mxu0 %v1948
        %3006 = vmatmul.mubr.bf16.gmra.mrb[0].mxu0 %v1947
        %v3007 = vpop.f32.mrb[0].mxu0
        %v3008 = vadd.f32 %v2847, %v3007
        %v3009 = vpop.f32.mrb[0].mxu0
        %v3010 = vpop.f32.mrb[0].mxu0
        %v3011 = vadd.f32 %v2850, %v3010
        %v3012 = vpop.f32.mrb[0].mxu0
        %3013 = vmatprep.mubr.bf16.mxu0 %v1957
        %3014 = vmatmul.mubr.bf16.gmra.mrb[0].mxu0 %v1956
        %v3015 = vpop.f32.mrb[0].mxu0
        %v3016 = vadd.f32 %v2855, %v3015
        %v3017 = vpop.f32.mrb[0].mxu0
        %v3018 = vpop.f32.mrb[0].mxu0
        %v3019 = vadd.f32 %v2858, %v3018
        %v3020 = vpop.f32.mrb[0].mxu0
        %3021 = vmatprep.mubr.bf16.mxu0 %v1966
        %3022 = vmatmul.mubr.bf16.gmra.mrb[0].mxu0 %v1965
        %v3023 = vpop.f32.mrb[0].mxu0
        %v3024 = vadd.f32 %v2863, %v3023
        %v3025 = vpop.f32.mrb[0].mxu0
        %v3026 = vpop.f32.mrb[0].mxu0
        %v3027 = vadd.f32 %v2866, %v3026
        %v3028 = vpop.f32.mrb[0].mxu0
        %3029 = vmatprep.mubr.bf16.mxu0 %v1975
        %3030 = vmatmul.mubr.bf16.gmra.mrb[0].mxu0 %v1974
        %v3031 = vpop.f32.mrb[0].mxu0
        %v3032 = vadd.f32 %v2871, %v3031
        %v3033 = vpop.f32.mrb[0].mxu0
        %v3034 = vpop.f32.mrb[0].mxu0
        %v3035 = vadd.f32 %v2874, %v3034
        %v3036 = vpop.f32.mrb[0].mxu0
        %3037 = vdwg.mxu0
        %3038 = vmatprep.subr.bf16.mxu0 0
        %3039 = vmatpush1.bf16.msra.mxu0 %v2459
        %3040 = vmatprep.subr.bf16.mxu0 0
        %3041 = vmatpush1.bf16.msra.mxu0 %v2460
        %3042 = vmatprep.subr.bf16.mxu0 0
        %3043 = vmatpush1.bf16.msra.mxu0 %v2461
        %3044 = vmatprep.subr.bf16.mxu0 0
        %3045 = vmatpush1.bf16.msra.mxu0 %v2462
        %3046 = vmatprep.subr.bf16.mxu0 0
        %3047 = vmatpush1.bf16.msra.mxu0 %v2463
        %3048 = vmatprep.subr.bf16.mxu0 0
        %3049 = vmatpush1.bf16.msra.mxu0 %v2464
        %3050 = vmatprep.subr.bf16.mxu0 0
        %3051 = vmatpush1.bf16.msra.mxu0 %v2465
        %3052 = vmatprep.subr.bf16.mxu0 0
        %3053 = vmatpush1.bf16.msra.mxu0 %v2466
        %3054 = vmatprep.subr.bf16.mxu0 0
        %3055 = vmatpush1.bf16.msra.mxu0 %v2467
        %3056 = vmatprep.subr.bf16.mxu0 0
        %3057 = vmatpush1.bf16.msra.mxu0 %v2468
        %3058 = vmatprep.subr.bf16.mxu0 0
        %3059 = vmatpush1.bf16.msra.mxu0 %v2469
        %3060 = vmatprep.subr.bf16.mxu0 0
        %3061 = vmatpush1.bf16.msra.mxu0 %v2470
        %3062 = vmatprep.subr.bf16.mxu0 0
        %3063 = vmatpush1.bf16.msra.mxu0 %v2471
        %3064 = vmatprep.subr.bf16.mxu0 0
        %3065 = vmatpush1.bf16.msra.mxu0 %v2472
        %3066 = vmatprep.subr.bf16.mxu0 0
        %3067 = vmatpush1.bf16.msra.mxu0 %v2473
        %3068 = vmatprep.subr.bf16.mxu0 0
        %3069 = vmatpush1.bf16.msra.mxu0 %v2474
        %3070 = vmatprep.mubr.bf16.mxu0 %v1842
        %3071 = vmatmul.mubr.bf16.gmra.mrb[0].mxu0 %v1841
        %v3072 = vpop.f32.mrb[0].mxu0
        %v3073 = vadd.f32 %v2912, %v3072
        %v3074 = vpop.f32.mrb[0].mxu0
        %v3075 = vpop.f32.mrb[0].mxu0
        %v3076 = vadd.f32 %v2915, %v3075
        %v3077 = vpop.f32.mrb[0].mxu0
        %3078 = vmatprep.mubr.bf16.mxu0 %v1851
        %3079 = vmatmul.mubr.bf16.gmra.mrb[0].mxu0 %v1850
        %v3080 = vpop.f32.mrb[0].mxu0
        %v3081 = vadd.f32 %v2920, %v3080
        %v3082 = vpop.f32.mrb[0].mxu0
        %v3083 = vpop.f32.mrb[0].mxu0
        %v3084 = vadd.f32 %v2923, %v3083
        %v3085 = vpop.f32.mrb[0].mxu0
        %3086 = vmatprep.mubr.bf16.mxu0 %v1860
        %3087 = vmatmul.mubr.bf16.gmra.mrb[0].mxu0 %v1859
        %v3088 = vpop.f32.mrb[0].mxu0
        %v3089 = vadd.f32 %v2928, %v3088
        %v3090 = vpop.f32.mrb[0].mxu0
        %v3091 = vpop.f32.mrb[0].mxu0
        %v3092 = vadd.f32 %v2931, %v3091
        %v3093 = vpop.f32.mrb[0].mxu0
        %3094 = vmatprep.mubr.bf16.mxu0 %v1869
        %3095 = vmatmul.mubr.bf16.gmra.mrb[0].mxu0 %v1868
        %v3096 = vpop.f32.mrb[0].mxu0
        %v3097 = vadd.f32 %v2936, %v3096
        %v3098 = vpop.f32.mrb[0].mxu0
        %v3099 = vpop.f32.mrb[0].mxu0
        %v3100 = vadd.f32 %v2939, %v3099
        %v3101 = vpop.f32.mrb[0].mxu0
        %3102 = vmatprep.mubr.bf16.mxu0 %v1878
        %3103 = vmatmul.mubr.bf16.gmra.mrb[0].mxu0 %v1877
        %v3104 = vpop.f32.mrb[0].mxu0
        %v3105 = vadd.f32 %v2944, %v3104
        %v3106 = vpop.f32.mrb[0].mxu0
        %v3107 = vpop.f32.mrb[0].mxu0
        %v3108 = vadd.f32 %v2947, %v3107
        %v3109 = vpop.f32.mrb[0].mxu0
        %3110 = vmatprep.mubr.bf16.mxu0 %v1887
        %3111 = vmatmul.mubr.bf16.gmra.mrb[0].mxu0 %v1886
        %v3112 = vpop.f32.mrb[0].mxu0
        %v3113 = vadd.f32 %v2952, %v3112
        %v3114 = vpop.f32.mrb[0].mxu0
        %v3115 = vpop.f32.mrb[0].mxu0
        %v3116 = vadd.f32 %v2955, %v3115
        %v3117 = vpop.f32.mrb[0].mxu0
        %3118 = vmatprep.mubr.bf16.mxu0 %v1896
        %3119 = vmatmul.mubr.bf16.gmra.mrb[0].mxu0 %v1895
        %v3120 = vpop.f32.mrb[0].mxu0
        %v3121 = vadd.f32 %v2960, %v3120
        %v3122 = vpop.f32.mrb[0].mxu0
        %v3123 = vpop.f32.mrb[0].mxu0
        %v3124 = vadd.f32 %v2963, %v3123
        %v3125 = vpop.f32.mrb[0].mxu0
        %3126 = vmatprep.mubr.bf16.mxu0 %v1905
        %3127 = vmatmul.mubr.bf16.gmra.mrb[0].mxu0 %v1904
        %v3128 = vpop.f32.mrb[0].mxu0
        %v3129 = vadd.f32 %v2968, %v3128
        %v3130 = vpop.f32.mrb[0].mxu0
        %v3131 = vpop.f32.mrb[0].mxu0
        %v3132 = vadd.f32 %v2971, %v3131
        %v3133 = vpop.f32.mrb[0].mxu0
        %3134 = vmatprep.mubr.bf16.mxu0 %v1914
        %3135 = vmatmul.mubr.bf16.gmra.mrb[0].mxu0 %v1913
        %v3136 = vpop.f32.mrb[0].mxu0
        %v3137 = vadd.f32 %v2976, %v3136
        %v3138 = vpop.f32.mrb[0].mxu0
        %v3139 = vpop.f32.mrb[0].mxu0
        %v3140 = vadd.f32 %v2979, %v3139
        %v3141 = vpop.f32.mrb[0].mxu0
        %3142 = vmatprep.mubr.bf16.mxu0 %v1923
        %3143 = vmatmul.mubr.bf16.gmra.mrb[0].mxu0 %v1922
        %v3144 = vpop.f32.mrb[0].mxu0
        %v3145 = vadd.f32 %v2984, %v3144
        %v3146 = vpop.f32.mrb[0].mxu0
        %v3147 = vpop.f32.mrb[0].mxu0
        %v3148 = vadd.f32 %v2987, %v3147
        %v3149 = vpop.f32.mrb[0].mxu0
        %3150 = vmatprep.mubr.bf16.mxu0 %v1932
        %3151 = vmatmul.mubr.bf16.gmra.mrb[0].mxu0 %v1931
        %v3152 = vpop.f32.mrb[0].mxu0
        %v3153 = vadd.f32 %v2992, %v3152
        %v3154 = vpop.f32.mrb[0].mxu0
        %v3155 = vpop.f32.mrb[0].mxu0
        %v3156 = vadd.f32 %v2995, %v3155
        %v3157 = vpop.f32.mrb[0].mxu0
        %3158 = vmatprep.mubr.bf16.mxu0 %v1941
        %3159 = vmatmul.mubr.bf16.gmra.mrb[0].mxu0 %v1940
        %v3160 = vpop.f32.mrb[0].mxu0
        %v3161 = vadd.f32 %v3000, %v3160
        %v3162 = vpop.f32.mrb[0].mxu0
        %v3163 = vpop.f32.mrb[0].mxu0
        %v3164 = vadd.f32 %v3003, %v3163
        %v3165 = vpop.f32.mrb[0].mxu0
        %3166 = vmatprep.mubr.bf16.mxu0 %v1950
        %3167 = vmatmul.mubr.bf16.gmra.mrb[0].mxu0 %v1949
        %v3168 = vpop.f32.mrb[0].mxu0
        %v3169 = vadd.f32 %v3008, %v3168
        %v3170 = vpop.f32.mrb[0].mxu0
        %v3171 = vpop.f32.mrb[0].mxu0
        %v3172 = vadd.f32 %v3011, %v3171
        %v3173 = vpop.f32.mrb[0].mxu0
        %3174 = vmatprep.mubr.bf16.mxu0 %v1959
        %3175 = vmatmul.mubr.bf16.gmra.mrb[0].mxu0 %v1958
        %v3176 = vpop.f32.mrb[0].mxu0
        %v3177 = vadd.f32 %v3016, %v3176
        %v3178 = vpop.f32.mrb[0].mxu0
        %v3179 = vpop.f32.mrb[0].mxu0
        %v3180 = vadd.f32 %v3019, %v3179
        %v3181 = vpop.f32.mrb[0].mxu0
        %3182 = vmatprep.mubr.bf16.mxu0 %v1968
        %3183 = vmatmul.mubr.bf16.gmra.mrb[0].mxu0 %v1967
        %v3184 = vpop.f32.mrb[0].mxu0
        %v3185 = vadd.f32 %v3024, %v3184
        %v3186 = vpop.f32.mrb[0].mxu0
        %v3187 = vpop.f32.mrb[0].mxu0
        %v3188 = vadd.f32 %v3027, %v3187
        %v3189 = vpop.f32.mrb[0].mxu0
        %3190 = vmatprep.mubr.bf16.mxu0 %v1977
        %3191 = vmatmul.mubr.bf16.gmra.mrb[0].mxu0 %v1976
        %v3192 = vpop.f32.mrb[0].mxu0
        %v3193 = vadd.f32 %v3032, %v3192
        %v3194 = vpop.f32.mrb[0].mxu0
        %v3195 = vpop.f32.mrb[0].mxu0
        %v3196 = vadd.f32 %v3035, %v3195
        %v3197 = vpop.f32.mrb[0].mxu0
        %3198 = vdwg.mxu0
        %3199 = vmatprep.subr.bf16.mxu0 0
        %3200 = vmatpush1.bf16.msra.mxu0 %v2475
        %3201 = vmatprep.subr.bf16.mxu0 0
        %3202 = vmatpush1.bf16.msra.mxu0 %v2476
        %3203 = vmatprep.subr.bf16.mxu0 0
        %3204 = vmatpush1.bf16.msra.mxu0 %v2477
        %3205 = vmatprep.subr.bf16.mxu0 0
        %3206 = vmatpush1.bf16.msra.mxu0 %v2478
        %3207 = vmatprep.subr.bf16.mxu0 0
        %3208 = vmatpush1.bf16.msra.mxu0 %v2479
        %3209 = vmatprep.subr.bf16.mxu0 0
        %3210 = vmatpush1.bf16.msra.mxu0 %v2480
        %3211 = vmatprep.subr.bf16.mxu0 0
        %3212 = vmatpush1.bf16.msra.mxu0 %v2481
        %3213 = vmatprep.subr.bf16.mxu0 0
        %3214 = vmatpush1.bf16.msra.mxu0 %v2482
        %3215 = vmatprep.subr.bf16.mxu0 0
        %3216 = vmatpush1.bf16.msra.mxu0 0
        %3217 = vmatprep.subr.bf16.mxu0 0
        %3218 = vmatpush1.bf16.msra.mxu0 0
        %3219 = vmatprep.subr.bf16.mxu0 0
        %3220 = vmatpush1.bf16.msra.mxu0 0
        %3221 = vmatprep.subr.bf16.mxu0 0
        %3222 = vmatpush1.bf16.msra.mxu0 0
        %3223 = vmatprep.subr.bf16.mxu0 0
        %3224 = vmatpush1.bf16.msra.mxu0 0
        %3225 = vmatprep.subr.bf16.mxu0 0
        %3226 = vmatpush1.bf16.msra.mxu0 0
        %3227 = vmatprep.subr.bf16.mxu0 0
        %3228 = vmatpush1.bf16.msra.mxu0 0
        %3229 = vmatprep.subr.bf16.mxu0 0
        %3230 = vmatpush1.bf16.msra.mxu0 0
        %3231 = vmatprep.mubr.bf16.mxu0 0
        %3232 = vmatmul.mubr.bf16.gmra.mrb[0].mxu0 %v1843
        %v3233 = vpop.f32.mrb[0].mxu0
        %v3234 = vadd.f32 %v3073, %v3233
        %v3235 = vpop.f32.mrb[0].mxu0
        %v3236 = vpop.f32.mrb[0].mxu0
        %v3237 = vadd.f32 %v3076, %v3236
        %v3238 = vpop.f32.mrb[0].mxu0
        %3239 = vmatprep.mubr.bf16.mxu0 0
        %3240 = vmatmul.mubr.bf16.gmra.mrb[0].mxu0 %v1852
        %v3241 = vpop.f32.mrb[0].mxu0
        %v3242 = vadd.f32 %v3081, %v3241
        %v3243 = vpop.f32.mrb[0].mxu0
        %v3244 = vpop.f32.mrb[0].mxu0
        %v3245 = vadd.f32 %v3084, %v3244
        %v3246 = vpop.f32.mrb[0].mxu0
        %3247 = vmatprep.mubr.bf16.mxu0 0
        %3248 = vmatmul.mubr.bf16.gmra.mrb[0].mxu0 %v1861
        %v3249 = vpop.f32.mrb[0].mxu0
        %v3250 = vadd.f32 %v3089, %v3249
        %v3251 = vpop.f32.mrb[0].mxu0
        %v3252 = vpop.f32.mrb[0].mxu0
        %v3253 = vadd.f32 %v3092, %v3252
        %v3254 = vpop.f32.mrb[0].mxu0
        %3255 = vmatprep.mubr.bf16.mxu0 0
        %3256 = vmatmul.mubr.bf16.gmra.mrb[0].mxu0 %v1870
        %v3257 = vpop.f32.mrb[0].mxu0
        %v3258 = vadd.f32 %v3097, %v3257
        %v3259 = vpop.f32.mrb[0].mxu0
        %v3260 = vpop.f32.mrb[0].mxu0
        %v3261 = vadd.f32 %v3100, %v3260
        %v3262 = vpop.f32.mrb[0].mxu0
        %3263 = vmatprep.mubr.bf16.mxu0 0
        %3264 = vmatmul.mubr.bf16.gmra.mrb[0].mxu0 %v1879
        %v3265 = vpop.f32.mrb[0].mxu0
        %v3266 = vadd.f32 %v3105, %v3265
        %v3267 = vpop.f32.mrb[0].mxu0
        %v3268 = vpop.f32.mrb[0].mxu0
        %v3269 = vadd.f32 %v3108, %v3268
        %v3270 = vpop.f32.mrb[0].mxu0
        %3271 = vmatprep.mubr.bf16.mxu0 0
        %3272 = vmatmul.mubr.bf16.gmra.mrb[0].mxu0 %v1888
        %v3273 = vpop.f32.mrb[0].mxu0
        %v3274 = vadd.f32 %v3113, %v3273
        %v3275 = vpop.f32.mrb[0].mxu0
        %v3276 = vpop.f32.mrb[0].mxu0
        %v3277 = vadd.f32 %v3116, %v3276
        %v3278 = vpop.f32.mrb[0].mxu0
        %3279 = vmatprep.mubr.bf16.mxu0 0
        %3280 = vmatmul.mubr.bf16.gmra.mrb[0].mxu0 %v1897
        %v3281 = vpop.f32.mrb[0].mxu0
        %v3282 = vadd.f32 %v3121, %v3281
        %v3283 = vpop.f32.mrb[0].mxu0
        %v3284 = vpop.f32.mrb[0].mxu0
        %v3285 = vadd.f32 %v3124, %v3284
        %v3286 = vpop.f32.mrb[0].mxu0
        %3287 = vmatprep.mubr.bf16.mxu0 0
        %3288 = vmatmul.mubr.bf16.gmra.mrb[0].mxu0 %v1906
        %v3289 = vpop.f32.mrb[0].mxu0
        %v3290 = vadd.f32 %v3129, %v3289
        %v3291 = vpop.f32.mrb[0].mxu0
        %v3292 = vpop.f32.mrb[0].mxu0
        %v3293 = vadd.f32 %v3132, %v3292
        %v3294 = vpop.f32.mrb[0].mxu0
        %3295 = vmatprep.mubr.bf16.mxu0 0
        %3296 = vmatmul.mubr.bf16.gmra.mrb[0].mxu0 %v1915
        %v3297 = vpop.f32.mrb[0].mxu0
        %v3298 = vadd.f32 %v3137, %v3297
        %v3299 = vpop.f32.mrb[0].mxu0
        %v3300 = vpop.f32.mrb[0].mxu0
        %v3301 = vadd.f32 %v3140, %v3300
        %v3302 = vpop.f32.mrb[0].mxu0
        %3303 = vmatprep.mubr.bf16.mxu0 0
        %3304 = vmatmul.mubr.bf16.gmra.mrb[0].mxu0 %v1924
        %v3305 = vpop.f32.mrb[0].mxu0
        %v3306 = vadd.f32 %v3145, %v3305
        %v3307 = vpop.f32.mrb[0].mxu0
        %v3308 = vpop.f32.mrb[0].mxu0
        %v3309 = vadd.f32 %v3148, %v3308
        %v3310 = vpop.f32.mrb[0].mxu0
        %3311 = vmatprep.mubr.bf16.mxu0 0
        %3312 = vmatmul.mubr.bf16.gmra.mrb[0].mxu0 %v1933
        %v3313 = vpop.f32.mrb[0].mxu0
        %v3314 = vadd.f32 %v3153, %v3313
        %v3315 = vpop.f32.mrb[0].mxu0
        %v3316 = vpop.f32.mrb[0].mxu0
        %v3317 = vadd.f32 %v3156, %v3316
        %v3318 = vpop.f32.mrb[0].mxu0
        %3319 = vmatprep.mubr.bf16.mxu0 0
        %3320 = vmatmul.mubr.bf16.gmra.mrb[0].mxu0 %v1942
        %v3321 = vpop.f32.mrb[0].mxu0
        %v3322 = vadd.f32 %v3161, %v3321
        %v3323 = vpop.f32.mrb[0].mxu0
        %v3324 = vpop.f32.mrb[0].mxu0
        %v3325 = vadd.f32 %v3164, %v3324
        %v3326 = vpop.f32.mrb[0].mxu0
        %3327 = vmatprep.mubr.bf16.mxu0 0
        %3328 = vmatmul.mubr.bf16.gmra.mrb[0].mxu0 %v1951
        %v3329 = vpop.f32.mrb[0].mxu0
        %v3330 = vadd.f32 %v3169, %v3329
        %v3331 = vpop.f32.mrb[0].mxu0
        %v3332 = vpop.f32.mrb[0].mxu0
        %v3333 = vadd.f32 %v3172, %v3332
        %v3334 = vpop.f32.mrb[0].mxu0
        %3335 = vmatprep.mubr.bf16.mxu0 0
        %3336 = vmatmul.mubr.bf16.gmra.mrb[0].mxu0 %v1960
        %v3337 = vpop.f32.mrb[0].mxu0
        %v3338 = vadd.f32 %v3177, %v3337
        %v3339 = vpop.f32.mrb[0].mxu0
        %v3340 = vpop.f32.mrb[0].mxu0
        %v3341 = vadd.f32 %v3180, %v3340
        %v3342 = vpop.f32.mrb[0].mxu0
        %3343 = vmatprep.mubr.bf16.mxu0 0
        %3344 = vmatmul.mubr.bf16.gmra.mrb[0].mxu0 %v1969
        %v3345 = vpop.f32.mrb[0].mxu0
        %v3346 = vadd.f32 %v3185, %v3345
        %v3347 = vpop.f32.mrb[0].mxu0
        %v3348 = vpop.f32.mrb[0].mxu0
        %v3349 = vadd.f32 %v3188, %v3348
        %v3350 = vpop.f32.mrb[0].mxu0
        %3351 = vmatprep.mubr.bf16.mxu0 0
        %3352 = vmatmul.mubr.bf16.gmra.mrb[0].mxu0 %v1978
        %v3353 = vpop.f32.mrb[0].mxu0
        %v3354 = vadd.f32 %v3193, %v3353
        %v3355 = vpop.f32.mrb[0].mxu0
        %v3356 = vpop.f32.mrb[0].mxu0
        %v3357 = vadd.f32 %v3196, %v3356
        %v3358 = vpop.f32.mrb[0].mxu0
        %3359 = vdwg.mxu0
        %v3360 = vadd.f32 %v3234, %v3237
        %v3361 = vadd.f32 %v3360, %v3242
        %v3362 = vadd.f32 %v3361, %v3245
        %v3363 = vadd.f32 %v3362, %v3250
        %v3364 = vadd.f32 %v3363, %v3253
        %v3365 = vadd.f32 %v3364, %v3258
        %v3366 = vadd.f32 %v3365, %v3261
        %v3367 = vadd.f32 %v3366, %v3266
        %v3368 = vadd.f32 %v3367, %v3269
        %v3369 = vadd.f32 %v3368, %v3274
        %v3370 = vadd.f32 %v3369, %v3277
        %v3371 = vadd.f32 %v3370, %v3282
        %v3372 = vadd.f32 %v3371, %v3285
        %v3373 = vadd.f32 %v3372, %v3290
        %v3374 = vadd.f32 %v3373, %v3293
        %v3375 = vadd.f32 %v3374, %v3298
        %v3376 = vadd.f32 %v3375, %v3301
        %v3377 = vadd.f32 %v3376, %v3306
        %v3378 = vadd.f32 %v3377, %v3309
        %v3379 = vadd.f32 %v3378, %v3314
        %v3380 = vadd.f32 %v3379, %v3317
        %v3381 = vadd.f32 %v3380, %v3322
        %v3382 = vadd.f32 %v3381, %v3325
        %v3383 = vadd.f32 %v3382, %v3330
        %v3384 = vadd.f32 %v3383, %v3333
        %v3385 = vadd.f32 %v3384, %v3338
        %v3386 = vadd.f32 %v3385, %v3341
        %v3387 = vadd.f32 %v3386, %v3346
        %v3388 = vadd.f32 %v3387, %v3349
        %v3389 = vadd.f32 %v3388, %v3354
        %v3390 = vadd.f32 %v3389, %v3357
        %v3391 = vrot.slane %v3390, 4
        %v3392 = vadd.f32 %v3390, %v3391
        %v3393 = vrot.slane %v3392, 2
        %v3394 = vadd.f32 %v3392, %v3393
        %v3395 = vrot.slane %v3394, 1
        %v3396 = vadd.f32 %v3394, %v3395
        %v3397 = vrcp.pop 256.0
        %v3398 = vmul.f32 %v3396, %v3397
        %v3399 = vmul.f32 %v3234, %v3234
        %v3400 = vmul.f32 %v3237, %v3237
        %v3401 = vmul.f32 %v3242, %v3242
        %v3402 = vmul.f32 %v3245, %v3245
        %v3403 = vmul.f32 %v3250, %v3250
        %v3404 = vmul.f32 %v3253, %v3253
        %v3405 = vmul.f32 %v3258, %v3258
        %v3406 = vmul.f32 %v3261, %v3261
        %v3407 = vmul.f32 %v3266, %v3266
        %v3408 = vmul.f32 %v3269, %v3269
        %v3409 = vmul.f32 %v3274, %v3274
        %v3410 = vmul.f32 %v3277, %v3277
        %v3411 = vmul.f32 %v3282, %v3282
        %v3412 = vmul.f32 %v3285, %v3285
        %v3413 = vmul.f32 %v3290, %v3290
        %v3414 = vmul.f32 %v3293, %v3293
        %v3415 = vmul.f32 %v3298, %v3298
        %v3416 = vmul.f32 %v3301, %v3301
        %v3417 = vmul.f32 %v3306, %v3306
        %v3418 = vmul.f32 %v3309, %v3309
        %v3419 = vmul.f32 %v3314, %v3314
        %v3420 = vmul.f32 %v3317, %v3317
        %v3421 = vmul.f32 %v3322, %v3322
        %v3422 = vmul.f32 %v3325, %v3325
        %v3423 = vmul.f32 %v3330, %v3330
        %v3424 = vmul.f32 %v3333, %v3333
        %v3425 = vmul.f32 %v3338, %v3338
        %v3426 = vmul.f32 %v3341, %v3341
        %v3427 = vmul.f32 %v3346, %v3346
        %v3428 = vmul.f32 %v3349, %v3349
        %v3429 = vmul.f32 %v3354, %v3354
        %v3430 = vmul.f32 %v3357, %v3357
        %v3431 = vadd.f32 %v3399, %v3400
        %v3432 = vadd.f32 %v3431, %v3401
        %v3433 = vadd.f32 %v3432, %v3402
        %v3434 = vadd.f32 %v3433, %v3403
        %v3435 = vadd.f32 %v3434, %v3404
        %v3436 = vadd.f32 %v3435, %v3405
        %v3437 = vadd.f32 %v3436, %v3406
        %v3438 = vadd.f32 %v3437, %v3407
        %v3439 = vadd.f32 %v3438, %v3408
        %v3440 = vadd.f32 %v3439, %v3409
        %v3441 = vadd.f32 %v3440, %v3410
        %v3442 = vadd.f32 %v3441, %v3411
        %v3443 = vadd.f32 %v3442, %v3412
        %v3444 = vadd.f32 %v3443, %v3413
        %v3445 = vadd.f32 %v3444, %v3414
        %v3446 = vadd.f32 %v3445, %v3415
        %v3447 = vadd.f32 %v3446, %v3416
        %v3448 = vadd.f32 %v3447, %v3417
        %v3449 = vadd.f32 %v3448, %v3418
        %v3450 = vadd.f32 %v3449, %v3419
        %v3451 = vadd.f32 %v3450, %v3420
        %v3452 = vadd.f32 %v3451, %v3421
        %v3453 = vadd.f32 %v3452, %v3422
        %v3454 = vadd.f32 %v3453, %v3423
        %v3455 = vadd.f32 %v3454, %v3424
        %v3456 = vadd.f32 %v3455, %v3425
        %v3457 = vadd.f32 %v3456, %v3426
        %v3458 = vadd.f32 %v3457, %v3427
        %v3459 = vadd.f32 %v3458, %v3428
        %v3460 = vadd.f32 %v3459, %v3429
        %v3461 = vadd.f32 %v3460, %v3430
        %v3462 = vrot.slane %v3461, 4
        %v3463 = vadd.f32 %v3461, %v3462
        %v3464 = vrot.slane %v3463, 2
        %v3465 = vadd.f32 %v3463, %v3464
        %v3466 = vrot.slane %v3465, 1
        %v3467 = vadd.f32 %v3465, %v3466
        %v3468 = vmul.f32 %v3467, %v3397
        %v3469 = vmul.f32 %v3398, %v3398
        %v3470 = vsub.f32 %v3468, %v3469
        %v3471 = vsub.f32 %v3234, %v3398
        %v3472 = vsub.f32 %v3237, %v3398
        %v3473 = vsub.f32 %v3242, %v3398
        %v3474 = vsub.f32 %v3245, %v3398
        %v3475 = vsub.f32 %v3250, %v3398
        %v3476 = vsub.f32 %v3253, %v3398
        %v3477 = vsub.f32 %v3258, %v3398
        %v3478 = vsub.f32 %v3261, %v3398
        %v3479 = vsub.f32 %v3266, %v3398
        %v3480 = vsub.f32 %v3269, %v3398
        %v3481 = vsub.f32 %v3274, %v3398
        %v3482 = vsub.f32 %v3277, %v3398
        %v3483 = vsub.f32 %v3282, %v3398
        %v3484 = vsub.f32 %v3285, %v3398
        %v3485 = vsub.f32 %v3290, %v3398
        %v3486 = vsub.f32 %v3293, %v3398
        %v3487 = vsub.f32 %v3298, %v3398
        %v3488 = vsub.f32 %v3301, %v3398
        %v3489 = vsub.f32 %v3306, %v3398
        %v3490 = vsub.f32 %v3309, %v3398
        %v3491 = vsub.f32 %v3314, %v3398
        %v3492 = vsub.f32 %v3317, %v3398
        %v3493 = vsub.f32 %v3322, %v3398
        %v3494 = vsub.f32 %v3325, %v3398
        %v3495 = vsub.f32 %v3330, %v3398
        %v3496 = vsub.f32 %v3333, %v3398
        %v3497 = vsub.f32 %v3338, %v3398
        %v3498 = vsub.f32 %v3341, %v3398
        %v3499 = vsub.f32 %v3346, %v3398
        %v3500 = vsub.f32 %v3349, %v3398
        %v3501 = vsub.f32 %v3354, %v3398
        %v3502 = vsub.f32 %v3357, %v3398
        %v3503 = vadd.f32 %v3470, 1e-05
        %v3504 = vrsqrt.pop %v3503
        %v3505 = vmul.f32 %v3471, %v3504
        %v3506 = vmul.f32 %v3472, %v3504
        %v3507 = vmul.f32 %v3473, %v3504
        %v3508 = vmul.f32 %v3474, %v3504
        %v3509 = vmul.f32 %v3475, %v3504
        %v3510 = vmul.f32 %v3476, %v3504
        %v3511 = vmul.f32 %v3477, %v3504
        %v3512 = vmul.f32 %v3478, %v3504
        %v3513 = vmul.f32 %v3479, %v3504
        %v3514 = vmul.f32 %v3480, %v3504
        %v3515 = vmul.f32 %v3481, %v3504
        %v3516 = vmul.f32 %v3482, %v3504
        %v3517 = vmul.f32 %v3483, %v3504
        %v3518 = vmul.f32 %v3484, %v3504
        %v3519 = vmul.f32 %v3485, %v3504
        %v3520 = vmul.f32 %v3486, %v3504
        %v3521 = vmul.f32 %v3487, %v3504
        %v3522 = vmul.f32 %v3488, %v3504
        %v3523 = vmul.f32 %v3489, %v3504
        %v3524 = vmul.f32 %v3490, %v3504
        %v3525 = vmul.f32 %v3491, %v3504
        %v3526 = vmul.f32 %v3492, %v3504
        %v3527 = vmul.f32 %v3493, %v3504
        %v3528 = vmul.f32 %v3494, %v3504
        %v3529 = vmul.f32 %v3495, %v3504
        %v3530 = vmul.f32 %v3496, %v3504
        %v3531 = vmul.f32 %v3497, %v3504
        %v3532 = vmul.f32 %v3498, %v3504
        %v3533 = vmul.f32 %v3499, %v3504
        %v3534 = vmul.f32 %v3500, %v3504
        %v3535 = vmul.f32 %v3501, %v3504
        %v3536 = vmul.f32 %v3502, %v3504
        %v3537 = vmax.f32 %v3505, 0.0
        %v3538 = vmax.f32 %v3506, 0.0
        %v3539 = vmax.f32 %v3507, 0.0
        %v3540 = vmax.f32 %v3508, 0.0
        %v3541 = vmax.f32 %v3509, 0.0
        %v3542 = vmax.f32 %v3510, 0.0
        %v3543 = vmax.f32 %v3511, 0.0
        %v3544 = vmax.f32 %v3512, 0.0
        %v3545 = vmax.f32 %v3513, 0.0
        %v3546 = vmax.f32 %v3514, 0.0
        %v3547 = vmax.f32 %v3515, 0.0
        %v3548 = vmax.f32 %v3516, 0.0
        %v3549 = vmax.f32 %v3517, 0.0
        %v3550 = vmax.f32 %v3518, 0.0
        %v3551 = vmax.f32 %v3519, 0.0
        %v3552 = vmax.f32 %v3520, 0.0
        %v3553 = vmax.f32 %v3521, 0.0
        %v3554 = vmax.f32 %v3522, 0.0
        %v3555 = vmax.f32 %v3523, 0.0
        %v3556 = vmax.f32 %v3524, 0.0
        %v3557 = vmax.f32 %v3525, 0.0
        %v3558 = vmax.f32 %v3526, 0.0
        %v3559 = vmax.f32 %v3527, 0.0
        %v3560 = vmax.f32 %v3528, 0.0
        %v3561 = vmax.f32 %v3529, 0.0
        %v3562 = vmax.f32 %v3530, 0.0
        %v3563 = vmax.f32 %v3531, 0.0
        %v3564 = vmax.f32 %v3532, 0.0
        %v3565 = vmax.f32 %v3533, 0.0
        %v3566 = vmax.f32 %v3534, 0.0
        %v3567 = vmax.f32 %v3535, 0.0
        %v3568 = vmax.f32 %v3536, 0.0
        %v3569 = vpack.c.bf16 %v3538, %v3537
        %v3570 = vpack.c.bf16 %v3540, %v3539
        %v3571 = vpack.c.bf16 %v3542, %v3541
        %v3572 = vpack.c.bf16 %v3544, %v3543
        %v3573 = vpack.c.bf16 %v3546, %v3545
        %v3574 = vpack.c.bf16 %v3548, %v3547
        %v3575 = vpack.c.bf16 %v3550, %v3549
        %v3576 = vpack.c.bf16 %v3552, %v3551
        %v3577 = vpack.c.bf16 %v3554, %v3553
        %v3578 = vpack.c.bf16 %v3556, %v3555
        %v3579 = vpack.c.bf16 %v3558, %v3557
        %v3580 = vpack.c.bf16 %v3560, %v3559
        %v3581 = vpack.c.bf16 %v3562, %v3561
        %v3582 = vpack.c.bf16 %v3564, %v3563
        %v3583 = vpack.c.bf16 %v3566, %v3565
        %v3584 = vpack.c.bf16 %v3568, %v3567
        %v3586 = vshrl.u32 %v3569, 16
        %v3589 = vshrl.u32 %v3570, 16
        %v3592 = vshrl.u32 %v3571, 16
        %v3595 = vshrl.u32 %v3572, 16
        %v3598 = vshrl.u32 %v3573, 16
        %v3601 = vshrl.u32 %v3574, 16
        %v3604 = vshrl.u32 %v3575, 16
        %v3607 = vshrl.u32 %v3576, 16
        %v3610 = vshrl.u32 %v3577, 16
        %v3613 = vshrl.u32 %v3578, 16
        %v3616 = vshrl.u32 %v3579, 16
        %v3619 = vshrl.u32 %v3580, 16
        %v3622 = vshrl.u32 %v3581, 16
        %v3625 = vshrl.u32 %v3582, 16
        %v3628 = vshrl.u32 %v3583, 16
        %v3631 = vshrl.u32 %v3584, 16
        %v3649 = vrot.slane %v3586, 7
        %v3650 = vshll.u32 %v3569, 16
        %v3652 = vor.u32 %v3649, %v3650
        %v3653 = vrot.slane %v3589, 7
        %v3654 = vshll.u32 %v3570, 16
        %v3656 = vor.u32 %v3653, %v3654
        %v3657 = vrot.slane %v3592, 7
        %v3658 = vshll.u32 %v3571, 16
        %v3660 = vor.u32 %v3657, %v3658
        %v3661 = vrot.slane %v3595, 7
        %v3662 = vshll.u32 %v3572, 16
        %v3664 = vor.u32 %v3661, %v3662
        %v3665 = vrot.slane %v3598, 7
        %v3666 = vshll.u32 %v3573, 16
        %v3668 = vor.u32 %v3665, %v3666
        %v3669 = vrot.slane %v3601, 7
        %v3670 = vshll.u32 %v3574, 16
        %v3672 = vor.u32 %v3669, %v3670
        %v3673 = vrot.slane %v3604, 7
        %v3674 = vshll.u32 %v3575, 16
        %v3676 = vor.u32 %v3673, %v3674
        %v3677 = vrot.slane %v3607, 7
        %v3678 = vshll.u32 %v3576, 16
        %v3680 = vor.u32 %v3677, %v3678
        %v3681 = vrot.slane %v3610, 7
        %v3682 = vshll.u32 %v3577, 16
        %v3684 = vor.u32 %v3681, %v3682
        %v3685 = vrot.slane %v3613, 7
        %v3686 = vshll.u32 %v3578, 16
        %v3688 = vor.u32 %v3685, %v3686
        %v3689 = vrot.slane %v3616, 7
        %v3690 = vshll.u32 %v3579, 16
        %v3692 = vor.u32 %v3689, %v3690
        %v3693 = vrot.slane %v3619, 7
        %v3694 = vshll.u32 %v3580, 16
        %v3696 = vor.u32 %v3693, %v3694
        %v3697 = vrot.slane %v3622, 7
        %v3698 = vshll.u32 %v3581, 16
        %v3700 = vor.u32 %v3697, %v3698
        %v3701 = vrot.slane %v3625, 7
        %v3702 = vshll.u32 %v3582, 16
        %v3704 = vor.u32 %v3701, %v3702
        %v3705 = vrot.slane %v3628, 7
        %v3706 = vshll.u32 %v3583, 16
        %v3708 = vor.u32 %v3705, %v3706
        %v3709 = vrot.slane %v3631, 7
        %v3710 = vshll.u32 %v3584, 16
        %v3712 = vor.u32 %v3709, %v3710
        %v3745 = vrot.slane %v3650, 7
        %v3746 = vrot.slane %v3654, 7
        %v3747 = vrot.slane %v3658, 7
        %v3748 = vrot.slane %v3662, 7
        %v3749 = vrot.slane %v3666, 7
        %v3750 = vrot.slane %v3670, 7
        %v3751 = vrot.slane %v3674, 7
        %v3752 = vrot.slane %v3678, 7
        %v3753 = vrot.slane %v3682, 7
        %v3754 = vrot.slane %v3686, 7
        %v3755 = vrot.slane %v3690, 7
        %v3756 = vrot.slane %v3694, 7
        %v3757 = vrot.slane %v3698, 7
        %v3758 = vrot.slane %v3702, 7
        %v3759 = vrot.slane %v3706, 7
        %v3760 = vrot.slane %v3710, 7
        %v3777 = vsel %vm412, %v3586, %v3652
        %v3778 = vsel %vm412, %v3589, %v3656
        %v3779 = vsel %vm412, %v3592, %v3660
        %v3780 = vsel %vm412, %v3595, %v3664
        %v3781 = vsel %vm412, %v3598, %v3668
        %v3782 = vsel %vm412, %v3601, %v3672
        %v3783 = vsel %vm412, %v3604, %v3676
        %v3784 = vsel %vm412, %v3607, %v3680
        %v3785 = vsel %vm412, %v3610, %v3684
        %v3786 = vsel %vm412, %v3613, %v3688
        %v3787 = vsel %vm412, %v3616, %v3692
        %v3788 = vsel %vm412, %v3619, %v3696
        %v3789 = vsel %vm412, %v3622, %v3700
        %v3790 = vsel %vm412, %v3625, %v3704
        %v3791 = vsel %vm412, %v3628, %v3708
        %v3792 = vsel %vm412, %v3631, %v3712
        %v3793 = vsel %vm412, %v3649, %v3745
        %v3794 = vsel %vm412, %v3653, %v3746
        %v3795 = vsel %vm412, %v3657, %v3747
        %v3796 = vsel %vm412, %v3661, %v3748
        %v3797 = vsel %vm412, %v3665, %v3749
        %v3798 = vsel %vm412, %v3669, %v3750
        %v3799 = vsel %vm412, %v3673, %v3751
        %v3800 = vsel %vm412, %v3677, %v3752
        %v3801 = vsel %vm412, %v3681, %v3753
        %v3802 = vsel %vm412, %v3685, %v3754
        %v3803 = vsel %vm412, %v3689, %v3755
        %v3804 = vsel %vm412, %v3693, %v3756
        %v3805 = vsel %vm412, %v3697, %v3757
        %v3806 = vsel %vm412, %v3701, %v3758
        %v3807 = vsel %vm412, %v3705, %v3759
        %v3808 = vsel %vm412, %v3709, %v3760
        %v3841 = vunpack.c.l.b16 %v3777
        %v3842 = vunpack.c.h.b16 %v3777
        %v3843 = vunpack.c.l.b16 %v3793
        %v3844 = vunpack.c.l.b16 %v3778
        %v3845 = vunpack.c.h.b16 %v3778
        %v3846 = vunpack.c.l.b16 %v3794
        %v3847 = vunpack.c.l.b16 %v3779
        %v3848 = vunpack.c.h.b16 %v3779
        %v3849 = vunpack.c.l.b16 %v3795
        %v3850 = vunpack.c.l.b16 %v3780
        %v3851 = vunpack.c.h.b16 %v3780
        %v3852 = vunpack.c.l.b16 %v3796
        %v3853 = vunpack.c.l.b16 %v3781
        %v3854 = vunpack.c.h.b16 %v3781
        %v3855 = vunpack.c.l.b16 %v3797
        %v3856 = vunpack.c.l.b16 %v3782
        %v3857 = vunpack.c.h.b16 %v3782
        %v3858 = vunpack.c.l.b16 %v3798
        %v3859 = vunpack.c.l.b16 %v3783
        %v3860 = vunpack.c.h.b16 %v3783
        %v3861 = vunpack.c.l.b16 %v3799
        %v3862 = vunpack.c.l.b16 %v3784
        %v3863 = vunpack.c.h.b16 %v3784
        %v3864 = vunpack.c.l.b16 %v3800
        %v3865 = vunpack.c.l.b16 %v3785
        %v3866 = vunpack.c.h.b16 %v3785
        %v3867 = vunpack.c.l.b16 %v3801
        %v3868 = vunpack.c.l.b16 %v3786
        %v3869 = vunpack.c.h.b16 %v3786
        %v3870 = vunpack.c.l.b16 %v3802
        %v3871 = vunpack.c.l.b16 %v3787
        %v3872 = vunpack.c.h.b16 %v3787
        %v3873 = vunpack.c.l.b16 %v3803
        %v3874 = vunpack.c.l.b16 %v3788
        %v3875 = vunpack.c.h.b16 %v3788
        %v3876 = vunpack.c.l.b16 %v3804
        %v3877 = vunpack.c.l.b16 %v3789
        %v3878 = vunpack.c.h.b16 %v3789
        %v3879 = vunpack.c.l.b16 %v3805
        %v3880 = vunpack.c.l.b16 %v3790
        %v3881 = vunpack.c.h.b16 %v3790
        %v3882 = vunpack.c.l.b16 %v3806
        %v3883 = vunpack.c.l.b16 %v3791
        %v3884 = vunpack.c.h.b16 %v3791
        %v3885 = vunpack.c.l.b16 %v3807
        %v3886 = vunpack.c.l.b16 %v3792
        %v3887 = vunpack.c.h.b16 %v3792
        %v3888 = vunpack.c.l.b16 %v3808
        %v3889 = vpack.c.b16 %v3841, %v3841
        %v3890 = vpack.c.b16 %v3842, %v3842
        %v3891 = vpack.c.b16 %v3843, %v3843
        %v3892 = vpack.c.b16 %v3844, %v3844
        %v3893 = vpack.c.b16 %v3845, %v3845
        %v3894 = vpack.c.b16 %v3846, %v3846
        %v3895 = vpack.c.b16 %v3847, %v3847
        %v3896 = vpack.c.b16 %v3848, %v3848
        %v3897 = vpack.c.b16 %v3849, %v3849
        %v3898 = vpack.c.b16 %v3850, %v3850
        %v3899 = vpack.c.b16 %v3851, %v3851
        %v3900 = vpack.c.b16 %v3852, %v3852
        %v3901 = vpack.c.b16 %v3853, %v3853
        %v3902 = vpack.c.b16 %v3854, %v3854
        %v3903 = vpack.c.b16 %v3855, %v3855
        %v3904 = vpack.c.b16 %v3856, %v3856
        %v3905 = vpack.c.b16 %v3857, %v3857
        %v3906 = vpack.c.b16 %v3858, %v3858
        %v3907 = vpack.c.b16 %v3859, %v3859
        %v3908 = vpack.c.b16 %v3860, %v3860
        %v3909 = vpack.c.b16 %v3861, %v3861
        %v3910 = vpack.c.b16 %v3862, %v3862
        %v3911 = vpack.c.b16 %v3863, %v3863
        %v3912 = vpack.c.b16 %v3864, %v3864
        %v3913 = vpack.c.b16 %v3865, %v3865
        %v3914 = vpack.c.b16 %v3866, %v3866
        %v3915 = vpack.c.b16 %v3867, %v3867
        %v3916 = vpack.c.b16 %v3868, %v3868
        %v3917 = vpack.c.b16 %v3869, %v3869
        %v3918 = vpack.c.b16 %v3870, %v3870
        %v3919 = vpack.c.b16 %v3871, %v3871
        %v3920 = vpack.c.b16 %v3872, %v3872
        %v3921 = vpack.c.b16 %v3873, %v3873
        %v3922 = vpack.c.b16 %v3874, %v3874
        %v3923 = vpack.c.b16 %v3875, %v3875
        %v3924 = vpack.c.b16 %v3876, %v3876
        %v3925 = vpack.c.b16 %v3877, %v3877
        %v3926 = vpack.c.b16 %v3878, %v3878
        %v3927 = vpack.c.b16 %v3879, %v3879
        %v3928 = vpack.c.b16 %v3880, %v3880
        %v3929 = vpack.c.b16 %v3881, %v3881
        %v3930 = vpack.c.b16 %v3882, %v3882
        %v3931 = vpack.c.b16 %v3883, %v3883
        %v3932 = vpack.c.b16 %v3884, %v3884
        %v3933 = vpack.c.b16 %v3885, %v3885
        %v3934 = vpack.c.b16 %v3886, %v3886
        %v3935 = vpack.c.b16 %v3887, %v3887
        %v3936 = vpack.c.b16 %v3888, %v3888
        %3985 = vst [vmem:[%s621] sm:$0xf] %v3889
        %3986 = vst [vmem:[%s621 + $0x4] sm:$0xf] %v3890
        %3987 = vst [vmem:[%s621 + $0x8] sm:$0x1] %v3891
        %3988 = vst [vmem:[%s621 + $0xc] sm:$0xf] %v3892
        %3989 = vst [vmem:[%s621 + $0x10] sm:$0xf] %v3893
        %3990 = vst [vmem:[%s621 + $0x14] sm:$0x1] %v3894
        %3991 = vst [vmem:[%s621 + $0x18] sm:$0xf] %v3895
        %3992 = vst [vmem:[%s621 + $0x1c] sm:$0xf] %v3896
        %3993 = vst [vmem:[%s621 + $0x20] sm:$0x1] %v3897
        %3994 = vst [vmem:[%s621 + $0x24] sm:$0xf] %v3898
        %3995 = vst [vmem:[%s621 + $0x28] sm:$0xf] %v3899
        %3996 = vst [vmem:[%s621 + $0x2c] sm:$0x1] %v3900
        %3997 = vst [vmem:[%s621 + $0x30] sm:$0xf] %v3901
        %3998 = vst [vmem:[%s621 + $0x34] sm:$0xf] %v3902
        %3999 = vst [vmem:[%s621 + $0x38] sm:$0x1] %v3903
        %4000 = vst [vmem:[%s621 + $0x3c] sm:$0xf] %v3904
        %4001 = vst [vmem:[%s621 + $0x40] sm:$0xf] %v3905
        %4002 = vst [vmem:[%s621 + $0x44] sm:$0x1] %v3906
        %4003 = vst [vmem:[%s621 + $0x48] sm:$0xf] %v3907
        %4004 = vst [vmem:[%s621 + $0x4c] sm:$0xf] %v3908
        %4005 = vst [vmem:[%s621 + $0x50] sm:$0x1] %v3909
        %4006 = vst [vmem:[%s621 + $0x54] sm:$0xf] %v3910
        %4007 = vst [vmem:[%s621 + $0x58] sm:$0xf] %v3911
        %4008 = vst [vmem:[%s621 + $0x5c] sm:$0x1] %v3912
        %4009 = vst [vmem:[%s621 + $0x60] sm:$0xf] %v3913
        %4010 = vst [vmem:[%s621 + $0x64] sm:$0xf] %v3914
        %4011 = vst [vmem:[%s621 + $0x68] sm:$0x1] %v3915
        %4012 = vst [vmem:[%s621 + $0x6c] sm:$0xf] %v3916
        %4013 = vst [vmem:[%s621 + $0x70] sm:$0xf] %v3917
        %4014 = vst [vmem:[%s621 + $0x74] sm:$0x1] %v3918
        %4015 = vst [vmem:[%s621 + $0x78] sm:$0xf] %v3919
        %4016 = vst [vmem:[%s621 + $0x7c] sm:$0xf] %v3920
        %4017 = vst [vmem:[%s621 + $0x80] sm:$0x1] %v3921
        %4018 = vst [vmem:[%s621 + $0x84] sm:$0xf] %v3922
        %4019 = vst [vmem:[%s621 + $0x88] sm:$0xf] %v3923
        %4020 = vst [vmem:[%s621 + $0x8c] sm:$0x1] %v3924
        %4021 = vst [vmem:[%s621 + $0x90] sm:$0xf] %v3925
        %4022 = vst [vmem:[%s621 + $0x94] sm:$0xf] %v3926
        %4023 = vst [vmem:[%s621 + $0x98] sm:$0x1] %v3927
        %4024 = vst [vmem:[%s621 + $0x9c] sm:$0xf] %v3928
        %4025 = vst [vmem:[%s621 + $0xa0] sm:$0xf] %v3929
        %4026 = vst [vmem:[%s621 + $0xa4] sm:$0x1] %v3930
        %4027 = vst [vmem:[%s621 + $0xa8] sm:$0xf] %v3931
        %4028 = vst [vmem:[%s621 + $0xac] sm:$0xf] %v3932
        %4029 = vst [vmem:[%s621 + $0xb0] sm:$0x1] %v3933
        %4030 = vst [vmem:[%s621 + $0xb4] sm:$0xf] %v3934
        %4031 = vst [vmem:[%s621 + $0xb8] sm:$0xf] %v3935
        %4032 = vst [vmem:[%s621 + $0xbc] sm:$0x1] %v3936
        %4033 = vst [vmem:[#allocation2] sm:$0xf] %v3892
        %4034 = vst [vmem:[#allocation2 + $0x4] sm:$0xf] %v3893
        %4035 = vst [vmem:[#allocation2 + $0x8] sm:$0x1] %v3894
        %4036 = vst [vmem:[%s673] sm:$0xf] %v3931
        %4037 = vst [vmem:[%s673 + $0x4] sm:$0xf] %v3932
        %4038 = vst [vmem:[%s673 + $0x8] sm:$0x1] %v3933
        %v4039 = vld [vmem:[#allocation2] sm:$0xf]
        %v4040 = vld [vmem:[#allocation2 + $0x4] sm:$0xf]
        %v4041 = vld [vmem:[#allocation2 + $0xc] sm:$0xf]
        %v4042 = vld [vmem:[#allocation2 + $0x10] sm:$0xf]
        %v4043 = vld [vmem:[#allocation2 + $0x18] sm:$0xf]
        %v4044 = vld [vmem:[#allocation2 + $0x1c] sm:$0xf]
        %v4045 = vld [vmem:[#allocation2 + $0x24] sm:$0xf]
        %v4046 = vld [vmem:[#allocation2 + $0x28] sm:$0xf]
        %v4047 = vld [vmem:[#allocation2 + $0x30] sm:$0xf]
        %v4048 = vld [vmem:[#allocation2 + $0x34] sm:$0xf]
        %v4049 = vld [vmem:[#allocation2 + $0x3c] sm:$0xf]
        %v4050 = vld [vmem:[#allocation2 + $0x40] sm:$0xf]
        %v4051 = vld [vmem:[#allocation2 + $0x48] sm:$0xf]
        %v4052 = vld [vmem:[#allocation2 + $0x4c] sm:$0xf]
        %v4053 = vld [vmem:[#allocation2 + $0x54] sm:$0xf]
        %v4054 = vld [vmem:[#allocation2 + $0x58] sm:$0xf]
        %v4055 = vld [vmem:[#allocation2 + $0x60] sm:$0xf]
        %v4056 = vld [vmem:[#allocation2 + $0x64] sm:$0xf]
        %v4057 = vld [vmem:[#allocation2 + $0x6c] sm:$0xf]
        %v4058 = vld [vmem:[#allocation2 + $0x70] sm:$0xf]
        %v4059 = vld [vmem:[#allocation2 + $0x78] sm:$0xf]
        %v4060 = vld [vmem:[#allocation2 + $0x7c] sm:$0xf]
        %v4061 = vld [vmem:[#allocation2 + $0x84] sm:$0xf]
        %v4062 = vld [vmem:[#allocation2 + $0x88] sm:$0xf]
        %v4063 = vld [vmem:[#allocation2 + $0x90] sm:$0xf]
        %v4064 = vld [vmem:[#allocation2 + $0x94] sm:$0xf]
        %v4065 = vld [vmem:[#allocation2 + $0x9c] sm:$0xf]
        %v4066 = vld [vmem:[#allocation2 + $0xa0] sm:$0xf]
        %v4067 = vld [vmem:[#allocation2 + $0xa8] sm:$0xf]
        %v4068 = vld [vmem:[#allocation2 + $0xac] sm:$0xf]
        %v4069 = vld [vmem:[#allocation2 + $0xb4] sm:$0xf]
        %v4070 = vld [vmem:[#allocation2 + $0xb8] sm:$0xf]
        %v4071 = vld [vmem:[#allocation2 + $0xc0] sm:$0xf]
        %v4072 = vld [vmem:[#allocation2 + $0xc4] sm:$0xf]
        %v4073 = vld [vmem:[#allocation2 + $0xcc] sm:$0xf]
        %v4074 = vld [vmem:[#allocation2 + $0xd0] sm:$0xf]
        %v4107 = vunpack.c.l.b16 %v4039
        %v4108 = vunpack.c.l.b16 %v4040
        %v4109 = vunpack.c.l.b16 %v4041
        %v4110 = vunpack.c.l.b16 %v4042
        %v4111 = vunpack.c.l.b16 %v4043
        %v4112 = vunpack.c.l.b16 %v4044
        %v4113 = vunpack.c.l.b16 %v4045
        %v4114 = vunpack.c.l.b16 %v4046
        %v4115 = vunpack.c.l.b16 %v4047
        %v4116 = vunpack.c.l.b16 %v4048
        %v4117 = vunpack.c.l.b16 %v4049
        %v4118 = vunpack.c.l.b16 %v4050
        %v4119 = vunpack.c.l.b16 %v4051
        %v4120 = vunpack.c.l.b16 %v4052
        %v4121 = vunpack.c.l.b16 %v4053
        %v4122 = vunpack.c.l.b16 %v4054
        %v4123 = vunpack.c.l.b16 %v4055
        %v4124 = vunpack.c.l.b16 %v4056
        %v4125 = vunpack.c.l.b16 %v4057
        %v4126 = vunpack.c.l.b16 %v4058
        %v4127 = vunpack.c.l.b16 %v4059
        %v4128 = vunpack.c.l.b16 %v4060
        %v4129 = vunpack.c.l.b16 %v4061
        %v4130 = vunpack.c.l.b16 %v4062
        %v4131 = vunpack.c.l.b16 %v4063
        %v4132 = vunpack.c.l.b16 %v4064
        %v4133 = vunpack.c.l.b16 %v4065
        %v4134 = vunpack.c.l.b16 %v4066
        %v4135 = vunpack.c.l.b16 %v4067
        %v4136 = vunpack.c.l.b16 %v4068
        %v4137 = vunpack.c.l.b16 %v4069
        %v4138 = vunpack.c.l.b16 %v4070
        %v4139 = vpack.c.b16 %v4108, %v4107
        %v4140 = vpack.c.b16 %v4110, %v4109
        %v4141 = vpack.c.b16 %v4112, %v4111
        %v4142 = vpack.c.b16 %v4114, %v4113
        %v4143 = vpack.c.b16 %v4116, %v4115
        %v4144 = vpack.c.b16 %v4118, %v4117
        %v4145 = vpack.c.b16 %v4120, %v4119
        %v4146 = vpack.c.b16 %v4122, %v4121
        %v4147 = vpack.c.b16 %v4124, %v4123
        %v4148 = vpack.c.b16 %v4126, %v4125
        %v4149 = vpack.c.b16 %v4128, %v4127
        %v4150 = vpack.c.b16 %v4130, %v4129
        %v4151 = vpack.c.b16 %v4132, %v4131
        %v4152 = vpack.c.b16 %v4134, %v4133
        %v4153 = vpack.c.b16 %v4136, %v4135
        %v4154 = vpack.c.b16 %v4138, %v4137
        %4171 = vst [vmem:[#allocation3] sm:$0xff] %v4139
        %4172 = vst [vmem:[#allocation3 + $0x48] sm:$0xff] %v4140
        %4173 = vst [vmem:[#allocation3 + $0x90] sm:$0xff] %v4141
        %4174 = vst [vmem:[#allocation3 + $0xd8] sm:$0xff] %v4142
        %4175 = vst [vmem:[#allocation3 + $0x120] sm:$0xff] %v4143
        %4176 = vst [vmem:[#allocation3 + $0x168] sm:$0xff] %v4144
        %4177 = vst [vmem:[#allocation3 + $0x1b0] sm:$0xff] %v4145
        %4178 = vst [vmem:[#allocation3 + $0x1f8] sm:$0xff] %v4146
        %4179 = vst [vmem:[#allocation3 + $0x240] sm:$0xff] %v4147
        %4180 = vst [vmem:[#allocation3 + $0x288] sm:$0xff] %v4148
        %4181 = vst [vmem:[#allocation3 + $0x2d0] sm:$0xff] %v4149
        %4182 = vst [vmem:[#allocation3 + $0x318] sm:$0xff] %v4150
        %4183 = vst [vmem:[#allocation3 + $0x360] sm:$0xff] %v4151
        %4184 = vst [vmem:[#allocation3 + $0x3a8] sm:$0xff] %v4152
        %4185 = vst [vmem:[#allocation3 + $0x3f0] sm:$0xff] %v4153
        %4186 = vst [vmem:[#allocation3 + $0x438] sm:$0xff] %v4154
        %v4189 = vunpack.c.l.b16 %v4071
        %v4190 = vunpack.c.l.b16 %v4072
        %v4191 = vpack.c.b16 %v4190, %v4189
        %4193 = vst [vmem:[#allocation3 + $0x18] sm:$0xff] %v4140
        %4194 = vst [vmem:[#allocation3 + $0x60] sm:$0xff] %v4141
        %4195 = vst [vmem:[#allocation3 + $0xa8] sm:$0xff] %v4142
        %4196 = vst [vmem:[#allocation3 + $0xf0] sm:$0xff] %v4143
        %4197 = vst [vmem:[#allocation3 + $0x138] sm:$0xff] %v4144
        %4198 = vst [vmem:[#allocation3 + $0x180] sm:$0xff] %v4145
        %4199 = vst [vmem:[#allocation3 + $0x1c8] sm:$0xff] %v4146
        %4200 = vst [vmem:[#allocation3 + $0x210] sm:$0xff] %v4147
        %4201 = vst [vmem:[#allocation3 + $0x258] sm:$0xff] %v4148
        %4202 = vst [vmem:[#allocation3 + $0x2a0] sm:$0xff] %v4149
        %4203 = vst [vmem:[#allocation3 + $0x2e8] sm:$0xff] %v4150
        %4204 = vst [vmem:[#allocation3 + $0x330] sm:$0xff] %v4151
        %4205 = vst [vmem:[#allocation3 + $0x378] sm:$0xff] %v4152
        %4206 = vst [vmem:[#allocation3 + $0x3c0] sm:$0xff] %v4153
        %4207 = vst [vmem:[#allocation3 + $0x408] sm:$0xff] %v4154
        %4208 = vst [vmem:[#allocation3 + $0x450] sm:$0xff] %v4191
        %v4211 = vunpack.c.l.b16 %v4073
        %v4212 = vunpack.c.l.b16 %v4074
        %v4213 = vpack.c.b16 %v4212, %v4211
        %4215 = vst [vmem:[#allocation3 + $0x30] sm:$0xff] %v4141
        %4216 = vst [vmem:[#allocation3 + $0x78] sm:$0xff] %v4142
        %4217 = vst [vmem:[#allocation3 + $0xc0] sm:$0xff] %v4143
        %4218 = vst [vmem:[#allocation3 + $0x108] sm:$0xff] %v4144
        %4219 = vst [vmem:[#allocation3 + $0x150] sm:$0xff] %v4145
        %4220 = vst [vmem:[#allocation3 + $0x198] sm:$0xff] %v4146
        %4221 = vst [vmem:[#allocation3 + $0x1e0] sm:$0xff] %v4147
        %4222 = vst [vmem:[#allocation3 + $0x228] sm:$0xff] %v4148
        %4223 = vst [vmem:[#allocation3 + $0x270] sm:$0xff] %v4149
        %4224 = vst [vmem:[#allocation3 + $0x2b8] sm:$0xff] %v4150
        %4225 = vst [vmem:[#allocation3 + $0x300] sm:$0xff] %v4151
        %4226 = vst [vmem:[#allocation3 + $0x348] sm:$0xff] %v4152
        %4227 = vst [vmem:[#allocation3 + $0x390] sm:$0xff] %v4153
        %4228 = vst [vmem:[#allocation3 + $0x3d8] sm:$0xff] %v4154
        %4229 = vst [vmem:[#allocation3 + $0x420] sm:$0xff] %v4191
        %4230 = vst [vmem:[#allocation3 + $0x468] sm:$0xff] %v4213
        %v4231 = vld [vmem:[#allocation2] sm:$0xf]
        %v4232 = vld [vmem:[#allocation2 + $0x4] sm:$0xf]
        %v4233 = vld [vmem:[#allocation2 + $0x8] sm:$0x1]
        %v4234 = vld [vmem:[#allocation2 + $0xc] sm:$0xf]
        %v4235 = vld [vmem:[#allocation2 + $0x10] sm:$0xf]
        %v4236 = vld [vmem:[#allocation2 + $0x14] sm:$0x1]
        %v4237 = vld [vmem:[#allocation2 + $0x18] sm:$0xf]
        %v4238 = vld [vmem:[#allocation2 + $0x1c] sm:$0xf]
        %v4239 = vld [vmem:[#allocation2 + $0x20] sm:$0x1]
        %v4240 = vld [vmem:[#allocation2 + $0x24] sm:$0xf]
        %v4241 = vld [vmem:[#allocation2 + $0x28] sm:$0xf]
        %v4242 = vld [vmem:[#allocation2 + $0x2c] sm:$0x1]
        %v4243 = vld [vmem:[#allocation2 + $0x30] sm:$0xf]
        %v4244 = vld [vmem:[#allocation2 + $0x34] sm:$0xf]
        %v4245 = vld [vmem:[#allocation2 + $0x38] sm:$0x1]
        %v4246 = vld [vmem:[#allocation2 + $0x3c] sm:$0xf]
        %v4247 = vld [vmem:[#allocation2 + $0x40] sm:$0xf]
        %v4248 = vld [vmem:[#allocation2 + $0x44] sm:$0x1]
        %v4249 = vld [vmem:[#allocation2 + $0x48] sm:$0xf]
        %v4250 = vld [vmem:[#allocation2 + $0x4c] sm:$0xf]
        %v4251 = vld [vmem:[#allocation2 + $0x50] sm:$0x1]
        %v4252 = vld [vmem:[#allocation2 + $0x54] sm:$0xf]
        %v4253 = vld [vmem:[#allocation2 + $0x58] sm:$0xf]
        %v4254 = vld [vmem:[#allocation2 + $0x5c] sm:$0x1]
        %v4255 = vld [vmem:[#allocation2 + $0x60] sm:$0xf]
        %v4256 = vld [vmem:[#allocation2 + $0x64] sm:$0xf]
        %v4257 = vld [vmem:[#allocation2 + $0x68] sm:$0x1]
        %v4258 = vld [vmem:[#allocation2 + $0x6c] sm:$0xf]
        %v4259 = vld [vmem:[#allocation2 + $0x70] sm:$0xf]
        %v4260 = vld [vmem:[#allocation2 + $0x74] sm:$0x1]
        %v4261 = vld [vmem:[#allocation2 + $0x78] sm:$0xf]
        %v4262 = vld [vmem:[#allocation2 + $0x7c] sm:$0xf]
        %v4263 = vld [vmem:[#allocation2 + $0x80] sm:$0x1]
        %v4264 = vld [vmem:[#allocation2 + $0x84] sm:$0xf]
        %v4265 = vld [vmem:[#allocation2 + $0x88] sm:$0xf]
        %v4266 = vld [vmem:[#allocation2 + $0x8c] sm:$0x1]
        %v4267 = vld [vmem:[#allocation2 + $0x90] sm:$0xf]
        %v4268 = vld [vmem:[#allocation2 + $0x94] sm:$0xf]
        %v4269 = vld [vmem:[#allocation2 + $0x98] sm:$0x1]
        %v4270 = vld [vmem:[#allocation2 + $0x9c] sm:$0xf]
        %v4271 = vld [vmem:[#allocation2 + $0xa0] sm:$0xf]
        %v4272 = vld [vmem:[#allocation2 + $0xa4] sm:$0x1]
        %v4273 = vld [vmem:[#allocation2 + $0xa8] sm:$0xf]
        %v4274 = vld [vmem:[#allocation2 + $0xac] sm:$0xf]
        %v4275 = vld [vmem:[#allocation2 + $0xb0] sm:$0x1]
        %v4276 = vld [vmem:[#allocation2 + $0xb4] sm:$0xf]
        %v4277 = vld [vmem:[#allocation2 + $0xb8] sm:$0xf]
        %v4278 = vld [vmem:[#allocation2 + $0xbc] sm:$0x1]
        %v4279 = vld [vmem:[#allocation2 + $0xc0] sm:$0xf]
        %v4280 = vld [vmem:[#allocation2 + $0xc4] sm:$0xf]
        %v4281 = vld [vmem:[#allocation2 + $0xc8] sm:$0x1]
        %v4282 = vld [vmem:[#allocation2 + $0xcc] sm:$0xf]
        %v4283 = vld [vmem:[#allocation2 + $0xd0] sm:$0xf]
        %v4284 = vld [vmem:[#allocation2 + $0xd4] sm:$0x1]
        %v4286 = vshrl.u32 %v4231, 16
        %v4288 = vrot.slane %v4286, 4
        %v4289 = vshll.u32 %v4231, 16
        %v4291 = vrot.slane %v4289, 5
        %v4292 = vor.u32 %v4288, %v4291
        %v4293 = vrot.slane %v4292, 4
        %v4295 = vshll.u32 %v4232, 16
        %v4297 = vrot.slane %v4295, 5
        %v4298 = vsel %vm925, %v4293, %v4297
        %v4299 = vshrl.u32 %v4232, 16
        %v4301 = vrot.slane %v4299, 4
        %v4302 = vor.u32 %v4301, %v4297
        %v4303 = vrot.slane %v4302, 4
        %v4305 = vshll.u32 %v4233, 16
        %v4307 = vrot.slane %v4305, 5
        %v4308 = vsel %vm925, %v4303, %v4307
        %v4310 = vshrl.u32 %v4234, 16
        %v4312 = vrot.slane %v4310, 4
        %v4313 = vshll.u32 %v4234, 16
        %v4315 = vrot.slane %v4313, 5
        %v4316 = vor.u32 %v4312, %v4315
        %v4317 = vrot.slane %v4316, 4
        %v4319 = vshll.u32 %v4235, 16
        %v4321 = vrot.slane %v4319, 5
        %v4322 = vsel %vm925, %v4317, %v4321
        %v4323 = vshrl.u32 %v4235, 16
        %v4325 = vrot.slane %v4323, 4
        %v4326 = vor.u32 %v4325, %v4321
        %v4327 = vrot.slane %v4326, 4
        %v4329 = vshll.u32 %v4236, 16
        %v4331 = vrot.slane %v4329, 5
        %v4332 = vsel %vm925, %v4327, %v4331
        %v4334 = vshrl.u32 %v4237, 16
        %v4336 = vrot.slane %v4334, 4
        %v4337 = vshll.u32 %v4237, 16
        %v4339 = vrot.slane %v4337, 5
        %v4340 = vor.u32 %v4336, %v4339
        %v4341 = vrot.slane %v4340, 4
        %v4343 = vshll.u32 %v4238, 16
        %v4345 = vrot.slane %v4343, 5
        %v4346 = vsel %vm925, %v4341, %v4345
        %v4347 = vshrl.u32 %v4238, 16
        %v4349 = vrot.slane %v4347, 4
        %v4350 = vor.u32 %v4349, %v4345
        %v4351 = vrot.slane %v4350, 4
        %v4353 = vshll.u32 %v4239, 16
        %v4355 = vrot.slane %v4353, 5
        %v4356 = vsel %vm925, %v4351, %v4355
        %v4358 = vshrl.u32 %v4240, 16
        %v4360 = vrot.slane %v4358, 4
        %v4361 = vshll.u32 %v4240, 16
        %v4363 = vrot.slane %v4361, 5
        %v4364 = vor.u32 %v4360, %v4363
        %v4365 = vrot.slane %v4364, 4
        %v4367 = vshll.u32 %v4241, 16
        %v4369 = vrot.slane %v4367, 5
        %v4370 = vsel %vm925, %v4365, %v4369
        %v4371 = vshrl.u32 %v4241, 16
        %v4373 = vrot.slane %v4371, 4
        %v4374 = vor.u32 %v4373, %v4369
        %v4375 = vrot.slane %v4374, 4
        %v4377 = vshll.u32 %v4242, 16
        %v4379 = vrot.slane %v4377, 5
        %v4380 = vsel %vm925, %v4375, %v4379
        %v4382 = vshrl.u32 %v4243, 16
        %v4384 = vrot.slane %v4382, 4
        %v4385 = vshll.u32 %v4243, 16
        %v4387 = vrot.slane %v4385, 5
        %v4388 = vor.u32 %v4384, %v4387
        %v4389 = vrot.slane %v4388, 4
        %v4391 = vshll.u32 %v4244, 16
        %v4393 = vrot.slane %v4391, 5
        %v4394 = vsel %vm925, %v4389, %v4393
        %v4395 = vshrl.u32 %v4244, 16
        %v4397 = vrot.slane %v4395, 4
        %v4398 = vor.u32 %v4397, %v4393
        %v4399 = vrot.slane %v4398, 4
        %v4401 = vshll.u32 %v4245, 16
        %v4403 = vrot.slane %v4401, 5
        %v4404 = vsel %vm925, %v4399, %v4403
        %v4406 = vshrl.u32 %v4246, 16
        %v4408 = vrot.slane %v4406, 4
        %v4409 = vshll.u32 %v4246, 16
        %v4411 = vrot.slane %v4409, 5
        %v4412 = vor.u32 %v4408, %v4411
        %v4413 = vrot.slane %v4412, 4
        %v4415 = vshll.u32 %v4247, 16
        %v4417 = vrot.slane %v4415, 5
        %v4418 = vsel %vm925, %v4413, %v4417
        %v4419 = vshrl.u32 %v4247, 16
        %v4421 = vrot.slane %v4419, 4
        %v4422 = vor.u32 %v4421, %v4417
        %v4423 = vrot.slane %v4422, 4
        %v4425 = vshll.u32 %v4248, 16
        %v4427 = vrot.slane %v4425, 5
        %v4428 = vsel %vm925, %v4423, %v4427
        %v4430 = vshrl.u32 %v4249, 16
        %v4432 = vrot.slane %v4430, 4
        %v4433 = vshll.u32 %v4249, 16
        %v4435 = vrot.slane %v4433, 5
        %v4436 = vor.u32 %v4432, %v4435
        %v4437 = vrot.slane %v4436, 4
        %v4439 = vshll.u32 %v4250, 16
        %v4441 = vrot.slane %v4439, 5
        %v4442 = vsel %vm925, %v4437, %v4441
        %v4443 = vshrl.u32 %v4250, 16
        %v4445 = vrot.slane %v4443, 4
        %v4446 = vor.u32 %v4445, %v4441
        %v4447 = vrot.slane %v4446, 4
        %v4449 = vshll.u32 %v4251, 16
        %v4451 = vrot.slane %v4449, 5
        %v4452 = vsel %vm925, %v4447, %v4451
        %v4454 = vshrl.u32 %v4252, 16
        %v4456 = vrot.slane %v4454, 4
        %v4457 = vshll.u32 %v4252, 16
        %v4459 = vrot.slane %v4457, 5
        %v4460 = vor.u32 %v4456, %v4459
        %v4461 = vrot.slane %v4460, 4
        %v4463 = vshll.u32 %v4253, 16
        %v4465 = vrot.slane %v4463, 5
        %v4466 = vsel %vm925, %v4461, %v4465
        %v4467 = vshrl.u32 %v4253, 16
        %v4469 = vrot.slane %v4467, 4
        %v4470 = vor.u32 %v4469, %v4465
        %v4471 = vrot.slane %v4470, 4
        %v4473 = vshll.u32 %v4254, 16
        %v4475 = vrot.slane %v4473, 5
        %v4476 = vsel %vm925, %v4471, %v4475
        %v4478 = vshrl.u32 %v4255, 16
        %v4480 = vrot.slane %v4478, 4
        %v4481 = vshll.u32 %v4255, 16
        %v4483 = vrot.slane %v4481, 5
        %v4484 = vor.u32 %v4480, %v4483
        %v4485 = vrot.slane %v4484, 4
        %v4487 = vshll.u32 %v4256, 16
        %v4489 = vrot.slane %v4487, 5
        %v4490 = vsel %vm925, %v4485, %v4489
        %v4491 = vshrl.u32 %v4256, 16
        %v4493 = vrot.slane %v4491, 4
        %v4494 = vor.u32 %v4493, %v4489
        %v4495 = vrot.slane %v4494, 4
        %v4497 = vshll.u32 %v4257, 16
        %v4499 = vrot.slane %v4497, 5
        %v4500 = vsel %vm925, %v4495, %v4499
        %v4502 = vshrl.u32 %v4258, 16
        %v4504 = vrot.slane %v4502, 4
        %v4505 = vshll.u32 %v4258, 16
        %v4507 = vrot.slane %v4505, 5
        %v4508 = vor.u32 %v4504, %v4507
        %v4509 = vrot.slane %v4508, 4
        %v4511 = vshll.u32 %v4259, 16
        %v4513 = vrot.slane %v4511, 5
        %v4514 = vsel %vm925, %v4509, %v4513
        %v4515 = vshrl.u32 %v4259, 16
        %v4517 = vrot.slane %v4515, 4
        %v4518 = vor.u32 %v4517, %v4513
        %v4519 = vrot.slane %v4518, 4
        %v4521 = vshll.u32 %v4260, 16
        %v4523 = vrot.slane %v4521, 5
        %v4524 = vsel %vm925, %v4519, %v4523
        %v4526 = vshrl.u32 %v4261, 16
        %v4528 = vrot.slane %v4526, 4
        %v4529 = vshll.u32 %v4261, 16
        %v4531 = vrot.slane %v4529, 5
        %v4532 = vor.u32 %v4528, %v4531
        %v4533 = vrot.slane %v4532, 4
        %v4535 = vshll.u32 %v4262, 16
        %v4537 = vrot.slane %v4535, 5
        %v4538 = vsel %vm925, %v4533, %v4537
        %v4539 = vshrl.u32 %v4262, 16
        %v4541 = vrot.slane %v4539, 4
        %v4542 = vor.u32 %v4541, %v4537
        %v4543 = vrot.slane %v4542, 4
        %v4545 = vshll.u32 %v4263, 16
        %v4547 = vrot.slane %v4545, 5
        %v4548 = vsel %vm925, %v4543, %v4547
        %v4550 = vshrl.u32 %v4264, 16
        %v4552 = vrot.slane %v4550, 4
        %v4553 = vshll.u32 %v4264, 16
        %v4555 = vrot.slane %v4553, 5
        %v4556 = vor.u32 %v4552, %v4555
        %v4557 = vrot.slane %v4556, 4
        %v4559 = vshll.u32 %v4265, 16
        %v4561 = vrot.slane %v4559, 5
        %v4562 = vsel %vm925, %v4557, %v4561
        %v4563 = vshrl.u32 %v4265, 16
        %v4565 = vrot.slane %v4563, 4
        %v4566 = vor.u32 %v4565, %v4561
        %v4567 = vrot.slane %v4566, 4
        %v4569 = vshll.u32 %v4266, 16
        %v4571 = vrot.slane %v4569, 5
        %v4572 = vsel %vm925, %v4567, %v4571
        %v4574 = vshrl.u32 %v4267, 16
        %v4576 = vrot.slane %v4574, 4
        %v4577 = vshll.u32 %v4267, 16
        %v4579 = vrot.slane %v4577, 5
        %v4580 = vor.u32 %v4576, %v4579
        %v4581 = vrot.slane %v4580, 4
        %v4583 = vshll.u32 %v4268, 16
        %v4585 = vrot.slane %v4583, 5
        %v4586 = vsel %vm925, %v4581, %v4585
        %v4587 = vshrl.u32 %v4268, 16
        %v4589 = vrot.slane %v4587, 4
        %v4590 = vor.u32 %v4589, %v4585
        %v4591 = vrot.slane %v4590, 4
        %v4593 = vshll.u32 %v4269, 16
        %v4595 = vrot.slane %v4593, 5
        %v4596 = vsel %vm925, %v4591, %v4595
        %v4598 = vshrl.u32 %v4270, 16
        %v4600 = vrot.slane %v4598, 4
        %v4601 = vshll.u32 %v4270, 16
        %v4603 = vrot.slane %v4601, 5
        %v4604 = vor.u32 %v4600, %v4603
        %v4605 = vrot.slane %v4604, 4
        %v4607 = vshll.u32 %v4271, 16
        %v4609 = vrot.slane %v4607, 5
        %v4610 = vsel %vm925, %v4605, %v4609
        %v4611 = vshrl.u32 %v4271, 16
        %v4613 = vrot.slane %v4611, 4
        %v4614 = vor.u32 %v4613, %v4609
        %v4615 = vrot.slane %v4614, 4
        %v4617 = vshll.u32 %v4272, 16
        %v4619 = vrot.slane %v4617, 5
        %v4620 = vsel %vm925, %v4615, %v4619
        %v4622 = vshrl.u32 %v4273, 16
        %v4624 = vrot.slane %v4622, 4
        %v4625 = vshll.u32 %v4273, 16
        %v4627 = vrot.slane %v4625, 5
        %v4628 = vor.u32 %v4624, %v4627
        %v4629 = vrot.slane %v4628, 4
        %v4631 = vshll.u32 %v4274, 16
        %v4633 = vrot.slane %v4631, 5
        %v4634 = vsel %vm925, %v4629, %v4633
        %v4635 = vshrl.u32 %v4274, 16
        %v4637 = vrot.slane %v4635, 4
        %v4638 = vor.u32 %v4637, %v4633
        %v4639 = vrot.slane %v4638, 4
        %v4641 = vshll.u32 %v4275, 16
        %v4643 = vrot.slane %v4641, 5
        %v4644 = vsel %vm925, %v4639, %v4643
        %v4646 = vshrl.u32 %v4276, 16
        %v4648 = vrot.slane %v4646, 4
        %v4649 = vshll.u32 %v4276, 16
        %v4651 = vrot.slane %v4649, 5
        %v4652 = vor.u32 %v4648, %v4651
        %v4653 = vrot.slane %v4652, 4
        %v4655 = vshll.u32 %v4277, 16
        %v4657 = vrot.slane %v4655, 5
        %v4658 = vsel %vm925, %v4653, %v4657
        %v4659 = vshrl.u32 %v4277, 16
        %v4661 = vrot.slane %v4659, 4
        %v4662 = vor.u32 %v4661, %v4657
        %v4663 = vrot.slane %v4662, 4
        %v4665 = vshll.u32 %v4278, 16
        %v4667 = vrot.slane %v4665, 5
        %v4668 = vsel %vm925, %v4663, %v4667
        %v4669 = vunpack.c.l.b16 %v4298
        %v4670 = vunpack.c.l.b16 %v4308
        %v4671 = vunpack.c.l.b16 %v4322
        %v4672 = vunpack.c.l.b16 %v4332
        %v4673 = vunpack.c.l.b16 %v4346
        %v4674 = vunpack.c.l.b16 %v4356
        %v4675 = vunpack.c.l.b16 %v4370
        %v4676 = vunpack.c.l.b16 %v4380
        %v4677 = vunpack.c.l.b16 %v4394
        %v4678 = vunpack.c.l.b16 %v4404
        %v4679 = vunpack.c.l.b16 %v4418
        %v4680 = vunpack.c.l.b16 %v4428
        %v4681 = vunpack.c.l.b16 %v4442
        %v4682 = vunpack.c.l.b16 %v4452
        %v4683 = vunpack.c.l.b16 %v4466
        %v4684 = vunpack.c.l.b16 %v4476
        %v4685 = vunpack.c.l.b16 %v4490
        %v4686 = vunpack.c.l.b16 %v4500
        %v4687 = vunpack.c.l.b16 %v4514
        %v4688 = vunpack.c.l.b16 %v4524
        %v4689 = vunpack.c.l.b16 %v4538
        %v4690 = vunpack.c.l.b16 %v4548
        %v4691 = vunpack.c.l.b16 %v4562
        %v4692 = vunpack.c.l.b16 %v4572
        %v4693 = vunpack.c.l.b16 %v4586
        %v4694 = vunpack.c.l.b16 %v4596
        %v4695 = vunpack.c.l.b16 %v4610
        %v4696 = vunpack.c.l.b16 %v4620
        %v4697 = vunpack.c.l.b16 %v4634
        %v4698 = vunpack.c.l.b16 %v4644
        %v4699 = vunpack.c.l.b16 %v4658
        %v4700 = vunpack.c.l.b16 %v4668
        %v4701 = vpack.c.b16 %v4670, %v4669
        %v4702 = vpack.c.b16 %v4672, %v4671
        %v4703 = vpack.c.b16 %v4674, %v4673
        %v4704 = vpack.c.b16 %v4676, %v4675
        %v4705 = vpack.c.b16 %v4678, %v4677
        %v4706 = vpack.c.b16 %v4680, %v4679
        %v4707 = vpack.c.b16 %v4682, %v4681
        %v4708 = vpack.c.b16 %v4684, %v4683
        %v4709 = vpack.c.b16 %v4686, %v4685
        %v4710 = vpack.c.b16 %v4688, %v4687
        %v4711 = vpack.c.b16 %v4690, %v4689
        %v4712 = vpack.c.b16 %v4692, %v4691
        %v4713 = vpack.c.b16 %v4694, %v4693
        %v4714 = vpack.c.b16 %v4696, %v4695
        %v4715 = vpack.c.b16 %v4698, %v4697
        %v4716 = vpack.c.b16 %v4700, %v4699
        %4733 = vst [vmem:[#allocation3 + $0x8] sm:$0xff] %v4701
        %4734 = vst [vmem:[#allocation3 + $0x50] sm:$0xff] %v4702
        %4735 = vst [vmem:[#allocation3 + $0x98] sm:$0xff] %v4703
        %4736 = vst [vmem:[#allocation3 + $0xe0] sm:$0xff] %v4704
        %4737 = vst [vmem:[#allocation3 + $0x128] sm:$0xff] %v4705
        %4738 = vst [vmem:[#allocation3 + $0x170] sm:$0xff] %v4706
        %4739 = vst [vmem:[#allocation3 + $0x1b8] sm:$0xff] %v4707
        %4740 = vst [vmem:[#allocation3 + $0x200] sm:$0xff] %v4708
        %4741 = vst [vmem:[#allocation3 + $0x248] sm:$0xff] %v4709
        %4742 = vst [vmem:[#allocation3 + $0x290] sm:$0xff] %v4710
        %4743 = vst [vmem:[#allocation3 + $0x2d8] sm:$0xff] %v4711
        %4744 = vst [vmem:[#allocation3 + $0x320] sm:$0xff] %v4712
        %4745 = vst [vmem:[#allocation3 + $0x368] sm:$0xff] %v4713
        %4746 = vst [vmem:[#allocation3 + $0x3b0] sm:$0xff] %v4714
        %4747 = vst [vmem:[#allocation3 + $0x3f8] sm:$0xff] %v4715
        %4748 = vst [vmem:[#allocation3 + $0x440] sm:$0xff] %v4716
        %v4750 = vshrl.u32 %v4279, 16
        %v4752 = vrot.slane %v4750, 4
        %v4753 = vshll.u32 %v4279, 16
        %v4755 = vrot.slane %v4753, 5
        %v4756 = vor.u32 %v4752, %v4755
        %v4757 = vrot.slane %v4756, 4
        %v4759 = vshll.u32 %v4280, 16
        %v4761 = vrot.slane %v4759, 5
        %v4762 = vsel %vm925, %v4757, %v4761
        %v4763 = vshrl.u32 %v4280, 16
        %v4765 = vrot.slane %v4763, 4
        %v4766 = vor.u32 %v4765, %v4761
        %v4767 = vrot.slane %v4766, 4
        %v4769 = vshll.u32 %v4281, 16
        %v4771 = vrot.slane %v4769, 5
        %v4772 = vsel %vm925, %v4767, %v4771
        %v4773 = vunpack.c.l.b16 %v4762
        %v4774 = vunpack.c.l.b16 %v4772
        %v4775 = vpack.c.b16 %v4774, %v4773
        %4777 = vst [vmem:[#allocation3 + $0x20] sm:$0xff] %v4702
        %4778 = vst [vmem:[#allocation3 + $0x68] sm:$0xff] %v4703
        %4779 = vst [vmem:[#allocation3 + $0xb0] sm:$0xff] %v4704
        %4780 = vst [vmem:[#allocation3 + $0xf8] sm:$0xff] %v4705
        %4781 = vst [vmem:[#allocation3 + $0x140] sm:$0xff] %v4706
        %4782 = vst [vmem:[#allocation3 + $0x188] sm:$0xff] %v4707
        %4783 = vst [vmem:[#allocation3 + $0x1d0] sm:$0xff] %v4708
        %4784 = vst [vmem:[#allocation3 + $0x218] sm:$0xff] %v4709
        %4785 = vst [vmem:[#allocation3 + $0x260] sm:$0xff] %v4710
        %4786 = vst [vmem:[#allocation3 + $0x2a8] sm:$0xff] %v4711
        %4787 = vst [vmem:[#allocation3 + $0x2f0] sm:$0xff] %v4712
        %4788 = vst [vmem:[#allocation3 + $0x338] sm:$0xff] %v4713
        %4789 = vst [vmem:[#allocation3 + $0x380] sm:$0xff] %v4714
        %4790 = vst [vmem:[#allocation3 + $0x3c8] sm:$0xff] %v4715
        %4791 = vst [vmem:[#allocation3 + $0x410] sm:$0xff] %v4716
        %4792 = vst [vmem:[#allocation3 + $0x458] sm:$0xff] %v4775
        %v4794 = vshrl.u32 %v4282, 16
        %v4796 = vrot.slane %v4794, 4
        %v4797 = vshll.u32 %v4282, 16
        %v4799 = vrot.slane %v4797, 5
        %v4800 = vor.u32 %v4796, %v4799
        %v4801 = vrot.slane %v4800, 4
        %v4803 = vshll.u32 %v4283, 16
        %v4805 = vrot.slane %v4803, 5
        %v4806 = vsel %vm925, %v4801, %v4805
        %v4807 = vshrl.u32 %v4283, 16
        %v4809 = vrot.slane %v4807, 4
        %v4810 = vor.u32 %v4809, %v4805
        %v4811 = vrot.slane %v4810, 4
        %v4813 = vshll.u32 %v4284, 16
        %v4815 = vrot.slane %v4813, 5
        %v4816 = vsel %vm925, %v4811, %v4815
        %v4817 = vunpack.c.l.b16 %v4806
        %v4818 = vunpack.c.l.b16 %v4816
        %v4819 = vpack.c.b16 %v4818, %v4817
        %4821 = vst [vmem:[#allocation3 + $0x38] sm:$0xff] %v4703
        %4822 = vst [vmem:[#allocation3 + $0x80] sm:$0xff] %v4704
        %4823 = vst [vmem:[#allocation3 + $0xc8] sm:$0xff] %v4705
        %4824 = vst [vmem:[#allocation3 + $0x110] sm:$0xff] %v4706
        %4825 = vst [vmem:[#allocation3 + $0x158] sm:$0xff] %v4707
        %4826 = vst [vmem:[#allocation3 + $0x1a0] sm:$0xff] %v4708
        %4827 = vst [vmem:[#allocation3 + $0x1e8] sm:$0xff] %v4709
        %4828 = vst [vmem:[#allocation3 + $0x230] sm:$0xff] %v4710
        %4829 = vst [vmem:[#allocation3 + $0x278] sm:$0xff] %v4711
        %4830 = vst [vmem:[#allocation3 + $0x2c0] sm:$0xff] %v4712
        %4831 = vst [vmem:[#allocation3 + $0x308] sm:$0xff] %v4713
        %4832 = vst [vmem:[#allocation3 + $0x350] sm:$0xff] %v4714
        %4833 = vst [vmem:[#allocation3 + $0x398] sm:$0xff] %v4715
        %4834 = vst [vmem:[#allocation3 + $0x3e0] sm:$0xff] %v4716
        %4835 = vst [vmem:[#allocation3 + $0x428] sm:$0xff] %v4775
        %4836 = vst [vmem:[#allocation3 + $0x470] sm:$0xff] %v4819
        %v4837 = vld [vmem:[#allocation2] sm:$0xe]
        %v4838 = vld [vmem:[#allocation2 + $0x4] sm:$0xf]
        %v4839 = vld [vmem:[#allocation2 + $0x8] sm:$0x1]
        %v4840 = vld [vmem:[#allocation2 + $0xc] sm:$0xe]
        %v4841 = vld [vmem:[#allocation2 + $0x10] sm:$0xf]
        %v4842 = vld [vmem:[#allocation2 + $0x14] sm:$0x1]
        %v4843 = vld [vmem:[#allocation2 + $0x18] sm:$0xe]
        %v4844 = vld [vmem:[#allocation2 + $0x1c] sm:$0xf]
        %v4845 = vld [vmem:[#allocation2 + $0x20] sm:$0x1]
        %v4846 = vld [vmem:[#allocation2 + $0x24] sm:$0xe]
        %v4847 = vld [vmem:[#allocation2 + $0x28] sm:$0xf]
        %v4848 = vld [vmem:[#allocation2 + $0x2c] sm:$0x1]
        %v4849 = vld [vmem:[#allocation2 + $0x30] sm:$0xe]
        %v4850 = vld [vmem:[#allocation2 + $0x34] sm:$0xf]
        %v4851 = vld [vmem:[#allocation2 + $0x38] sm:$0x1]
        %v4852 = vld [vmem:[#allocation2 + $0x3c] sm:$0xe]
        %v4853 = vld [vmem:[#allocation2 + $0x40] sm:$0xf]
        %v4854 = vld [vmem:[#allocation2 + $0x44] sm:$0x1]
        %v4855 = vld [vmem:[#allocation2 + $0x48] sm:$0xe]
        %v4856 = vld [vmem:[#allocation2 + $0x4c] sm:$0xf]
        %v4857 = vld [vmem:[#allocation2 + $0x50] sm:$0x1]
        %v4858 = vld [vmem:[#allocation2 + $0x54] sm:$0xe]
        %v4859 = vld [vmem:[#allocation2 + $0x58] sm:$0xf]
        %v4860 = vld [vmem:[#allocation2 + $0x5c] sm:$0x1]
        %v4861 = vld [vmem:[#allocation2 + $0x60] sm:$0xe]
        %v4862 = vld [vmem:[#allocation2 + $0x64] sm:$0xf]
        %v4863 = vld [vmem:[#allocation2 + $0x68] sm:$0x1]
        %v4864 = vld [vmem:[#allocation2 + $0x6c] sm:$0xe]
        %v4865 = vld [vmem:[#allocation2 + $0x70] sm:$0xf]
        %v4866 = vld [vmem:[#allocation2 + $0x74] sm:$0x1]
        %v4867 = vld [vmem:[#allocation2 + $0x78] sm:$0xe]
        %v4868 = vld [vmem:[#allocation2 + $0x7c] sm:$0xf]
        %v4869 = vld [vmem:[#allocation2 + $0x80] sm:$0x1]
        %v4870 = vld [vmem:[#allocation2 + $0x84] sm:$0xe]
        %v4871 = vld [vmem:[#allocation2 + $0x88] sm:$0xf]
        %v4872 = vld [vmem:[#allocation2 + $0x8c] sm:$0x1]
        %v4873 = vld [vmem:[#allocation2 + $0x90] sm:$0xe]
        %v4874 = vld [vmem:[#allocation2 + $0x94] sm:$0xf]
        %v4875 = vld [vmem:[#allocation2 + $0x98] sm:$0x1]
        %v4876 = vld [vmem:[#allocation2 + $0x9c] sm:$0xe]
        %v4877 = vld [vmem:[#allocation2 + $0xa0] sm:$0xf]
        %v4878 = vld [vmem:[#allocation2 + $0xa4] sm:$0x1]
        %v4879 = vld [vmem:[#allocation2 + $0xa8] sm:$0xe]
        %v4880 = vld [vmem:[#allocation2 + $0xac] sm:$0xf]
        %v4881 = vld [vmem:[#allocation2 + $0xb0] sm:$0x1]
        %v4882 = vld [vmem:[#allocation2 + $0xb4] sm:$0xe]
        %v4883 = vld [vmem:[#allocation2 + $0xb8] sm:$0xf]
        %v4884 = vld [vmem:[#allocation2 + $0xbc] sm:$0x1]
        %v4885 = vld [vmem:[#allocation2 + $0xc0] sm:$0xe]
        %v4886 = vld [vmem:[#allocation2 + $0xc4] sm:$0xf]
        %v4887 = vld [vmem:[#allocation2 + $0xc8] sm:$0x1]
        %v4888 = vld [vmem:[#allocation2 + $0xcc] sm:$0xe]
        %v4889 = vld [vmem:[#allocation2 + $0xd0] sm:$0xf]
        %v4890 = vld [vmem:[#allocation2 + $0xd4] sm:$0x1]
        %v4939 = vrot.slane %v4837, 5
        %v4940 = vrot.slane %v4939, 4
        %v4941 = vrot.slane %v4838, 5
        %v4942 = vsel %vm1582, %v4940, %v4941
        %v4943 = vrot.slane %v4941, 4
        %v4944 = vrot.slane %v4839, 5
        %v4945 = vsel %vm1582, %v4943, %v4944
        %v4946 = vrot.slane %v4840, 5
        %v4947 = vrot.slane %v4946, 4
        %v4948 = vrot.slane %v4841, 5
        %v4949 = vsel %vm1582, %v4947, %v4948
        %v4950 = vrot.slane %v4948, 4
        %v4951 = vrot.slane %v4842, 5
        %v4952 = vsel %vm1582, %v4950, %v4951
        %v4953 = vrot.slane %v4843, 5
        %v4954 = vrot.slane %v4953, 4
        %v4955 = vrot.slane %v4844, 5
        %v4956 = vsel %vm1582, %v4954, %v4955
        %v4957 = vrot.slane %v4955, 4
        %v4958 = vrot.slane %v4845, 5
        %v4959 = vsel %vm1582, %v4957, %v4958
        %v4960 = vrot.slane %v4846, 5
        %v4961 = vrot.slane %v4960, 4
        %v4962 = vrot.slane %v4847, 5
        %v4963 = vsel %vm1582, %v4961, %v4962
        %v4964 = vrot.slane %v4962, 4
        %v4965 = vrot.slane %v4848, 5
        %v4966 = vsel %vm1582, %v4964, %v4965
        %v4967 = vrot.slane %v4849, 5
        %v4968 = vrot.slane %v4967, 4
        %v4969 = vrot.slane %v4850, 5
        %v4970 = vsel %vm1582, %v4968, %v4969
        %v4971 = vrot.slane %v4969, 4
        %v4972 = vrot.slane %v4851, 5
        %v4973 = vsel %vm1582, %v4971, %v4972
        %v4974 = vrot.slane %v4852, 5
        %v4975 = vrot.slane %v4974, 4
        %v4976 = vrot.slane %v4853, 5
        %v4977 = vsel %vm1582, %v4975, %v4976
        %v4978 = vrot.slane %v4976, 4
        %v4979 = vrot.slane %v4854, 5
        %v4980 = vsel %vm1582, %v4978, %v4979
        %v4981 = vrot.slane %v4855, 5
        %v4982 = vrot.slane %v4981, 4
        %v4983 = vrot.slane %v4856, 5
        %v4984 = vsel %vm1582, %v4982, %v4983
        %v4985 = vrot.slane %v4983, 4
        %v4986 = vrot.slane %v4857, 5
        %v4987 = vsel %vm1582, %v4985, %v4986
        %v4988 = vrot.slane %v4858, 5
        %v4989 = vrot.slane %v4988, 4
        %v4990 = vrot.slane %v4859, 5
        %v4991 = vsel %vm1582, %v4989, %v4990
        %v4992 = vrot.slane %v4990, 4
        %v4993 = vrot.slane %v4860, 5
        %v4994 = vsel %vm1582, %v4992, %v4993
        %v4995 = vrot.slane %v4861, 5
        %v4996 = vrot.slane %v4995, 4
        %v4997 = vrot.slane %v4862, 5
        %v4998 = vsel %vm1582, %v4996, %v4997
        %v4999 = vrot.slane %v4997, 4
        %v5000 = vrot.slane %v4863, 5
        %v5001 = vsel %vm1582, %v4999, %v5000
        %v5002 = vrot.slane %v4864, 5
        %v5003 = vrot.slane %v5002, 4
        %v5004 = vrot.slane %v4865, 5
        %v5005 = vsel %vm1582, %v5003, %v5004
        %v5006 = vrot.slane %v5004, 4
        %v5007 = vrot.slane %v4866, 5
        %v5008 = vsel %vm1582, %v5006, %v5007
        %v5009 = vrot.slane %v4867, 5
        %v5010 = vrot.slane %v5009, 4
        %v5011 = vrot.slane %v4868, 5
        %v5012 = vsel %vm1582, %v5010, %v5011
        %v5013 = vrot.slane %v5011, 4
        %v5014 = vrot.slane %v4869, 5
        %v5015 = vsel %vm1582, %v5013, %v5014
        %v5016 = vrot.slane %v4870, 5
        %v5017 = vrot.slane %v5016, 4
        %v5018 = vrot.slane %v4871, 5
        %v5019 = vsel %vm1582, %v5017, %v5018
        %v5020 = vrot.slane %v5018, 4
        %v5021 = vrot.slane %v4872, 5
        %v5022 = vsel %vm1582, %v5020, %v5021
        %v5023 = vrot.slane %v4873, 5
        %v5024 = vrot.slane %v5023, 4
        %v5025 = vrot.slane %v4874, 5
        %v5026 = vsel %vm1582, %v5024, %v5025
        %v5027 = vrot.slane %v5025, 4
        %v5028 = vrot.slane %v4875, 5
        %v5029 = vsel %vm1582, %v5027, %v5028
        %v5030 = vrot.slane %v4876, 5
        %v5031 = vrot.slane %v5030, 4
        %v5032 = vrot.slane %v4877, 5
        %v5033 = vsel %vm1582, %v5031, %v5032
        %v5034 = vrot.slane %v5032, 4
        %v5035 = vrot.slane %v4878, 5
        %v5036 = vsel %vm1582, %v5034, %v5035
        %v5037 = vrot.slane %v4879, 5
        %v5038 = vrot.slane %v5037, 4
        %v5039 = vrot.slane %v4880, 5
        %v5040 = vsel %vm1582, %v5038, %v5039
        %v5041 = vrot.slane %v5039, 4
        %v5042 = vrot.slane %v4881, 5
        %v5043 = vsel %vm1582, %v5041, %v5042
        %v5044 = vrot.slane %v4882, 5
        %v5045 = vrot.slane %v5044, 4
        %v5046 = vrot.slane %v4883, 5
        %v5047 = vsel %vm1582, %v5045, %v5046
        %v5048 = vrot.slane %v5046, 4
        %v5049 = vrot.slane %v4884, 5
        %v5050 = vsel %vm1582, %v5048, %v5049
        %v5051 = vunpack.c.l.b16 %v4942
        %v5052 = vunpack.c.l.b16 %v4945
        %v5053 = vunpack.c.l.b16 %v4949
        %v5054 = vunpack.c.l.b16 %v4952
        %v5055 = vunpack.c.l.b16 %v4956
        %v5056 = vunpack.c.l.b16 %v4959
        %v5057 = vunpack.c.l.b16 %v4963
        %v5058 = vunpack.c.l.b16 %v4966
        %v5059 = vunpack.c.l.b16 %v4970
        %v5060 = vunpack.c.l.b16 %v4973
        %v5061 = vunpack.c.l.b16 %v4977
        %v5062 = vunpack.c.l.b16 %v4980
        %v5063 = vunpack.c.l.b16 %v4984
        %v5064 = vunpack.c.l.b16 %v4987
        %v5065 = vunpack.c.l.b16 %v4991
        %v5066 = vunpack.c.l.b16 %v4994
        %v5067 = vunpack.c.l.b16 %v4998
        %v5068 = vunpack.c.l.b16 %v5001
        %v5069 = vunpack.c.l.b16 %v5005
        %v5070 = vunpack.c.l.b16 %v5008
        %v5071 = vunpack.c.l.b16 %v5012
        %v5072 = vunpack.c.l.b16 %v5015
        %v5073 = vunpack.c.l.b16 %v5019
        %v5074 = vunpack.c.l.b16 %v5022
        %v5075 = vunpack.c.l.b16 %v5026
        %v5076 = vunpack.c.l.b16 %v5029
        %v5077 = vunpack.c.l.b16 %v5033
        %v5078 = vunpack.c.l.b16 %v5036
        %v5079 = vunpack.c.l.b16 %v5040
        %v5080 = vunpack.c.l.b16 %v5043
        %v5081 = vunpack.c.l.b16 %v5047
        %v5082 = vunpack.c.l.b16 %v5050
        %v5083 = vpack.c.b16 %v5052, %v5051
        %v5084 = vpack.c.b16 %v5054, %v5053
        %v5085 = vpack.c.b16 %v5056, %v5055
        %v5086 = vpack.c.b16 %v5058, %v5057
        %v5087 = vpack.c.b16 %v5060, %v5059
        %v5088 = vpack.c.b16 %v5062, %v5061
        %v5089 = vpack.c.b16 %v5064, %v5063
        %v5090 = vpack.c.b16 %v5066, %v5065
        %v5091 = vpack.c.b16 %v5068, %v5067
        %v5092 = vpack.c.b16 %v5070, %v5069
        %v5093 = vpack.c.b16 %v5072, %v5071
        %v5094 = vpack.c.b16 %v5074, %v5073
        %v5095 = vpack.c.b16 %v5076, %v5075
        %v5096 = vpack.c.b16 %v5078, %v5077
        %v5097 = vpack.c.b16 %v5080, %v5079
        %v5098 = vpack.c.b16 %v5082, %v5081
        %5115 = vst [vmem:[#allocation3 + $0x10] sm:$0xff] %v5083
        %5116 = vst [vmem:[#allocation3 + $0x58] sm:$0xff] %v5084
        %5117 = vst [vmem:[#allocation3 + $0xa0] sm:$0xff] %v5085
        %5118 = vst [vmem:[#allocation3 + $0xe8] sm:$0xff] %v5086
        %5119 = vst [vmem:[#allocation3 + $0x130] sm:$0xff] %v5087
        %5120 = vst [vmem:[#allocation3 + $0x178] sm:$0xff] %v5088
        %5121 = vst [vmem:[#allocation3 + $0x1c0] sm:$0xff] %v5089
        %5122 = vst [vmem:[#allocation3 + $0x208] sm:$0xff] %v5090
        %5123 = vst [vmem:[#allocation3 + $0x250] sm:$0xff] %v5091
        %5124 = vst [vmem:[#allocation3 + $0x298] sm:$0xff] %v5092
        %5125 = vst [vmem:[#allocation3 + $0x2e0] sm:$0xff] %v5093
        %5126 = vst [vmem:[#allocation3 + $0x328] sm:$0xff] %v5094
        %5127 = vst [vmem:[#allocation3 + $0x370] sm:$0xff] %v5095
        %5128 = vst [vmem:[#allocation3 + $0x3b8] sm:$0xff] %v5096
        %5129 = vst [vmem:[#allocation3 + $0x400] sm:$0xff] %v5097
        %5130 = vst [vmem:[#allocation3 + $0x448] sm:$0xff] %v5098
        %v5134 = vrot.slane %v4885, 5
        %v5135 = vrot.slane %v5134, 4
        %v5136 = vrot.slane %v4886, 5
        %v5137 = vsel %vm1582, %v5135, %v5136
        %v5138 = vrot.slane %v5136, 4
        %v5139 = vrot.slane %v4887, 5
        %v5140 = vsel %vm1582, %v5138, %v5139
        %v5141 = vunpack.c.l.b16 %v5137
        %v5142 = vunpack.c.l.b16 %v5140
        %v5143 = vpack.c.b16 %v5142, %v5141
        %5145 = vst [vmem:[#allocation3 + $0x28] sm:$0xff] %v5084
        %5146 = vst [vmem:[#allocation3 + $0x70] sm:$0xff] %v5085
        %5147 = vst [vmem:[#allocation3 + $0xb8] sm:$0xff] %v5086
        %5148 = vst [vmem:[#allocation3 + $0x100] sm:$0xff] %v5087
        %5149 = vst [vmem:[#allocation3 + $0x148] sm:$0xff] %v5088
        %5150 = vst [vmem:[#allocation3 + $0x190] sm:$0xff] %v5089
        %5151 = vst [vmem:[#allocation3 + $0x1d8] sm:$0xff] %v5090
        %5152 = vst [vmem:[#allocation3 + $0x220] sm:$0xff] %v5091
        %5153 = vst [vmem:[#allocation3 + $0x268] sm:$0xff] %v5092
        %5154 = vst [vmem:[#allocation3 + $0x2b0] sm:$0xff] %v5093
        %5155 = vst [vmem:[#allocation3 + $0x2f8] sm:$0xff] %v5094
        %5156 = vst [vmem:[#allocation3 + $0x340] sm:$0xff] %v5095
        %5157 = vst [vmem:[#allocation3 + $0x388] sm:$0xff] %v5096
        %5158 = vst [vmem:[#allocation3 + $0x3d0] sm:$0xff] %v5097
        %5159 = vst [vmem:[#allocation3 + $0x418] sm:$0xff] %v5098
        %5160 = vst [vmem:[#allocation3 + $0x460] sm:$0xff] %v5143
        %v5164 = vrot.slane %v4888, 5
        %v5165 = vrot.slane %v5164, 4
        %v5166 = vrot.slane %v4889, 5
        %v5167 = vsel %vm1582, %v5165, %v5166
        %v5168 = vrot.slane %v5166, 4
        %v5169 = vrot.slane %v4890, 5
        %v5170 = vsel %vm1582, %v5168, %v5169
        %v5171 = vunpack.c.l.b16 %v5167
        %v5172 = vunpack.c.l.b16 %v5170
        %v5173 = vpack.c.b16 %v5172, %v5171
        %5175 = vst [vmem:[#allocation3 + $0x40] sm:$0xff] %v5085
        %5176 = vst [vmem:[#allocation3 + $0x88] sm:$0xff] %v5086
        %5177 = vst [vmem:[#allocation3 + $0xd0] sm:$0xff] %v5087
        %5178 = vst [vmem:[#allocation3 + $0x118] sm:$0xff] %v5088
        %5179 = vst [vmem:[#allocation3 + $0x160] sm:$0xff] %v5089
        %5180 = vst [vmem:[#allocation3 + $0x1a8] sm:$0xff] %v5090
        %5181 = vst [vmem:[#allocation3 + $0x1f0] sm:$0xff] %v5091
        %5182 = vst [vmem:[#allocation3 + $0x238] sm:$0xff] %v5092
        %5183 = vst [vmem:[#allocation3 + $0x280] sm:$0xff] %v5093
        %5184 = vst [vmem:[#allocation3 + $0x2c8] sm:$0xff] %v5094
        %5185 = vst [vmem:[#allocation3 + $0x310] sm:$0xff] %v5095
        %5186 = vst [vmem:[#allocation3 + $0x358] sm:$0xff] %v5096
        %5187 = vst [vmem:[#allocation3 + $0x3a0] sm:$0xff] %v5097
        %5188 = vst [vmem:[#allocation3 + $0x3e8] sm:$0xff] %v5098
        %5189 = vst [vmem:[#allocation3 + $0x430] sm:$0xff] %v5143
        %5190 = vst [vmem:[#allocation3 + $0x478] sm:$0xff] %v5173
        %v5191 = vld [vmem:[#allocation3] sm:$0xff]
        %v5192 = vld [vmem:[#allocation3 + $0x8] sm:$0xff]
        %v5193 = vld [vmem:[#allocation3 + $0x10] sm:$0xff]
        %v5194 = vld [vmem:[#allocation3 + $0x18] sm:$0xff]
        %v5195 = vld [vmem:[#allocation3 + $0x20] sm:$0xff]
        %v5196 = vld [vmem:[#allocation3 + $0x28] sm:$0xff]
        %v5197 = vld [vmem:[#allocation3 + $0x30] sm:$0xff]
        %v5198 = vld [vmem:[#allocation3 + $0x38] sm:$0xff]
        %v5199 = vld [vmem:[#allocation3 + $0x40] sm:$0xff]
        %v5200 = vld [vmem:[#allocation3 + $0x48] sm:$0xff]
        %v5201 = vld [vmem:[#allocation3 + $0x50] sm:$0xff]
        %v5202 = vld [vmem:[#allocation3 + $0x58] sm:$0xff]
        %v5203 = vld [vmem:[#allocation3 + $0x60] sm:$0xff]
        %v5204 = vld [vmem:[#allocation3 + $0x68] sm:$0xff]
        %v5205 = vld [vmem:[#allocation3 + $0x70] sm:$0xff]
        %v5206 = vld [vmem:[#allocation3 + $0x78] sm:$0xff]
        %v5207 = vld [vmem:[#allocation3 + $0x80] sm:$0xff]
        %v5208 = vld [vmem:[#allocation3 + $0x88] sm:$0xff]
        %v5209 = vld [vmem:[#allocation3 + $0x90] sm:$0xff]
        %v5210 = vld [vmem:[#allocation3 + $0x98] sm:$0xff]
        %v5211 = vld [vmem:[#allocation3 + $0xa0] sm:$0xff]
        %v5212 = vld [vmem:[#allocation3 + $0xa8] sm:$0xff]
        %v5213 = vld [vmem:[#allocation3 + $0xb0] sm:$0xff]
        %v5214 = vld [vmem:[#allocation3 + $0xb8] sm:$0xff]
        %v5215 = vld [vmem:[#allocation3 + $0xc0] sm:$0xff]
        %v5216 = vld [vmem:[#allocation3 + $0xc8] sm:$0xff]
        %v5217 = vld [vmem:[#allocation3 + $0xd0] sm:$0xff]
        %v5218 = vld [vmem:[#allocation3 + $0xd8] sm:$0xff]
        %v5219 = vld [vmem:[#allocation3 + $0xe0] sm:$0xff]
        %v5220 = vld [vmem:[#allocation3 + $0xe8] sm:$0xff]
        %v5221 = vld [vmem:[#allocation3 + $0xf0] sm:$0xff]
        %v5222 = vld [vmem:[#allocation3 + $0xf8] sm:$0xff]
        %v5223 = vld [vmem:[#allocation3 + $0x100] sm:$0xff]
        %v5224 = vld [vmem:[#allocation3 + $0x108] sm:$0xff]
        %v5225 = vld [vmem:[#allocation3 + $0x110] sm:$0xff]
        %v5226 = vld [vmem:[#allocation3 + $0x118] sm:$0xff]
        %v5227 = vld [vmem:[#allocation3 + $0x120] sm:$0xff]
        %v5228 = vld [vmem:[#allocation3 + $0x128] sm:$0xff]
        %v5229 = vld [vmem:[#allocation3 + $0x130] sm:$0xff]
        %v5230 = vld [vmem:[#allocation3 + $0x138] sm:$0xff]
        %v5231 = vld [vmem:[#allocation3 + $0x140] sm:$0xff]
        %v5232 = vld [vmem:[#allocation3 + $0x148] sm:$0xff]
        %v5233 = vld [vmem:[#allocation3 + $0x150] sm:$0xff]
        %v5234 = vld [vmem:[#allocation3 + $0x158] sm:$0xff]
        %v5235 = vld [vmem:[#allocation3 + $0x160] sm:$0xff]
        %v5236 = vld [vmem:[#allocation3 + $0x168] sm:$0xff]
        %v5237 = vld [vmem:[#allocation3 + $0x170] sm:$0xff]
        %v5238 = vld [vmem:[#allocation3 + $0x178] sm:$0xff]
        %v5239 = vld [vmem:[#allocation3 + $0x180] sm:$0xff]
        %v5240 = vld [vmem:[#allocation3 + $0x188] sm:$0xff]
        %v5241 = vld [vmem:[#allocation3 + $0x190] sm:$0xff]
        %v5242 = vld [vmem:[#allocation3 + $0x198] sm:$0xff]
        %v5243 = vld [vmem:[#allocation3 + $0x1a0] sm:$0xff]
        %v5244 = vld [vmem:[#allocation3 + $0x1a8] sm:$0xff]
        %v5245 = vld [vmem:[#allocation3 + $0x1b0] sm:$0xff]
        %v5246 = vld [vmem:[#allocation3 + $0x1b8] sm:$0xff]
        %v5247 = vld [vmem:[#allocation3 + $0x1c0] sm:$0xff]
        %v5248 = vld [vmem:[#allocation3 + $0x1c8] sm:$0xff]
        %v5249 = vld [vmem:[#allocation3 + $0x1d0] sm:$0xff]
        %v5250 = vld [vmem:[#allocation3 + $0x1d8] sm:$0xff]
        %v5251 = vld [vmem:[#allocation3 + $0x1e0] sm:$0xff]
        %v5252 = vld [vmem:[#allocation3 + $0x1e8] sm:$0xff]
        %v5253 = vld [vmem:[#allocation3 + $0x1f0] sm:$0xff]
        %v5254 = vld [vmem:[#allocation3 + $0x1f8] sm:$0xff]
        %v5255 = vld [vmem:[#allocation3 + $0x200] sm:$0xff]
        %v5256 = vld [vmem:[#allocation3 + $0x208] sm:$0xff]
        %v5257 = vld [vmem:[#allocation3 + $0x210] sm:$0xff]
        %v5258 = vld [vmem:[#allocation3 + $0x218] sm:$0xff]
        %v5259 = vld [vmem:[#allocation3 + $0x220] sm:$0xff]
        %v5260 = vld [vmem:[#allocation3 + $0x228] sm:$0xff]
        %v5261 = vld [vmem:[#allocation3 + $0x230] sm:$0xff]
        %v5262 = vld [vmem:[#allocation3 + $0x238] sm:$0xff]
        %v5263 = vld [vmem:[#allocation3 + $0x240] sm:$0xff]
        %v5264 = vld [vmem:[#allocation3 + $0x248] sm:$0xff]
        %v5265 = vld [vmem:[#allocation3 + $0x250] sm:$0xff]
        %v5266 = vld [vmem:[#allocation3 + $0x258] sm:$0xff]
        %v5267 = vld [vmem:[#allocation3 + $0x260] sm:$0xff]
        %v5268 = vld [vmem:[#allocation3 + $0x268] sm:$0xff]
        %v5269 = vld [vmem:[#allocation3 + $0x270] sm:$0xff]
        %v5270 = vld [vmem:[#allocation3 + $0x278] sm:$0xff]
        %v5271 = vld [vmem:[#allocation3 + $0x280] sm:$0xff]
        %v5272 = vld [vmem:[#allocation3 + $0x288] sm:$0xff]
        %v5273 = vld [vmem:[#allocation3 + $0x290] sm:$0xff]
        %v5274 = vld [vmem:[#allocation3 + $0x298] sm:$0xff]
        %v5275 = vld [vmem:[#allocation3 + $0x2a0] sm:$0xff]
        %v5276 = vld [vmem:[#allocation3 + $0x2a8] sm:$0xff]
        %v5277 = vld [vmem:[#allocation3 + $0x2b0] sm:$0xff]
        %v5278 = vld [vmem:[#allocation3 + $0x2b8] sm:$0xff]
        %v5279 = vld [vmem:[#allocation3 + $0x2c0] sm:$0xff]
        %v5280 = vld [vmem:[#allocation3 + $0x2c8] sm:$0xff]
        %v5281 = vld [vmem:[#allocation3 + $0x2d0] sm:$0xff]
        %v5282 = vld [vmem:[#allocation3 + $0x2d8] sm:$0xff]
        %v5283 = vld [vmem:[#allocation3 + $0x2e0] sm:$0xff]
        %v5284 = vld [vmem:[#allocation3 + $0x2e8] sm:$0xff]
        %v5285 = vld [vmem:[#allocation3 + $0x2f0] sm:$0xff]
        %v5286 = vld [vmem:[#allocation3 + $0x2f8] sm:$0xff]
        %v5287 = vld [vmem:[#allocation3 + $0x300] sm:$0xff]
        %v5288 = vld [vmem:[#allocation3 + $0x308] sm:$0xff]
        %v5289 = vld [vmem:[#allocation3 + $0x310] sm:$0xff]
        %v5290 = vld [vmem:[#allocation3 + $0x318] sm:$0xff]
        %v5291 = vld [vmem:[#allocation3 + $0x320] sm:$0xff]
        %v5292 = vld [vmem:[#allocation3 + $0x328] sm:$0xff]
        %v5293 = vld [vmem:[#allocation3 + $0x330] sm:$0xff]
        %v5294 = vld [vmem:[#allocation3 + $0x338] sm:$0xff]
        %v5295 = vld [vmem:[#allocation3 + $0x340] sm:$0xff]
        %v5296 = vld [vmem:[#allocation3 + $0x348] sm:$0xff]
        %v5297 = vld [vmem:[#allocation3 + $0x350] sm:$0xff]
        %v5298 = vld [vmem:[#allocation3 + $0x358] sm:$0xff]
        %v5299 = vld [vmem:[#allocation3 + $0x360] sm:$0xff]
        %v5300 = vld [vmem:[#allocation3 + $0x368] sm:$0xff]
        %v5301 = vld [vmem:[#allocation3 + $0x370] sm:$0xff]
        %v5302 = vld [vmem:[#allocation3 + $0x378] sm:$0xff]
        %v5303 = vld [vmem:[#allocation3 + $0x380] sm:$0xff]
        %v5304 = vld [vmem:[#allocation3 + $0x388] sm:$0xff]
        %v5305 = vld [vmem:[#allocation3 + $0x390] sm:$0xff]
        %v5306 = vld [vmem:[#allocation3 + $0x398] sm:$0xff]
        %v5307 = vld [vmem:[#allocation3 + $0x3a0] sm:$0xff]
        %v5308 = vld [vmem:[#allocation3 + $0x3a8] sm:$0xff]
        %v5309 = vld [vmem:[#allocation3 + $0x3b0] sm:$0xff]
        %v5310 = vld [vmem:[#allocation3 + $0x3b8] sm:$0xff]
        %v5311 = vld [vmem:[#allocation3 + $0x3c0] sm:$0xff]
        %v5312 = vld [vmem:[#allocation3 + $0x3c8] sm:$0xff]
        %v5313 = vld [vmem:[#allocation3 + $0x3d0] sm:$0xff]
        %v5314 = vld [vmem:[#allocation3 + $0x3d8] sm:$0xff]
        %v5315 = vld [vmem:[#allocation3 + $0x3e0] sm:$0xff]
        %v5316 = vld [vmem:[#allocation3 + $0x3e8] sm:$0xff]
        %v5317 = vld [vmem:[#allocation3 + $0x3f0] sm:$0xff]
        %v5318 = vld [vmem:[#allocation3 + $0x3f8] sm:$0xff]
        %v5319 = vld [vmem:[#allocation3 + $0x400] sm:$0xff]
        %v5320 = vld [vmem:[#allocation3 + $0x408] sm:$0xff]
        %v5321 = vld [vmem:[#allocation3 + $0x410] sm:$0xff]
        %v5322 = vld [vmem:[#allocation3 + $0x418] sm:$0xff]
        %v5323 = vld [vmem:[#allocation3 + $0x420] sm:$0xff]
        %v5324 = vld [vmem:[#allocation3 + $0x428] sm:$0xff]
        %v5325 = vld [vmem:[#allocation3 + $0x430] sm:$0xff]
        %v5326 = vld [vmem:[#allocation3 + $0x438] sm:$0xff]
        %v5327 = vld [vmem:[#allocation3 + $0x440] sm:$0xff]
        %v5328 = vld [vmem:[#allocation3 + $0x448] sm:$0xff]
        %v5329 = vld [vmem:[#allocation3 + $0x450] sm:$0xff]
        %v5330 = vld [vmem:[#allocation3 + $0x458] sm:$0xff]
        %v5331 = vld [vmem:[#allocation3 + $0x460] sm:$0xff]
        %v5332 = vld [vmem:[#allocation3 + $0x468] sm:$0xff]
        %v5333 = vld [vmem:[#allocation3 + $0x470] sm:$0xff]
        %v5334 = vld [vmem:[#allocation3 + $0x478] sm:$0xff]
        %v5335 = vld [vmem:[%s2] sm:$0xf]
        %v5336 = vld [vmem:[%s2 + $0x4] sm:$0xf]
        %v5337 = vld [vmem:[%s2 + $0x8] sm:$0xf]
        %v5338 = vld [vmem:[%s2 + $0xc] sm:$0xf]
        %v5339 = vld [vmem:[%s2 + $0x10] sm:$0xf]
        %v5340 = vld [vmem:[%s2 + $0x14] sm:$0xf]
        %v5341 = vld [vmem:[%s2 + $0x18] sm:$0xf]
        %v5342 = vld [vmem:[%s2 + $0x1c] sm:$0xf]
        %v5343 = vld [vmem:[%s2 + $0x20] sm:$0xf]
        %v5344 = vld [vmem:[%s2 + $0x24] sm:$0xf]
        %v5345 = vld [vmem:[%s2 + $0x28] sm:$0xf]
        %v5346 = vld [vmem:[%s2 + $0x2c] sm:$0xf]
        %v5347 = vld [vmem:[%s2 + $0x30] sm:$0xf]
        %v5348 = vld [vmem:[%s2 + $0x34] sm:$0xf]
        %v5349 = vld [vmem:[%s2 + $0x38] sm:$0xf]
        %v5350 = vld [vmem:[%s2 + $0x3c] sm:$0xf]
        %v5351 = vld [vmem:[%s2 + $0x40] sm:$0xf]
        %v5352 = vld [vmem:[%s2 + $0x44] sm:$0xf]
        %v5353 = vld [vmem:[%s2 + $0x48] sm:$0xf]
        %v5354 = vld [vmem:[%s2 + $0x4c] sm:$0xf]
        %v5355 = vld [vmem:[%s2 + $0x50] sm:$0xf]
        %v5356 = vld [vmem:[%s2 + $0x54] sm:$0xf]
        %v5357 = vld [vmem:[%s2 + $0x58] sm:$0xf]
        %v5358 = vld [vmem:[%s2 + $0x5c] sm:$0xf]
        %v5359 = vld [vmem:[%s2 + $0x60] sm:$0xf]
        %v5360 = vld [vmem:[%s2 + $0x64] sm:$0xf]
        %v5361 = vld [vmem:[%s2 + $0x68] sm:$0xf]
        %v5362 = vld [vmem:[%s2 + $0x6c] sm:$0xf]
        %v5363 = vld [vmem:[%s2 + $0x70] sm:$0xf]
        %v5364 = vld [vmem:[%s2 + $0x74] sm:$0xf]
        %v5365 = vld [vmem:[%s2 + $0x78] sm:$0xf]
        %v5366 = vld [vmem:[%s2 + $0x7c] sm:$0xf]
        %v5367 = vld [vmem:[%s2 + $0x80] sm:$0xf]
        %v5368 = vld [vmem:[%s2 + $0x84] sm:$0xf]
        %v5369 = vld [vmem:[%s2 + $0x88] sm:$0xf]
        %v5370 = vld [vmem:[%s2 + $0x8c] sm:$0xf]
        %v5371 = vld [vmem:[%s2 + $0x90] sm:$0xf]
        %v5372 = vld [vmem:[%s2 + $0x94] sm:$0xf]
        %v5373 = vld [vmem:[%s2 + $0x98] sm:$0xf]
        %v5374 = vld [vmem:[%s2 + $0x9c] sm:$0xf]
        %v5375 = vld [vmem:[%s2 + $0xa0] sm:$0xf]
        %v5376 = vld [vmem:[%s2 + $0xa4] sm:$0xf]
        %v5377 = vld [vmem:[%s2 + $0xa8] sm:$0xf]
        %v5378 = vld [vmem:[%s2 + $0xac] sm:$0xf]
        %v5379 = vld [vmem:[%s2 + $0xb0] sm:$0xf]
        %v5380 = vld [vmem:[%s2 + $0xb4] sm:$0xf]
        %v5381 = vld [vmem:[%s2 + $0xb8] sm:$0xf]
        %v5382 = vld [vmem:[%s2 + $0xbc] sm:$0xf]
        %v5383 = vld [vmem:[%s2 + $0xc0] sm:$0xf]
        %v5384 = vld [vmem:[%s2 + $0xc4] sm:$0xf]
        %v5385 = vld [vmem:[%s2 + $0xc8] sm:$0xf]
        %v5386 = vld [vmem:[%s2 + $0xcc] sm:$0xf]
        %v5387 = vld [vmem:[%s2 + $0xd0] sm:$0xf]
        %v5388 = vld [vmem:[%s2 + $0xd4] sm:$0xf]
        %v5389 = vld [vmem:[%s2 + $0xd8] sm:$0xf]
        %v5390 = vld [vmem:[%s2 + $0xdc] sm:$0xf]
        %v5391 = vld [vmem:[%s2 + $0xe0] sm:$0xf]
        %v5392 = vld [vmem:[%s2 + $0xe4] sm:$0xf]
        %v5393 = vld [vmem:[%s2 + $0xe8] sm:$0xf]
        %v5394 = vld [vmem:[%s2 + $0xec] sm:$0xf]
        %v5395 = vld [vmem:[%s2 + $0xf0] sm:$0xf]
        %v5396 = vld [vmem:[%s2 + $0xf4] sm:$0xf]
        %v5397 = vld [vmem:[%s2 + $0xf8] sm:$0xf]
        %v5398 = vld [vmem:[%s2 + $0xfc] sm:$0xf]
        %v5399 = vld [vmem:[%s2 + $0x100] sm:$0xf]
        %v5400 = vld [vmem:[%s2 + $0x104] sm:$0xf]
        %v5401 = vld [vmem:[%s2 + $0x108] sm:$0xf]
        %v5402 = vld [vmem:[%s2 + $0x10c] sm:$0xf]
        %v5403 = vld [vmem:[%s2 + $0x110] sm:$0xf]
        %v5404 = vld [vmem:[%s2 + $0x114] sm:$0xf]
        %v5405 = vld [vmem:[%s2 + $0x118] sm:$0xf]
        %v5406 = vld [vmem:[%s2 + $0x11c] sm:$0xf]
        %v5407 = vld [vmem:[%s2 + $0x120] sm:$0xf]
        %v5408 = vld [vmem:[%s2 + $0x124] sm:$0xf]
        %v5409 = vld [vmem:[%s2 + $0x128] sm:$0xf]
        %v5410 = vld [vmem:[%s2 + $0x12c] sm:$0xf]
        %v5411 = vld [vmem:[%s2 + $0x130] sm:$0xf]
        %v5412 = vld [vmem:[%s2 + $0x134] sm:$0xf]
        %v5413 = vld [vmem:[%s2 + $0x138] sm:$0xf]
        %v5414 = vld [vmem:[%s2 + $0x13c] sm:$0xf]
        %v5415 = vld [vmem:[%s2 + $0x140] sm:$0xf]
        %v5416 = vld [vmem:[%s2 + $0x144] sm:$0xf]
        %v5417 = vld [vmem:[%s2 + $0x148] sm:$0xf]
        %v5418 = vld [vmem:[%s2 + $0x14c] sm:$0xf]
        %v5419 = vld [vmem:[%s2 + $0x150] sm:$0xf]
        %v5420 = vld [vmem:[%s2 + $0x154] sm:$0xf]
        %v5421 = vld [vmem:[%s2 + $0x158] sm:$0xf]
        %v5422 = vld [vmem:[%s2 + $0x15c] sm:$0xf]
        %v5423 = vld [vmem:[%s2 + $0x160] sm:$0xf]
        %v5424 = vld [vmem:[%s2 + $0x164] sm:$0xf]
        %v5425 = vld [vmem:[%s2 + $0x168] sm:$0xf]
        %v5426 = vld [vmem:[%s2 + $0x16c] sm:$0xf]
        %v5427 = vld [vmem:[%s2 + $0x170] sm:$0xf]
        %v5428 = vld [vmem:[%s2 + $0x174] sm:$0xf]
        %v5429 = vld [vmem:[%s2 + $0x178] sm:$0xf]
        %v5430 = vld [vmem:[%s2 + $0x17c] sm:$0xf]
        %v5431 = vld [vmem:[%s2 + $0x180] sm:$0xf]
        %v5432 = vld [vmem:[%s2 + $0x184] sm:$0xf]
        %v5433 = vld [vmem:[%s2 + $0x188] sm:$0xf]
        %v5434 = vld [vmem:[%s2 + $0x18c] sm:$0xf]
        %v5435 = vld [vmem:[%s2 + $0x190] sm:$0xf]
        %v5436 = vld [vmem:[%s2 + $0x194] sm:$0xf]
        %v5437 = vld [vmem:[%s2 + $0x198] sm:$0xf]
        %v5438 = vld [vmem:[%s2 + $0x19c] sm:$0xf]
        %v5439 = vld [vmem:[%s2 + $0x1a0] sm:$0xf]
        %v5440 = vld [vmem:[%s2 + $0x1a4] sm:$0xf]
        %v5441 = vld [vmem:[%s2 + $0x1a8] sm:$0xf]
        %v5442 = vld [vmem:[%s2 + $0x1ac] sm:$0xf]
        %v5443 = vld [vmem:[%s2 + $0x1b0] sm:$0xf]
        %v5444 = vld [vmem:[%s2 + $0x1b4] sm:$0xf]
        %v5445 = vld [vmem:[%s2 + $0x1b8] sm:$0xf]
        %v5446 = vld [vmem:[%s2 + $0x1bc] sm:$0xf]
        %v5447 = vld [vmem:[%s2 + $0x1c0] sm:$0xf]
        %v5448 = vld [vmem:[%s2 + $0x1c4] sm:$0xf]
        %v5449 = vld [vmem:[%s2 + $0x1c8] sm:$0xf]
        %v5450 = vld [vmem:[%s2 + $0x1cc] sm:$0xf]
        %v5451 = vld [vmem:[%s2 + $0x1d0] sm:$0xf]
        %v5452 = vld [vmem:[%s2 + $0x1d4] sm:$0xf]
        %v5453 = vld [vmem:[%s2 + $0x1d8] sm:$0xf]
        %v5454 = vld [vmem:[%s2 + $0x1dc] sm:$0xf]
        %v5455 = vld [vmem:[%s2 + $0x1e0] sm:$0xf]
        %v5456 = vld [vmem:[%s2 + $0x1e4] sm:$0xf]
        %v5457 = vld [vmem:[%s2 + $0x1e8] sm:$0xf]
        %v5458 = vld [vmem:[%s2 + $0x1ec] sm:$0xf]
        %v5459 = vld [vmem:[%s2 + $0x1f0] sm:$0xf]
        %v5460 = vld [vmem:[%s2 + $0x1f4] sm:$0xf]
        %v5461 = vld [vmem:[%s2 + $0x1f8] sm:$0xf]
        %v5462 = vld [vmem:[%s2 + $0x1fc] sm:$0xf]
        %v5463 = vld [vmem:[%s2 + $0x200] sm:$0xf]
        %v5464 = vld [vmem:[%s2 + $0x204] sm:$0xf]
        %v5465 = vld [vmem:[%s2 + $0x208] sm:$0xf]
        %v5466 = vld [vmem:[%s2 + $0x20c] sm:$0xf]
        %v5467 = vld [vmem:[%s2 + $0x210] sm:$0xf]
        %v5468 = vld [vmem:[%s2 + $0x214] sm:$0xf]
        %v5469 = vld [vmem:[%s2 + $0x218] sm:$0xf]
        %v5470 = vld [vmem:[%s2 + $0x21c] sm:$0xf]
        %v5471 = vld [vmem:[%s2 + $0x220] sm:$0xf]
        %v5472 = vld [vmem:[%s2 + $0x224] sm:$0xf]
        %v5473 = vld [vmem:[%s2 + $0x228] sm:$0xf]
        %v5474 = vld [vmem:[%s2 + $0x22c] sm:$0xf]
        %v5475 = vld [vmem:[%s2 + $0x230] sm:$0xf]
        %v5476 = vld [vmem:[%s2 + $0x234] sm:$0xf]
        %v5477 = vld [vmem:[%s2 + $0x238] sm:$0xf]
        %v5478 = vld [vmem:[%s2 + $0x23c] sm:$0xf]
        %v5623 = vunpack.c.l.b16 %v5335
        %v5624 = vunpack.c.l.b16 %v5336
        %v5625 = vunpack.c.l.b16 %v5337
        %v5626 = vunpack.c.l.b16 %v5338
        %v5627 = vunpack.c.l.b16 %v5339
        %v5628 = vunpack.c.l.b16 %v5340
        %v5629 = vunpack.c.l.b16 %v5341
        %v5630 = vunpack.c.l.b16 %v5342
        %v5631 = vunpack.c.l.b16 %v5343
        %v5632 = vunpack.c.l.b16 %v5344
        %v5633 = vunpack.c.l.b16 %v5345
        %v5634 = vunpack.c.l.b16 %v5346
        %v5635 = vunpack.c.l.b16 %v5347
        %v5636 = vunpack.c.l.b16 %v5348
        %v5637 = vunpack.c.l.b16 %v5349
        %v5638 = vunpack.c.l.b16 %v5350
        %v5639 = vunpack.c.l.b16 %v5351
        %v5640 = vunpack.c.l.b16 %v5352
        %v5641 = vunpack.c.l.b16 %v5353
        %v5642 = vunpack.c.l.b16 %v5354
        %v5643 = vunpack.c.l.b16 %v5355
        %v5644 = vunpack.c.l.b16 %v5356
        %v5645 = vunpack.c.l.b16 %v5357
        %v5646 = vunpack.c.l.b16 %v5358
        %v5647 = vunpack.c.l.b16 %v5359
        %v5648 = vunpack.c.l.b16 %v5360
        %v5649 = vunpack.c.l.b16 %v5361
        %v5650 = vunpack.c.l.b16 %v5362
        %v5651 = vunpack.c.l.b16 %v5363
        %v5652 = vunpack.c.l.b16 %v5364
        %v5653 = vunpack.c.l.b16 %v5365
        %v5654 = vunpack.c.l.b16 %v5366
        %v5655 = vunpack.c.l.b16 %v5367
        %v5656 = vunpack.c.l.b16 %v5368
        %v5657 = vunpack.c.l.b16 %v5369
        %v5658 = vunpack.c.l.b16 %v5370
        %v5659 = vunpack.c.l.b16 %v5371
        %v5660 = vunpack.c.l.b16 %v5372
        %v5661 = vunpack.c.l.b16 %v5373
        %v5662 = vunpack.c.l.b16 %v5374
        %v5663 = vunpack.c.l.b16 %v5375
        %v5664 = vunpack.c.l.b16 %v5376
        %v5665 = vunpack.c.l.b16 %v5377
        %v5666 = vunpack.c.l.b16 %v5378
        %v5667 = vunpack.c.l.b16 %v5379
        %v5668 = vunpack.c.l.b16 %v5380
        %v5669 = vunpack.c.l.b16 %v5381
        %v5670 = vunpack.c.l.b16 %v5382
        %v5671 = vunpack.c.l.b16 %v5383
        %v5672 = vunpack.c.l.b16 %v5384
        %v5673 = vunpack.c.l.b16 %v5385
        %v5674 = vunpack.c.l.b16 %v5386
        %v5675 = vunpack.c.l.b16 %v5387
        %v5676 = vunpack.c.l.b16 %v5388
        %v5677 = vunpack.c.l.b16 %v5389
        %v5678 = vunpack.c.l.b16 %v5390
        %v5679 = vunpack.c.l.b16 %v5391
        %v5680 = vunpack.c.l.b16 %v5392
        %v5681 = vunpack.c.l.b16 %v5393
        %v5682 = vunpack.c.l.b16 %v5394
        %v5683 = vunpack.c.l.b16 %v5395
        %v5684 = vunpack.c.l.b16 %v5396
        %v5685 = vunpack.c.l.b16 %v5397
        %v5686 = vunpack.c.l.b16 %v5398
        %v5687 = vunpack.c.l.b16 %v5399
        %v5688 = vunpack.c.l.b16 %v5400
        %v5689 = vunpack.c.l.b16 %v5401
        %v5690 = vunpack.c.l.b16 %v5402
        %v5691 = vunpack.c.l.b16 %v5403
        %v5692 = vunpack.c.l.b16 %v5404
        %v5693 = vunpack.c.l.b16 %v5405
        %v5694 = vunpack.c.l.b16 %v5406
        %v5695 = vunpack.c.l.b16 %v5407
        %v5696 = vunpack.c.l.b16 %v5408
        %v5697 = vunpack.c.l.b16 %v5409
        %v5698 = vunpack.c.l.b16 %v5410
        %v5699 = vunpack.c.l.b16 %v5411
        %v5700 = vunpack.c.l.b16 %v5412
        %v5701 = vunpack.c.l.b16 %v5413
        %v5702 = vunpack.c.l.b16 %v5414
        %v5703 = vunpack.c.l.b16 %v5415
        %v5704 = vunpack.c.l.b16 %v5416
        %v5705 = vunpack.c.l.b16 %v5417
        %v5706 = vunpack.c.l.b16 %v5418
        %v5707 = vunpack.c.l.b16 %v5419
        %v5708 = vunpack.c.l.b16 %v5420
        %v5709 = vunpack.c.l.b16 %v5421
        %v5710 = vunpack.c.l.b16 %v5422
        %v5711 = vunpack.c.l.b16 %v5423
        %v5712 = vunpack.c.l.b16 %v5424
        %v5713 = vunpack.c.l.b16 %v5425
        %v5714 = vunpack.c.l.b16 %v5426
        %v5715 = vunpack.c.l.b16 %v5427
        %v5716 = vunpack.c.l.b16 %v5428
        %v5717 = vunpack.c.l.b16 %v5429
        %v5718 = vunpack.c.l.b16 %v5430
        %v5719 = vunpack.c.l.b16 %v5431
        %v5720 = vunpack.c.l.b16 %v5432
        %v5721 = vunpack.c.l.b16 %v5433
        %v5722 = vunpack.c.l.b16 %v5434
        %v5723 = vunpack.c.l.b16 %v5435
        %v5724 = vunpack.c.l.b16 %v5436
        %v5725 = vunpack.c.l.b16 %v5437
        %v5726 = vunpack.c.l.b16 %v5438
        %v5727 = vunpack.c.l.b16 %v5439
        %v5728 = vunpack.c.l.b16 %v5440
        %v5729 = vunpack.c.l.b16 %v5441
        %v5730 = vunpack.c.l.b16 %v5442
        %v5731 = vunpack.c.l.b16 %v5443
        %v5732 = vunpack.c.l.b16 %v5444
        %v5733 = vunpack.c.l.b16 %v5445
        %v5734 = vunpack.c.l.b16 %v5446
        %v5735 = vunpack.c.l.b16 %v5447
        %v5736 = vunpack.c.l.b16 %v5448
        %v5737 = vunpack.c.l.b16 %v5449
        %v5738 = vunpack.c.l.b16 %v5450
        %v5739 = vunpack.c.l.b16 %v5451
        %v5740 = vunpack.c.l.b16 %v5452
        %v5741 = vunpack.c.l.b16 %v5453
        %v5742 = vunpack.c.l.b16 %v5454
        %v5743 = vunpack.c.l.b16 %v5455
        %v5744 = vunpack.c.l.b16 %v5456
        %v5745 = vunpack.c.l.b16 %v5457
        %v5746 = vunpack.c.l.b16 %v5458
        %v5747 = vunpack.c.l.b16 %v5459
        %v5748 = vunpack.c.l.b16 %v5460
        %v5749 = vunpack.c.l.b16 %v5461
        %v5750 = vunpack.c.l.b16 %v5462
        %v5751 = vunpack.c.l.b16 %v5463
        %v5752 = vunpack.c.l.b16 %v5464
        %v5753 = vunpack.c.l.b16 %v5465
        %v5754 = vunpack.c.l.b16 %v5466
        %v5755 = vunpack.c.l.b16 %v5467
        %v5756 = vunpack.c.l.b16 %v5468
        %v5757 = vunpack.c.l.b16 %v5469
        %v5758 = vunpack.c.l.b16 %v5470
        %v5759 = vunpack.c.l.b16 %v5471
        %v5760 = vunpack.c.l.b16 %v5472
        %v5761 = vunpack.c.l.b16 %v5473
        %v5762 = vunpack.c.l.b16 %v5474
        %v5763 = vunpack.c.l.b16 %v5475
        %v5764 = vunpack.c.l.b16 %v5476
        %v5765 = vunpack.c.l.b16 %v5477
        %v5766 = vunpack.c.l.b16 %v5478
        %v5767 = vpack.c.b16 %v5624, %v5623
        %v5768 = vpack.c.b16 %v5626, %v5625
        %v5769 = vpack.c.b16 %v5628, %v5627
        %v5770 = vpack.c.b16 %v5630, %v5629
        %v5771 = vpack.c.b16 %v5632, %v5631
        %v5772 = vpack.c.b16 %v5634, %v5633
        %v5773 = vpack.c.b16 %v5636, %v5635
        %v5774 = vpack.c.b16 %v5638, %v5637
        %v5775 = vpack.c.b16 %v5640, %v5639
        %v5776 = vpack.c.b16 %v5642, %v5641
        %v5777 = vpack.c.b16 %v5644, %v5643
        %v5778 = vpack.c.b16 %v5646, %v5645
        %v5779 = vpack.c.b16 %v5648, %v5647
        %v5780 = vpack.c.b16 %v5650, %v5649
        %v5781 = vpack.c.b16 %v5652, %v5651
        %v5782 = vpack.c.b16 %v5654, %v5653
        %v5783 = vpack.c.b16 %v5656, %v5655
        %v5784 = vpack.c.b16 %v5658, %v5657
        %v5785 = vpack.c.b16 %v5660, %v5659
        %v5786 = vpack.c.b16 %v5662, %v5661
        %v5787 = vpack.c.b16 %v5664, %v5663
        %v5788 = vpack.c.b16 %v5666, %v5665
        %v5789 = vpack.c.b16 %v5668, %v5667
        %v5790 = vpack.c.b16 %v5670, %v5669
        %v5791 = vpack.c.b16 %v5672, %v5671
        %v5792 = vpack.c.b16 %v5674, %v5673
        %v5793 = vpack.c.b16 %v5676, %v5675
        %v5794 = vpack.c.b16 %v5678, %v5677
        %v5795 = vpack.c.b16 %v5680, %v5679
        %v5796 = vpack.c.b16 %v5682, %v5681
        %v5797 = vpack.c.b16 %v5684, %v5683
        %v5798 = vpack.c.b16 %v5686, %v5685
        %v5799 = vpack.c.b16 %v5688, %v5687
        %v5800 = vpack.c.b16 %v5690, %v5689
        %v5801 = vpack.c.b16 %v5692, %v5691
        %v5802 = vpack.c.b16 %v5694, %v5693
        %v5803 = vpack.c.b16 %v5696, %v5695
        %v5804 = vpack.c.b16 %v5698, %v5697
        %v5805 = vpack.c.b16 %v5700, %v5699
        %v5806 = vpack.c.b16 %v5702, %v5701
        %v5807 = vpack.c.b16 %v5704, %v5703
        %v5808 = vpack.c.b16 %v5706, %v5705
        %v5809 = vpack.c.b16 %v5708, %v5707
        %v5810 = vpack.c.b16 %v5710, %v5709
        %v5811 = vpack.c.b16 %v5712, %v5711
        %v5812 = vpack.c.b16 %v5714, %v5713
        %v5813 = vpack.c.b16 %v5716, %v5715
        %v5814 = vpack.c.b16 %v5718, %v5717
        %v5815 = vpack.c.b16 %v5720, %v5719
        %v5816 = vpack.c.b16 %v5722, %v5721
        %v5817 = vpack.c.b16 %v5724, %v5723
        %v5818 = vpack.c.b16 %v5726, %v5725
        %v5819 = vpack.c.b16 %v5728, %v5727
        %v5820 = vpack.c.b16 %v5730, %v5729
        %v5821 = vpack.c.b16 %v5732, %v5731
        %v5822 = vpack.c.b16 %v5734, %v5733
        %v5823 = vpack.c.b16 %v5736, %v5735
        %v5824 = vpack.c.b16 %v5738, %v5737
        %v5825 = vpack.c.b16 %v5740, %v5739
        %v5826 = vpack.c.b16 %v5742, %v5741
        %v5827 = vpack.c.b16 %v5744, %v5743
        %v5828 = vpack.c.b16 %v5746, %v5745
        %v5829 = vpack.c.b16 %v5748, %v5747
        %v5830 = vpack.c.b16 %v5750, %v5749
        %v5831 = vpack.c.b16 %v5752, %v5751
        %v5832 = vpack.c.b16 %v5754, %v5753
        %v5833 = vpack.c.b16 %v5756, %v5755
        %v5834 = vpack.c.b16 %v5758, %v5757
        %v5835 = vpack.c.b16 %v5760, %v5759
        %v5836 = vpack.c.b16 %v5762, %v5761
        %v5837 = vpack.c.b16 %v5764, %v5763
        %v5838 = vpack.c.b16 %v5766, %v5765
        %5911 = vmatprep.subr.bf16.mxu0 0
        %5912 = vmatpush1.bf16.msra.mxu0 %v5767
        %5913 = vmatprep.subr.bf16.mxu0 0
        %5914 = vmatpush1.bf16.msra.mxu0 %v5768
        %5915 = vmatprep.subr.bf16.mxu0 0
        %5916 = vmatpush1.bf16.msra.mxu0 %v5769
        %5917 = vmatprep.subr.bf16.mxu0 0
        %5918 = vmatpush1.bf16.msra.mxu0 %v5770
        %5919 = vmatprep.subr.bf16.mxu0 0
        %5920 = vmatpush1.bf16.msra.mxu0 %v5771
        %5921 = vmatprep.subr.bf16.mxu0 0
        %5922 = vmatpush1.bf16.msra.mxu0 %v5772
        %5923 = vmatprep.subr.bf16.mxu0 0
        %5924 = vmatpush1.bf16.msra.mxu0 %v5773
        %5925 = vmatprep.subr.bf16.mxu0 0
        %5926 = vmatpush1.bf16.msra.mxu0 %v5774
        %5927 = vmatprep.subr.bf16.mxu0 0
        %5928 = vmatpush1.bf16.msra.mxu0 %v5775
        %5929 = vmatprep.subr.bf16.mxu0 0
        %5930 = vmatpush1.bf16.msra.mxu0 %v5776
        %5931 = vmatprep.subr.bf16.mxu0 0
        %5932 = vmatpush1.bf16.msra.mxu0 %v5777
        %5933 = vmatprep.subr.bf16.mxu0 0
        %5934 = vmatpush1.bf16.msra.mxu0 %v5778
        %5935 = vmatprep.subr.bf16.mxu0 0
        %5936 = vmatpush1.bf16.msra.mxu0 %v5779
        %5937 = vmatprep.subr.bf16.mxu0 0
        %5938 = vmatpush1.bf16.msra.mxu0 %v5780
        %5939 = vmatprep.subr.bf16.mxu0 0
        %5940 = vmatpush1.bf16.msra.mxu0 %v5781
        %5941 = vmatprep.subr.bf16.mxu0 0
        %5942 = vmatpush1.bf16.msra.mxu0 %v5782
        %5943 = vmatprep.mubr.bf16.mxu0 %v5192
        %5944 = vmatmul.mubr.bf16.gmra.mrb[0].mxu0 %v5191
        %v5945 = vpop.f32.mrb[0].mxu0
        %v5946 = vadd.f32 0.0, %v5945
        %v5947 = vpop.f32.mrb[0].mxu0
        %v5948 = vpop.f32.mrb[0].mxu0
        %v5949 = vadd.f32 0.0, %v5948
        %v5950 = vpop.f32.mrb[0].mxu0
        %5951 = vmatprep.mubr.bf16.mxu0 %v5201
        %5952 = vmatmul.mubr.bf16.gmra.mrb[0].mxu0 %v5200
        %v5953 = vpop.f32.mrb[0].mxu0
        %v5954 = vadd.f32 0.0, %v5953
        %v5955 = vpop.f32.mrb[0].mxu0
        %v5956 = vpop.f32.mrb[0].mxu0
        %v5957 = vadd.f32 0.0, %v5956
        %v5958 = vpop.f32.mrb[0].mxu0
        %5959 = vmatprep.mubr.bf16.mxu0 %v5210
        %5960 = vmatmul.mubr.bf16.gmra.mrb[0].mxu0 %v5209
        %v5961 = vpop.f32.mrb[0].mxu0
        %v5962 = vadd.f32 0.0, %v5961
        %v5963 = vpop.f32.mrb[0].mxu0
        %v5964 = vpop.f32.mrb[0].mxu0
        %v5965 = vadd.f32 0.0, %v5964
        %v5966 = vpop.f32.mrb[0].mxu0
        %5967 = vmatprep.mubr.bf16.mxu0 %v5219
        %5968 = vmatmul.mubr.bf16.gmra.mrb[0].mxu0 %v5218
        %v5969 = vpop.f32.mrb[0].mxu0
        %v5970 = vadd.f32 0.0, %v5969
        %v5971 = vpop.f32.mrb[0].mxu0
        %v5972 = vpop.f32.mrb[0].mxu0
        %v5973 = vadd.f32 0.0, %v5972
        %v5974 = vpop.f32.mrb[0].mxu0
        %5975 = vmatprep.mubr.bf16.mxu0 %v5228
        %5976 = vmatmul.mubr.bf16.gmra.mrb[0].mxu0 %v5227
        %v5977 = vpop.f32.mrb[0].mxu0
        %v5978 = vadd.f32 0.0, %v5977
        %v5979 = vpop.f32.mrb[0].mxu0
        %v5980 = vpop.f32.mrb[0].mxu0
        %v5981 = vadd.f32 0.0, %v5980
        %v5982 = vpop.f32.mrb[0].mxu0
        %5983 = vmatprep.mubr.bf16.mxu0 %v5237
        %5984 = vmatmul.mubr.bf16.gmra.mrb[0].mxu0 %v5236
        %v5985 = vpop.f32.mrb[0].mxu0
        %v5986 = vadd.f32 0.0, %v5985
        %v5987 = vpop.f32.mrb[0].mxu0
        %v5988 = vpop.f32.mrb[0].mxu0
        %v5989 = vadd.f32 0.0, %v5988
        %v5990 = vpop.f32.mrb[0].mxu0
        %5991 = vmatprep.mubr.bf16.mxu0 %v5246
        %5992 = vmatmul.mubr.bf16.gmra.mrb[0].mxu0 %v5245
        %v5993 = vpop.f32.mrb[0].mxu0
        %v5994 = vadd.f32 0.0, %v5993
        %v5995 = vpop.f32.mrb[0].mxu0
        %v5996 = vpop.f32.mrb[0].mxu0
        %v5997 = vadd.f32 0.0, %v5996
        %v5998 = vpop.f32.mrb[0].mxu0
        %5999 = vmatprep.mubr.bf16.mxu0 %v5255
        %6000 = vmatmul.mubr.bf16.gmra.mrb[0].mxu0 %v5254
        %v6001 = vpop.f32.mrb[0].mxu0
        %v6002 = vadd.f32 0.0, %v6001
        %v6003 = vpop.f32.mrb[0].mxu0
        %v6004 = vpop.f32.mrb[0].mxu0
        %v6005 = vadd.f32 0.0, %v6004
        %v6006 = vpop.f32.mrb[0].mxu0
        %6007 = vmatprep.mubr.bf16.mxu0 %v5264
        %6008 = vmatmul.mubr.bf16.gmra.mrb[0].mxu0 %v5263
        %v6009 = vpop.f32.mrb[0].mxu0
        %v6010 = vadd.f32 0.0, %v6009
        %v6011 = vpop.f32.mrb[0].mxu0
        %v6012 = vpop.f32.mrb[0].mxu0
        %v6013 = vadd.f32 0.0, %v6012
        %v6014 = vpop.f32.mrb[0].mxu0
        %6015 = vmatprep.mubr.bf16.mxu0 %v5273
        %6016 = vmatmul.mubr.bf16.gmra.mrb[0].mxu0 %v5272
        %v6017 = vpop.f32.mrb[0].mxu0
        %v6018 = vadd.f32 0.0, %v6017
        %v6019 = vpop.f32.mrb[0].mxu0
        %v6020 = vpop.f32.mrb[0].mxu0
        %v6021 = vadd.f32 0.0, %v6020
        %v6022 = vpop.f32.mrb[0].mxu0
        %6023 = vmatprep.mubr.bf16.mxu0 %v5282
        %6024 = vmatmul.mubr.bf16.gmra.mrb[0].mxu0 %v5281
        %v6025 = vpop.f32.mrb[0].mxu0
        %v6026 = vadd.f32 0.0, %v6025
        %v6027 = vpop.f32.mrb[0].mxu0
        %v6028 = vpop.f32.mrb[0].mxu0
        %v6029 = vadd.f32 0.0, %v6028
        %v6030 = vpop.f32.mrb[0].mxu0
        %6031 = vmatprep.mubr.bf16.mxu0 %v5291
        %6032 = vmatmul.mubr.bf16.gmra.mrb[0].mxu0 %v5290
        %v6033 = vpop.f32.mrb[0].mxu0
        %v6034 = vadd.f32 0.0, %v6033
        %v6035 = vpop.f32.mrb[0].mxu0
        %v6036 = vpop.f32.mrb[0].mxu0
        %v6037 = vadd.f32 0.0, %v6036
        %v6038 = vpop.f32.mrb[0].mxu0
        %6039 = vmatprep.mubr.bf16.mxu0 %v5300
        %6040 = vmatmul.mubr.bf16.gmra.mrb[0].mxu0 %v5299
        %v6041 = vpop.f32.mrb[0].mxu0
        %v6042 = vadd.f32 0.0, %v6041
        %v6043 = vpop.f32.mrb[0].mxu0
        %v6044 = vpop.f32.mrb[0].mxu0
        %v6045 = vadd.f32 0.0, %v6044
        %v6046 = vpop.f32.mrb[0].mxu0
        %6047 = vmatprep.mubr.bf16.mxu0 %v5309
        %6048 = vmatmul.mubr.bf16.gmra.mrb[0].mxu0 %v5308
        %v6049 = vpop.f32.mrb[0].mxu0
        %v6050 = vadd.f32 0.0, %v6049
        %v6051 = vpop.f32.mrb[0].mxu0
        %v6052 = vpop.f32.mrb[0].mxu0
        %v6053 = vadd.f32 0.0, %v6052
        %v6054 = vpop.f32.mrb[0].mxu0
        %6055 = vmatprep.mubr.bf16.mxu0 %v5318
        %6056 = vmatmul.mubr.bf16.gmra.mrb[0].mxu0 %v5317
        %v6057 = vpop.f32.mrb[0].mxu0
        %v6058 = vadd.f32 0.0, %v6057
        %v6059 = vpop.f32.mrb[0].mxu0
        %v6060 = vpop.f32.mrb[0].mxu0
        %v6061 = vadd.f32 0.0, %v6060
        %v6062 = vpop.f32.mrb[0].mxu0
        %6063 = vmatprep.mubr.bf16.mxu0 %v5327
        %6064 = vmatmul.mubr.bf16.gmra.mrb[0].mxu0 %v5326
        %v6065 = vpop.f32.mrb[0].mxu0
        %v6066 = vadd.f32 0.0, %v6065
        %v6067 = vpop.f32.mrb[0].mxu0
        %v6068 = vpop.f32.mrb[0].mxu0
        %v6069 = vadd.f32 0.0, %v6068
        %v6070 = vpop.f32.mrb[0].mxu0
        %6071 = vdwg.mxu0
        %6072 = vmatprep.subr.bf16.mxu0 0
        %6073 = vmatpush1.bf16.msra.mxu0 %v5783
        %6074 = vmatprep.subr.bf16.mxu0 0
        %6075 = vmatpush1.bf16.msra.mxu0 %v5784
        %6076 = vmatprep.subr.bf16.mxu0 0
        %6077 = vmatpush1.bf16.msra.mxu0 %v5785
        %6078 = vmatprep.subr.bf16.mxu0 0
        %6079 = vmatpush1.bf16.msra.mxu0 %v5786
        %6080 = vmatprep.subr.bf16.mxu0 0
        %6081 = vmatpush1.bf16.msra.mxu0 %v5787
        %6082 = vmatprep.subr.bf16.mxu0 0
        %6083 = vmatpush1.bf16.msra.mxu0 %v5788
        %6084 = vmatprep.subr.bf16.mxu0 0
        %6085 = vmatpush1.bf16.msra.mxu0 %v5789
        %6086 = vmatprep.subr.bf16.mxu0 0
        %6087 = vmatpush1.bf16.msra.mxu0 %v5790
        %6088 = vmatprep.subr.bf16.mxu0 0
        %6089 = vmatpush1.bf16.msra.mxu0 %v5791
        %6090 = vmatprep.subr.bf16.mxu0 0
        %6091 = vmatpush1.bf16.msra.mxu0 %v5792
        %6092 = vmatprep.subr.bf16.mxu0 0
        %6093 = vmatpush1.bf16.msra.mxu0 %v5793
        %6094 = vmatprep.subr.bf16.mxu0 0
        %6095 = vmatpush1.bf16.msra.mxu0 %v5794
        %6096 = vmatprep.subr.bf16.mxu0 0
        %6097 = vmatpush1.bf16.msra.mxu0 %v5795
        %6098 = vmatprep.subr.bf16.mxu0 0
        %6099 = vmatpush1.bf16.msra.mxu0 %v5796
        %6100 = vmatprep.subr.bf16.mxu0 0
        %6101 = vmatpush1.bf16.msra.mxu0 %v5797
        %6102 = vmatprep.subr.bf16.mxu0 0
        %6103 = vmatpush1.bf16.msra.mxu0 %v5798
        %6104 = vmatprep.mubr.bf16.mxu0 %v5194
        %6105 = vmatmul.mubr.bf16.gmra.mrb[0].mxu0 %v5193
        %v6106 = vpop.f32.mrb[0].mxu0
        %v6107 = vadd.f32 %v5946, %v6106
        %v6108 = vpop.f32.mrb[0].mxu0
        %v6109 = vpop.f32.mrb[0].mxu0
        %v6110 = vadd.f32 %v5949, %v6109
        %v6111 = vpop.f32.mrb[0].mxu0
        %6112 = vmatprep.mubr.bf16.mxu0 %v5203
        %6113 = vmatmul.mubr.bf16.gmra.mrb[0].mxu0 %v5202
        %v6114 = vpop.f32.mrb[0].mxu0
        %v6115 = vadd.f32 %v5954, %v6114
        %v6116 = vpop.f32.mrb[0].mxu0
        %v6117 = vpop.f32.mrb[0].mxu0
        %v6118 = vadd.f32 %v5957, %v6117
        %v6119 = vpop.f32.mrb[0].mxu0
        %6120 = vmatprep.mubr.bf16.mxu0 %v5212
        %6121 = vmatmul.mubr.bf16.gmra.mrb[0].mxu0 %v5211
        %v6122 = vpop.f32.mrb[0].mxu0
        %v6123 = vadd.f32 %v5962, %v6122
        %v6124 = vpop.f32.mrb[0].mxu0
        %v6125 = vpop.f32.mrb[0].mxu0
        %v6126 = vadd.f32 %v5965, %v6125
        %v6127 = vpop.f32.mrb[0].mxu0
        %6128 = vmatprep.mubr.bf16.mxu0 %v5221
        %6129 = vmatmul.mubr.bf16.gmra.mrb[0].mxu0 %v5220
        %v6130 = vpop.f32.mrb[0].mxu0
        %v6131 = vadd.f32 %v5970, %v6130
        %v6132 = vpop.f32.mrb[0].mxu0
        %v6133 = vpop.f32.mrb[0].mxu0
        %v6134 = vadd.f32 %v5973, %v6133
        %v6135 = vpop.f32.mrb[0].mxu0
        %6136 = vmatprep.mubr.bf16.mxu0 %v5230
        %6137 = vmatmul.mubr.bf16.gmra.mrb[0].mxu0 %v5229
        %v6138 = vpop.f32.mrb[0].mxu0
        %v6139 = vadd.f32 %v5978, %v6138
        %v6140 = vpop.f32.mrb[0].mxu0
        %v6141 = vpop.f32.mrb[0].mxu0
        %v6142 = vadd.f32 %v5981, %v6141
        %v6143 = vpop.f32.mrb[0].mxu0
        %6144 = vmatprep.mubr.bf16.mxu0 %v5239
        %6145 = vmatmul.mubr.bf16.gmra.mrb[0].mxu0 %v5238
        %v6146 = vpop.f32.mrb[0].mxu0
        %v6147 = vadd.f32 %v5986, %v6146
        %v6148 = vpop.f32.mrb[0].mxu0
        %v6149 = vpop.f32.mrb[0].mxu0
        %v6150 = vadd.f32 %v5989, %v6149
        %v6151 = vpop.f32.mrb[0].mxu0
        %6152 = vmatprep.mubr.bf16.mxu0 %v5248
        %6153 = vmatmul.mubr.bf16.gmra.mrb[0].mxu0 %v5247
        %v6154 = vpop.f32.mrb[0].mxu0
        %v6155 = vadd.f32 %v5994, %v6154
        %v6156 = vpop.f32.mrb[0].mxu0
        %v6157 = vpop.f32.mrb[0].mxu0
        %v6158 = vadd.f32 %v5997, %v6157
        %v6159 = vpop.f32.mrb[0].mxu0
        %6160 = vmatprep.mubr.bf16.mxu0 %v5257
        %6161 = vmatmul.mubr.bf16.gmra.mrb[0].mxu0 %v5256
        %v6162 = vpop.f32.mrb[0].mxu0
        %v6163 = vadd.f32 %v6002, %v6162
        %v6164 = vpop.f32.mrb[0].mxu0
        %v6165 = vpop.f32.mrb[0].mxu0
        %v6166 = vadd.f32 %v6005, %v6165
        %v6167 = vpop.f32.mrb[0].mxu0
        %6168 = vmatprep.mubr.bf16.mxu0 %v5266
        %6169 = vmatmul.mubr.bf16.gmra.mrb[0].mxu0 %v5265
        %v6170 = vpop.f32.mrb[0].mxu0
        %v6171 = vadd.f32 %v6010, %v6170
        %v6172 = vpop.f32.mrb[0].mxu0
        %v6173 = vpop.f32.mrb[0].mxu0
        %v6174 = vadd.f32 %v6013, %v6173
        %v6175 = vpop.f32.mrb[0].mxu0
        %6176 = vmatprep.mubr.bf16.mxu0 %v5275
        %6177 = vmatmul.mubr.bf16.gmra.mrb[0].mxu0 %v5274
        %v6178 = vpop.f32.mrb[0].mxu0
        %v6179 = vadd.f32 %v6018, %v6178
        %v6180 = vpop.f32.mrb[0].mxu0
        %v6181 = vpop.f32.mrb[0].mxu0
        %v6182 = vadd.f32 %v6021, %v6181
        %v6183 = vpop.f32.mrb[0].mxu0
        %6184 = vmatprep.mubr.bf16.mxu0 %v5284
        %6185 = vmatmul.mubr.bf16.gmra.mrb[0].mxu0 %v5283
        %v6186 = vpop.f32.mrb[0].mxu0
        %v6187 = vadd.f32 %v6026, %v6186
        %v6188 = vpop.f32.mrb[0].mxu0
        %v6189 = vpop.f32.mrb[0].mxu0
        %v6190 = vadd.f32 %v6029, %v6189
        %v6191 = vpop.f32.mrb[0].mxu0
        %6192 = vmatprep.mubr.bf16.mxu0 %v5293
        %6193 = vmatmul.mubr.bf16.gmra.mrb[0].mxu0 %v5292
        %v6194 = vpop.f32.mrb[0].mxu0
        %v6195 = vadd.f32 %v6034, %v6194
        %v6196 = vpop.f32.mrb[0].mxu0
        %v6197 = vpop.f32.mrb[0].mxu0
        %v6198 = vadd.f32 %v6037, %v6197
        %v6199 = vpop.f32.mrb[0].mxu0
        %6200 = vmatprep.mubr.bf16.mxu0 %v5302
        %6201 = vmatmul.mubr.bf16.gmra.mrb[0].mxu0 %v5301
        %v6202 = vpop.f32.mrb[0].mxu0
        %v6203 = vadd.f32 %v6042, %v6202
        %v6204 = vpop.f32.mrb[0].mxu0
        %v6205 = vpop.f32.mrb[0].mxu0
        %v6206 = vadd.f32 %v6045, %v6205
        %v6207 = vpop.f32.mrb[0].mxu0
        %6208 = vmatprep.mubr.bf16.mxu0 %v5311
        %6209 = vmatmul.mubr.bf16.gmra.mrb[0].mxu0 %v5310
        %v6210 = vpop.f32.mrb[0].mxu0
        %v6211 = vadd.f32 %v6050, %v6210
        %v6212 = vpop.f32.mrb[0].mxu0
        %v6213 = vpop.f32.mrb[0].mxu0
        %v6214 = vadd.f32 %v6053, %v6213
        %v6215 = vpop.f32.mrb[0].mxu0
        %6216 = vmatprep.mubr.bf16.mxu0 %v5320
        %6217 = vmatmul.mubr.bf16.gmra.mrb[0].mxu0 %v5319
        %v6218 = vpop.f32.mrb[0].mxu0
        %v6219 = vadd.f32 %v6058, %v6218
        %v6220 = vpop.f32.mrb[0].mxu0
        %v6221 = vpop.f32.mrb[0].mxu0
        %v6222 = vadd.f32 %v6061, %v6221
        %v6223 = vpop.f32.mrb[0].mxu0
        %6224 = vmatprep.mubr.bf16.mxu0 %v5329
        %6225 = vmatmul.mubr.bf16.gmra.mrb[0].mxu0 %v5328
        %v6226 = vpop.f32.mrb[0].mxu0
        %v6227 = vadd.f32 %v6066, %v6226
        %v6228 = vpop.f32.mrb[0].mxu0
        %v6229 = vpop.f32.mrb[0].mxu0
        %v6230 = vadd.f32 %v6069, %v6229
        %v6231 = vpop.f32.mrb[0].mxu0
        %6232 = vdwg.mxu0
        %6233 = vmatprep.subr.bf16.mxu0 0
        %6234 = vmatpush1.bf16.msra.mxu0 %v5799
        %6235 = vmatprep.subr.bf16.mxu0 0
        %6236 = vmatpush1.bf16.msra.mxu0 %v5800
        %6237 = vmatprep.subr.bf16.mxu0 0
        %6238 = vmatpush1.bf16.msra.mxu0 %v5801
        %6239 = vmatprep.subr.bf16.mxu0 0
        %6240 = vmatpush1.bf16.msra.mxu0 %v5802
        %6241 = vmatprep.subr.bf16.mxu0 0
        %6242 = vmatpush1.bf16.msra.mxu0 %v5803
        %6243 = vmatprep.subr.bf16.mxu0 0
        %6244 = vmatpush1.bf16.msra.mxu0 %v5804
        %6245 = vmatprep.subr.bf16.mxu0 0
        %6246 = vmatpush1.bf16.msra.mxu0 %v5805
        %6247 = vmatprep.subr.bf16.mxu0 0
        %6248 = vmatpush1.bf16.msra.mxu0 %v5806
        %6249 = vmatprep.subr.bf16.mxu0 0
        %6250 = vmatpush1.bf16.msra.mxu0 %v5807
        %6251 = vmatprep.subr.bf16.mxu0 0
        %6252 = vmatpush1.bf16.msra.mxu0 %v5808
        %6253 = vmatprep.subr.bf16.mxu0 0
        %6254 = vmatpush1.bf16.msra.mxu0 %v5809
        %6255 = vmatprep.subr.bf16.mxu0 0
        %6256 = vmatpush1.bf16.msra.mxu0 %v5810
        %6257 = vmatprep.subr.bf16.mxu0 0
        %6258 = vmatpush1.bf16.msra.mxu0 %v5811
        %6259 = vmatprep.subr.bf16.mxu0 0
        %6260 = vmatpush1.bf16.msra.mxu0 %v5812
        %6261 = vmatprep.subr.bf16.mxu0 0
        %6262 = vmatpush1.bf16.msra.mxu0 %v5813
        %6263 = vmatprep.subr.bf16.mxu0 0
        %6264 = vmatpush1.bf16.msra.mxu0 %v5814
        %6265 = vmatprep.mubr.bf16.mxu0 %v5196
        %6266 = vmatmul.mubr.bf16.gmra.mrb[0].mxu0 %v5195
        %v6267 = vpop.f32.mrb[0].mxu0
        %v6268 = vadd.f32 %v6107, %v6267
        %v6269 = vpop.f32.mrb[0].mxu0
        %v6270 = vpop.f32.mrb[0].mxu0
        %v6271 = vadd.f32 %v6110, %v6270
        %v6272 = vpop.f32.mrb[0].mxu0
        %6273 = vmatprep.mubr.bf16.mxu0 %v5205
        %6274 = vmatmul.mubr.bf16.gmra.mrb[0].mxu0 %v5204
        %v6275 = vpop.f32.mrb[0].mxu0
        %v6276 = vadd.f32 %v6115, %v6275
        %v6277 = vpop.f32.mrb[0].mxu0
        %v6278 = vpop.f32.mrb[0].mxu0
        %v6279 = vadd.f32 %v6118, %v6278
        %v6280 = vpop.f32.mrb[0].mxu0
        %6281 = vmatprep.mubr.bf16.mxu0 %v5214
        %6282 = vmatmul.mubr.bf16.gmra.mrb[0].mxu0 %v5213
        %v6283 = vpop.f32.mrb[0].mxu0
        %v6284 = vadd.f32 %v6123, %v6283
        %v6285 = vpop.f32.mrb[0].mxu0
        %v6286 = vpop.f32.mrb[0].mxu0
        %v6287 = vadd.f32 %v6126, %v6286
        %v6288 = vpop.f32.mrb[0].mxu0
        %6289 = vmatprep.mubr.bf16.mxu0 %v5223
        %6290 = vmatmul.mubr.bf16.gmra.mrb[0].mxu0 %v5222
        %v6291 = vpop.f32.mrb[0].mxu0
        %v6292 = vadd.f32 %v6131, %v6291
        %v6293 = vpop.f32.mrb[0].mxu0
        %v6294 = vpop.f32.mrb[0].mxu0
        %v6295 = vadd.f32 %v6134, %v6294
        %v6296 = vpop.f32.mrb[0].mxu0
        %6297 = vmatprep.mubr.bf16.mxu0 %v5232
        %6298 = vmatmul.mubr.bf16.gmra.mrb[0].mxu0 %v5231
        %v6299 = vpop.f32.mrb[0].mxu0
        %v6300 = vadd.f32 %v6139, %v6299
        %v6301 = vpop.f32.mrb[0].mxu0
        %v6302 = vpop.f32.mrb[0].mxu0
        %v6303 = vadd.f32 %v6142, %v6302
        %v6304 = vpop.f32.mrb[0].mxu0
        %6305 = vmatprep.mubr.bf16.mxu0 %v5241
        %6306 = vmatmul.mubr.bf16.gmra.mrb[0].mxu0 %v5240
        %v6307 = vpop.f32.mrb[0].mxu0
        %v6308 = vadd.f32 %v6147, %v6307
        %v6309 = vpop.f32.mrb[0].mxu0
        %v6310 = vpop.f32.mrb[0].mxu0
        %v6311 = vadd.f32 %v6150, %v6310
        %v6312 = vpop.f32.mrb[0].mxu0
        %6313 = vmatprep.mubr.bf16.mxu0 %v5250
        %6314 = vmatmul.mubr.bf16.gmra.mrb[0].mxu0 %v5249
        %v6315 = vpop.f32.mrb[0].mxu0
        %v6316 = vadd.f32 %v6155, %v6315
        %v6317 = vpop.f32.mrb[0].mxu0
        %v6318 = vpop.f32.mrb[0].mxu0
        %v6319 = vadd.f32 %v6158, %v6318
        %v6320 = vpop.f32.mrb[0].mxu0
        %6321 = vmatprep.mubr.bf16.mxu0 %v5259
        %6322 = vmatmul.mubr.bf16.gmra.mrb[0].mxu0 %v5258
        %v6323 = vpop.f32.mrb[0].mxu0
        %v6324 = vadd.f32 %v6163, %v6323
        %v6325 = vpop.f32.mrb[0].mxu0
        %v6326 = vpop.f32.mrb[0].mxu0
        %v6327 = vadd.f32 %v6166, %v6326
        %v6328 = vpop.f32.mrb[0].mxu0
        %6329 = vmatprep.mubr.bf16.mxu0 %v5268
        %6330 = vmatmul.mubr.bf16.gmra.mrb[0].mxu0 %v5267
        %v6331 = vpop.f32.mrb[0].mxu0
        %v6332 = vadd.f32 %v6171, %v6331
        %v6333 = vpop.f32.mrb[0].mxu0
        %v6334 = vpop.f32.mrb[0].mxu0
        %v6335 = vadd.f32 %v6174, %v6334
        %v6336 = vpop.f32.mrb[0].mxu0
        %6337 = vmatprep.mubr.bf16.mxu0 %v5277
        %6338 = vmatmul.mubr.bf16.gmra.mrb[0].mxu0 %v5276
        %v6339 = vpop.f32.mrb[0].mxu0
        %v6340 = vadd.f32 %v6179, %v6339
        %v6341 = vpop.f32.mrb[0].mxu0
        %v6342 = vpop.f32.mrb[0].mxu0
        %v6343 = vadd.f32 %v6182, %v6342
        %v6344 = vpop.f32.mrb[0].mxu0
        %6345 = vmatprep.mubr.bf16.mxu0 %v5286
        %6346 = vmatmul.mubr.bf16.gmra.mrb[0].mxu0 %v5285
        %v6347 = vpop.f32.mrb[0].mxu0
        %v6348 = vadd.f32 %v6187, %v6347
        %v6349 = vpop.f32.mrb[0].mxu0
        %v6350 = vpop.f32.mrb[0].mxu0
        %v6351 = vadd.f32 %v6190, %v6350
        %v6352 = vpop.f32.mrb[0].mxu0
        %6353 = vmatprep.mubr.bf16.mxu0 %v5295
        %6354 = vmatmul.mubr.bf16.gmra.mrb[0].mxu0 %v5294
        %v6355 = vpop.f32.mrb[0].mxu0
        %v6356 = vadd.f32 %v6195, %v6355
        %v6357 = vpop.f32.mrb[0].mxu0
        %v6358 = vpop.f32.mrb[0].mxu0
        %v6359 = vadd.f32 %v6198, %v6358
        %v6360 = vpop.f32.mrb[0].mxu0
        %6361 = vmatprep.mubr.bf16.mxu0 %v5304
        %6362 = vmatmul.mubr.bf16.gmra.mrb[0].mxu0 %v5303
        %v6363 = vpop.f32.mrb[0].mxu0
        %v6364 = vadd.f32 %v6203, %v6363
        %v6365 = vpop.f32.mrb[0].mxu0
        %v6366 = vpop.f32.mrb[0].mxu0
        %v6367 = vadd.f32 %v6206, %v6366
        %v6368 = vpop.f32.mrb[0].mxu0
        %6369 = vmatprep.mubr.bf16.mxu0 %v5313
        %6370 = vmatmul.mubr.bf16.gmra.mrb[0].mxu0 %v5312
        %v6371 = vpop.f32.mrb[0].mxu0
        %v6372 = vadd.f32 %v6211, %v6371
        %v6373 = vpop.f32.mrb[0].mxu0
        %v6374 = vpop.f32.mrb[0].mxu0
        %v6375 = vadd.f32 %v6214, %v6374
        %v6376 = vpop.f32.mrb[0].mxu0
        %6377 = vmatprep.mubr.bf16.mxu0 %v5322
        %6378 = vmatmul.mubr.bf16.gmra.mrb[0].mxu0 %v5321
        %v6379 = vpop.f32.mrb[0].mxu0
        %v6380 = vadd.f32 %v6219, %v6379
        %v6381 = vpop.f32.mrb[0].mxu0
        %v6382 = vpop.f32.mrb[0].mxu0
        %v6383 = vadd.f32 %v6222, %v6382
        %v6384 = vpop.f32.mrb[0].mxu0
        %6385 = vmatprep.mubr.bf16.mxu0 %v5331
        %6386 = vmatmul.mubr.bf16.gmra.mrb[0].mxu0 %v5330
        %v6387 = vpop.f32.mrb[0].mxu0
        %v6388 = vadd.f32 %v6227, %v6387
        %v6389 = vpop.f32.mrb[0].mxu0
        %v6390 = vpop.f32.mrb[0].mxu0
        %v6391 = vadd.f32 %v6230, %v6390
        %v6392 = vpop.f32.mrb[0].mxu0
        %6393 = vdwg.mxu0
        %6394 = vmatprep.subr.bf16.mxu0 0
        %6395 = vmatpush1.bf16.msra.mxu0 %v5815
        %6396 = vmatprep.subr.bf16.mxu0 0
        %6397 = vmatpush1.bf16.msra.mxu0 %v5816
        %6398 = vmatprep.subr.bf16.mxu0 0
        %6399 = vmatpush1.bf16.msra.mxu0 %v5817
        %6400 = vmatprep.subr.bf16.mxu0 0
        %6401 = vmatpush1.bf16.msra.mxu0 %v5818
        %6402 = vmatprep.subr.bf16.mxu0 0
        %6403 = vmatpush1.bf16.msra.mxu0 %v5819
        %6404 = vmatprep.subr.bf16.mxu0 0
        %6405 = vmatpush1.bf16.msra.mxu0 %v5820
        %6406 = vmatprep.subr.bf16.mxu0 0
        %6407 = vmatpush1.bf16.msra.mxu0 %v5821
        %6408 = vmatprep.subr.bf16.mxu0 0
        %6409 = vmatpush1.bf16.msra.mxu0 %v5822
        %6410 = vmatprep.subr.bf16.mxu0 0
        %6411 = vmatpush1.bf16.msra.mxu0 %v5823
        %6412 = vmatprep.subr.bf16.mxu0 0
        %6413 = vmatpush1.bf16.msra.mxu0 %v5824
        %6414 = vmatprep.subr.bf16.mxu0 0
        %6415 = vmatpush1.bf16.msra.mxu0 %v5825
        %6416 = vmatprep.subr.bf16.mxu0 0
        %6417 = vmatpush1.bf16.msra.mxu0 %v5826
        %6418 = vmatprep.subr.bf16.mxu0 0
        %6419 = vmatpush1.bf16.msra.mxu0 %v5827
        %6420 = vmatprep.subr.bf16.mxu0 0
        %6421 = vmatpush1.bf16.msra.mxu0 %v5828
        %6422 = vmatprep.subr.bf16.mxu0 0
        %6423 = vmatpush1.bf16.msra.mxu0 %v5829
        %6424 = vmatprep.subr.bf16.mxu0 0
        %6425 = vmatpush1.bf16.msra.mxu0 %v5830
        %6426 = vmatprep.mubr.bf16.mxu0 %v5198
        %6427 = vmatmul.mubr.bf16.gmra.mrb[0].mxu0 %v5197
        %v6428 = vpop.f32.mrb[0].mxu0
        %v6429 = vadd.f32 %v6268, %v6428
        %v6430 = vpop.f32.mrb[0].mxu0
        %v6431 = vpop.f32.mrb[0].mxu0
        %v6432 = vadd.f32 %v6271, %v6431
        %v6433 = vpop.f32.mrb[0].mxu0
        %6434 = vmatprep.mubr.bf16.mxu0 %v5207
        %6435 = vmatmul.mubr.bf16.gmra.mrb[0].mxu0 %v5206
        %v6436 = vpop.f32.mrb[0].mxu0
        %v6437 = vadd.f32 %v6276, %v6436
        %v6438 = vpop.f32.mrb[0].mxu0
        %v6439 = vpop.f32.mrb[0].mxu0
        %v6440 = vadd.f32 %v6279, %v6439
        %v6441 = vpop.f32.mrb[0].mxu0
        %6442 = vmatprep.mubr.bf16.mxu0 %v5216
        %6443 = vmatmul.mubr.bf16.gmra.mrb[0].mxu0 %v5215
        %v6444 = vpop.f32.mrb[0].mxu0
        %v6445 = vadd.f32 %v6284, %v6444
        %v6446 = vpop.f32.mrb[0].mxu0
        %v6447 = vpop.f32.mrb[0].mxu0
        %v6448 = vadd.f32 %v6287, %v6447
        %v6449 = vpop.f32.mrb[0].mxu0
        %6450 = vmatprep.mubr.bf16.mxu0 %v5225
        %6451 = vmatmul.mubr.bf16.gmra.mrb[0].mxu0 %v5224
        %v6452 = vpop.f32.mrb[0].mxu0
        %v6453 = vadd.f32 %v6292, %v6452
        %v6454 = vpop.f32.mrb[0].mxu0
        %v6455 = vpop.f32.mrb[0].mxu0
        %v6456 = vadd.f32 %v6295, %v6455
        %v6457 = vpop.f32.mrb[0].mxu0
        %6458 = vmatprep.mubr.bf16.mxu0 %v5234
        %6459 = vmatmul.mubr.bf16.gmra.mrb[0].mxu0 %v5233
        %v6460 = vpop.f32.mrb[0].mxu0
        %v6461 = vadd.f32 %v6300, %v6460
        %v6462 = vpop.f32.mrb[0].mxu0
        %v6463 = vpop.f32.mrb[0].mxu0
        %v6464 = vadd.f32 %v6303, %v6463
        %v6465 = vpop.f32.mrb[0].mxu0
        %6466 = vmatprep.mubr.bf16.mxu0 %v5243
        %6467 = vmatmul.mubr.bf16.gmra.mrb[0].mxu0 %v5242
        %v6468 = vpop.f32.mrb[0].mxu0
        %v6469 = vadd.f32 %v6308, %v6468
        %v6470 = vpop.f32.mrb[0].mxu0
        %v6471 = vpop.f32.mrb[0].mxu0
        %v6472 = vadd.f32 %v6311, %v6471
        %v6473 = vpop.f32.mrb[0].mxu0
        %6474 = vmatprep.mubr.bf16.mxu0 %v5252
        %6475 = vmatmul.mubr.bf16.gmra.mrb[0].mxu0 %v5251
        %v6476 = vpop.f32.mrb[0].mxu0
        %v6477 = vadd.f32 %v6316, %v6476
        %v6478 = vpop.f32.mrb[0].mxu0
        %v6479 = vpop.f32.mrb[0].mxu0
        %v6480 = vadd.f32 %v6319, %v6479
        %v6481 = vpop.f32.mrb[0].mxu0
        %6482 = vmatprep.mubr.bf16.mxu0 %v5261
        %6483 = vmatmul.mubr.bf16.gmra.mrb[0].mxu0 %v5260
        %v6484 = vpop.f32.mrb[0].mxu0
        %v6485 = vadd.f32 %v6324, %v6484
        %v6486 = vpop.f32.mrb[0].mxu0
        %v6487 = vpop.f32.mrb[0].mxu0
        %v6488 = vadd.f32 %v6327, %v6487
        %v6489 = vpop.f32.mrb[0].mxu0
        %6490 = vmatprep.mubr.bf16.mxu0 %v5270
        %6491 = vmatmul.mubr.bf16.gmra.mrb[0].mxu0 %v5269
        %v6492 = vpop.f32.mrb[0].mxu0
        %v6493 = vadd.f32 %v6332, %v6492
        %v6494 = vpop.f32.mrb[0].mxu0
        %v6495 = vpop.f32.mrb[0].mxu0
        %v6496 = vadd.f32 %v6335, %v6495
        %v6497 = vpop.f32.mrb[0].mxu0
        %6498 = vmatprep.mubr.bf16.mxu0 %v5279
        %6499 = vmatmul.mubr.bf16.gmra.mrb[0].mxu0 %v5278
        %v6500 = vpop.f32.mrb[0].mxu0
        %v6501 = vadd.f32 %v6340, %v6500
        %v6502 = vpop.f32.mrb[0].mxu0
        %v6503 = vpop.f32.mrb[0].mxu0
        %v6504 = vadd.f32 %v6343, %v6503
        %v6505 = vpop.f32.mrb[0].mxu0
        %6506 = vmatprep.mubr.bf16.mxu0 %v5288
        %6507 = vmatmul.mubr.bf16.gmra.mrb[0].mxu0 %v5287
        %v6508 = vpop.f32.mrb[0].mxu0
        %v6509 = vadd.f32 %v6348, %v6508
        %v6510 = vpop.f32.mrb[0].mxu0
        %v6511 = vpop.f32.mrb[0].mxu0
        %v6512 = vadd.f32 %v6351, %v6511
        %v6513 = vpop.f32.mrb[0].mxu0
        %6514 = vmatprep.mubr.bf16.mxu0 %v5297
        %6515 = vmatmul.mubr.bf16.gmra.mrb[0].mxu0 %v5296
        %v6516 = vpop.f32.mrb[0].mxu0
        %v6517 = vadd.f32 %v6356, %v6516
        %v6518 = vpop.f32.mrb[0].mxu0
        %v6519 = vpop.f32.mrb[0].mxu0
        %v6520 = vadd.f32 %v6359, %v6519
        %v6521 = vpop.f32.mrb[0].mxu0
        %6522 = vmatprep.mubr.bf16.mxu0 %v5306
        %6523 = vmatmul.mubr.bf16.gmra.mrb[0].mxu0 %v5305
        %v6524 = vpop.f32.mrb[0].mxu0
        %v6525 = vadd.f32 %v6364, %v6524
        %v6526 = vpop.f32.mrb[0].mxu0
        %v6527 = vpop.f32.mrb[0].mxu0
        %v6528 = vadd.f32 %v6367, %v6527
        %v6529 = vpop.f32.mrb[0].mxu0
        %6530 = vmatprep.mubr.bf16.mxu0 %v5315
        %6531 = vmatmul.mubr.bf16.gmra.mrb[0].mxu0 %v5314
        %v6532 = vpop.f32.mrb[0].mxu0
        %v6533 = vadd.f32 %v6372, %v6532
        %v6534 = vpop.f32.mrb[0].mxu0
        %v6535 = vpop.f32.mrb[0].mxu0
        %v6536 = vadd.f32 %v6375, %v6535
        %v6537 = vpop.f32.mrb[0].mxu0
        %6538 = vmatprep.mubr.bf16.mxu0 %v5324
        %6539 = vmatmul.mubr.bf16.gmra.mrb[0].mxu0 %v5323
        %v6540 = vpop.f32.mrb[0].mxu0
        %v6541 = vadd.f32 %v6380, %v6540
        %v6542 = vpop.f32.mrb[0].mxu0
        %v6543 = vpop.f32.mrb[0].mxu0
        %v6544 = vadd.f32 %v6383, %v6543
        %v6545 = vpop.f32.mrb[0].mxu0
        %6546 = vmatprep.mubr.bf16.mxu0 %v5333
        %6547 = vmatmul.mubr.bf16.gmra.mrb[0].mxu0 %v5332
        %v6548 = vpop.f32.mrb[0].mxu0
        %v6549 = vadd.f32 %v6388, %v6548
        %v6550 = vpop.f32.mrb[0].mxu0
        %v6551 = vpop.f32.mrb[0].mxu0
        %v6552 = vadd.f32 %v6391, %v6551
        %v6553 = vpop.f32.mrb[0].mxu0
        %6554 = vdwg.mxu0
        %6555 = vmatprep.subr.bf16.mxu0 0
        %6556 = vmatpush1.bf16.msra.mxu0 %v5831
        %6557 = vmatprep.subr.bf16.mxu0 0
        %6558 = vmatpush1.bf16.msra.mxu0 %v5832
        %6559 = vmatprep.subr.bf16.mxu0 0
        %6560 = vmatpush1.bf16.msra.mxu0 %v5833
        %6561 = vmatprep.subr.bf16.mxu0 0
        %6562 = vmatpush1.bf16.msra.mxu0 %v5834
        %6563 = vmatprep.subr.bf16.mxu0 0
        %6564 = vmatpush1.bf16.msra.mxu0 %v5835
        %6565 = vmatprep.subr.bf16.mxu0 0
        %6566 = vmatpush1.bf16.msra.mxu0 %v5836
        %6567 = vmatprep.subr.bf16.mxu0 0
        %6568 = vmatpush1.bf16.msra.mxu0 %v5837
        %6569 = vmatprep.subr.bf16.mxu0 0
        %6570 = vmatpush1.bf16.msra.mxu0 %v5838
        %6571 = vmatprep.subr.bf16.mxu0 0
        %6572 = vmatpush1.bf16.msra.mxu0 0
        %6573 = vmatprep.subr.bf16.mxu0 0
        %6574 = vmatpush1.bf16.msra.mxu0 0
        %6575 = vmatprep.subr.bf16.mxu0 0
        %6576 = vmatpush1.bf16.msra.mxu0 0
        %6577 = vmatprep.subr.bf16.mxu0 0
        %6578 = vmatpush1.bf16.msra.mxu0 0
        %6579 = vmatprep.subr.bf16.mxu0 0
        %6580 = vmatpush1.bf16.msra.mxu0 0
        %6581 = vmatprep.subr.bf16.mxu0 0
        %6582 = vmatpush1.bf16.msra.mxu0 0
        %6583 = vmatprep.subr.bf16.mxu0 0
        %6584 = vmatpush1.bf16.msra.mxu0 0
        %6585 = vmatprep.subr.bf16.mxu0 0
        %6586 = vmatpush1.bf16.msra.mxu0 0
        %6587 = vmatprep.mubr.bf16.mxu0 0
        %6588 = vmatmul.mubr.bf16.gmra.mrb[0].mxu0 %v5199
        %v6589 = vpop.f32.mrb[0].mxu0
        %v6590 = vadd.f32 %v6429, %v6589
        %v6591 = vpop.f32.mrb[0].mxu0
        %v6592 = vpop.f32.mrb[0].mxu0
        %v6593 = vadd.f32 %v6432, %v6592
        %v6594 = vpop.f32.mrb[0].mxu0
        %6595 = vmatprep.mubr.bf16.mxu0 0
        %6596 = vmatmul.mubr.bf16.gmra.mrb[0].mxu0 %v5208
        %v6597 = vpop.f32.mrb[0].mxu0
        %v6598 = vadd.f32 %v6437, %v6597
        %v6599 = vpop.f32.mrb[0].mxu0
        %v6600 = vpop.f32.mrb[0].mxu0
        %v6601 = vadd.f32 %v6440, %v6600
        %v6602 = vpop.f32.mrb[0].mxu0
        %6603 = vmatprep.mubr.bf16.mxu0 0
        %6604 = vmatmul.mubr.bf16.gmra.mrb[0].mxu0 %v5217
        %v6605 = vpop.f32.mrb[0].mxu0
        %v6606 = vadd.f32 %v6445, %v6605
        %v6607 = vpop.f32.mrb[0].mxu0
        %v6608 = vpop.f32.mrb[0].mxu0
        %v6609 = vadd.f32 %v6448, %v6608
        %v6610 = vpop.f32.mrb[0].mxu0
        %6611 = vmatprep.mubr.bf16.mxu0 0
        %6612 = vmatmul.mubr.bf16.gmra.mrb[0].mxu0 %v5226
        %v6613 = vpop.f32.mrb[0].mxu0
        %v6614 = vadd.f32 %v6453, %v6613
        %v6615 = vpop.f32.mrb[0].mxu0
        %v6616 = vpop.f32.mrb[0].mxu0
        %v6617 = vadd.f32 %v6456, %v6616
        %v6618 = vpop.f32.mrb[0].mxu0
        %6619 = vmatprep.mubr.bf16.mxu0 0
        %6620 = vmatmul.mubr.bf16.gmra.mrb[0].mxu0 %v5235
        %v6621 = vpop.f32.mrb[0].mxu0
        %v6622 = vadd.f32 %v6461, %v6621
        %v6623 = vpop.f32.mrb[0].mxu0
        %v6624 = vpop.f32.mrb[0].mxu0
        %v6625 = vadd.f32 %v6464, %v6624
        %v6626 = vpop.f32.mrb[0].mxu0
        %6627 = vmatprep.mubr.bf16.mxu0 0
        %6628 = vmatmul.mubr.bf16.gmra.mrb[0].mxu0 %v5244
        %v6629 = vpop.f32.mrb[0].mxu0
        %v6630 = vadd.f32 %v6469, %v6629
        %v6631 = vpop.f32.mrb[0].mxu0
        %v6632 = vpop.f32.mrb[0].mxu0
        %v6633 = vadd.f32 %v6472, %v6632
        %v6634 = vpop.f32.mrb[0].mxu0
        %6635 = vmatprep.mubr.bf16.mxu0 0
        %6636 = vmatmul.mubr.bf16.gmra.mrb[0].mxu0 %v5253
        %v6637 = vpop.f32.mrb[0].mxu0
        %v6638 = vadd.f32 %v6477, %v6637
        %v6639 = vpop.f32.mrb[0].mxu0
        %v6640 = vpop.f32.mrb[0].mxu0
        %v6641 = vadd.f32 %v6480, %v6640
        %v6642 = vpop.f32.mrb[0].mxu0
        %6643 = vmatprep.mubr.bf16.mxu0 0
        %6644 = vmatmul.mubr.bf16.gmra.mrb[0].mxu0 %v5262
        %v6645 = vpop.f32.mrb[0].mxu0
        %v6646 = vadd.f32 %v6485, %v6645
        %v6647 = vpop.f32.mrb[0].mxu0
        %v6648 = vpop.f32.mrb[0].mxu0
        %v6649 = vadd.f32 %v6488, %v6648
        %v6650 = vpop.f32.mrb[0].mxu0
        %6651 = vmatprep.mubr.bf16.mxu0 0
        %6652 = vmatmul.mubr.bf16.gmra.mrb[0].mxu0 %v5271
        %v6653 = vpop.f32.mrb[0].mxu0
        %v6654 = vadd.f32 %v6493, %v6653
        %v6655 = vpop.f32.mrb[0].mxu0
        %v6656 = vpop.f32.mrb[0].mxu0
        %v6657 = vadd.f32 %v6496, %v6656
        %v6658 = vpop.f32.mrb[0].mxu0
        %6659 = vmatprep.mubr.bf16.mxu0 0
        %6660 = vmatmul.mubr.bf16.gmra.mrb[0].mxu0 %v5280
        %v6661 = vpop.f32.mrb[0].mxu0
        %v6662 = vadd.f32 %v6501, %v6661
        %v6663 = vpop.f32.mrb[0].mxu0
        %v6664 = vpop.f32.mrb[0].mxu0
        %v6665 = vadd.f32 %v6504, %v6664
        %v6666 = vpop.f32.mrb[0].mxu0
        %6667 = vmatprep.mubr.bf16.mxu0 0
        %6668 = vmatmul.mubr.bf16.gmra.mrb[0].mxu0 %v5289
        %v6669 = vpop.f32.mrb[0].mxu0
        %v6670 = vadd.f32 %v6509, %v6669
        %v6671 = vpop.f32.mrb[0].mxu0
        %v6672 = vpop.f32.mrb[0].mxu0
        %v6673 = vadd.f32 %v6512, %v6672
        %v6674 = vpop.f32.mrb[0].mxu0
        %6675 = vmatprep.mubr.bf16.mxu0 0
        %6676 = vmatmul.mubr.bf16.gmra.mrb[0].mxu0 %v5298
        %v6677 = vpop.f32.mrb[0].mxu0
        %v6678 = vadd.f32 %v6517, %v6677
        %v6679 = vpop.f32.mrb[0].mxu0
        %v6680 = vpop.f32.mrb[0].mxu0
        %v6681 = vadd.f32 %v6520, %v6680
        %v6682 = vpop.f32.mrb[0].mxu0
        %6683 = vmatprep.mubr.bf16.mxu0 0
        %6684 = vmatmul.mubr.bf16.gmra.mrb[0].mxu0 %v5307
        %v6685 = vpop.f32.mrb[0].mxu0
        %v6686 = vadd.f32 %v6525, %v6685
        %v6687 = vpop.f32.mrb[0].mxu0
        %v6688 = vpop.f32.mrb[0].mxu0
        %v6689 = vadd.f32 %v6528, %v6688
        %v6690 = vpop.f32.mrb[0].mxu0
        %6691 = vmatprep.mubr.bf16.mxu0 0
        %6692 = vmatmul.mubr.bf16.gmra.mrb[0].mxu0 %v5316
        %v6693 = vpop.f32.mrb[0].mxu0
        %v6694 = vadd.f32 %v6533, %v6693
        %v6695 = vpop.f32.mrb[0].mxu0
        %v6696 = vpop.f32.mrb[0].mxu0
        %v6697 = vadd.f32 %v6536, %v6696
        %v6698 = vpop.f32.mrb[0].mxu0
        %6699 = vmatprep.mubr.bf16.mxu0 0
        %6700 = vmatmul.mubr.bf16.gmra.mrb[0].mxu0 %v5325
        %v6701 = vpop.f32.mrb[0].mxu0
        %v6702 = vadd.f32 %v6541, %v6701
        %v6703 = vpop.f32.mrb[0].mxu0
        %v6704 = vpop.f32.mrb[0].mxu0
        %v6705 = vadd.f32 %v6544, %v6704
        %v6706 = vpop.f32.mrb[0].mxu0
        %6707 = vmatprep.mubr.bf16.mxu0 0
        %6708 = vmatmul.mubr.bf16.gmra.mrb[0].mxu0 %v5334
        %v6709 = vpop.f32.mrb[0].mxu0
        %v6710 = vadd.f32 %v6549, %v6709
        %v6711 = vpop.f32.mrb[0].mxu0
        %v6712 = vpop.f32.mrb[0].mxu0
        %v6713 = vadd.f32 %v6552, %v6712
        %v6714 = vpop.f32.mrb[0].mxu0
        %6715 = vdwg.mxu0
        %v6716 = vadd.f32 %v6590, %v6593
        %v6717 = vadd.f32 %v6716, %v6598
        %v6718 = vadd.f32 %v6717, %v6601
        %v6719 = vadd.f32 %v6718, %v6606
        %v6720 = vadd.f32 %v6719, %v6609
        %v6721 = vadd.f32 %v6720, %v6614
        %v6722 = vadd.f32 %v6721, %v6617
        %v6723 = vadd.f32 %v6722, %v6622
        %v6724 = vadd.f32 %v6723, %v6625
        %v6725 = vadd.f32 %v6724, %v6630
        %v6726 = vadd.f32 %v6725, %v6633
        %v6727 = vadd.f32 %v6726, %v6638
        %v6728 = vadd.f32 %v6727, %v6641
        %v6729 = vadd.f32 %v6728, %v6646
        %v6730 = vadd.f32 %v6729, %v6649
        %v6731 = vadd.f32 %v6730, %v6654
        %v6732 = vadd.f32 %v6731, %v6657
        %v6733 = vadd.f32 %v6732, %v6662
        %v6734 = vadd.f32 %v6733, %v6665
        %v6735 = vadd.f32 %v6734, %v6670
        %v6736 = vadd.f32 %v6735, %v6673
        %v6737 = vadd.f32 %v6736, %v6678
        %v6738 = vadd.f32 %v6737, %v6681
        %v6739 = vadd.f32 %v6738, %v6686
        %v6740 = vadd.f32 %v6739, %v6689
        %v6741 = vadd.f32 %v6740, %v6694
        %v6742 = vadd.f32 %v6741, %v6697
        %v6743 = vadd.f32 %v6742, %v6702
        %v6744 = vadd.f32 %v6743, %v6705
        %v6745 = vadd.f32 %v6744, %v6710
        %v6746 = vadd.f32 %v6745, %v6713
        %v6747 = vrot.slane %v6746, 4
        %v6748 = vadd.f32 %v6746, %v6747
        %v6749 = vrot.slane %v6748, 2
        %v6750 = vadd.f32 %v6748, %v6749
        %v6751 = vrot.slane %v6750, 1
        %v6752 = vadd.f32 %v6750, %v6751
        %v6753 = vmul.f32 %v6752, %v3397
        %v6754 = vmul.f32 %v6590, %v6590
        %v6755 = vmul.f32 %v6593, %v6593
        %v6756 = vmul.f32 %v6598, %v6598
        %v6757 = vmul.f32 %v6601, %v6601
        %v6758 = vmul.f32 %v6606, %v6606
        %v6759 = vmul.f32 %v6609, %v6609
        %v6760 = vmul.f32 %v6614, %v6614
        %v6761 = vmul.f32 %v6617, %v6617
        %v6762 = vmul.f32 %v6622, %v6622
        %v6763 = vmul.f32 %v6625, %v6625
        %v6764 = vmul.f32 %v6630, %v6630
        %v6765 = vmul.f32 %v6633, %v6633
        %v6766 = vmul.f32 %v6638, %v6638
        %v6767 = vmul.f32 %v6641, %v6641
        %v6768 = vmul.f32 %v6646, %v6646
        %v6769 = vmul.f32 %v6649, %v6649
        %v6770 = vmul.f32 %v6654, %v6654
        %v6771 = vmul.f32 %v6657, %v6657
        %v6772 = vmul.f32 %v6662, %v6662
        %v6773 = vmul.f32 %v6665, %v6665
        %v6774 = vmul.f32 %v6670, %v6670
        %v6775 = vmul.f32 %v6673, %v6673
        %v6776 = vmul.f32 %v6678, %v6678
        %v6777 = vmul.f32 %v6681, %v6681
        %v6778 = vmul.f32 %v6686, %v6686
        %v6779 = vmul.f32 %v6689, %v6689
        %v6780 = vmul.f32 %v6694, %v6694
        %v6781 = vmul.f32 %v6697, %v6697
        %v6782 = vmul.f32 %v6702, %v6702
        %v6783 = vmul.f32 %v6705, %v6705
        %v6784 = vmul.f32 %v6710, %v6710
        %v6785 = vmul.f32 %v6713, %v6713
        %v6786 = vadd.f32 %v6754, %v6755
        %v6787 = vadd.f32 %v6786, %v6756
        %v6788 = vadd.f32 %v6787, %v6757
        %v6789 = vadd.f32 %v6788, %v6758
        %v6790 = vadd.f32 %v6789, %v6759
        %v6791 = vadd.f32 %v6790, %v6760
        %v6792 = vadd.f32 %v6791, %v6761
        %v6793 = vadd.f32 %v6792, %v6762
        %v6794 = vadd.f32 %v6793, %v6763
        %v6795 = vadd.f32 %v6794, %v6764
        %v6796 = vadd.f32 %v6795, %v6765
        %v6797 = vadd.f32 %v6796, %v6766
        %v6798 = vadd.f32 %v6797, %v6767
        %v6799 = vadd.f32 %v6798, %v6768
        %v6800 = vadd.f32 %v6799, %v6769
        %v6801 = vadd.f32 %v6800, %v6770
        %v6802 = vadd.f32 %v6801, %v6771
        %v6803 = vadd.f32 %v6802, %v6772
        %v6804 = vadd.f32 %v6803, %v6773
        %v6805 = vadd.f32 %v6804, %v6774
        %v6806 = vadd.f32 %v6805, %v6775
        %v6807 = vadd.f32 %v6806, %v6776
        %v6808 = vadd.f32 %v6807, %v6777
        %v6809 = vadd.f32 %v6808, %v6778
        %v6810 = vadd.f32 %v6809, %v6779
        %v6811 = vadd.f32 %v6810, %v6780
        %v6812 = vadd.f32 %v6811, %v6781
        %v6813 = vadd.f32 %v6812, %v6782
        %v6814 = vadd.f32 %v6813, %v6783
        %v6815 = vadd.f32 %v6814, %v6784
        %v6816 = vadd.f32 %v6815, %v6785
        %v6817 = vrot.slane %v6816, 4
        %v6818 = vadd.f32 %v6816, %v6817
        %v6819 = vrot.slane %v6818, 2
        %v6820 = vadd.f32 %v6818, %v6819
        %v6821 = vrot.slane %v6820, 1
        %v6822 = vadd.f32 %v6820, %v6821
        %v6823 = vmul.f32 %v6822, %v3397
        %v6824 = vmul.f32 %v6753, %v6753
        %v6825 = vsub.f32 %v6823, %v6824
        %v6826 = vsub.f32 %v6590, %v6753
        %v6827 = vsub.f32 %v6593, %v6753
        %v6828 = vsub.f32 %v6598, %v6753
        %v6829 = vsub.f32 %v6601, %v6753
        %v6830 = vsub.f32 %v6606, %v6753
        %v6831 = vsub.f32 %v6609, %v6753
        %v6832 = vsub.f32 %v6614, %v6753
        %v6833 = vsub.f32 %v6617, %v6753
        %v6834 = vsub.f32 %v6622, %v6753
        %v6835 = vsub.f32 %v6625, %v6753
        %v6836 = vsub.f32 %v6630, %v6753
        %v6837 = vsub.f32 %v6633, %v6753
        %v6838 = vsub.f32 %v6638, %v6753
        %v6839 = vsub.f32 %v6641, %v6753
        %v6840 = vsub.f32 %v6646, %v6753
        %v6841 = vsub.f32 %v6649, %v6753
        %v6842 = vsub.f32 %v6654, %v6753
        %v6843 = vsub.f32 %v6657, %v6753
        %v6844 = vsub.f32 %v6662, %v6753
        %v6845 = vsub.f32 %v6665, %v6753
        %v6846 = vsub.f32 %v6670, %v6753
        %v6847 = vsub.f32 %v6673, %v6753
        %v6848 = vsub.f32 %v6678, %v6753
        %v6849 = vsub.f32 %v6681, %v6753
        %v6850 = vsub.f32 %v6686, %v6753
        %v6851 = vsub.f32 %v6689, %v6753
        %v6852 = vsub.f32 %v6694, %v6753
        %v6853 = vsub.f32 %v6697, %v6753
        %v6854 = vsub.f32 %v6702, %v6753
        %v6855 = vsub.f32 %v6705, %v6753
        %v6856 = vsub.f32 %v6710, %v6753
        %v6857 = vsub.f32 %v6713, %v6753
        %v6858 = vadd.f32 %v6825, 1e-05
        %v6859 = vrsqrt.pop %v6858
        %v6860 = vmul.f32 %v6826, %v6859
        %v6861 = vmul.f32 %v6827, %v6859
        %v6862 = vmul.f32 %v6828, %v6859
        %v6863 = vmul.f32 %v6829, %v6859
        %v6864 = vmul.f32 %v6830, %v6859
        %v6865 = vmul.f32 %v6831, %v6859
        %v6866 = vmul.f32 %v6832, %v6859
        %v6867 = vmul.f32 %v6833, %v6859
        %v6868 = vmul.f32 %v6834, %v6859
        %v6869 = vmul.f32 %v6835, %v6859
        %v6870 = vmul.f32 %v6836, %v6859
        %v6871 = vmul.f32 %v6837, %v6859
        %v6872 = vmul.f32 %v6838, %v6859
        %v6873 = vmul.f32 %v6839, %v6859
        %v6874 = vmul.f32 %v6840, %v6859
        %v6875 = vmul.f32 %v6841, %v6859
        %v6876 = vmul.f32 %v6842, %v6859
        %v6877 = vmul.f32 %v6843, %v6859
        %v6878 = vmul.f32 %v6844, %v6859
        %v6879 = vmul.f32 %v6845, %v6859
        %v6880 = vmul.f32 %v6846, %v6859
        %v6881 = vmul.f32 %v6847, %v6859
        %v6882 = vmul.f32 %v6848, %v6859
        %v6883 = vmul.f32 %v6849, %v6859
        %v6884 = vmul.f32 %v6850, %v6859
        %v6885 = vmul.f32 %v6851, %v6859
        %v6886 = vmul.f32 %v6852, %v6859
        %v6887 = vmul.f32 %v6853, %v6859
        %v6888 = vmul.f32 %v6854, %v6859
        %v6889 = vmul.f32 %v6855, %v6859
        %v6890 = vmul.f32 %v6856, %v6859
        %v6891 = vmul.f32 %v6857, %v6859
        %v6892 = vld [vmem:[%s168] sm:$0xff]
        %v6893 = vld [vmem:[%s168 + $0x8] sm:$0xff]
        %v6894 = vld [vmem:[%s168 + $0x10] sm:$0xff]
        %v6895 = vld [vmem:[%s168 + $0x18] sm:$0xff]
        %v6896 = vld [vmem:[%s168 + $0x20] sm:$0xff]
        %v6897 = vld [vmem:[%s168 + $0x28] sm:$0xff]
        %v6898 = vld [vmem:[%s168 + $0x30] sm:$0xff]
        %v6899 = vld [vmem:[%s168 + $0x38] sm:$0xff]
        %v6900 = vld [vmem:[%s168 + $0x40] sm:$0xff]
        %v6901 = vld [vmem:[%s168 + $0x48] sm:$0xff]
        %v6902 = vld [vmem:[%s168 + $0x50] sm:$0xff]
        %v6903 = vld [vmem:[%s168 + $0x58] sm:$0xff]
        %v6904 = vld [vmem:[%s168 + $0x60] sm:$0xff]
        %v6905 = vld [vmem:[%s168 + $0x68] sm:$0xff]
        %v6906 = vld [vmem:[%s168 + $0x70] sm:$0xff]
        %v6907 = vld [vmem:[%s168 + $0x78] sm:$0xff]
        %v6908 = vld [vmem:[%s168 + $0x80] sm:$0xff]
        %v6909 = vld [vmem:[%s168 + $0x88] sm:$0xff]
        %v6910 = vld [vmem:[%s168 + $0x90] sm:$0xff]
        %v6911 = vld [vmem:[%s168 + $0x98] sm:$0xff]
        %v6912 = vld [vmem:[%s168 + $0xa0] sm:$0xff]
        %v6913 = vld [vmem:[%s168 + $0xa8] sm:$0xff]
        %v6914 = vld [vmem:[%s168 + $0xb0] sm:$0xff]
        %v6915 = vld [vmem:[%s168 + $0xb8] sm:$0xff]
        %v6916 = vld [vmem:[%s168 + $0xc0] sm:$0xff]
        %v6917 = vld [vmem:[%s168 + $0xc8] sm:$0xff]
        %v6918 = vld [vmem:[%s168 + $0xd0] sm:$0xff]
        %v6919 = vld [vmem:[%s168 + $0xd8] sm:$0xff]
        %v6920 = vld [vmem:[%s168 + $0xe0] sm:$0xff]
        %v6921 = vld [vmem:[%s168 + $0xe8] sm:$0xff]
        %v6922 = vld [vmem:[%s168 + $0xf0] sm:$0xff]
        %v6923 = vld [vmem:[%s168 + $0xf8] sm:$0xff]
        %v6924 = vadd.f32 %v6892, %v6860
        %v6925 = vadd.f32 %v6893, %v6861
        %v6926 = vadd.f32 %v6894, %v6862
        %v6927 = vadd.f32 %v6895, %v6863
        %v6928 = vadd.f32 %v6896, %v6864
        %v6929 = vadd.f32 %v6897, %v6865
        %v6930 = vadd.f32 %v6898, %v6866
        %v6931 = vadd.f32 %v6899, %v6867
        %v6932 = vadd.f32 %v6900, %v6868
        %v6933 = vadd.f32 %v6901, %v6869
        %v6934 = vadd.f32 %v6902, %v6870
        %v6935 = vadd.f32 %v6903, %v6871
        %v6936 = vadd.f32 %v6904, %v6872
        %v6937 = vadd.f32 %v6905, %v6873
        %v6938 = vadd.f32 %v6906, %v6874
        %v6939 = vadd.f32 %v6907, %v6875
        %v6940 = vadd.f32 %v6908, %v6876
        %v6941 = vadd.f32 %v6909, %v6877
        %v6942 = vadd.f32 %v6910, %v6878
        %v6943 = vadd.f32 %v6911, %v6879
        %v6944 = vadd.f32 %v6912, %v6880
        %v6945 = vadd.f32 %v6913, %v6881
        %v6946 = vadd.f32 %v6914, %v6882
        %v6947 = vadd.f32 %v6915, %v6883
        %v6948 = vadd.f32 %v6916, %v6884
        %v6949 = vadd.f32 %v6917, %v6885
        %v6950 = vadd.f32 %v6918, %v6886
        %v6951 = vadd.f32 %v6919, %v6887
        %v6952 = vadd.f32 %v6920, %v6888
        %v6953 = vadd.f32 %v6921, %v6889
        %v6954 = vadd.f32 %v6922, %v6890
        %v6955 = vadd.f32 %v6923, %v6891
        %6956 = vst [vmem:[%s163] sm:$0xff] %v6924
        %6957 = vst [vmem:[%s163 + $0x8] sm:$0xff] %v6925
        %6958 = vst [vmem:[%s163 + $0x10] sm:$0xff] %v6926
        %6959 = vst [vmem:[%s163 + $0x18] sm:$0xff] %v6927
        %6960 = vst [vmem:[%s163 + $0x20] sm:$0xff] %v6928
        %6961 = vst [vmem:[%s163 + $0x28] sm:$0xff] %v6929
        %6962 = vst [vmem:[%s163 + $0x30] sm:$0xff] %v6930
        %6963 = vst [vmem:[%s163 + $0x38] sm:$0xff] %v6931
        %6964 = vst [vmem:[%s163 + $0x40] sm:$0xff] %v6932
        %6965 = vst [vmem:[%s163 + $0x48] sm:$0xff] %v6933
        %6966 = vst [vmem:[%s163 + $0x50] sm:$0xff] %v6934
        %6967 = vst [vmem:[%s163 + $0x58] sm:$0xff] %v6935
        %6968 = vst [vmem:[%s163 + $0x60] sm:$0xff] %v6936
        %6969 = vst [vmem:[%s163 + $0x68] sm:$0xff] %v6937
        %6970 = vst [vmem:[%s163 + $0x70] sm:$0xff] %v6938
        %6971 = vst [vmem:[%s163 + $0x78] sm:$0xff] %v6939
        %6972 = vst [vmem:[%s163 + $0x80] sm:$0xff] %v6940
        %6973 = vst [vmem:[%s163 + $0x88] sm:$0xff] %v6941
        %6974 = vst [vmem:[%s163 + $0x90] sm:$0xff] %v6942
        %6975 = vst [vmem:[%s163 + $0x98] sm:$0xff] %v6943
        %6976 = vst [vmem:[%s163 + $0xa0] sm:$0xff] %v6944
        %6977 = vst [vmem:[%s163 + $0xa8] sm:$0xff] %v6945
        %6978 = vst [vmem:[%s163 + $0xb0] sm:$0xff] %v6946
        %6979 = vst [vmem:[%s163 + $0xb8] sm:$0xff] %v6947
        %6980 = vst [vmem:[%s163 + $0xc0] sm:$0xff] %v6948
        %6981 = vst [vmem:[%s163 + $0xc8] sm:$0xff] %v6949
        %6982 = vst [vmem:[%s163 + $0xd0] sm:$0xff] %v6950
        %6983 = vst [vmem:[%s163 + $0xd8] sm:$0xff] %v6951
        %6984 = vst [vmem:[%s163 + $0xe0] sm:$0xff] %v6952
        %6985 = vst [vmem:[%s163 + $0xe8] sm:$0xff] %v6953
        %6986 = vst [vmem:[%s163 + $0xf0] sm:$0xff] %v6954
        %6987 = vst [vmem:[%s163 + $0xf8] sm:$0xff] %v6955
        %s6988 = sand.u32 %s93, 1
        %s6989 = scalar_lea.sflag [#allocation5], %s6988
        %s6990 = sand.u32 %s93, 1
        %s6991 = smul.addr %s6990, 256
        %s6992 = scalar_lea.vmem [#allocation4], %s6991
        // Predicated region
        $region33: #{resnet_block_forward.1} parent=31 // pred_check
          %p6993 = pneg %p103
        $region34: #{resnet_block_forward.1} parent=31 // pred_check_branch
          %6995 = sbr.rel (%p6993) target = $region36
        $region35: #{resnet_block_forward.1} parent=31 // pred_region
          %s6997 = ssub.s32 4096, 4096
          %6998 = vsyncadd %s6989, %s6997
          %s6999 = smul.addr %s17, 32
          %s7000 = smul.addr %s6999, 128
          %s7001 = scalar_lea.hbm %s3, %s7000
          %s7002 = sshll.u32 %s6992, 4
          %s7003 = int_to_ptr.vmem [resolvable:$true] %s7002
          %7008 = dma.vmem_to_hbm [thread:$0]  %s7003, 4096, %s7001, %s6989, 128, 128, 8
        $region36: #{resnet_block_forward.1} parent=31 // pred_fallthru
          _
      $region32: #{resnet_block_forward.1} parent=5 // pred_fallthru
        _
      %p7009 = scmp.le.s32.totalorder 2, %s12
      // Predicated region
      $region37: #{resnet_block_forward.1} parent=5 // pred_check
        %p7010 = pneg %p7009
      $region38: #{resnet_block_forward.1} parent=5 // pred_check_branch
        %7012 = sbr.rel (%p7010) target = $region40
      $region39: #{resnet_block_forward.1} parent=5 // pred_region
        %s7013 = ssub.s32 %s12, 2
        // Predicated region
        $region41: #{resnet_block_forward.1} parent=39 // pred_check
          %p7014 = pneg %p109
        $region42: #{resnet_block_forward.1} parent=39 // pred_check_branch
          %7016 = sbr.rel (%p7014) target = $region44
        $region43: #{resnet_block_forward.1} parent=39 // pred_region
          %s7017 = sand.u32 %s94, 1
          %s7018 = scalar_lea.sflag [#allocation5], %s7017
          %s7019 = sand.u32 %s94, 1
          %s7020 = smul.addr %s7019, 256
          %s7021 = scalar_lea.vmem [#allocation4], %s7020
          %7022 = dma.done %s7018, 4096
        $region44: #{resnet_block_forward.1} parent=39 // pred_fallthru
          _
      $region40: #{resnet_block_forward.1} parent=5 // pred_fallthru
        _
    $region6: #{resnet_block_forward.1} parent=1 // loop_footer
      %s16 = sadd.s32 1, %s12
    $region7: #{resnet_block_forward.1} parent=1 // loop_footer_branch
      %11 = sbr.rel target = $region3
    $region8: #{resnet_block_forward.1} parent=1 // loop_exit
      _
    %7023 = vsyncpa [#allocation5], 1
    %s7024 = scalar_lea.sflag [#allocation5], 1
    %7025 = vsyncpa %s7024, 1

</llo_original>
